<compile_context>
chip_gen: v7x
topology: tpu7x:2x2x1
jax: 0.10.0
libtpu: 0.0.40
codegen_flags: <defaults>
</compile_context>

<pallas_src>
import functools

import jax
import jax.numpy as jnp
from jax.experimental import pallas as pl
from jax.experimental.pallas import tpu as pltpu

_VMEM_LIMIT = 32 * 1024 * 1024  # fits scoped VMEM on v5e/v6e/v7x


def _pick_tile(m, candidates=(512, 256, 128, 64, 32, 16, 8)):
    # Prefer the largest tile that divides m (per-step grid overhead ~0.35us).
    for t in candidates:
        if t <= m and m % t == 0:
            return t
    return m


# ----------------------------------------------------------------------------
# Merged-gate layout helper (trace-time, tiny weights only)
# ----------------------------------------------------------------------------
def _to_merged(m4h, direction, hd):
    """Map a (..., 4H) tensor in PyTorch gate order [i, f, g, o] into the
    merged (..., 8H) layout used by the kernel: four 2H-wide lane groups in
    order [F | I | O | G]; within each group the fwd direction occupies the
    low H lanes and the bwd direction the high H lanes (zeros elsewhere)."""
    i_, f_, g_, o_ = jnp.split(m4h, 4, axis=-1)
    z = jnp.zeros_like(i_)

    def put(g):
        return (jnp.concatenate([g, z], axis=-1) if direction == 0
                else jnp.concatenate([z, g], axis=-1))

    return jnp.concatenate([put(f_), put(i_), put(o_), put(g_)], axis=-1)


# ----------------------------------------------------------------------------
# Fused conv1 + bidirectional LSTM recurrence kernel
# ----------------------------------------------------------------------------
def _bilstm_kernel(x_ref, w_in_ref, b_in_ref, w_hh_ref, of_ref, ob_ref,
                   xw_scr, h_scr, c_scr, *, tb, hd, bsz):
    """One time block of the merged bidirectional recurrence.

    x_ref   : (tb*B, 2C) bf16, t-major rows; lanes [x(t) | x(T-1-t)].
    w_in_ref: (2C, 8H) bf16 merged input-projection weights (conv1 folded in,
              biases folded into b_in_ref).
    w_hh_ref: (2H, 8H) bf16 block-diagonal recurrent weights.
    of_ref  : (tb*B, H) bf16 fwd outputs for time block s.
    ob_ref  : (tb*B, H) bf16 bwd outputs for the mirrored time block nb-1-s.
    h_scr/c_scr: (B, 2H) carried state, [h_f | h_b] / [c_f | c_b].
    Gate lane layout: [F | I | O | G], each group [fwd | bwd] (see _to_merged).
    """
    s = pl.program_id(0)

    @pl.when(s == 0)
    def _():
        h_scr[...] = jnp.zeros_like(h_scr)
        c_scr[...] = jnp.zeros_like(c_scr)

    # Prologue: fused conv1 + LSTM input projection for this block, both
    # directions in one MXU dot (bwd time-flip already baked into x lanes).
    xw_scr[...] = (jnp.dot(x_ref[...], w_in_ref[...],
                           preferred_element_type=jnp.float32)
                   + b_in_ref[...])

    w_hh = w_hh_ref[...]                 # hoisted: (2H, 8H) bf16
    h = h_scr[...]                       # (B, 2H) bf16
    c = c_scr[...]                       # (B, 2H) f32
    H2 = 2 * hd

    for j in range(tb):                  # static unroll over the time block
        r0 = j * bsz
        # One (B,2H)x(2H,8H) MXU push covers both directions' gates.
        gates = xw_scr[r0:r0 + bsz, :] + jnp.dot(
            h, w_hh, preferred_element_type=jnp.float32)       # (B, 8H) f32
        sg = jax.nn.sigmoid(gates)                              # full width
        f_g = sg[:, 0 * H2:1 * H2]
        i_g = sg[:, 1 * H2:2 * H2]
        o_g = sg[:, 2 * H2:3 * H2]
        g_g = jnp.tanh(gates[:, 3 * H2:4 * H2])                 # only g needs tanh
        c = f_g * c + i_g * g_g
        h = (o_g * jnp.tanh(c)).astype(jnp.bfloat16)            # carry h in bf16
        of_ref[r0:r0 + bsz, :] = h[:, :hd]                      # fwd @ time s*tb+j
        rr = (tb - 1 - j) * bsz
        ob_ref[rr:rr + bsz, :] = h[:, hd:]                      # bwd @ mirrored time

    h_scr[...] = h
    c_scr[...] = c


def bilstm_fused(x_tm, w_in, b_in, w_hh, *, batch, hidden):
    """x_tm: (T*B, 2C) bf16 t-major with the bwd time-flip baked into lanes.
    Returns (out_f, out_b), each (T*B, H) bf16 in t-major row order."""
    TB, C2 = x_tm.shape
    T = TB // batch
    Hd = hidden
    G8 = 8 * Hd
    # Largest-first block candidates; fallback tb=T fully unrolls (only hit
    # for odd sequence lengths - acceptable for the shapes this module sees).
    tb = next((t for t in (64, 32, 16, 8) if T % t == 0), T)
    nb = T // tb

    kern = functools.partial(_bilstm_kernel, tb=tb, hd=Hd, bsz=batch)
    out_f, out_b = pl.pallas_call(
        kern,
        out_shape=(
            jax.ShapeDtypeStruct((TB, Hd), jnp.bfloat16),
            jax.ShapeDtypeStruct((TB, Hd), jnp.bfloat16),
        ),
        grid=(nb,),
        in_specs=[
            pl.BlockSpec((tb * batch, C2), lambda s: (s, 0)),
            pl.BlockSpec((C2, G8), lambda s: (0, 0)),
            pl.BlockSpec((1, G8), lambda s: (0, 0)),
            pl.BlockSpec((2 * Hd, G8), lambda s: (0, 0)),
        ],
        out_specs=(
            pl.BlockSpec((tb * batch, Hd), lambda s: (s, 0)),
            pl.BlockSpec((tb * batch, Hd), lambda s: (nb - 1 - s, 0)),
        ),
        scratch_shapes=[
            pltpu.VMEM((tb * batch, G8), jnp.float32),   # per-block xw
            pltpu.VMEM((batch, 2 * Hd), jnp.bfloat16),   # h  [fwd | bwd]
            pltpu.VMEM((batch, 2 * Hd), jnp.float32),    # c  [fwd | bwd]
        ],
        compiler_params=pltpu.CompilerParams(
            dimension_semantics=("arbitrary",),          # sequential recurrence
            vmem_limit_bytes=_VMEM_LIMIT),
    )(x_tm, w_in, b_in, w_hh)
    return out_f, out_b


# ----------------------------------------------------------------------------
# Fused Linear(2H->H) + conv2(1x1) + ReLU head
# ----------------------------------------------------------------------------
def _head_kernel(f_ref, r_ref, wf_ref, wb_ref, bias_ref, o_ref):
    y = jnp.dot(f_ref[...], wf_ref[...], preferred_element_type=jnp.float32)
    y = y + jnp.dot(r_ref[...], wb_ref[...], preferred_element_type=jnp.float32)
    y = y + bias_ref[...]
    o_ref[...] = jnp.maximum(y, 0.0).astype(o_ref.dtype)


def head(out_f, out_b, wf, wb, bias):
    M, Hd = out_f.shape
    Cout = wf.shape[1]
    tm = _pick_tile(M)
    bias2 = bias.reshape(1, Cout).astype(jnp.float32)
    return pl.pallas_call(
        _head_kernel,
        out_shape=jax.ShapeDtypeStruct((M, Cout), jnp.float32),
        grid=(M // tm,),
        in_specs=[
            pl.BlockSpec((tm, Hd), lambda i: (i, 0)),
            pl.BlockSpec((tm, Hd), lambda i: (i, 0)),
            pl.BlockSpec((Hd, Cout), lambda i: (0, 0)),
            pl.BlockSpec((Hd, Cout), lambda i: (0, 0)),
            pl.BlockSpec((1, Cout), lambda i: (0, 0)),
        ],
        out_specs=pl.BlockSpec((tm, Cout), lambda i: (i, 0)),
        compiler_params=pltpu.CompilerParams(
            dimension_semantics=("parallel",),
            vmem_limit_bytes=_VMEM_LIMIT),
    )(out_f, out_b, wf, wb, bias2)


# ----------------------------------------------------------------------------
# Parameter construction (PyTorch-equivalent shapes, independent keys)
# ----------------------------------------------------------------------------
def init_params(key, input_size, hidden_size, output_size):
    ks = jax.random.split(key, 14)

    def u(k, shape, bound):
        return jax.random.uniform(k, shape, jnp.float32, -bound, bound)

    kc1 = 1.0 / jnp.sqrt(input_size * 1.0)
    kl = 1.0 / jnp.sqrt(hidden_size * 1.0)
    klin = 1.0 / jnp.sqrt(2.0 * hidden_size)
    kc2 = 1.0 / jnp.sqrt(hidden_size * 1.0)

    return dict(
        conv1_w=u(ks[0], (input_size, input_size), kc1),       # (Cout, Cin) 1x1 conv
        conv1_b=u(ks[1], (input_size,), kc1),
        w_ih_f=u(ks[2], (4 * hidden_size, input_size), kl),    # weight_ih_l0
        w_hh_f=u(ks[3], (4 * hidden_size, hidden_size), kl),   # weight_hh_l0
        b_ih_f=u(ks[4], (4 * hidden_size,), kl),
        b_hh_f=u(ks[5], (4 * hidden_size,), kl),
        w_ih_b=u(ks[6], (4 * hidden_size, input_size), kl),    # *_reverse
        w_hh_b=u(ks[7], (4 * hidden_size, hidden_size), kl),
        b_ih_b=u(ks[8], (4 * hidden_size,), kl),
        b_hh_b=u(ks[9], (4 * hidden_size,), kl),
        lin_w=u(ks[10], (hidden_size, 2 * hidden_size), klin),  # nn.Linear weight
        lin_b=u(ks[11], (hidden_size,), klin),
        conv2_w=u(ks[12], (output_size, hidden_size), kc2),     # (Cout, Cin) 1x1 conv
        conv2_b=u(ks[13], (output_size,), kc2),
    )


# ----------------------------------------------------------------------------
# Forward pass (hot paths in 2 Pallas kernels; only tiny weight algebra and
# <=8 KB permutes remain in the wrapper)
# ----------------------------------------------------------------------------
def blstm_forward(params, x):
    B, C, Hsp, Wsp = x.shape
    T = Hsp * Wsp
    Hd = params["w_hh_f"].shape[1]
    Cout = params["conv2_w"].shape[0]

    # -- trace-time weight prep: fold conv1 into the LSTM input projection,
    #    pack both directions into the merged gate layout, block-diagonal
    #    recurrent weights, and fuse Linear + conv2 into one head matmul.
    w1t = params["conv1_w"].T                                    # (C, C)
    w_eff_f = w1t @ params["w_ih_f"].T                           # (C, 4H) [i,f,g,o]
    w_eff_b = w1t @ params["w_ih_b"].T
    b_eff_f = (params["conv1_b"] @ params["w_ih_f"].T
               + params["b_ih_f"] + params["b_hh_f"])            # (4H,)
    b_eff_b = (params["conv1_b"] @ params["w_ih_b"].T
               + params["b_ih_b"] + params["b_hh_b"])

    w_in = jnp.concatenate([_to_merged(w_eff_f, 0, Hd),
                            _to_merged(w_eff_b, 1, Hd)], axis=0)  # (2C, 8H)
    b_in = (_to_merged(b_eff_f[None, :], 0, Hd)
            + _to_merged(b_eff_b[None, :], 1, Hd))                # (1, 8H)
    w_hh = jnp.concatenate([_to_merged(params["w_hh_f"].T, 0, Hd),
                            _to_merged(params["w_hh_b"].T, 1, Hd)], axis=0)  # (2H, 8H)

    w_head = params["lin_w"].T @ params["conv2_w"].T              # (2H, Cout)
    b_head = params["conv2_w"] @ params["lin_b"] + params["conv2_b"]

    # -- input staging: NCHW -> (B,T,C) -> t-major (T*B, 2C) with the bwd
    #    direction's time flip baked into the lane dimension (tiny XLA ops).
    x_btc = jnp.transpose(x, (0, 2, 3, 1)).reshape(B, T, C)
    x_cat = jnp.concatenate([x_btc, jnp.flip(x_btc, axis=1)], axis=-1)  # (B,T,2C)
    x_tm = jnp.transpose(x_cat, (1, 0, 2)).reshape(T * B, 2 * C).astype(jnp.bfloat16)

    # -- fused conv1 + input projection + merged bidirectional recurrence
    out_f, out_b = bilstm_fused(x_tm, w_in.astype(jnp.bfloat16), b_in,
                                w_hh.astype(jnp.bfloat16),
                                batch=B, hidden=Hd)               # (T*B, H) bf16 each

    # -- fused Linear + conv2 + ReLU head
    y = head(out_f, out_b,
             w_head[:Hd].astype(jnp.bfloat16),
             w_head[Hd:].astype(jnp.bfloat16),
             b_head)                                              # (T*B, Cout) f32

    out = jnp.transpose(y.reshape(T, B, Cout), (1, 0, 2)).reshape(B, Hsp, Wsp, Cout)
    return jnp.transpose(out, (0, 3, 1, 2))                       # NCHW


# ----------------------------------------------------------------------------
if __name__ == "__main__":
    B, C, Hsp, Wsp = 2, 4, 16, 16        # batch, input_size, height, width
    hidden_size, output_size = 32, 4

    key = jax.random.PRNGKey(0)
    kx, kp = jax.random.split(key)
    x = jax.random.normal(kx, (B, C, Hsp, Wsp), jnp.float32)
    params = init_params(kp, C, hidden_size, output_size)

    fwd = jax.jit(blstm_forward)
    out = fwd(params, x)
    jax.block_until_ready(out)

    assert out.shape == (B, output_size, Hsp, Wsp)
    assert bool(jnp.all(jnp.isfinite(out)))
    print("KERNEL_OK")
</pallas_src>

<mosaic_0001>
module attributes {stable_mosaic.version = 11 : i64} {
  func.func @_head_kernel(%arg0: i32, %arg1: memref<512x32xbf16, #tpu.memory_space<vmem>>, %arg2: memref<512x32xbf16, #tpu.memory_space<vmem>>, %arg3: memref<32x4xbf16, #tpu.memory_space<vmem>>, %arg4: memref<32x4xbf16, #tpu.memory_space<vmem>>, %arg5: memref<1x4xf32, #tpu.memory_space<vmem>>, %arg6: memref<512x4xf32, #tpu.memory_space<vmem>>) attributes {dimension_semantics = [#tpu.dimension_semantics<parallel>], iteration_bounds = array<i64: 1>, scalar_prefetch = 0 : i64, scratch_operands = 0 : i64, tpu.core_type = #tpu.core_type<tc>, window_params = [{transform_indices = @transform_0, window_bounds = array<i64: 512, 32>}, {transform_indices = @transform_1, window_bounds = array<i64: 512, 32>}, {pipeline_mode = #tpu.pipeline_mode<synchronous>, transform_indices = @transform_2, window_bounds = array<i64: 32, 4>}, {pipeline_mode = #tpu.pipeline_mode<synchronous>, transform_indices = @transform_3, window_bounds = array<i64: 32, 4>}, {pipeline_mode = #tpu.pipeline_mode<synchronous>, transform_indices = @transform_4, window_bounds = array<i64: 1, 4>}, {transform_indices = @transform_5, window_bounds = array<i64: 512, 4>}]} {
    %c0 = arith.constant 0 : index
    %c0_0 = arith.constant 0 : index
    %0 = vector.load %arg1[%c0, %c0_0] : memref<512x32xbf16, #tpu.memory_space<vmem>>, vector<512x32xbf16>
    %c0_1 = arith.constant 0 : index
    %c0_2 = arith.constant 0 : index
    %1 = vector.load %arg3[%c0_1, %c0_2] : memref<32x4xbf16, #tpu.memory_space<vmem>>, vector<32x4xbf16>
    %cst = arith.constant dense<0.000000e+00> : vector<512x4xf32>
    %2 = tpu.matmul %0, %1, %cst {dimension_numbers = #tpu.dot_dimension_numbers<[1], [0], [0], [1], [0, 0, 1, 1], [], []>} : vector<512x32xbf16>, vector<32x4xbf16>, vector<512x4xf32> -> vector<512x4xf32>
    %c0_3 = arith.constant 0 : index
    %c0_4 = arith.constant 0 : index
    %3 = vector.load %arg2[%c0_3, %c0_4] : memref<512x32xbf16, #tpu.memory_space<vmem>>, vector<512x32xbf16>
    %c0_5 = arith.constant 0 : index
    %c0_6 = arith.constant 0 : index
    %4 = vector.load %arg4[%c0_5, %c0_6] : memref<32x4xbf16, #tpu.memory_space<vmem>>, vector<32x4xbf16>
    %cst_7 = arith.constant dense<0.000000e+00> : vector<512x4xf32>
    %5 = tpu.matmul %3, %4, %cst_7 {dimension_numbers = #tpu.dot_dimension_numbers<[1], [0], [0], [1], [0, 0, 1, 1], [], []>} : vector<512x32xbf16>, vector<32x4xbf16>, vector<512x4xf32> -> vector<512x4xf32>
    %6 = arith.addf %2, %5 : vector<512x4xf32>
    %c0_8 = arith.constant 0 : index
    %c0_9 = arith.constant 0 : index
    %7 = vector.load %arg5[%c0_8, %c0_9] : memref<1x4xf32, #tpu.memory_space<vmem>>, vector<1x4xf32>
    %8 = vector.broadcast %7 : vector<1x4xf32> to vector<512x4xf32>
    %9 = arith.addf %6, %8 : vector<512x4xf32>
    %cst_10 = arith.constant 0.000000e+00 : f32
    %10 = vector.broadcast %cst_10 : f32 to vector<512x4xf32>
    %11 = arith.maximumf %9, %10 : vector<512x4xf32>
    %c0_11 = arith.constant 0 : index
    %c0_12 = arith.constant 0 : index
    %12 = vector.load %arg6[%c0_11, %c0_12] : memref<512x4xf32, #tpu.memory_space<vmem>>, vector<512x4xf32>
    tpu.vector_store %arg6[%c0_11, %c0_12], %11 {strides = array<i32>} : memref<512x4xf32, #tpu.memory_space<vmem>>, vector<512x4xf32>,
    return
  }
  func.func @transform_0(%arg0: i32) -> (i32, i32) {
    %c0_i32 = arith.constant 0 : i32
    %c0_i32_0 = arith.constant 0 : i32
    return %arg0, %c0_i32 : i32, i32
  }
  func.func @transform_1(%arg0: i32) -> (i32, i32) {
    %c0_i32 = arith.constant 0 : i32
    %c0_i32_0 = arith.constant 0 : i32
    return %arg0, %c0_i32 : i32, i32
  }
  func.func @transform_2(%arg0: i32) -> (i32, i32) {
    %c0_i32 = arith.constant 0 : i32
    %c0_i32_0 = arith.constant 0 : i32
    %c0_i32_1 = arith.constant 0 : i32
    return %c0_i32, %c0_i32_0 : i32, i32
  }
  func.func @transform_3(%arg0: i32) -> (i32, i32) {
    %c0_i32 = arith.constant 0 : i32
    %c0_i32_0 = arith.constant 0 : i32
    %c0_i32_1 = arith.constant 0 : i32
    return %c0_i32, %c0_i32_0 : i32, i32
  }
  func.func @transform_4(%arg0: i32) -> (i32, i32) {
    %c0_i32 = arith.constant 0 : i32
    %c0_i32_0 = arith.constant 0 : i32
    %c0_i32_1 = arith.constant 0 : i32
    return %c0_i32, %c0_i32_0 : i32, i32
  }
  func.func @transform_5(%arg0: i32) -> (i32, i32) {
    %c0_i32 = arith.constant 0 : i32
    %c0_i32_0 = arith.constant 0 : i32
    return %arg0, %c0_i32 : i32, i32
  }
}

module attributes {stable_mosaic.version = 11 : i64} {
  func.func @_bilstm_kernel(%arg0: i32, %arg1: memref<128x8xbf16, #tpu.memory_space<vmem>>, %arg2: memref<8x256xbf16, #tpu.memory_space<vmem>>, %arg3: memref<1x256xf32, #tpu.memory_space<vmem>>, %arg4: memref<64x256xbf16, #tpu.memory_space<vmem>>, %arg5: memref<128x32xbf16, #tpu.memory_space<vmem>>, %arg6: memref<128x32xbf16, #tpu.memory_space<vmem>>, %arg7: memref<128x256xf32, #tpu.memory_space<vmem>>, %arg8: memref<2x64xbf16, #tpu.memory_space<vmem>>, %arg9: memref<2x64xf32, #tpu.memory_space<vmem>>) attributes {dimension_semantics = [#tpu.dimension_semantics<arbitrary>], iteration_bounds = array<i64: 4>, scalar_prefetch = 0 : i64, scratch_operands = 3 : i64, tpu.core_type = #tpu.core_type<tc>, window_params = [{transform_indices = @transform_0, window_bounds = array<i64: 128, 8>}, {pipeline_mode = #tpu.pipeline_mode<synchronous>, transform_indices = @transform_1, window_bounds = array<i64: 8, 256>}, {pipeline_mode = #tpu.pipeline_mode<synchronous>, transform_indices = @transform_2, window_bounds = array<i64: 1, 256>}, {pipeline_mode = #tpu.pipeline_mode<synchronous>, transform_indices = @transform_3, window_bounds = array<i64: 64, 256>}, {transform_indices = @transform_4, window_bounds = array<i64: 128, 32>}, {transform_indices = @transform_5, window_bounds = array<i64: 128, 32>}]} {
    %c0_i32 = arith.constant 0 : i32
    %0 = arith.cmpi eq, %arg0, %c0_i32 : i32
    %1 = arith.extui %0 : i1 to i32
    %c0_i32_0 = arith.constant 0 : i32
    %2 = arith.cmpi ne, %1, %c0_i32_0 : i32
    scf.if %2 {
      %cst_467 = arith.constant 0.000000e+00 : bf16
      %1487 = vector.broadcast %cst_467 : bf16 to vector<2x64xbf16>
      %c0_468 = arith.constant 0 : index
      %c0_469 = arith.constant 0 : index
      %1488 = vector.load %arg8[%c0_468, %c0_469] : memref<2x64xbf16, #tpu.memory_space<vmem>>, vector<2x64xbf16>
      tpu.vector_store %arg8[%c0_468, %c0_469], %1487 {strides = array<i32>} : memref<2x64xbf16, #tpu.memory_space<vmem>>, vector<2x64xbf16>,
      %cst_470 = arith.constant 0.000000e+00 : f32
      %1489 = vector.broadcast %cst_470 : f32 to vector<2x64xf32>
      %c0_471 = arith.constant 0 : index
      %c0_472 = arith.constant 0 : index
      %1490 = vector.load %arg9[%c0_471, %c0_472] : memref<2x64xf32, #tpu.memory_space<vmem>>, vector<2x64xf32>
      tpu.vector_store %arg9[%c0_471, %c0_472], %1489 {strides = array<i32>} : memref<2x64xf32, #tpu.memory_space<vmem>>, vector<2x64xf32>,
    } else {
    }
    %c0 = arith.constant 0 : index
    %c0_1 = arith.constant 0 : index
    %3 = vector.load %arg1[%c0, %c0_1] : memref<128x8xbf16, #tpu.memory_space<vmem>>, vector<128x8xbf16>
    %c0_2 = arith.constant 0 : index
    %c0_3 = arith.constant 0 : index
    %4 = vector.load %arg2[%c0_2, %c0_3] : memref<8x256xbf16, #tpu.memory_space<vmem>>, vector<8x256xbf16>
    %cst = arith.constant dense<0.000000e+00> : vector<128x256xf32>
    %5 = tpu.matmul %3, %4, %cst {dimension_numbers = #tpu.dot_dimension_numbers<[1], [0], [0], [1], [0, 0, 1, 1], [], []>} : vector<128x8xbf16>, vector<8x256xbf16>, vector<128x256xf32> -> vector<128x256xf32>
    %c0_4 = arith.constant 0 : index
    %c0_5 = arith.constant 0 : index
    %6 = vector.load %arg3[%c0_4, %c0_5] : memref<1x256xf32, #tpu.memory_space<vmem>>, vector<1x256xf32>
    %7 = vector.broadcast %6 : vector<1x256xf32> to vector<128x256xf32>
    %8 = arith.addf %5, %7 : vector<128x256xf32>
    %c0_6 = arith.constant 0 : index
    %c0_7 = arith.constant 0 : index
    %9 = vector.load %arg7[%c0_6, %c0_7] : memref<128x256xf32, #tpu.memory_space<vmem>>, vector<128x256xf32>
    tpu.vector_store %arg7[%c0_6, %c0_7], %8 {strides = array<i32>} : memref<128x256xf32, #tpu.memory_space<vmem>>, vector<128x256xf32>,
    %c0_8 = arith.constant 0 : index
    %c0_9 = arith.constant 0 : index
    %10 = vector.load %arg4[%c0_8, %c0_9] : memref<64x256xbf16, #tpu.memory_space<vmem>>, vector<64x256xbf16>
    %c0_10 = arith.constant 0 : index
    %c0_11 = arith.constant 0 : index
    %11 = vector.load %arg8[%c0_10, %c0_11] : memref<2x64xbf16, #tpu.memory_space<vmem>>, vector<2x64xbf16>
    %c0_12 = arith.constant 0 : index
    %c0_13 = arith.constant 0 : index
    %12 = vector.load %arg9[%c0_12, %c0_13] : memref<2x64xf32, #tpu.memory_space<vmem>>, vector<2x64xf32>
    %c0_14 = arith.constant 0 : index
    %c0_15 = arith.constant 0 : index
    %13 = vector.load %arg7[%c0_14, %c0_15] : memref<128x256xf32, #tpu.memory_space<vmem>>, vector<2x256xf32>
    %cst_16 = arith.constant dense<0.000000e+00> : vector<2x256xf32>
    %14 = tpu.matmul %11, %10, %cst_16 {dimension_numbers = #tpu.dot_dimension_numbers<[1], [0], [0], [1], [0, 0, 1, 1], [], []>} : vector<2x64xbf16>, vector<64x256xbf16>, vector<2x256xf32> -> vector<2x256xf32>
    %15 = arith.addf %13, %14 : vector<2x256xf32>
    %16 = arith.negf %15 : vector<2x256xf32>
    %17 = math.exp %16 : vector<2x256xf32>
    %cst_17 = arith.constant 1.000000e+00 : f32
    %18 = vector.broadcast %cst_17 : f32 to vector<2x256xf32>
    %19 = arith.addf %18, %17 : vector<2x256xf32>
    %20 = arith.divf %18, %19 : vector<2x256xf32>
    %21 = vector.extract_strided_slice %20 {offsets = [0, 0], sizes = [2, 64], strides = [1, 1]} : vector<2x256xf32> to vector<2x64xf32>
    %22 = vector.extract_strided_slice %20 {offsets = [0, 64], sizes = [2, 64], strides = [1, 1]} : vector<2x256xf32> to vector<2x64xf32>
    %23 = vector.extract_strided_slice %20 {offsets = [0, 128], sizes = [2, 64], strides = [1, 1]} : vector<2x256xf32> to vector<2x64xf32>
    %24 = vector.extract_strided_slice %15 {offsets = [0, 192], sizes = [2, 64], strides = [1, 1]} : vector<2x256xf32> to vector<2x64xf32>
    %25 = math.tanh %24 : vector<2x64xf32>
    %26 = arith.mulf %21, %12 : vector<2x64xf32>
    %27 = arith.mulf %22, %25 : vector<2x64xf32>
    %28 = arith.addf %26, %27 : vector<2x64xf32>
    %29 = math.tanh %28 : vector<2x64xf32>
    %30 = arith.mulf %23, %29 : vector<2x64xf32>
    %31 = arith.truncf %30 : vector<2x64xf32> to vector<2x64xbf16>
    %32 = vector.extract_strided_slice %31 {offsets = [0, 0], sizes = [2, 32], strides = [1, 1]} : vector<2x64xbf16> to vector<2x32xbf16>
    %c0_18 = arith.constant 0 : index
    %c0_19 = arith.constant 0 : index
    %33 = vector.load %arg5[%c0_18, %c0_19] : memref<128x32xbf16, #tpu.memory_space<vmem>>, vector<2x32xbf16>
    tpu.vector_store %arg5[%c0_18, %c0_19], %32 {strides = array<i32>} : memref<128x32xbf16, #tpu.memory_space<vmem>>, vector<2x32xbf16>,
    %34 = vector.extract_strided_slice %31 {offsets = [0, 32], sizes = [2, 32], strides = [1, 1]} : vector<2x64xbf16> to vector<2x32xbf16>
    %c126 = arith.constant 126 : index
    %c0_20 = arith.constant 0 : index
    %35 = vector.load %arg6[%c126, %c0_20] : memref<128x32xbf16, #tpu.memory_space<vmem>>, vector<2x32xbf16>
    tpu.vector_store %arg6[%c126, %c0_20], %34 {strides = array<i32>} : memref<128x32xbf16, #tpu.memory_space<vmem>>, vector<2x32xbf16>,
    %c2 = arith.constant 2 : index
    %c0_21 = arith.constant 0 : index
    %36 = vector.load %arg7[%c2, %c0_21] : memref<128x256xf32, #tpu.memory_space<vmem>>, vector<2x256xf32>
    %cst_22 = arith.constant dense<0.000000e+00> : vector<2x256xf32>
    %37 = tpu.matmul %31, %10, %cst_22 {dimension_numbers = #tpu.dot_dimension_numbers<[1], [0], [0], [1], [0, 0, 1, 1], [], []>} : vector<2x64xbf16>, vector<64x256xbf16>, vector<2x256xf32> -> vector<2x256xf32>
    %38 = arith.addf %36, %37 : vector<2x256xf32>
    %39 = arith.negf %38 : vector<2x256xf32>
    %40 = math.exp %39 : vector<2x256xf32>
    %cst_23 = arith.constant 1.000000e+00 : f32
    %41 = vector.broadcast %cst_23 : f32 to vector<2x256xf32>
    %42 = arith.addf %41, %40 : vector<2x256xf32>
    %43 = arith.divf %41, %42 : vector<2x256xf32>
    %44 = vector.extract_strided_slice %43 {offsets = [0, 0], sizes = [2, 64], strides = [1, 1]} : vector<2x256xf32> to vector<2x64xf32>
    %45 = vector.extract_strided_slice %43 {offsets = [0, 64], sizes = [2, 64], strides = [1, 1]} : vector<2x256xf32> to vector<2x64xf32>
    %46 = vector.extract_strided_slice %43 {offsets = [0, 128], sizes = [2, 64], strides = [1, 1]} : vector<2x256xf32> to vector<2x64xf32>
    %47 = vector.extract_strided_slice %38 {offsets = [0, 192], sizes = [2, 64], strides = [1, 1]} : vector<2x256xf32> to vector<2x64xf32>
    %48 = math.tanh %47 : vector<2x64xf32>
    %49 = arith.mulf %44, %28 : vector<2x64xf32>
    %50 = arith.mulf %45, %48 : vector<2x64xf32>
    %51 = arith.addf %49, %50 : vector<2x64xf32>
    %52 = math.tanh %51 : vector<2x64xf32>
    %53 = arith.mulf %46, %52 : vector<2x64xf32>
    %54 = arith.truncf %53 : vector<2x64xf32> to vector<2x64xbf16>
    %55 = vector.extract_strided_slice %54 {offsets = [0, 0], sizes = [2, 32], strides = [1, 1]} : vector<2x64xbf16> to vector<2x32xbf16>
    %c2_24 = arith.constant 2 : index
    %c0_25 = arith.constant 0 : index
    %56 = vector.load %arg5[%c2_24, %c0_25] : memref<128x32xbf16, #tpu.memory_space<vmem>>, vector<2x32xbf16>
    tpu.vector_store %arg5[%c2_24, %c0_25], %55 {strides = array<i32>} : memref<128x32xbf16, #tpu.memory_space<vmem>>, vector<2x32xbf16>,
    %57 = vector.extract_strided_slice %54 {offsets = [0, 32], sizes = [2, 32], strides = [1, 1]} : vector<2x64xbf16> to vector<2x32xbf16>
    %c124 = arith.constant 124 : index
    %c0_26 = arith.constant 0 : index
    %58 = vector.load %arg6[%c124, %c0_26] : memref<128x32xbf16, #tpu.memory_space<vmem>>, vector<2x32xbf16>
    tpu.vector_store %arg6[%c124, %c0_26], %57 {strides = array<i32>} : memref<128x32xbf16, #tpu.memory_space<vmem>>, vector<2x32xbf16>,
    %c4 = arith.constant 4 : index
    %c0_27 = arith.constant 0 : index
    %59 = vector.load %arg7[%c4, %c0_27] : memref<128x256xf32, #tpu.memory_space<vmem>>, vector<2x256xf32>
    %cst_28 = arith.constant dense<0.000000e+00> : vector<2x256xf32>
    %60 = tpu.matmul %54, %10, %cst_28 {dimension_numbers = #tpu.dot_dimension_numbers<[1], [0], [0], [1], [0, 0, 1, 1], [], []>} : vector<2x64xbf16>, vector<64x256xbf16>, vector<2x256xf32> -> vector<2x256xf32>
    %61 = arith.addf %59, %60 : vector<2x256xf32>
    %62 = arith.negf %61 : vector<2x256xf32>
    %63 = math.exp %62 : vector<2x256xf32>
    %cst_29 = arith.constant 1.000000e+00 : f32
    %64 = vector.broadcast %cst_29 : f32 to vector<2x256xf32>
    %65 = arith.addf %64, %63 : vector<2x256xf32>
    %66 = arith.divf %64, %65 : vector<2x256xf32>
    %67 = vector.extract_strided_slice %66 {offsets = [0, 0], sizes = [2, 64], strides = [1, 1]} : vector<2x256xf32> to vector<2x64xf32>
    %68 = vector.extract_strided_slice %66 {offsets = [0, 64], sizes = [2, 64], strides = [1, 1]} : vector<2x256xf32> to vector<2x64xf32>
    %69 = vector.extract_strided_slice %66 {offsets = [0, 128], sizes = [2, 64], strides = [1, 1]} : vector<2x256xf32> to vector<2x64xf32>
    %70 = vector.extract_strided_slice %61 {offsets = [0, 192], sizes = [2, 64], strides = [1, 1]} : vector<2x256xf32> to vector<2x64xf32>
    %71 = math.tanh %70 : vector<2x64xf32>
    %72 = arith.mulf %67, %51 : vector<2x64xf32>
    %73 = arith.mulf %68, %71 : vector<2x64xf32>
    %74 = arith.addf %72, %73 : vector<2x64xf32>
    %75 = math.tanh %74 : vector<2x64xf32>
    %76 = arith.mulf %69, %75 : vector<2x64xf32>
    %77 = arith.truncf %76 : vector<2x64xf32> to vector<2x64xbf16>
    %78 = vector.extract_strided_slice %77 {offsets = [0, 0], sizes = [2, 32], strides = [1, 1]} : vector<2x64xbf16> to vector<2x32xbf16>
    %c4_30 = arith.constant 4 : index
    %c0_31 = arith.constant 0 : index
    %79 = vector.load %arg5[%c4_30, %c0_31] : memref<128x32xbf16, #tpu.memory_space<vmem>>, vector<2x32xbf16>
    tpu.vector_store %arg5[%c4_30, %c0_31], %78 {strides = array<i32>} : memref<128x32xbf16, #tpu.memory_space<vmem>>, vector<2x32xbf16>,
    %80 = vector.extract_strided_slice %77 {offsets = [0, 32], sizes = [2, 32], strides = [1, 1]} : vector<2x64xbf16> to vector<2x32xbf16>
    %c122 = arith.constant 122 : index
    %c0_32 = arith.constant 0 : index
    %81 = vector.load %arg6[%c122, %c0_32] : memref<128x32xbf16, #tpu.memory_space<vmem>>, vector<2x32xbf16>
    tpu.vector_store %arg6[%c122, %c0_32], %80 {strides = array<i32>} : memref<128x32xbf16, #tpu.memory_space<vmem>>, vector<2x32xbf16>,
    %c6 = arith.constant 6 : index
    %c0_33 = arith.constant 0 : index
    %82 = vector.load %arg7[%c6, %c0_33] : memref<128x256xf32, #tpu.memory_space<vmem>>, vector<2x256xf32>
    %cst_34 = arith.constant dense<0.000000e+00> : vector<2x256xf32>
    %83 = tpu.matmul %77, %10, %cst_34 {dimension_numbers = #tpu.dot_dimension_numbers<[1], [0], [0], [1], [0, 0, 1, 1], [], []>} : vector<2x64xbf16>, vector<64x256xbf16>, vector<2x256xf32> -> vector<2x256xf32>
    %84 = arith.addf %82, %83 : vector<2x256xf32>
    %85 = arith.negf %84 : vector<2x256xf32>
    %86 = math.exp %85 : vector<2x256xf32>
    %cst_35 = arith.constant 1.000000e+00 : f32
    %87 = vector.broadcast %cst_35 : f32 to vector<2x256xf32>
    %88 = arith.addf %87, %86 : vector<2x256xf32>
    %89 = arith.divf %87, %88 : vector<2x256xf32>
    %90 = vector.extract_strided_slice %89 {offsets = [0, 0], sizes = [2, 64], strides = [1, 1]} : vector<2x256xf32> to vector<2x64xf32>
    %91 = vector.extract_strided_slice %89 {offsets = [0, 64], sizes = [2, 64], strides = [1, 1]} : vector<2x256xf32> to vector<2x64xf32>
    %92 = vector.extract_strided_slice %89 {offsets = [0, 128], sizes = [2, 64], strides = [1, 1]} : vector<2x256xf32> to vector<2x64xf32>
    %93 = vector.extract_strided_slice %84 {offsets = [0, 192], sizes = [2, 64], strides = [1, 1]} : vector<2x256xf32> to vector<2x64xf32>
    %94 = math.tanh %93 : vector<2x64xf32>
    %95 = arith.mulf %90, %74 : vector<2x64xf32>
    %96 = arith.mulf %91, %94 : vector<2x64xf32>
    %97 = arith.addf %95, %96 : vector<2x64xf32>
    %98 = math.tanh %97 : vector<2x64xf32>
    %99 = arith.mulf %92, %98 : vector<2x64xf32>
    %100 = arith.truncf %99 : vector<2x64xf32> to vector<2x64xbf16>
    %101 = vector.extract_strided_slice %100 {offsets = [0, 0], sizes = [2, 32], strides = [1, 1]} : vector<2x64xbf16> to vector<2x32xbf16>
    %c6_36 = arith.constant 6 : index
    %c0_37 = arith.constant 0 : index
    %102 = vector.load %arg5[%c6_36, %c0_37] : memref<128x32xbf16, #tpu.memory_space<vmem>>, vector<2x32xbf16>
    tpu.vector_store %arg5[%c6_36, %c0_37], %101 {strides = array<i32>} : memref<128x32xbf16, #tpu.memory_space<vmem>>, vector<2x32xbf16>,
    %103 = vector.extract_strided_slice %100 {offsets = [0, 32], sizes = [2, 32], strides = [1, 1]} : vector<2x64xbf16> to vector<2x32xbf16>
    %c120 = arith.constant 120 : index
    %c0_38 = arith.constant 0 : index
    %104 = vector.load %arg6[%c120, %c0_38] : memref<128x32xbf16, #tpu.memory_space<vmem>>, vector<2x32xbf16>
    tpu.vector_store %arg6[%c120, %c0_38], %103 {strides = array<i32>} : memref<128x32xbf16, #tpu.memory_space<vmem>>, vector<2x32xbf16>,
    %c8 = arith.constant 8 : index
    %c0_39 = arith.constant 0 : index
    %105 = vector.load %arg7[%c8, %c0_39] : memref<128x256xf32, #tpu.memory_space<vmem>>, vector<2x256xf32>
    %cst_40 = arith.constant dense<0.000000e+00> : vector<2x256xf32>
    %106 = tpu.matmul %100, %10, %cst_40 {dimension_numbers = #tpu.dot_dimension_numbers<[1], [0], [0], [1], [0, 0, 1, 1], [], []>} : vector<2x64xbf16>, vector<64x256xbf16>, vector<2x256xf32> -> vector<2x256xf32>
    %107 = arith.addf %105, %106 : vector<2x256xf32>
    %108 = arith.negf %107 : vector<2x256xf32>
    %109 = math.exp %108 : vector<2x256xf32>
    %cst_41 = arith.constant 1.000000e+00 : f32
    %110 = vector.broadcast %cst_41 : f32 to vector<2x256xf32>
    %111 = arith.addf %110, %109 : vector<2x256xf32>
    %112 = arith.divf %110, %111 : vector<2x256xf32>
    %113 = vector.extract_strided_slice %112 {offsets = [0, 0], sizes = [2, 64], strides = [1, 1]} : vector<2x256xf32> to vector<2x64xf32>
    %114 = vector.extract_strided_slice %112 {offsets = [0, 64], sizes = [2, 64], strides = [1, 1]} : vector<2x256xf32> to vector<2x64xf32>
    %115 = vector.extract_strided_slice %112 {offsets = [0, 128], sizes = [2, 64], strides = [1, 1]} : vector<2x256xf32> to vector<2x64xf32>
    %116 = vector.extract_strided_slice %107 {offsets = [0, 192], sizes = [2, 64], strides = [1, 1]} : vector<2x256xf32> to vector<2x64xf32>
    %117 = math.tanh %116 : vector<2x64xf32>
    %118 = arith.mulf %113, %97 : vector<2x64xf32>
    %119 = arith.mulf %114, %117 : vector<2x64xf32>
    %120 = arith.addf %118, %119 : vector<2x64xf32>
    %121 = math.tanh %120 : vector<2x64xf32>
    %122 = arith.mulf %115, %121 : vector<2x64xf32>
    %123 = arith.truncf %122 : vector<2x64xf32> to vector<2x64xbf16>
    %124 = vector.extract_strided_slice %123 {offsets = [0, 0], sizes = [2, 32], strides = [1, 1]} : vector<2x64xbf16> to vector<2x32xbf16>
    %c8_42 = arith.constant 8 : index
    %c0_43 = arith.constant 0 : index
    %125 = vector.load %arg5[%c8_42, %c0_43] : memref<128x32xbf16, #tpu.memory_space<vmem>>, vector<2x32xbf16>
    tpu.vector_store %arg5[%c8_42, %c0_43], %124 {strides = array<i32>} : memref<128x32xbf16, #tpu.memory_space<vmem>>, vector<2x32xbf16>,
    %126 = vector.extract_strided_slice %123 {offsets = [0, 32], sizes = [2, 32], strides = [1, 1]} : vector<2x64xbf16> to vector<2x32xbf16>
    %c118 = arith.constant 118 : index
    %c0_44 = arith.constant 0 : index
    %127 = vector.load %arg6[%c118, %c0_44] : memref<128x32xbf16, #tpu.memory_space<vmem>>, vector<2x32xbf16>
    tpu.vector_store %arg6[%c118, %c0_44], %126 {strides = array<i32>} : memref<128x32xbf16, #tpu.memory_space<vmem>>, vector<2x32xbf16>,
    %c10 = arith.constant 10 : index
    %c0_45 = arith.constant 0 : index
    %128 = vector.load %arg7[%c10, %c0_45] : memref<128x256xf32, #tpu.memory_space<vmem>>, vector<2x256xf32>
    %cst_46 = arith.constant dense<0.000000e+00> : vector<2x256xf32>
    %129 = tpu.matmul %123, %10, %cst_46 {dimension_numbers = #tpu.dot_dimension_numbers<[1], [0], [0], [1], [0, 0, 1, 1], [], []>} : vector<2x64xbf16>, vector<64x256xbf16>, vector<2x256xf32> -> vector<2x256xf32>
    %130 = arith.addf %128, %129 : vector<2x256xf32>
    %131 = arith.negf %130 : vector<2x256xf32>
    %132 = math.exp %131 : vector<2x256xf32>
    %cst_47 = arith.constant 1.000000e+00 : f32
    %133 = vector.broadcast %cst_47 : f32 to vector<2x256xf32>
    %134 = arith.addf %133, %132 : vector<2x256xf32>
    %135 = arith.divf %133, %134 : vector<2x256xf32>
    %136 = vector.extract_strided_slice %135 {offsets = [0, 0], sizes = [2, 64], strides = [1, 1]} : vector<2x256xf32> to vector<2x64xf32>
    %137 = vector.extract_strided_slice %135 {offsets = [0, 64], sizes = [2, 64], strides = [1, 1]} : vector<2x256xf32> to vector<2x64xf32>
    %138 = vector.extract_strided_slice %135 {offsets = [0, 128], sizes = [2, 64], strides = [1, 1]} : vector<2x256xf32> to vector<2x64xf32>
    %139 = vector.extract_strided_slice %130 {offsets = [0, 192], sizes = [2, 64], strides = [1, 1]} : vector<2x256xf32> to vector<2x64xf32>
    %140 = math.tanh %139 : vector<2x64xf32>
    %141 = arith.mulf %136, %120 : vector<2x64xf32>
    %142 = arith.mulf %137, %140 : vector<2x64xf32>
    %143 = arith.addf %141, %142 : vector<2x64xf32>
    %144 = math.tanh %143 : vector<2x64xf32>
    %145 = arith.mulf %138, %144 : vector<2x64xf32>
    %146 = arith.truncf %145 : vector<2x64xf32> to vector<2x64xbf16>
    %147 = vector.extract_strided_slice %146 {offsets = [0, 0], sizes = [2, 32], strides = [1, 1]} : vector<2x64xbf16> to vector<2x32xbf16>
    %c10_48 = arith.constant 10 : index
    %c0_49 = arith.constant 0 : index
    %148 = vector.load %arg5[%c10_48, %c0_49] : memref<128x32xbf16, #tpu.memory_space<vmem>>, vector<2x32xbf16>
    tpu.vector_store %arg5[%c10_48, %c0_49], %147 {strides = array<i32>} : memref<128x32xbf16, #tpu.memory_space<vmem>>, vector<2x32xbf16>,
    %149 = vector.extract_strided_slice %146 {offsets = [0, 32], sizes = [2, 32], strides = [1, 1]} : vector<2x64xbf16> to vector<2x32xbf16>
    %c116 = arith.constant 116 : index
    %c0_50 = arith.constant 0 : index
    %150 = vector.load %arg6[%c116, %c0_50] : memref<128x32xbf16, #tpu.memory_space<vmem>>, vector<2x32xbf16>
    tpu.vector_store %arg6[%c116, %c0_50], %149 {strides = array<i32>} : memref<128x32xbf16, #tpu.memory_space<vmem>>, vector<2x32xbf16>,
    %c12 = arith.constant 12 : index
    %c0_51 = arith.constant 0 : index
    %151 = vector.load %arg7[%c12, %c0_51] : memref<128x256xf32, #tpu.memory_space<vmem>>, vector<2x256xf32>
    %cst_52 = arith.constant dense<0.000000e+00> : vector<2x256xf32>
    %152 = tpu.matmul %146, %10, %cst_52 {dimension_numbers = #tpu.dot_dimension_numbers<[1], [0], [0], [1], [0, 0, 1, 1], [], []>} : vector<2x64xbf16>, vector<64x256xbf16>, vector<2x256xf32> -> vector<2x256xf32>
    %153 = arith.addf %151, %152 : vector<2x256xf32>
    %154 = arith.negf %153 : vector<2x256xf32>
    %155 = math.exp %154 : vector<2x256xf32>
    %cst_53 = arith.constant 1.000000e+00 : f32
    %156 = vector.broadcast %cst_53 : f32 to vector<2x256xf32>
    %157 = arith.addf %156, %155 : vector<2x256xf32>
    %158 = arith.divf %156, %157 : vector<2x256xf32>
    %159 = vector.extract_strided_slice %158 {offsets = [0, 0], sizes = [2, 64], strides = [1, 1]} : vector<2x256xf32> to vector<2x64xf32>
    %160 = vector.extract_strided_slice %158 {offsets = [0, 64], sizes = [2, 64], strides = [1, 1]} : vector<2x256xf32> to vector<2x64xf32>
    %161 = vector.extract_strided_slice %158 {offsets = [0, 128], sizes = [2, 64], strides = [1, 1]} : vector<2x256xf32> to vector<2x64xf32>
    %162 = vector.extract_strided_slice %153 {offsets = [0, 192], sizes = [2, 64], strides = [1, 1]} : vector<2x256xf32> to vector<2x64xf32>
    %163 = math.tanh %162 : vector<2x64xf32>
    %164 = arith.mulf %159, %143 : vector<2x64xf32>
    %165 = arith.mulf %160, %163 : vector<2x64xf32>
    %166 = arith.addf %164, %165 : vector<2x64xf32>
    %167 = math.tanh %166 : vector<2x64xf32>
    %168 = arith.mulf %161, %167 : vector<2x64xf32>
    %169 = arith.truncf %168 : vector<2x64xf32> to vector<2x64xbf16>
    %170 = vector.extract_strided_slice %169 {offsets = [0, 0], sizes = [2, 32], strides = [1, 1]} : vector<2x64xbf16> to vector<2x32xbf16>
    %c12_54 = arith.constant 12 : index
    %c0_55 = arith.constant 0 : index
    %171 = vector.load %arg5[%c12_54, %c0_55] : memref<128x32xbf16, #tpu.memory_space<vmem>>, vector<2x32xbf16>
    tpu.vector_store %arg5[%c12_54, %c0_55], %170 {strides = array<i32>} : memref<128x32xbf16, #tpu.memory_space<vmem>>, vector<2x32xbf16>,
    %172 = vector.extract_strided_slice %169 {offsets = [0, 32], sizes = [2, 32], strides = [1, 1]} : vector<2x64xbf16> to vector<2x32xbf16>
    %c114 = arith.constant 114 : index
    %c0_56 = arith.constant 0 : index
    %173 = vector.load %arg6[%c114, %c0_56] : memref<128x32xbf16, #tpu.memory_space<vmem>>, vector<2x32xbf16>
    tpu.vector_store %arg6[%c114, %c0_56], %172 {strides = array<i32>} : memref<128x32xbf16, #tpu.memory_space<vmem>>, vector<2x32xbf16>,
    %c14 = arith.constant 14 : index
    %c0_57 = arith.constant 0 : index
    %174 = vector.load %arg7[%c14, %c0_57] : memref<128x256xf32, #tpu.memory_space<vmem>>, vector<2x256xf32>
    %cst_58 = arith.constant dense<0.000000e+00> : vector<2x256xf32>
    %175 = tpu.matmul %169, %10, %cst_58 {dimension_numbers = #tpu.dot_dimension_numbers<[1], [0], [0], [1], [0, 0, 1, 1], [], []>} : vector<2x64xbf16>, vector<64x256xbf16>, vector<2x256xf32> -> vector<2x256xf32>
    %176 = arith.addf %174, %175 : vector<2x256xf32>
    %177 = arith.negf %176 : vector<2x256xf32>
    %178 = math.exp %177 : vector<2x256xf32>
    %cst_59 = arith.constant 1.000000e+00 : f32
    %179 = vector.broadcast %cst_59 : f32 to vector<2x256xf32>
    %180 = arith.addf %179, %178 : vector<2x256xf32>
    %181 = arith.divf %179, %180 : vector<2x256xf32>
    %182 = vector.extract_strided_slice %181 {offsets = [0, 0], sizes = [2, 64], strides = [1, 1]} : vector<2x256xf32> to vector<2x64xf32>
    %183 = vector.extract_strided_slice %181 {offsets = [0, 64], sizes = [2, 64], strides = [1, 1]} : vector<2x256xf32> to vector<2x64xf32>
    %184 = vector.extract_strided_slice %181 {offsets = [0, 128], sizes = [2, 64], strides = [1, 1]} : vector<2x256xf32> to vector<2x64xf32>
    %185 = vector.extract_strided_slice %176 {offsets = [0, 192], sizes = [2, 64], strides = [1, 1]} : vector<2x256xf32> to vector<2x64xf32>
    %186 = math.tanh %185 : vector<2x64xf32>
    %187 = arith.mulf %182, %166 : vector<2x64xf32>
    %188 = arith.mulf %183, %186 : vector<2x64xf32>
    %189 = arith.addf %187, %188 : vector<2x64xf32>
    %190 = math.tanh %189 : vector<2x64xf32>
    %191 = arith.mulf %184, %190 : vector<2x64xf32>
    %192 = arith.truncf %191 : vector<2x64xf32> to vector<2x64xbf16>
    %193 = vector.extract_strided_slice %192 {offsets = [0, 0], sizes = [2, 32], strides = [1, 1]} : vector<2x64xbf16> to vector<2x32xbf16>
    %c14_60 = arith.constant 14 : index
    %c0_61 = arith.constant 0 : index
    %194 = vector.load %arg5[%c14_60, %c0_61] : memref<128x32xbf16, #tpu.memory_space<vmem>>, vector<2x32xbf16>
    tpu.vector_store %arg5[%c14_60, %c0_61], %193 {strides = array<i32>} : memref<128x32xbf16, #tpu.memory_space<vmem>>, vector<2x32xbf16>,
    %195 = vector.extract_strided_slice %192 {offsets = [0, 32], sizes = [2, 32], strides = [1, 1]} : vector<2x64xbf16> to vector<2x32xbf16>
    %c112 = arith.constant 112 : index
    %c0_62 = arith.constant 0 : index
    %196 = vector.load %arg6[%c112, %c0_62] : memref<128x32xbf16, #tpu.memory_space<vmem>>, vector<2x32xbf16>
    tpu.vector_store %arg6[%c112, %c0_62], %195 {strides = array<i32>} : memref<128x32xbf16, #tpu.memory_space<vmem>>, vector<2x32xbf16>,
    %c16 = arith.constant 16 : index
    %c0_63 = arith.constant 0 : index
    %197 = vector.load %arg7[%c16, %c0_63] : memref<128x256xf32, #tpu.memory_space<vmem>>, vector<2x256xf32>
    %cst_64 = arith.constant dense<0.000000e+00> : vector<2x256xf32>
    %198 = tpu.matmul %192, %10, %cst_64 {dimension_numbers = #tpu.dot_dimension_numbers<[1], [0], [0], [1], [0, 0, 1, 1], [], []>} : vector<2x64xbf16>, vector<64x256xbf16>, vector<2x256xf32> -> vector<2x256xf32>
    %199 = arith.addf %197, %198 : vector<2x256xf32>
    %200 = arith.negf %199 : vector<2x256xf32>
    %201 = math.exp %200 : vector<2x256xf32>
    %cst_65 = arith.constant 1.000000e+00 : f32
    %202 = vector.broadcast %cst_65 : f32 to vector<2x256xf32>
    %203 = arith.addf %202, %201 : vector<2x256xf32>
    %204 = arith.divf %202, %203 : vector<2x256xf32>
    %205 = vector.extract_strided_slice %204 {offsets = [0, 0], sizes = [2, 64], strides = [1, 1]} : vector<2x256xf32> to vector<2x64xf32>
    %206 = vector.extract_strided_slice %204 {offsets = [0, 64], sizes = [2, 64], strides = [1, 1]} : vector<2x256xf32> to vector<2x64xf32>
    %207 = vector.extract_strided_slice %204 {offsets = [0, 128], sizes = [2, 64], strides = [1, 1]} : vector<2x256xf32> to vector<2x64xf32>
    %208 = vector.extract_strided_slice %199 {offsets = [0, 192], sizes = [2, 64], strides = [1, 1]} : vector<2x256xf32> to vector<2x64xf32>
    %209 = math.tanh %208 : vector<2x64xf32>
    %210 = arith.mulf %205, %189 : vector<2x64xf32>
    %211 = arith.mulf %206, %209 : vector<2x64xf32>
    %212 = arith.addf %210, %211 : vector<2x64xf32>
    %213 = math.tanh %212 : vector<2x64xf32>
    %214 = arith.mulf %207, %213 : vector<2x64xf32>
    %215 = arith.truncf %214 : vector<2x64xf32> to vector<2x64xbf16>
    %216 = vector.extract_strided_slice %215 {offsets = [0, 0], sizes = [2, 32], strides = [1, 1]} : vector<2x64xbf16> to vector<2x32xbf16>
    %c16_66 = arith.constant 16 : index
    %c0_67 = arith.constant 0 : index
    %217 = vector.load %arg5[%c16_66, %c0_67] : memref<128x32xbf16, #tpu.memory_space<vmem>>, vector<2x32xbf16>
    tpu.vector_store %arg5[%c16_66, %c0_67], %216 {strides = array<i32>} : memref<128x32xbf16, #tpu.memory_space<vmem>>, vector<2x32xbf16>,
    %218 = vector.extract_strided_slice %215 {offsets = [0, 32], sizes = [2, 32], strides = [1, 1]} : vector<2x64xbf16> to vector<2x32xbf16>
    %c110 = arith.constant 110 : index
    %c0_68 = arith.constant 0 : index
    %219 = vector.load %arg6[%c110, %c0_68] : memref<128x32xbf16, #tpu.memory_space<vmem>>, vector<2x32xbf16>
    tpu.vector_store %arg6[%c110, %c0_68], %218 {strides = array<i32>} : memref<128x32xbf16, #tpu.memory_space<vmem>>, vector<2x32xbf16>,
    %c18 = arith.constant 18 : index
    %c0_69 = arith.constant 0 : index
    %220 = vector.load %arg7[%c18, %c0_69] : memref<128x256xf32, #tpu.memory_space<vmem>>, vector<2x256xf32>
    %cst_70 = arith.constant dense<0.000000e+00> : vector<2x256xf32>
    %221 = tpu.matmul %215, %10, %cst_70 {dimension_numbers = #tpu.dot_dimension_numbers<[1], [0], [0], [1], [0, 0, 1, 1], [], []>} : vector<2x64xbf16>, vector<64x256xbf16>, vector<2x256xf32> -> vector<2x256xf32>
    %222 = arith.addf %220, %221 : vector<2x256xf32>
    %223 = arith.negf %222 : vector<2x256xf32>
    %224 = math.exp %223 : vector<2x256xf32>
    %cst_71 = arith.constant 1.000000e+00 : f32
    %225 = vector.broadcast %cst_71 : f32 to vector<2x256xf32>
    %226 = arith.addf %225, %224 : vector<2x256xf32>
    %227 = arith.divf %225, %226 : vector<2x256xf32>
    %228 = vector.extract_strided_slice %227 {offsets = [0, 0], sizes = [2, 64], strides = [1, 1]} : vector<2x256xf32> to vector<2x64xf32>
    %229 = vector.extract_strided_slice %227 {offsets = [0, 64], sizes = [2, 64], strides = [1, 1]} : vector<2x256xf32> to vector<2x64xf32>
    %230 = vector.extract_strided_slice %227 {offsets = [0, 128], sizes = [2, 64], strides = [1, 1]} : vector<2x256xf32> to vector<2x64xf32>
    %231 = vector.extract_strided_slice %222 {offsets = [0, 192], sizes = [2, 64], strides = [1, 1]} : vector<2x256xf32> to vector<2x64xf32>
    %232 = math.tanh %231 : vector<2x64xf32>
    %233 = arith.mulf %228, %212 : vector<2x64xf32>
    %234 = arith.mulf %229, %232 : vector<2x64xf32>
    %235 = arith.addf %233, %234 : vector<2x64xf32>
    %236 = math.tanh %235 : vector<2x64xf32>
    %237 = arith.mulf %230, %236 : vector<2x64xf32>
    %238 = arith.truncf %237 : vector<2x64xf32> to vector<2x64xbf16>
    %239 = vector.extract_strided_slice %238 {offsets = [0, 0], sizes = [2, 32], strides = [1, 1]} : vector<2x64xbf16> to vector<2x32xbf16>
    %c18_72 = arith.constant 18 : index
    %c0_73 = arith.constant 0 : index
    %240 = vector.load %arg5[%c18_72, %c0_73] : memref<128x32xbf16, #tpu.memory_space<vmem>>, vector<2x32xbf16>
    tpu.vector_store %arg5[%c18_72, %c0_73], %239 {strides = array<i32>} : memref<128x32xbf16, #tpu.memory_space<vmem>>, vector<2x32xbf16>,
    %241 = vector.extract_strided_slice %238 {offsets = [0, 32], sizes = [2, 32], strides = [1, 1]} : vector<2x64xbf16> to vector<2x32xbf16>
    %c108 = arith.constant 108 : index
    %c0_74 = arith.constant 0 : index
    %242 = vector.load %arg6[%c108, %c0_74] : memref<128x32xbf16, #tpu.memory_space<vmem>>, vector<2x32xbf16>
    tpu.vector_store %arg6[%c108, %c0_74], %241 {strides = array<i32>} : memref<128x32xbf16, #tpu.memory_space<vmem>>, vector<2x32xbf16>,
    %c20 = arith.constant 20 : index
    %c0_75 = arith.constant 0 : index
    %243 = vector.load %arg7[%c20, %c0_75] : memref<128x256xf32, #tpu.memory_space<vmem>>, vector<2x256xf32>
    %cst_76 = arith.constant dense<0.000000e+00> : vector<2x256xf32>
    %244 = tpu.matmul %238, %10, %cst_76 {dimension_numbers = #tpu.dot_dimension_numbers<[1], [0], [0], [1], [0, 0, 1, 1], [], []>} : vector<2x64xbf16>, vector<64x256xbf16>, vector<2x256xf32> -> vector<2x256xf32>
    %245 = arith.addf %243, %244 : vector<2x256xf32>
    %246 = arith.negf %245 : vector<2x256xf32>
    %247 = math.exp %246 : vector<2x256xf32>
    %cst_77 = arith.constant 1.000000e+00 : f32
    %248 = vector.broadcast %cst_77 : f32 to vector<2x256xf32>
    %249 = arith.addf %248, %247 : vector<2x256xf32>
    %250 = arith.divf %248, %249 : vector<2x256xf32>
    %251 = vector.extract_strided_slice %250 {offsets = [0, 0], sizes = [2, 64], strides = [1, 1]} : vector<2x256xf32> to vector<2x64xf32>
    %252 = vector.extract_strided_slice %250 {offsets = [0, 64], sizes = [2, 64], strides = [1, 1]} : vector<2x256xf32> to vector<2x64xf32>
    %253 = vector.extract_strided_slice %250 {offsets = [0, 128], sizes = [2, 64], strides = [1, 1]} : vector<2x256xf32> to vector<2x64xf32>
    %254 = vector.extract_strided_slice %245 {offsets = [0, 192], sizes = [2, 64], strides = [1, 1]} : vector<2x256xf32> to vector<2x64xf32>
    %255 = math.tanh %254 : vector<2x64xf32>
    %256 = arith.mulf %251, %235 : vector<2x64xf32>
    %257 = arith.mulf %252, %255 : vector<2x64xf32>
    %258 = arith.addf %256, %257 : vector<2x64xf32>
    %259 = math.tanh %258 : vector<2x64xf32>
    %260 = arith.mulf %253, %259 : vector<2x64xf32>
    %261 = arith.truncf %260 : vector<2x64xf32> to vector<2x64xbf16>
    %262 = vector.extract_strided_slice %261 {offsets = [0, 0], sizes = [2, 32], strides = [1, 1]} : vector<2x64xbf16> to vector<2x32xbf16>
    %c20_78 = arith.constant 20 : index
    %c0_79 = arith.constant 0 : index
    %263 = vector.load %arg5[%c20_78, %c0_79] : memref<128x32xbf16, #tpu.memory_space<vmem>>, vector<2x32xbf16>
    tpu.vector_store %arg5[%c20_78, %c0_79], %262 {strides = array<i32>} : memref<128x32xbf16, #tpu.memory_space<vmem>>, vector<2x32xbf16>,
    %264 = vector.extract_strided_slice %261 {offsets = [0, 32], sizes = [2, 32], strides = [1, 1]} : vector<2x64xbf16> to vector<2x32xbf16>
    %c106 = arith.constant 106 : index
    %c0_80 = arith.constant 0 : index
    %265 = vector.load %arg6[%c106, %c0_80] : memref<128x32xbf16, #tpu.memory_space<vmem>>, vector<2x32xbf16>
    tpu.vector_store %arg6[%c106, %c0_80], %264 {strides = array<i32>} : memref<128x32xbf16, #tpu.memory_space<vmem>>, vector<2x32xbf16>,
    %c22 = arith.constant 22 : index
    %c0_81 = arith.constant 0 : index
    %266 = vector.load %arg7[%c22, %c0_81] : memref<128x256xf32, #tpu.memory_space<vmem>>, vector<2x256xf32>
    %cst_82 = arith.constant dense<0.000000e+00> : vector<2x256xf32>
    %267 = tpu.matmul %261, %10, %cst_82 {dimension_numbers = #tpu.dot_dimension_numbers<[1], [0], [0], [1], [0, 0, 1, 1], [], []>} : vector<2x64xbf16>, vector<64x256xbf16>, vector<2x256xf32> -> vector<2x256xf32>
    %268 = arith.addf %266, %267 : vector<2x256xf32>
    %269 = arith.negf %268 : vector<2x256xf32>
    %270 = math.exp %269 : vector<2x256xf32>
    %cst_83 = arith.constant 1.000000e+00 : f32
    %271 = vector.broadcast %cst_83 : f32 to vector<2x256xf32>
    %272 = arith.addf %271, %270 : vector<2x256xf32>
    %273 = arith.divf %271, %272 : vector<2x256xf32>
    %274 = vector.extract_strided_slice %273 {offsets = [0, 0], sizes = [2, 64], strides = [1, 1]} : vector<2x256xf32> to vector<2x64xf32>
    %275 = vector.extract_strided_slice %273 {offsets = [0, 64], sizes = [2, 64], strides = [1, 1]} : vector<2x256xf32> to vector<2x64xf32>
    %276 = vector.extract_strided_slice %273 {offsets = [0, 128], sizes = [2, 64], strides = [1, 1]} : vector<2x256xf32> to vector<2x64xf32>
    %277 = vector.extract_strided_slice %268 {offsets = [0, 192], sizes = [2, 64], strides = [1, 1]} : vector<2x256xf32> to vector<2x64xf32>
    %278 = math.tanh %277 : vector<2x64xf32>
    %279 = arith.mulf %274, %258 : vector<2x64xf32>
    %280 = arith.mulf %275, %278 : vector<2x64xf32>
    %281 = arith.addf %279, %280 : vector<2x64xf32>
    %282 = math.tanh %281 : vector<2x64xf32>
    %283 = arith.mulf %276, %282 : vector<2x64xf32>
    %284 = arith.truncf %283 : vector<2x64xf32> to vector<2x64xbf16>
    %285 = vector.extract_strided_slice %284 {offsets = [0, 0], sizes = [2, 32], strides = [1, 1]} : vector<2x64xbf16> to vector<2x32xbf16>
    %c22_84 = arith.constant 22 : index
    %c0_85 = arith.constant 0 : index
    %286 = vector.load %arg5[%c22_84, %c0_85] : memref<128x32xbf16, #tpu.memory_space<vmem>>, vector<2x32xbf16>
    tpu.vector_store %arg5[%c22_84, %c0_85], %285 {strides = array<i32>} : memref<128x32xbf16, #tpu.memory_space<vmem>>, vector<2x32xbf16>,
    %287 = vector.extract_strided_slice %284 {offsets = [0, 32], sizes = [2, 32], strides = [1, 1]} : vector<2x64xbf16> to vector<2x32xbf16>
    %c104 = arith.constant 104 : index
    %c0_86 = arith.constant 0 : index
    %288 = vector.load %arg6[%c104, %c0_86] : memref<128x32xbf16, #tpu.memory_space<vmem>>, vector<2x32xbf16>
    tpu.vector_store %arg6[%c104, %c0_86], %287 {strides = array<i32>} : memref<128x32xbf16, #tpu.memory_space<vmem>>, vector<2x32xbf16>,
    %c24 = arith.constant 24 : index
    %c0_87 = arith.constant 0 : index
    %289 = vector.load %arg7[%c24, %c0_87] : memref<128x256xf32, #tpu.memory_space<vmem>>, vector<2x256xf32>
    %cst_88 = arith.constant dense<0.000000e+00> : vector<2x256xf32>
    %290 = tpu.matmul %284, %10, %cst_88 {dimension_numbers = #tpu.dot_dimension_numbers<[1], [0], [0], [1], [0, 0, 1, 1], [], []>} : vector<2x64xbf16>, vector<64x256xbf16>, vector<2x256xf32> -> vector<2x256xf32>
    %291 = arith.addf %289, %290 : vector<2x256xf32>
    %292 = arith.negf %291 : vector<2x256xf32>
    %293 = math.exp %292 : vector<2x256xf32>
    %cst_89 = arith.constant 1.000000e+00 : f32
    %294 = vector.broadcast %cst_89 : f32 to vector<2x256xf32>
    %295 = arith.addf %294, %293 : vector<2x256xf32>
    %296 = arith.divf %294, %295 : vector<2x256xf32>
    %297 = vector.extract_strided_slice %296 {offsets = [0, 0], sizes = [2, 64], strides = [1, 1]} : vector<2x256xf32> to vector<2x64xf32>
    %298 = vector.extract_strided_slice %296 {offsets = [0, 64], sizes = [2, 64], strides = [1, 1]} : vector<2x256xf32> to vector<2x64xf32>
    %299 = vector.extract_strided_slice %296 {offsets = [0, 128], sizes = [2, 64], strides = [1, 1]} : vector<2x256xf32> to vector<2x64xf32>
    %300 = vector.extract_strided_slice %291 {offsets = [0, 192], sizes = [2, 64], strides = [1, 1]} : vector<2x256xf32> to vector<2x64xf32>
    %301 = math.tanh %300 : vector<2x64xf32>
    %302 = arith.mulf %297, %281 : vector<2x64xf32>
    %303 = arith.mulf %298, %301 : vector<2x64xf32>
    %304 = arith.addf %302, %303 : vector<2x64xf32>
    %305 = math.tanh %304 : vector<2x64xf32>
    %306 = arith.mulf %299, %305 : vector<2x64xf32>
    %307 = arith.truncf %306 : vector<2x64xf32> to vector<2x64xbf16>
    %308 = vector.extract_strided_slice %307 {offsets = [0, 0], sizes = [2, 32], strides = [1, 1]} : vector<2x64xbf16> to vector<2x32xbf16>
    %c24_90 = arith.constant 24 : index
    %c0_91 = arith.constant 0 : index
    %309 = vector.load %arg5[%c24_90, %c0_91] : memref<128x32xbf16, #tpu.memory_space<vmem>>, vector<2x32xbf16>
    tpu.vector_store %arg5[%c24_90, %c0_91], %308 {strides = array<i32>} : memref<128x32xbf16, #tpu.memory_space<vmem>>, vector<2x32xbf16>,
    %310 = vector.extract_strided_slice %307 {offsets = [0, 32], sizes = [2, 32], strides = [1, 1]} : vector<2x64xbf16> to vector<2x32xbf16>
    %c102 = arith.constant 102 : index
    %c0_92 = arith.constant 0 : index
    %311 = vector.load %arg6[%c102, %c0_92] : memref<128x32xbf16, #tpu.memory_space<vmem>>, vector<2x32xbf16>
    tpu.vector_store %arg6[%c102, %c0_92], %310 {strides = array<i32>} : memref<128x32xbf16, #tpu.memory_space<vmem>>, vector<2x32xbf16>,
    %c26 = arith.constant 26 : index
    %c0_93 = arith.constant 0 : index
    %312 = vector.load %arg7[%c26, %c0_93] : memref<128x256xf32, #tpu.memory_space<vmem>>, vector<2x256xf32>
    %cst_94 = arith.constant dense<0.000000e+00> : vector<2x256xf32>
    %313 = tpu.matmul %307, %10, %cst_94 {dimension_numbers = #tpu.dot_dimension_numbers<[1], [0], [0], [1], [0, 0, 1, 1], [], []>} : vector<2x64xbf16>, vector<64x256xbf16>, vector<2x256xf32> -> vector<2x256xf32>
    %314 = arith.addf %312, %313 : vector<2x256xf32>
    %315 = arith.negf %314 : vector<2x256xf32>
    %316 = math.exp %315 : vector<2x256xf32>
    %cst_95 = arith.constant 1.000000e+00 : f32
    %317 = vector.broadcast %cst_95 : f32 to vector<2x256xf32>
    %318 = arith.addf %317, %316 : vector<2x256xf32>
    %319 = arith.divf %317, %318 : vector<2x256xf32>
    %320 = vector.extract_strided_slice %319 {offsets = [0, 0], sizes = [2, 64], strides = [1, 1]} : vector<2x256xf32> to vector<2x64xf32>
    %321 = vector.extract_strided_slice %319 {offsets = [0, 64], sizes = [2, 64], strides = [1, 1]} : vector<2x256xf32> to vector<2x64xf32>
    %322 = vector.extract_strided_slice %319 {offsets = [0, 128], sizes = [2, 64], strides = [1, 1]} : vector<2x256xf32> to vector<2x64xf32>
    %323 = vector.extract_strided_slice %314 {offsets = [0, 192], sizes = [2, 64], strides = [1, 1]} : vector<2x256xf32> to vector<2x64xf32>
    %324 = math.tanh %323 : vector<2x64xf32>
    %325 = arith.mulf %320, %304 : vector<2x64xf32>
    %326 = arith.mulf %321, %324 : vector<2x64xf32>
    %327 = arith.addf %325, %326 : vector<2x64xf32>
    %328 = math.tanh %327 : vector<2x64xf32>
    %329 = arith.mulf %322, %328 : vector<2x64xf32>
    %330 = arith.truncf %329 : vector<2x64xf32> to vector<2x64xbf16>
    %331 = vector.extract_strided_slice %330 {offsets = [0, 0], sizes = [2, 32], strides = [1, 1]} : vector<2x64xbf16> to vector<2x32xbf16>
    %c26_96 = arith.constant 26 : index
    %c0_97 = arith.constant 0 : index
    %332 = vector.load %arg5[%c26_96, %c0_97] : memref<128x32xbf16, #tpu.memory_space<vmem>>, vector<2x32xbf16>
    tpu.vector_store %arg5[%c26_96, %c0_97], %331 {strides = array<i32>} : memref<128x32xbf16, #tpu.memory_space<vmem>>, vector<2x32xbf16>,
    %333 = vector.extract_strided_slice %330 {offsets = [0, 32], sizes = [2, 32], strides = [1, 1]} : vector<2x64xbf16> to vector<2x32xbf16>
    %c100 = arith.constant 100 : index
    %c0_98 = arith.constant 0 : index
    %334 = vector.load %arg6[%c100, %c0_98] : memref<128x32xbf16, #tpu.memory_space<vmem>>, vector<2x32xbf16>
    tpu.vector_store %arg6[%c100, %c0_98], %333 {strides = array<i32>} : memref<128x32xbf16, #tpu.memory_space<vmem>>, vector<2x32xbf16>,
    %c28 = arith.constant 28 : index
    %c0_99 = arith.constant 0 : index
    %335 = vector.load %arg7[%c28, %c0_99] : memref<128x256xf32, #tpu.memory_space<vmem>>, vector<2x256xf32>
    %cst_100 = arith.constant dense<0.000000e+00> : vector<2x256xf32>
    %336 = tpu.matmul %330, %10, %cst_100 {dimension_numbers = #tpu.dot_dimension_numbers<[1], [0], [0], [1], [0, 0, 1, 1], [], []>} : vector<2x64xbf16>, vector<64x256xbf16>, vector<2x256xf32> -> vector<2x256xf32>
    %337 = arith.addf %335, %336 : vector<2x256xf32>
    %338 = arith.negf %337 : vector<2x256xf32>
    %339 = math.exp %338 : vector<2x256xf32>
    %cst_101 = arith.constant 1.000000e+00 : f32
    %340 = vector.broadcast %cst_101 : f32 to vector<2x256xf32>
    %341 = arith.addf %340, %339 : vector<2x256xf32>
    %342 = arith.divf %340, %341 : vector<2x256xf32>
    %343 = vector.extract_strided_slice %342 {offsets = [0, 0], sizes = [2, 64], strides = [1, 1]} : vector<2x256xf32> to vector<2x64xf32>
    %344 = vector.extract_strided_slice %342 {offsets = [0, 64], sizes = [2, 64], strides = [1, 1]} : vector<2x256xf32> to vector<2x64xf32>
    %345 = vector.extract_strided_slice %342 {offsets = [0, 128], sizes = [2, 64], strides = [1, 1]} : vector<2x256xf32> to vector<2x64xf32>
    %346 = vector.extract_strided_slice %337 {offsets = [0, 192], sizes = [2, 64], strides = [1, 1]} : vector<2x256xf32> to vector<2x64xf32>
    %347 = math.tanh %346 : vector<2x64xf32>
    %348 = arith.mulf %343, %327 : vector<2x64xf32>
    %349 = arith.mulf %344, %347 : vector<2x64xf32>
    %350 = arith.addf %348, %349 : vector<2x64xf32>
    %351 = math.tanh %350 : vector<2x64xf32>
    %352 = arith.mulf %345, %351 : vector<2x64xf32>
    %353 = arith.truncf %352 : vector<2x64xf32> to vector<2x64xbf16>
    %354 = vector.extract_strided_slice %353 {offsets = [0, 0], sizes = [2, 32], strides = [1, 1]} : vector<2x64xbf16> to vector<2x32xbf16>
    %c28_102 = arith.constant 28 : index
    %c0_103 = arith.constant 0 : index
    %355 = vector.load %arg5[%c28_102, %c0_103] : memref<128x32xbf16, #tpu.memory_space<vmem>>, vector<2x32xbf16>
    tpu.vector_store %arg5[%c28_102, %c0_103], %354 {strides = array<i32>} : memref<128x32xbf16, #tpu.memory_space<vmem>>, vector<2x32xbf16>,
    %356 = vector.extract_strided_slice %353 {offsets = [0, 32], sizes = [2, 32], strides = [1, 1]} : vector<2x64xbf16> to vector<2x32xbf16>
    %c98 = arith.constant 98 : index
    %c0_104 = arith.constant 0 : index
    %357 = vector.load %arg6[%c98, %c0_104] : memref<128x32xbf16, #tpu.memory_space<vmem>>, vector<2x32xbf16>
    tpu.vector_store %arg6[%c98, %c0_104], %356 {strides = array<i32>} : memref<128x32xbf16, #tpu.memory_space<vmem>>, vector<2x32xbf16>,
    %c30 = arith.constant 30 : index
    %c0_105 = arith.constant 0 : index
    %358 = vector.load %arg7[%c30, %c0_105] : memref<128x256xf32, #tpu.memory_space<vmem>>, vector<2x256xf32>
    %cst_106 = arith.constant dense<0.000000e+00> : vector<2x256xf32>
    %359 = tpu.matmul %353, %10, %cst_106 {dimension_numbers = #tpu.dot_dimension_numbers<[1], [0], [0], [1], [0, 0, 1, 1], [], []>} : vector<2x64xbf16>, vector<64x256xbf16>, vector<2x256xf32> -> vector<2x256xf32>
    %360 = arith.addf %358, %359 : vector<2x256xf32>
    %361 = arith.negf %360 : vector<2x256xf32>
    %362 = math.exp %361 : vector<2x256xf32>
    %cst_107 = arith.constant 1.000000e+00 : f32
    %363 = vector.broadcast %cst_107 : f32 to vector<2x256xf32>
    %364 = arith.addf %363, %362 : vector<2x256xf32>
    %365 = arith.divf %363, %364 : vector<2x256xf32>
    %366 = vector.extract_strided_slice %365 {offsets = [0, 0], sizes = [2, 64], strides = [1, 1]} : vector<2x256xf32> to vector<2x64xf32>
    %367 = vector.extract_strided_slice %365 {offsets = [0, 64], sizes = [2, 64], strides = [1, 1]} : vector<2x256xf32> to vector<2x64xf32>
    %368 = vector.extract_strided_slice %365 {offsets = [0, 128], sizes = [2, 64], strides = [1, 1]} : vector<2x256xf32> to vector<2x64xf32>
    %369 = vector.extract_strided_slice %360 {offsets = [0, 192], sizes = [2, 64], strides = [1, 1]} : vector<2x256xf32> to vector<2x64xf32>
    %370 = math.tanh %369 : vector<2x64xf32>
    %371 = arith.mulf %366, %350 : vector<2x64xf32>
    %372 = arith.mulf %367, %370 : vector<2x64xf32>
    %373 = arith.addf %371, %372 : vector<2x64xf32>
    %374 = math.tanh %373 : vector<2x64xf32>
    %375 = arith.mulf %368, %374 : vector<2x64xf32>
    %376 = arith.truncf %375 : vector<2x64xf32> to vector<2x64xbf16>
    %377 = vector.extract_strided_slice %376 {offsets = [0, 0], sizes = [2, 32], strides = [1, 1]} : vector<2x64xbf16> to vector<2x32xbf16>
    %c30_108 = arith.constant 30 : index
    %c0_109 = arith.constant 0 : index
    %378 = vector.load %arg5[%c30_108, %c0_109] : memref<128x32xbf16, #tpu.memory_space<vmem>>, vector<2x32xbf16>
    tpu.vector_store %arg5[%c30_108, %c0_109], %377 {strides = array<i32>} : memref<128x32xbf16, #tpu.memory_space<vmem>>, vector<2x32xbf16>,
    %379 = vector.extract_strided_slice %376 {offsets = [0, 32], sizes = [2, 32], strides = [1, 1]} : vector<2x64xbf16> to vector<2x32xbf16>
    %c96 = arith.constant 96 : index
    %c0_110 = arith.constant 0 : index
    %380 = vector.load %arg6[%c96, %c0_110] : memref<128x32xbf16, #tpu.memory_space<vmem>>, vector<2x32xbf16>
    tpu.vector_store %arg6[%c96, %c0_110], %379 {strides = array<i32>} : memref<128x32xbf16, #tpu.memory_space<vmem>>, vector<2x32xbf16>,
    %c32 = arith.constant 32 : index
    %c0_111 = arith.constant 0 : index
    %381 = vector.load %arg7[%c32, %c0_111] : memref<128x256xf32, #tpu.memory_space<vmem>>, vector<2x256xf32>
    %cst_112 = arith.constant dense<0.000000e+00> : vector<2x256xf32>
    %382 = tpu.matmul %376, %10, %cst_112 {dimension_numbers = #tpu.dot_dimension_numbers<[1], [0], [0], [1], [0, 0, 1, 1], [], []>} : vector<2x64xbf16>, vector<64x256xbf16>, vector<2x256xf32> -> vector<2x256xf32>
    %383 = arith.addf %381, %382 : vector<2x256xf32>
    %384 = arith.negf %383 : vector<2x256xf32>
    %385 = math.exp %384 : vector<2x256xf32>
    %cst_113 = arith.constant 1.000000e+00 : f32
    %386 = vector.broadcast %cst_113 : f32 to vector<2x256xf32>
    %387 = arith.addf %386, %385 : vector<2x256xf32>
    %388 = arith.divf %386, %387 : vector<2x256xf32>
    %389 = vector.extract_strided_slice %388 {offsets = [0, 0], sizes = [2, 64], strides = [1, 1]} : vector<2x256xf32> to vector<2x64xf32>
    %390 = vector.extract_strided_slice %388 {offsets = [0, 64], sizes = [2, 64], strides = [1, 1]} : vector<2x256xf32> to vector<2x64xf32>
    %391 = vector.extract_strided_slice %388 {offsets = [0, 128], sizes = [2, 64], strides = [1, 1]} : vector<2x256xf32> to vector<2x64xf32>
    %392 = vector.extract_strided_slice %383 {offsets = [0, 192], sizes = [2, 64], strides = [1, 1]} : vector<2x256xf32> to vector<2x64xf32>
    %393 = math.tanh %392 : vector<2x64xf32>
    %394 = arith.mulf %389, %373 : vector<2x64xf32>
    %395 = arith.mulf %390, %393 : vector<2x64xf32>
    %396 = arith.addf %394, %395 : vector<2x64xf32>
    %397 = math.tanh %396 : vector<2x64xf32>
    %398 = arith.mulf %391, %397 : vector<2x64xf32>
    %399 = arith.truncf %398 : vector<2x64xf32> to vector<2x64xbf16>
    %400 = vector.extract_strided_slice %399 {offsets = [0, 0], sizes = [2, 32], strides = [1, 1]} : vector<2x64xbf16> to vector<2x32xbf16>
    %c32_114 = arith.constant 32 : index
    %c0_115 = arith.constant 0 : index
    %401 = vector.load %arg5[%c32_114, %c0_115] : memref<128x32xbf16, #tpu.memory_space<vmem>>, vector<2x32xbf16>
    tpu.vector_store %arg5[%c32_114, %c0_115], %400 {strides = array<i32>} : memref<128x32xbf16, #tpu.memory_space<vmem>>, vector<2x32xbf16>,
    %402 = vector.extract_strided_slice %399 {offsets = [0, 32], sizes = [2, 32], strides = [1, 1]} : vector<2x64xbf16> to vector<2x32xbf16>
    %c94 = arith.constant 94 : index
    %c0_116 = arith.constant 0 : index
    %403 = vector.load %arg6[%c94, %c0_116] : memref<128x32xbf16, #tpu.memory_space<vmem>>, vector<2x32xbf16>
    tpu.vector_store %arg6[%c94, %c0_116], %402 {strides = array<i32>} : memref<128x32xbf16, #tpu.memory_space<vmem>>, vector<2x32xbf16>,
    %c34 = arith.constant 34 : index
    %c0_117 = arith.constant 0 : index
    %404 = vector.load %arg7[%c34, %c0_117] : memref<128x256xf32, #tpu.memory_space<vmem>>, vector<2x256xf32>
    %cst_118 = arith.constant dense<0.000000e+00> : vector<2x256xf32>
    %405 = tpu.matmul %399, %10, %cst_118 {dimension_numbers = #tpu.dot_dimension_numbers<[1], [0], [0], [1], [0, 0, 1, 1], [], []>} : vector<2x64xbf16>, vector<64x256xbf16>, vector<2x256xf32> -> vector<2x256xf32>
    %406 = arith.addf %404, %405 : vector<2x256xf32>
    %407 = arith.negf %406 : vector<2x256xf32>
    %408 = math.exp %407 : vector<2x256xf32>
    %cst_119 = arith.constant 1.000000e+00 : f32
    %409 = vector.broadcast %cst_119 : f32 to vector<2x256xf32>
    %410 = arith.addf %409, %408 : vector<2x256xf32>
    %411 = arith.divf %409, %410 : vector<2x256xf32>
    %412 = vector.extract_strided_slice %411 {offsets = [0, 0], sizes = [2, 64], strides = [1, 1]} : vector<2x256xf32> to vector<2x64xf32>
    %413 = vector.extract_strided_slice %411 {offsets = [0, 64], sizes = [2, 64], strides = [1, 1]} : vector<2x256xf32> to vector<2x64xf32>
    %414 = vector.extract_strided_slice %411 {offsets = [0, 128], sizes = [2, 64], strides = [1, 1]} : vector<2x256xf32> to vector<2x64xf32>
    %415 = vector.extract_strided_slice %406 {offsets = [0, 192], sizes = [2, 64], strides = [1, 1]} : vector<2x256xf32> to vector<2x64xf32>
    %416 = math.tanh %415 : vector<2x64xf32>
    %417 = arith.mulf %412, %396 : vector<2x64xf32>
    %418 = arith.mulf %413, %416 : vector<2x64xf32>
    %419 = arith.addf %417, %418 : vector<2x64xf32>
    %420 = math.tanh %419 : vector<2x64xf32>
    %421 = arith.mulf %414, %420 : vector<2x64xf32>
    %422 = arith.truncf %421 : vector<2x64xf32> to vector<2x64xbf16>
    %423 = vector.extract_strided_slice %422 {offsets = [0, 0], sizes = [2, 32], strides = [1, 1]} : vector<2x64xbf16> to vector<2x32xbf16>
    %c34_120 = arith.constant 34 : index
    %c0_121 = arith.constant 0 : index
    %424 = vector.load %arg5[%c34_120, %c0_121] : memref<128x32xbf16, #tpu.memory_space<vmem>>, vector<2x32xbf16>
    tpu.vector_store %arg5[%c34_120, %c0_121], %423 {strides = array<i32>} : memref<128x32xbf16, #tpu.memory_space<vmem>>, vector<2x32xbf16>,
    %425 = vector.extract_strided_slice %422 {offsets = [0, 32], sizes = [2, 32], strides = [1, 1]} : vector<2x64xbf16> to vector<2x32xbf16>
    %c92 = arith.constant 92 : index
    %c0_122 = arith.constant 0 : index
    %426 = vector.load %arg6[%c92, %c0_122] : memref<128x32xbf16, #tpu.memory_space<vmem>>, vector<2x32xbf16>
    tpu.vector_store %arg6[%c92, %c0_122], %425 {strides = array<i32>} : memref<128x32xbf16, #tpu.memory_space<vmem>>, vector<2x32xbf16>,
    %c36 = arith.constant 36 : index
    %c0_123 = arith.constant 0 : index
    %427 = vector.load %arg7[%c36, %c0_123] : memref<128x256xf32, #tpu.memory_space<vmem>>, vector<2x256xf32>
    %cst_124 = arith.constant dense<0.000000e+00> : vector<2x256xf32>
    %428 = tpu.matmul %422, %10, %cst_124 {dimension_numbers = #tpu.dot_dimension_numbers<[1], [0], [0], [1], [0, 0, 1, 1], [], []>} : vector<2x64xbf16>, vector<64x256xbf16>, vector<2x256xf32> -> vector<2x256xf32>
    %429 = arith.addf %427, %428 : vector<2x256xf32>
    %430 = arith.negf %429 : vector<2x256xf32>
    %431 = math.exp %430 : vector<2x256xf32>
    %cst_125 = arith.constant 1.000000e+00 : f32
    %432 = vector.broadcast %cst_125 : f32 to vector<2x256xf32>
    %433 = arith.addf %432, %431 : vector<2x256xf32>
    %434 = arith.divf %432, %433 : vector<2x256xf32>
    %435 = vector.extract_strided_slice %434 {offsets = [0, 0], sizes = [2, 64], strides = [1, 1]} : vector<2x256xf32> to vector<2x64xf32>
    %436 = vector.extract_strided_slice %434 {offsets = [0, 64], sizes = [2, 64], strides = [1, 1]} : vector<2x256xf32> to vector<2x64xf32>
    %437 = vector.extract_strided_slice %434 {offsets = [0, 128], sizes = [2, 64], strides = [1, 1]} : vector<2x256xf32> to vector<2x64xf32>
    %438 = vector.extract_strided_slice %429 {offsets = [0, 192], sizes = [2, 64], strides = [1, 1]} : vector<2x256xf32> to vector<2x64xf32>
    %439 = math.tanh %438 : vector<2x64xf32>
    %440 = arith.mulf %435, %419 : vector<2x64xf32>
    %441 = arith.mulf %436, %439 : vector<2x64xf32>
    %442 = arith.addf %440, %441 : vector<2x64xf32>
    %443 = math.tanh %442 : vector<2x64xf32>
    %444 = arith.mulf %437, %443 : vector<2x64xf32>
    %445 = arith.truncf %444 : vector<2x64xf32> to vector<2x64xbf16>
    %446 = vector.extract_strided_slice %445 {offsets = [0, 0], sizes = [2, 32], strides = [1, 1]} : vector<2x64xbf16> to vector<2x32xbf16>
    %c36_126 = arith.constant 36 : index
    %c0_127 = arith.constant 0 : index
    %447 = vector.load %arg5[%c36_126, %c0_127] : memref<128x32xbf16, #tpu.memory_space<vmem>>, vector<2x32xbf16>
    tpu.vector_store %arg5[%c36_126, %c0_127], %446 {strides = array<i32>} : memref<128x32xbf16, #tpu.memory_space<vmem>>, vector<2x32xbf16>,
    %448 = vector.extract_strided_slice %445 {offsets = [0, 32], sizes = [2, 32], strides = [1, 1]} : vector<2x64xbf16> to vector<2x32xbf16>
    %c90 = arith.constant 90 : index
    %c0_128 = arith.constant 0 : index
    %449 = vector.load %arg6[%c90, %c0_128] : memref<128x32xbf16, #tpu.memory_space<vmem>>, vector<2x32xbf16>
    tpu.vector_store %arg6[%c90, %c0_128], %448 {strides = array<i32>} : memref<128x32xbf16, #tpu.memory_space<vmem>>, vector<2x32xbf16>,
    %c38 = arith.constant 38 : index
    %c0_129 = arith.constant 0 : index
    %450 = vector.load %arg7[%c38, %c0_129] : memref<128x256xf32, #tpu.memory_space<vmem>>, vector<2x256xf32>
    %cst_130 = arith.constant dense<0.000000e+00> : vector<2x256xf32>
    %451 = tpu.matmul %445, %10, %cst_130 {dimension_numbers = #tpu.dot_dimension_numbers<[1], [0], [0], [1], [0, 0, 1, 1], [], []>} : vector<2x64xbf16>, vector<64x256xbf16>, vector<2x256xf32> -> vector<2x256xf32>
    %452 = arith.addf %450, %451 : vector<2x256xf32>
    %453 = arith.negf %452 : vector<2x256xf32>
    %454 = math.exp %453 : vector<2x256xf32>
    %cst_131 = arith.constant 1.000000e+00 : f32
    %455 = vector.broadcast %cst_131 : f32 to vector<2x256xf32>
    %456 = arith.addf %455, %454 : vector<2x256xf32>
    %457 = arith.divf %455, %456 : vector<2x256xf32>
    %458 = vector.extract_strided_slice %457 {offsets = [0, 0], sizes = [2, 64], strides = [1, 1]} : vector<2x256xf32> to vector<2x64xf32>
    %459 = vector.extract_strided_slice %457 {offsets = [0, 64], sizes = [2, 64], strides = [1, 1]} : vector<2x256xf32> to vector<2x64xf32>
    %460 = vector.extract_strided_slice %457 {offsets = [0, 128], sizes = [2, 64], strides = [1, 1]} : vector<2x256xf32> to vector<2x64xf32>
    %461 = vector.extract_strided_slice %452 {offsets = [0, 192], sizes = [2, 64], strides = [1, 1]} : vector<2x256xf32> to vector<2x64xf32>
    %462 = math.tanh %461 : vector<2x64xf32>
    %463 = arith.mulf %458, %442 : vector<2x64xf32>
    %464 = arith.mulf %459, %462 : vector<2x64xf32>
    %465 = arith.addf %463, %464 : vector<2x64xf32>
    %466 = math.tanh %465 : vector<2x64xf32>
    %467 = arith.mulf %460, %466 : vector<2x64xf32>
    %468 = arith.truncf %467 : vector<2x64xf32> to vector<2x64xbf16>
    %469 = vector.extract_strided_slice %468 {offsets = [0, 0], sizes = [2, 32], strides = [1, 1]} : vector<2x64xbf16> to vector<2x32xbf16>
    %c38_132 = arith.constant 38 : index
    %c0_133 = arith.constant 0 : index
    %470 = vector.load %arg5[%c38_132, %c0_133] : memref<128x32xbf16, #tpu.memory_space<vmem>>, vector<2x32xbf16>
    tpu.vector_store %arg5[%c38_132, %c0_133], %469 {strides = array<i32>} : memref<128x32xbf16, #tpu.memory_space<vmem>>, vector<2x32xbf16>,
    %471 = vector.extract_strided_slice %468 {offsets = [0, 32], sizes = [2, 32], strides = [1, 1]} : vector<2x64xbf16> to vector<2x32xbf16>
    %c88 = arith.constant 88 : index
    %c0_134 = arith.constant 0 : index
    %472 = vector.load %arg6[%c88, %c0_134] : memref<128x32xbf16, #tpu.memory_space<vmem>>, vector<2x32xbf16>
    tpu.vector_store %arg6[%c88, %c0_134], %471 {strides = array<i32>} : memref<128x32xbf16, #tpu.memory_space<vmem>>, vector<2x32xbf16>,
    %c40 = arith.constant 40 : index
    %c0_135 = arith.constant 0 : index
    %473 = vector.load %arg7[%c40, %c0_135] : memref<128x256xf32, #tpu.memory_space<vmem>>, vector<2x256xf32>
    %cst_136 = arith.constant dense<0.000000e+00> : vector<2x256xf32>
    %474 = tpu.matmul %468, %10, %cst_136 {dimension_numbers = #tpu.dot_dimension_numbers<[1], [0], [0], [1], [0, 0, 1, 1], [], []>} : vector<2x64xbf16>, vector<64x256xbf16>, vector<2x256xf32> -> vector<2x256xf32>
    %475 = arith.addf %473, %474 : vector<2x256xf32>
    %476 = arith.negf %475 : vector<2x256xf32>
    %477 = math.exp %476 : vector<2x256xf32>
    %cst_137 = arith.constant 1.000000e+00 : f32
    %478 = vector.broadcast %cst_137 : f32 to vector<2x256xf32>
    %479 = arith.addf %478, %477 : vector<2x256xf32>
    %480 = arith.divf %478, %479 : vector<2x256xf32>
    %481 = vector.extract_strided_slice %480 {offsets = [0, 0], sizes = [2, 64], strides = [1, 1]} : vector<2x256xf32> to vector<2x64xf32>
    %482 = vector.extract_strided_slice %480 {offsets = [0, 64], sizes = [2, 64], strides = [1, 1]} : vector<2x256xf32> to vector<2x64xf32>
    %483 = vector.extract_strided_slice %480 {offsets = [0, 128], sizes = [2, 64], strides = [1, 1]} : vector<2x256xf32> to vector<2x64xf32>
    %484 = vector.extract_strided_slice %475 {offsets = [0, 192], sizes = [2, 64], strides = [1, 1]} : vector<2x256xf32> to vector<2x64xf32>
    %485 = math.tanh %484 : vector<2x64xf32>
    %486 = arith.mulf %481, %465 : vector<2x64xf32>
    %487 = arith.mulf %482, %485 : vector<2x64xf32>
    %488 = arith.addf %486, %487 : vector<2x64xf32>
    %489 = math.tanh %488 : vector<2x64xf32>
    %490 = arith.mulf %483, %489 : vector<2x64xf32>
    %491 = arith.truncf %490 : vector<2x64xf32> to vector<2x64xbf16>
    %492 = vector.extract_strided_slice %491 {offsets = [0, 0], sizes = [2, 32], strides = [1, 1]} : vector<2x64xbf16> to vector<2x32xbf16>
    %c40_138 = arith.constant 40 : index
    %c0_139 = arith.constant 0 : index
    %493 = vector.load %arg5[%c40_138, %c0_139] : memref<128x32xbf16, #tpu.memory_space<vmem>>, vector<2x32xbf16>
    tpu.vector_store %arg5[%c40_138, %c0_139], %492 {strides = array<i32>} : memref<128x32xbf16, #tpu.memory_space<vmem>>, vector<2x32xbf16>,
    %494 = vector.extract_strided_slice %491 {offsets = [0, 32], sizes = [2, 32], strides = [1, 1]} : vector<2x64xbf16> to vector<2x32xbf16>
    %c86 = arith.constant 86 : index
    %c0_140 = arith.constant 0 : index
    %495 = vector.load %arg6[%c86, %c0_140] : memref<128x32xbf16, #tpu.memory_space<vmem>>, vector<2x32xbf16>
    tpu.vector_store %arg6[%c86, %c0_140], %494 {strides = array<i32>} : memref<128x32xbf16, #tpu.memory_space<vmem>>, vector<2x32xbf16>,
    %c42 = arith.constant 42 : index
    %c0_141 = arith.constant 0 : index
    %496 = vector.load %arg7[%c42, %c0_141] : memref<128x256xf32, #tpu.memory_space<vmem>>, vector<2x256xf32>
    %cst_142 = arith.constant dense<0.000000e+00> : vector<2x256xf32>
    %497 = tpu.matmul %491, %10, %cst_142 {dimension_numbers = #tpu.dot_dimension_numbers<[1], [0], [0], [1], [0, 0, 1, 1], [], []>} : vector<2x64xbf16>, vector<64x256xbf16>, vector<2x256xf32> -> vector<2x256xf32>
    %498 = arith.addf %496, %497 : vector<2x256xf32>
    %499 = arith.negf %498 : vector<2x256xf32>
    %500 = math.exp %499 : vector<2x256xf32>
    %cst_143 = arith.constant 1.000000e+00 : f32
    %501 = vector.broadcast %cst_143 : f32 to vector<2x256xf32>
    %502 = arith.addf %501, %500 : vector<2x256xf32>
    %503 = arith.divf %501, %502 : vector<2x256xf32>
    %504 = vector.extract_strided_slice %503 {offsets = [0, 0], sizes = [2, 64], strides = [1, 1]} : vector<2x256xf32> to vector<2x64xf32>
    %505 = vector.extract_strided_slice %503 {offsets = [0, 64], sizes = [2, 64], strides = [1, 1]} : vector<2x256xf32> to vector<2x64xf32>
    %506 = vector.extract_strided_slice %503 {offsets = [0, 128], sizes = [2, 64], strides = [1, 1]} : vector<2x256xf32> to vector<2x64xf32>
    %507 = vector.extract_strided_slice %498 {offsets = [0, 192], sizes = [2, 64], strides = [1, 1]} : vector<2x256xf32> to vector<2x64xf32>
    %508 = math.tanh %507 : vector<2x64xf32>
    %509 = arith.mulf %504, %488 : vector<2x64xf32>
    %510 = arith.mulf %505, %508 : vector<2x64xf32>
    %511 = arith.addf %509, %510 : vector<2x64xf32>
    %512 = math.tanh %511 : vector<2x64xf32>
    %513 = arith.mulf %506, %512 : vector<2x64xf32>
    %514 = arith.truncf %513 : vector<2x64xf32> to vector<2x64xbf16>
    %515 = vector.extract_strided_slice %514 {offsets = [0, 0], sizes = [2, 32], strides = [1, 1]} : vector<2x64xbf16> to vector<2x32xbf16>
    %c42_144 = arith.constant 42 : index
    %c0_145 = arith.constant 0 : index
    %516 = vector.load %arg5[%c42_144, %c0_145] : memref<128x32xbf16, #tpu.memory_space<vmem>>, vector<2x32xbf16>
    tpu.vector_store %arg5[%c42_144, %c0_145], %515 {strides = array<i32>} : memref<128x32xbf16, #tpu.memory_space<vmem>>, vector<2x32xbf16>,
    %517 = vector.extract_strided_slice %514 {offsets = [0, 32], sizes = [2, 32], strides = [1, 1]} : vector<2x64xbf16> to vector<2x32xbf16>
    %c84 = arith.constant 84 : index
    %c0_146 = arith.constant 0 : index
    %518 = vector.load %arg6[%c84, %c0_146] : memref<128x32xbf16, #tpu.memory_space<vmem>>, vector<2x32xbf16>
    tpu.vector_store %arg6[%c84, %c0_146], %517 {strides = array<i32>} : memref<128x32xbf16, #tpu.memory_space<vmem>>, vector<2x32xbf16>,
    %c44 = arith.constant 44 : index
    %c0_147 = arith.constant 0 : index
    %519 = vector.load %arg7[%c44, %c0_147] : memref<128x256xf32, #tpu.memory_space<vmem>>, vector<2x256xf32>
    %cst_148 = arith.constant dense<0.000000e+00> : vector<2x256xf32>
    %520 = tpu.matmul %514, %10, %cst_148 {dimension_numbers = #tpu.dot_dimension_numbers<[1], [0], [0], [1], [0, 0, 1, 1], [], []>} : vector<2x64xbf16>, vector<64x256xbf16>, vector<2x256xf32> -> vector<2x256xf32>
    %521 = arith.addf %519, %520 : vector<2x256xf32>
    %522 = arith.negf %521 : vector<2x256xf32>
    %523 = math.exp %522 : vector<2x256xf32>
    %cst_149 = arith.constant 1.000000e+00 : f32
    %524 = vector.broadcast %cst_149 : f32 to vector<2x256xf32>
    %525 = arith.addf %524, %523 : vector<2x256xf32>
    %526 = arith.divf %524, %525 : vector<2x256xf32>
    %527 = vector.extract_strided_slice %526 {offsets = [0, 0], sizes = [2, 64], strides = [1, 1]} : vector<2x256xf32> to vector<2x64xf32>
    %528 = vector.extract_strided_slice %526 {offsets = [0, 64], sizes = [2, 64], strides = [1, 1]} : vector<2x256xf32> to vector<2x64xf32>
    %529 = vector.extract_strided_slice %526 {offsets = [0, 128], sizes = [2, 64], strides = [1, 1]} : vector<2x256xf32> to vector<2x64xf32>
    %530 = vector.extract_strided_slice %521 {offsets = [0, 192], sizes = [2, 64], strides = [1, 1]} : vector<2x256xf32> to vector<2x64xf32>
    %531 = math.tanh %530 : vector<2x64xf32>
    %532 = arith.mulf %527, %511 : vector<2x64xf32>
    %533 = arith.mulf %528, %531 : vector<2x64xf32>
    %534 = arith.addf %532, %533 : vector<2x64xf32>
    %535 = math.tanh %534 : vector<2x64xf32>
    %536 = arith.mulf %529, %535 : vector<2x64xf32>
    %537 = arith.truncf %536 : vector<2x64xf32> to vector<2x64xbf16>
    %538 = vector.extract_strided_slice %537 {offsets = [0, 0], sizes = [2, 32], strides = [1, 1]} : vector<2x64xbf16> to vector<2x32xbf16>
    %c44_150 = arith.constant 44 : index
    %c0_151 = arith.constant 0 : index
    %539 = vector.load %arg5[%c44_150, %c0_151] : memref<128x32xbf16, #tpu.memory_space<vmem>>, vector<2x32xbf16>
    tpu.vector_store %arg5[%c44_150, %c0_151], %538 {strides = array<i32>} : memref<128x32xbf16, #tpu.memory_space<vmem>>, vector<2x32xbf16>,
    %540 = vector.extract_strided_slice %537 {offsets = [0, 32], sizes = [2, 32], strides = [1, 1]} : vector<2x64xbf16> to vector<2x32xbf16>
    %c82 = arith.constant 82 : index
    %c0_152 = arith.constant 0 : index
    %541 = vector.load %arg6[%c82, %c0_152] : memref<128x32xbf16, #tpu.memory_space<vmem>>, vector<2x32xbf16>
    tpu.vector_store %arg6[%c82, %c0_152], %540 {strides = array<i32>} : memref<128x32xbf16, #tpu.memory_space<vmem>>, vector<2x32xbf16>,
    %c46 = arith.constant 46 : index
    %c0_153 = arith.constant 0 : index
    %542 = vector.load %arg7[%c46, %c0_153] : memref<128x256xf32, #tpu.memory_space<vmem>>, vector<2x256xf32>
    %cst_154 = arith.constant dense<0.000000e+00> : vector<2x256xf32>
    %543 = tpu.matmul %537, %10, %cst_154 {dimension_numbers = #tpu.dot_dimension_numbers<[1], [0], [0], [1], [0, 0, 1, 1], [], []>} : vector<2x64xbf16>, vector<64x256xbf16>, vector<2x256xf32> -> vector<2x256xf32>
    %544 = arith.addf %542, %543 : vector<2x256xf32>
    %545 = arith.negf %544 : vector<2x256xf32>
    %546 = math.exp %545 : vector<2x256xf32>
    %cst_155 = arith.constant 1.000000e+00 : f32
    %547 = vector.broadcast %cst_155 : f32 to vector<2x256xf32>
    %548 = arith.addf %547, %546 : vector<2x256xf32>
    %549 = arith.divf %547, %548 : vector<2x256xf32>
    %550 = vector.extract_strided_slice %549 {offsets = [0, 0], sizes = [2, 64], strides = [1, 1]} : vector<2x256xf32> to vector<2x64xf32>
    %551 = vector.extract_strided_slice %549 {offsets = [0, 64], sizes = [2, 64], strides = [1, 1]} : vector<2x256xf32> to vector<2x64xf32>
    %552 = vector.extract_strided_slice %549 {offsets = [0, 128], sizes = [2, 64], strides = [1, 1]} : vector<2x256xf32> to vector<2x64xf32>
    %553 = vector.extract_strided_slice %544 {offsets = [0, 192], sizes = [2, 64], strides = [1, 1]} : vector<2x256xf32> to vector<2x64xf32>
    %554 = math.tanh %553 : vector<2x64xf32>
    %555 = arith.mulf %550, %534 : vector<2x64xf32>
    %556 = arith.mulf %551, %554 : vector<2x64xf32>
    %557 = arith.addf %555, %556 : vector<2x64xf32>
    %558 = math.tanh %557 : vector<2x64xf32>
    %559 = arith.mulf %552, %558 : vector<2x64xf32>
    %560 = arith.truncf %559 : vector<2x64xf32> to vector<2x64xbf16>
    %561 = vector.extract_strided_slice %560 {offsets = [0, 0], sizes = [2, 32], strides = [1, 1]} : vector<2x64xbf16> to vector<2x32xbf16>
    %c46_156 = arith.constant 46 : index
    %c0_157 = arith.constant 0 : index
    %562 = vector.load %arg5[%c46_156, %c0_157] : memref<128x32xbf16, #tpu.memory_space<vmem>>, vector<2x32xbf16>
    tpu.vector_store %arg5[%c46_156, %c0_157], %561 {strides = array<i32>} : memref<128x32xbf16, #tpu.memory_space<vmem>>, vector<2x32xbf16>,
    %563 = vector.extract_strided_slice %560 {offsets = [0, 32], sizes = [2, 32], strides = [1, 1]} : vector<2x64xbf16> to vector<2x32xbf16>
    %c80 = arith.constant 80 : index
    %c0_158 = arith.constant 0 : index
    %564 = vector.load %arg6[%c80, %c0_158] : memref<128x32xbf16, #tpu.memory_space<vmem>>, vector<2x32xbf16>
    tpu.vector_store %arg6[%c80, %c0_158], %563 {strides = array<i32>} : memref<128x32xbf16, #tpu.memory_space<vmem>>, vector<2x32xbf16>,
    %c48 = arith.constant 48 : index
    %c0_159 = arith.constant 0 : index
    %565 = vector.load %arg7[%c48, %c0_159] : memref<128x256xf32, #tpu.memory_space<vmem>>, vector<2x256xf32>
    %cst_160 = arith.constant dense<0.000000e+00> : vector<2x256xf32>
    %566 = tpu.matmul %560, %10, %cst_160 {dimension_numbers = #tpu.dot_dimension_numbers<[1], [0], [0], [1], [0, 0, 1, 1], [], []>} : vector<2x64xbf16>, vector<64x256xbf16>, vector<2x256xf32> -> vector<2x256xf32>
    %567 = arith.addf %565, %566 : vector<2x256xf32>
    %568 = arith.negf %567 : vector<2x256xf32>
    %569 = math.exp %568 : vector<2x256xf32>
    %cst_161 = arith.constant 1.000000e+00 : f32
    %570 = vector.broadcast %cst_161 : f32 to vector<2x256xf32>
    %571 = arith.addf %570, %569 : vector<2x256xf32>
    %572 = arith.divf %570, %571 : vector<2x256xf32>
    %573 = vector.extract_strided_slice %572 {offsets = [0, 0], sizes = [2, 64], strides = [1, 1]} : vector<2x256xf32> to vector<2x64xf32>
    %574 = vector.extract_strided_slice %572 {offsets = [0, 64], sizes = [2, 64], strides = [1, 1]} : vector<2x256xf32> to vector<2x64xf32>
    %575 = vector.extract_strided_slice %572 {offsets = [0, 128], sizes = [2, 64], strides = [1, 1]} : vector<2x256xf32> to vector<2x64xf32>
    %576 = vector.extract_strided_slice %567 {offsets = [0, 192], sizes = [2, 64], strides = [1, 1]} : vector<2x256xf32> to vector<2x64xf32>
    %577 = math.tanh %576 : vector<2x64xf32>
    %578 = arith.mulf %573, %557 : vector<2x64xf32>
    %579 = arith.mulf %574, %577 : vector<2x64xf32>
    %580 = arith.addf %578, %579 : vector<2x64xf32>
    %581 = math.tanh %580 : vector<2x64xf32>
    %582 = arith.mulf %575, %581 : vector<2x64xf32>
    %583 = arith.truncf %582 : vector<2x64xf32> to vector<2x64xbf16>
    %584 = vector.extract_strided_slice %583 {offsets = [0, 0], sizes = [2, 32], strides = [1, 1]} : vector<2x64xbf16> to vector<2x32xbf16>
    %c48_162 = arith.constant 48 : index
    %c0_163 = arith.constant 0 : index
    %585 = vector.load %arg5[%c48_162, %c0_163] : memref<128x32xbf16, #tpu.memory_space<vmem>>, vector<2x32xbf16>
    tpu.vector_store %arg5[%c48_162, %c0_163], %584 {strides = array<i32>} : memref<128x32xbf16, #tpu.memory_space<vmem>>, vector<2x32xbf16>,
    %586 = vector.extract_strided_slice %583 {offsets = [0, 32], sizes = [2, 32], strides = [1, 1]} : vector<2x64xbf16> to vector<2x32xbf16>
    %c78 = arith.constant 78 : index
    %c0_164 = arith.constant 0 : index
    %587 = vector.load %arg6[%c78, %c0_164] : memref<128x32xbf16, #tpu.memory_space<vmem>>, vector<2x32xbf16>
    tpu.vector_store %arg6[%c78, %c0_164], %586 {strides = array<i32>} : memref<128x32xbf16, #tpu.memory_space<vmem>>, vector<2x32xbf16>,
    %c50 = arith.constant 50 : index
    %c0_165 = arith.constant 0 : index
    %588 = vector.load %arg7[%c50, %c0_165] : memref<128x256xf32, #tpu.memory_space<vmem>>, vector<2x256xf32>
    %cst_166 = arith.constant dense<0.000000e+00> : vector<2x256xf32>
    %589 = tpu.matmul %583, %10, %cst_166 {dimension_numbers = #tpu.dot_dimension_numbers<[1], [0], [0], [1], [0, 0, 1, 1], [], []>} : vector<2x64xbf16>, vector<64x256xbf16>, vector<2x256xf32> -> vector<2x256xf32>
    %590 = arith.addf %588, %589 : vector<2x256xf32>
    %591 = arith.negf %590 : vector<2x256xf32>
    %592 = math.exp %591 : vector<2x256xf32>
    %cst_167 = arith.constant 1.000000e+00 : f32
    %593 = vector.broadcast %cst_167 : f32 to vector<2x256xf32>
    %594 = arith.addf %593, %592 : vector<2x256xf32>
    %595 = arith.divf %593, %594 : vector<2x256xf32>
    %596 = vector.extract_strided_slice %595 {offsets = [0, 0], sizes = [2, 64], strides = [1, 1]} : vector<2x256xf32> to vector<2x64xf32>
    %597 = vector.extract_strided_slice %595 {offsets = [0, 64], sizes = [2, 64], strides = [1, 1]} : vector<2x256xf32> to vector<2x64xf32>
    %598 = vector.extract_strided_slice %595 {offsets = [0, 128], sizes = [2, 64], strides = [1, 1]} : vector<2x256xf32> to vector<2x64xf32>
    %599 = vector.extract_strided_slice %590 {offsets = [0, 192], sizes = [2, 64], strides = [1, 1]} : vector<2x256xf32> to vector<2x64xf32>
    %600 = math.tanh %599 : vector<2x64xf32>
    %601 = arith.mulf %596, %580 : vector<2x64xf32>
    %602 = arith.mulf %597, %600 : vector<2x64xf32>
    %603 = arith.addf %601, %602 : vector<2x64xf32>
    %604 = math.tanh %603 : vector<2x64xf32>
    %605 = arith.mulf %598, %604 : vector<2x64xf32>
    %606 = arith.truncf %605 : vector<2x64xf32> to vector<2x64xbf16>
    %607 = vector.extract_strided_slice %606 {offsets = [0, 0], sizes = [2, 32], strides = [1, 1]} : vector<2x64xbf16> to vector<2x32xbf16>
    %c50_168 = arith.constant 50 : index
    %c0_169 = arith.constant 0 : index
    %608 = vector.load %arg5[%c50_168, %c0_169] : memref<128x32xbf16, #tpu.memory_space<vmem>>, vector<2x32xbf16>
    tpu.vector_store %arg5[%c50_168, %c0_169], %607 {strides = array<i32>} : memref<128x32xbf16, #tpu.memory_space<vmem>>, vector<2x32xbf16>,
    %609 = vector.extract_strided_slice %606 {offsets = [0, 32], sizes = [2, 32], strides = [1, 1]} : vector<2x64xbf16> to vector<2x32xbf16>
    %c76 = arith.constant 76 : index
    %c0_170 = arith.constant 0 : index
    %610 = vector.load %arg6[%c76, %c0_170] : memref<128x32xbf16, #tpu.memory_space<vmem>>, vector<2x32xbf16>
    tpu.vector_store %arg6[%c76, %c0_170], %609 {strides = array<i32>} : memref<128x32xbf16, #tpu.memory_space<vmem>>, vector<2x32xbf16>,
    %c52 = arith.constant 52 : index
    %c0_171 = arith.constant 0 : index
    %611 = vector.load %arg7[%c52, %c0_171] : memref<128x256xf32, #tpu.memory_space<vmem>>, vector<2x256xf32>
    %cst_172 = arith.constant dense<0.000000e+00> : vector<2x256xf32>
    %612 = tpu.matmul %606, %10, %cst_172 {dimension_numbers = #tpu.dot_dimension_numbers<[1], [0], [0], [1], [0, 0, 1, 1], [], []>} : vector<2x64xbf16>, vector<64x256xbf16>, vector<2x256xf32> -> vector<2x256xf32>
    %613 = arith.addf %611, %612 : vector<2x256xf32>
    %614 = arith.negf %613 : vector<2x256xf32>
    %615 = math.exp %614 : vector<2x256xf32>
    %cst_173 = arith.constant 1.000000e+00 : f32
    %616 = vector.broadcast %cst_173 : f32 to vector<2x256xf32>
    %617 = arith.addf %616, %615 : vector<2x256xf32>
    %618 = arith.divf %616, %617 : vector<2x256xf32>
    %619 = vector.extract_strided_slice %618 {offsets = [0, 0], sizes = [2, 64], strides = [1, 1]} : vector<2x256xf32> to vector<2x64xf32>
    %620 = vector.extract_strided_slice %618 {offsets = [0, 64], sizes = [2, 64], strides = [1, 1]} : vector<2x256xf32> to vector<2x64xf32>
    %621 = vector.extract_strided_slice %618 {offsets = [0, 128], sizes = [2, 64], strides = [1, 1]} : vector<2x256xf32> to vector<2x64xf32>
    %622 = vector.extract_strided_slice %613 {offsets = [0, 192], sizes = [2, 64], strides = [1, 1]} : vector<2x256xf32> to vector<2x64xf32>
    %623 = math.tanh %622 : vector<2x64xf32>
    %624 = arith.mulf %619, %603 : vector<2x64xf32>
    %625 = arith.mulf %620, %623 : vector<2x64xf32>
    %626 = arith.addf %624, %625 : vector<2x64xf32>
    %627 = math.tanh %626 : vector<2x64xf32>
    %628 = arith.mulf %621, %627 : vector<2x64xf32>
    %629 = arith.truncf %628 : vector<2x64xf32> to vector<2x64xbf16>
    %630 = vector.extract_strided_slice %629 {offsets = [0, 0], sizes = [2, 32], strides = [1, 1]} : vector<2x64xbf16> to vector<2x32xbf16>
    %c52_174 = arith.constant 52 : index
    %c0_175 = arith.constant 0 : index
    %631 = vector.load %arg5[%c52_174, %c0_175] : memref<128x32xbf16, #tpu.memory_space<vmem>>, vector<2x32xbf16>
    tpu.vector_store %arg5[%c52_174, %c0_175], %630 {strides = array<i32>} : memref<128x32xbf16, #tpu.memory_space<vmem>>, vector<2x32xbf16>,
    %632 = vector.extract_strided_slice %629 {offsets = [0, 32], sizes = [2, 32], strides = [1, 1]} : vector<2x64xbf16> to vector<2x32xbf16>
    %c74 = arith.constant 74 : index
    %c0_176 = arith.constant 0 : index
    %633 = vector.load %arg6[%c74, %c0_176] : memref<128x32xbf16, #tpu.memory_space<vmem>>, vector<2x32xbf16>
    tpu.vector_store %arg6[%c74, %c0_176], %632 {strides = array<i32>} : memref<128x32xbf16, #tpu.memory_space<vmem>>, vector<2x32xbf16>,
    %c54 = arith.constant 54 : index
    %c0_177 = arith.constant 0 : index
    %634 = vector.load %arg7[%c54, %c0_177] : memref<128x256xf32, #tpu.memory_space<vmem>>, vector<2x256xf32>
    %cst_178 = arith.constant dense<0.000000e+00> : vector<2x256xf32>
    %635 = tpu.matmul %629, %10, %cst_178 {dimension_numbers = #tpu.dot_dimension_numbers<[1], [0], [0], [1], [0, 0, 1, 1], [], []>} : vector<2x64xbf16>, vector<64x256xbf16>, vector<2x256xf32> -> vector<2x256xf32>
    %636 = arith.addf %634, %635 : vector<2x256xf32>
    %637 = arith.negf %636 : vector<2x256xf32>
    %638 = math.exp %637 : vector<2x256xf32>
    %cst_179 = arith.constant 1.000000e+00 : f32
    %639 = vector.broadcast %cst_179 : f32 to vector<2x256xf32>
    %640 = arith.addf %639, %638 : vector<2x256xf32>
    %641 = arith.divf %639, %640 : vector<2x256xf32>
    %642 = vector.extract_strided_slice %641 {offsets = [0, 0], sizes = [2, 64], strides = [1, 1]} : vector<2x256xf32> to vector<2x64xf32>
    %643 = vector.extract_strided_slice %641 {offsets = [0, 64], sizes = [2, 64], strides = [1, 1]} : vector<2x256xf32> to vector<2x64xf32>
    %644 = vector.extract_strided_slice %641 {offsets = [0, 128], sizes = [2, 64], strides = [1, 1]} : vector<2x256xf32> to vector<2x64xf32>
    %645 = vector.extract_strided_slice %636 {offsets = [0, 192], sizes = [2, 64], strides = [1, 1]} : vector<2x256xf32> to vector<2x64xf32>
    %646 = math.tanh %645 : vector<2x64xf32>
    %647 = arith.mulf %642, %626 : vector<2x64xf32>
    %648 = arith.mulf %643, %646 : vector<2x64xf32>
    %649 = arith.addf %647, %648 : vector<2x64xf32>
    %650 = math.tanh %649 : vector<2x64xf32>
    %651 = arith.mulf %644, %650 : vector<2x64xf32>
    %652 = arith.truncf %651 : vector<2x64xf32> to vector<2x64xbf16>
    %653 = vector.extract_strided_slice %652 {offsets = [0, 0], sizes = [2, 32], strides = [1, 1]} : vector<2x64xbf16> to vector<2x32xbf16>
    %c54_180 = arith.constant 54 : index
    %c0_181 = arith.constant 0 : index
    %654 = vector.load %arg5[%c54_180, %c0_181] : memref<128x32xbf16, #tpu.memory_space<vmem>>, vector<2x32xbf16>
    tpu.vector_store %arg5[%c54_180, %c0_181], %653 {strides = array<i32>} : memref<128x32xbf16, #tpu.memory_space<vmem>>, vector<2x32xbf16>,
    %655 = vector.extract_strided_slice %652 {offsets = [0, 32], sizes = [2, 32], strides = [1, 1]} : vector<2x64xbf16> to vector<2x32xbf16>
    %c72 = arith.constant 72 : index
    %c0_182 = arith.constant 0 : index
    %656 = vector.load %arg6[%c72, %c0_182] : memref<128x32xbf16, #tpu.memory_space<vmem>>, vector<2x32xbf16>
    tpu.vector_store %arg6[%c72, %c0_182], %655 {strides = array<i32>} : memref<128x32xbf16, #tpu.memory_space<vmem>>, vector<2x32xbf16>,
    %c56 = arith.constant 56 : index
    %c0_183 = arith.constant 0 : index
    %657 = vector.load %arg7[%c56, %c0_183] : memref<128x256xf32, #tpu.memory_space<vmem>>, vector<2x256xf32>
    %cst_184 = arith.constant dense<0.000000e+00> : vector<2x256xf32>
    %658 = tpu.matmul %652, %10, %cst_184 {dimension_numbers = #tpu.dot_dimension_numbers<[1], [0], [0], [1], [0, 0, 1, 1], [], []>} : vector<2x64xbf16>, vector<64x256xbf16>, vector<2x256xf32> -> vector<2x256xf32>
    %659 = arith.addf %657, %658 : vector<2x256xf32>
    %660 = arith.negf %659 : vector<2x256xf32>
    %661 = math.exp %660 : vector<2x256xf32>
    %cst_185 = arith.constant 1.000000e+00 : f32
    %662 = vector.broadcast %cst_185 : f32 to vector<2x256xf32>
    %663 = arith.addf %662, %661 : vector<2x256xf32>
    %664 = arith.divf %662, %663 : vector<2x256xf32>
    %665 = vector.extract_strided_slice %664 {offsets = [0, 0], sizes = [2, 64], strides = [1, 1]} : vector<2x256xf32> to vector<2x64xf32>
    %666 = vector.extract_strided_slice %664 {offsets = [0, 64], sizes = [2, 64], strides = [1, 1]} : vector<2x256xf32> to vector<2x64xf32>
    %667 = vector.extract_strided_slice %664 {offsets = [0, 128], sizes = [2, 64], strides = [1, 1]} : vector<2x256xf32> to vector<2x64xf32>
    %668 = vector.extract_strided_slice %659 {offsets = [0, 192], sizes = [2, 64], strides = [1, 1]} : vector<2x256xf32> to vector<2x64xf32>
    %669 = math.tanh %668 : vector<2x64xf32>
    %670 = arith.mulf %665, %649 : vector<2x64xf32>
    %671 = arith.mulf %666, %669 : vector<2x64xf32>
    %672 = arith.addf %670, %671 : vector<2x64xf32>
    %673 = math.tanh %672 : vector<2x64xf32>
    %674 = arith.mulf %667, %673 : vector<2x64xf32>
    %675 = arith.truncf %674 : vector<2x64xf32> to vector<2x64xbf16>
    %676 = vector.extract_strided_slice %675 {offsets = [0, 0], sizes = [2, 32], strides = [1, 1]} : vector<2x64xbf16> to vector<2x32xbf16>
    %c56_186 = arith.constant 56 : index
    %c0_187 = arith.constant 0 : index
    %677 = vector.load %arg5[%c56_186, %c0_187] : memref<128x32xbf16, #tpu.memory_space<vmem>>, vector<2x32xbf16>
    tpu.vector_store %arg5[%c56_186, %c0_187], %676 {strides = array<i32>} : memref<128x32xbf16, #tpu.memory_space<vmem>>, vector<2x32xbf16>,
    %678 = vector.extract_strided_slice %675 {offsets = [0, 32], sizes = [2, 32], strides = [1, 1]} : vector<2x64xbf16> to vector<2x32xbf16>
    %c70 = arith.constant 70 : index
    %c0_188 = arith.constant 0 : index
    %679 = vector.load %arg6[%c70, %c0_188] : memref<128x32xbf16, #tpu.memory_space<vmem>>, vector<2x32xbf16>
    tpu.vector_store %arg6[%c70, %c0_188], %678 {strides = array<i32>} : memref<128x32xbf16, #tpu.memory_space<vmem>>, vector<2x32xbf16>,
    %c58 = arith.constant 58 : index
    %c0_189 = arith.constant 0 : index
    %680 = vector.load %arg7[%c58, %c0_189] : memref<128x256xf32, #tpu.memory_space<vmem>>, vector<2x256xf32>
    %cst_190 = arith.constant dense<0.000000e+00> : vector<2x256xf32>
    %681 = tpu.matmul %675, %10, %cst_190 {dimension_numbers = #tpu.dot_dimension_numbers<[1], [0], [0], [1], [0, 0, 1, 1], [], []>} : vector<2x64xbf16>, vector<64x256xbf16>, vector<2x256xf32> -> vector<2x256xf32>
    %682 = arith.addf %680, %681 : vector<2x256xf32>
    %683 = arith.negf %682 : vector<2x256xf32>
    %684 = math.exp %683 : vector<2x256xf32>
    %cst_191 = arith.constant 1.000000e+00 : f32
    %685 = vector.broadcast %cst_191 : f32 to vector<2x256xf32>
    %686 = arith.addf %685, %684 : vector<2x256xf32>
    %687 = arith.divf %685, %686 : vector<2x256xf32>
    %688 = vector.extract_strided_slice %687 {offsets = [0, 0], sizes = [2, 64], strides = [1, 1]} : vector<2x256xf32> to vector<2x64xf32>
    %689 = vector.extract_strided_slice %687 {offsets = [0, 64], sizes = [2, 64], strides = [1, 1]} : vector<2x256xf32> to vector<2x64xf32>
    %690 = vector.extract_strided_slice %687 {offsets = [0, 128], sizes = [2, 64], strides = [1, 1]} : vector<2x256xf32> to vector<2x64xf32>
    %691 = vector.extract_strided_slice %682 {offsets = [0, 192], sizes = [2, 64], strides = [1, 1]} : vector<2x256xf32> to vector<2x64xf32>
    %692 = math.tanh %691 : vector<2x64xf32>
    %693 = arith.mulf %688, %672 : vector<2x64xf32>
    %694 = arith.mulf %689, %692 : vector<2x64xf32>
    %695 = arith.addf %693, %694 : vector<2x64xf32>
    %696 = math.tanh %695 : vector<2x64xf32>
    %697 = arith.mulf %690, %696 : vector<2x64xf32>
    %698 = arith.truncf %697 : vector<2x64xf32> to vector<2x64xbf16>
    %699 = vector.extract_strided_slice %698 {offsets = [0, 0], sizes = [2, 32], strides = [1, 1]} : vector<2x64xbf16> to vector<2x32xbf16>
    %c58_192 = arith.constant 58 : index
    %c0_193 = arith.constant 0 : index
    %700 = vector.load %arg5[%c58_192, %c0_193] : memref<128x32xbf16, #tpu.memory_space<vmem>>, vector<2x32xbf16>
    tpu.vector_store %arg5[%c58_192, %c0_193], %699 {strides = array<i32>} : memref<128x32xbf16, #tpu.memory_space<vmem>>, vector<2x32xbf16>,
    %701 = vector.extract_strided_slice %698 {offsets = [0, 32], sizes = [2, 32], strides = [1, 1]} : vector<2x64xbf16> to vector<2x32xbf16>
    %c68 = arith.constant 68 : index
    %c0_194 = arith.constant 0 : index
    %702 = vector.load %arg6[%c68, %c0_194] : memref<128x32xbf16, #tpu.memory_space<vmem>>, vector<2x32xbf16>
    tpu.vector_store %arg6[%c68, %c0_194], %701 {strides = array<i32>} : memref<128x32xbf16, #tpu.memory_space<vmem>>, vector<2x32xbf16>,
    %c60 = arith.constant 60 : index
    %c0_195 = arith.constant 0 : index
    %703 = vector.load %arg7[%c60, %c0_195] : memref<128x256xf32, #tpu.memory_space<vmem>>, vector<2x256xf32>
    %cst_196 = arith.constant dense<0.000000e+00> : vector<2x256xf32>
    %704 = tpu.matmul %698, %10, %cst_196 {dimension_numbers = #tpu.dot_dimension_numbers<[1], [0], [0], [1], [0, 0, 1, 1], [], []>} : vector<2x64xbf16>, vector<64x256xbf16>, vector<2x256xf32> -> vector<2x256xf32>
    %705 = arith.addf %703, %704 : vector<2x256xf32>
    %706 = arith.negf %705 : vector<2x256xf32>
    %707 = math.exp %706 : vector<2x256xf32>
    %cst_197 = arith.constant 1.000000e+00 : f32
    %708 = vector.broadcast %cst_197 : f32 to vector<2x256xf32>
    %709 = arith.addf %708, %707 : vector<2x256xf32>
    %710 = arith.divf %708, %709 : vector<2x256xf32>
    %711 = vector.extract_strided_slice %710 {offsets = [0, 0], sizes = [2, 64], strides = [1, 1]} : vector<2x256xf32> to vector<2x64xf32>
    %712 = vector.extract_strided_slice %710 {offsets = [0, 64], sizes = [2, 64], strides = [1, 1]} : vector<2x256xf32> to vector<2x64xf32>
    %713 = vector.extract_strided_slice %710 {offsets = [0, 128], sizes = [2, 64], strides = [1, 1]} : vector<2x256xf32> to vector<2x64xf32>
    %714 = vector.extract_strided_slice %705 {offsets = [0, 192], sizes = [2, 64], strides = [1, 1]} : vector<2x256xf32> to vector<2x64xf32>
    %715 = math.tanh %714 : vector<2x64xf32>
    %716 = arith.mulf %711, %695 : vector<2x64xf32>
    %717 = arith.mulf %712, %715 : vector<2x64xf32>
    %718 = arith.addf %716, %717 : vector<2x64xf32>
    %719 = math.tanh %718 : vector<2x64xf32>
    %720 = arith.mulf %713, %719 : vector<2x64xf32>
    %721 = arith.truncf %720 : vector<2x64xf32> to vector<2x64xbf16>
    %722 = vector.extract_strided_slice %721 {offsets = [0, 0], sizes = [2, 32], strides = [1, 1]} : vector<2x64xbf16> to vector<2x32xbf16>
    %c60_198 = arith.constant 60 : index
    %c0_199 = arith.constant 0 : index
    %723 = vector.load %arg5[%c60_198, %c0_199] : memref<128x32xbf16, #tpu.memory_space<vmem>>, vector<2x32xbf16>
    tpu.vector_store %arg5[%c60_198, %c0_199], %722 {strides = array<i32>} : memref<128x32xbf16, #tpu.memory_space<vmem>>, vector<2x32xbf16>,
    %724 = vector.extract_strided_slice %721 {offsets = [0, 32], sizes = [2, 32], strides = [1, 1]} : vector<2x64xbf16> to vector<2x32xbf16>
    %c66 = arith.constant 66 : index
    %c0_200 = arith.constant 0 : index
    %725 = vector.load %arg6[%c66, %c0_200] : memref<128x32xbf16, #tpu.memory_space<vmem>>, vector<2x32xbf16>
    tpu.vector_store %arg6[%c66, %c0_200], %724 {strides = array<i32>} : memref<128x32xbf16, #tpu.memory_space<vmem>>, vector<2x32xbf16>,
    %c62 = arith.constant 62 : index
    %c0_201 = arith.constant 0 : index
    %726 = vector.load %arg7[%c62, %c0_201] : memref<128x256xf32, #tpu.memory_space<vmem>>, vector<2x256xf32>
    %cst_202 = arith.constant dense<0.000000e+00> : vector<2x256xf32>
    %727 = tpu.matmul %721, %10, %cst_202 {dimension_numbers = #tpu.dot_dimension_numbers<[1], [0], [0], [1], [0, 0, 1, 1], [], []>} : vector<2x64xbf16>, vector<64x256xbf16>, vector<2x256xf32> -> vector<2x256xf32>
    %728 = arith.addf %726, %727 : vector<2x256xf32>
    %729 = arith.negf %728 : vector<2x256xf32>
    %730 = math.exp %729 : vector<2x256xf32>
    %cst_203 = arith.constant 1.000000e+00 : f32
    %731 = vector.broadcast %cst_203 : f32 to vector<2x256xf32>
    %732 = arith.addf %731, %730 : vector<2x256xf32>
    %733 = arith.divf %731, %732 : vector<2x256xf32>
    %734 = vector.extract_strided_slice %733 {offsets = [0, 0], sizes = [2, 64], strides = [1, 1]} : vector<2x256xf32> to vector<2x64xf32>
    %735 = vector.extract_strided_slice %733 {offsets = [0, 64], sizes = [2, 64], strides = [1, 1]} : vector<2x256xf32> to vector<2x64xf32>
    %736 = vector.extract_strided_slice %733 {offsets = [0, 128], sizes = [2, 64], strides = [1, 1]} : vector<2x256xf32> to vector<2x64xf32>
    %737 = vector.extract_strided_slice %728 {offsets = [0, 192], sizes = [2, 64], strides = [1, 1]} : vector<2x256xf32> to vector<2x64xf32>
    %738 = math.tanh %737 : vector<2x64xf32>
    %739 = arith.mulf %734, %718 : vector<2x64xf32>
    %740 = arith.mulf %735, %738 : vector<2x64xf32>
    %741 = arith.addf %739, %740 : vector<2x64xf32>
    %742 = math.tanh %741 : vector<2x64xf32>
    %743 = arith.mulf %736, %742 : vector<2x64xf32>
    %744 = arith.truncf %743 : vector<2x64xf32> to vector<2x64xbf16>
    %745 = vector.extract_strided_slice %744 {offsets = [0, 0], sizes = [2, 32], strides = [1, 1]} : vector<2x64xbf16> to vector<2x32xbf16>
    %c62_204 = arith.constant 62 : index
    %c0_205 = arith.constant 0 : index
    %746 = vector.load %arg5[%c62_204, %c0_205] : memref<128x32xbf16, #tpu.memory_space<vmem>>, vector<2x32xbf16>
    tpu.vector_store %arg5[%c62_204, %c0_205], %745 {strides = array<i32>} : memref<128x32xbf16, #tpu.memory_space<vmem>>, vector<2x32xbf16>,
    %747 = vector.extract_strided_slice %744 {offsets = [0, 32], sizes = [2, 32], strides = [1, 1]} : vector<2x64xbf16> to vector<2x32xbf16>
    %c64 = arith.constant 64 : index
    %c0_206 = arith.constant 0 : index
    %748 = vector.load %arg6[%c64, %c0_206] : memref<128x32xbf16, #tpu.memory_space<vmem>>, vector<2x32xbf16>
    tpu.vector_store %arg6[%c64, %c0_206], %747 {strides = array<i32>} : memref<128x32xbf16, #tpu.memory_space<vmem>>, vector<2x32xbf16>,
    %c64_207 = arith.constant 64 : index
    %c0_208 = arith.constant 0 : index
    %749 = vector.load %arg7[%c64_207, %c0_208] : memref<128x256xf32, #tpu.memory_space<vmem>>, vector<2x256xf32>
    %cst_209 = arith.constant dense<0.000000e+00> : vector<2x256xf32>
    %750 = tpu.matmul %744, %10, %cst_209 {dimension_numbers = #tpu.dot_dimension_numbers<[1], [0], [0], [1], [0, 0, 1, 1], [], []>} : vector<2x64xbf16>, vector<64x256xbf16>, vector<2x256xf32> -> vector<2x256xf32>
    %751 = arith.addf %749, %750 : vector<2x256xf32>
    %752 = arith.negf %751 : vector<2x256xf32>
    %753 = math.exp %752 : vector<2x256xf32>
    %cst_210 = arith.constant 1.000000e+00 : f32
    %754 = vector.broadcast %cst_210 : f32 to vector<2x256xf32>
    %755 = arith.addf %754, %753 : vector<2x256xf32>
    %756 = arith.divf %754, %755 : vector<2x256xf32>
    %757 = vector.extract_strided_slice %756 {offsets = [0, 0], sizes = [2, 64], strides = [1, 1]} : vector<2x256xf32> to vector<2x64xf32>
    %758 = vector.extract_strided_slice %756 {offsets = [0, 64], sizes = [2, 64], strides = [1, 1]} : vector<2x256xf32> to vector<2x64xf32>
    %759 = vector.extract_strided_slice %756 {offsets = [0, 128], sizes = [2, 64], strides = [1, 1]} : vector<2x256xf32> to vector<2x64xf32>
    %760 = vector.extract_strided_slice %751 {offsets = [0, 192], sizes = [2, 64], strides = [1, 1]} : vector<2x256xf32> to vector<2x64xf32>
    %761 = math.tanh %760 : vector<2x64xf32>
    %762 = arith.mulf %757, %741 : vector<2x64xf32>
    %763 = arith.mulf %758, %761 : vector<2x64xf32>
    %764 = arith.addf %762, %763 : vector<2x64xf32>
    %765 = math.tanh %764 : vector<2x64xf32>
    %766 = arith.mulf %759, %765 : vector<2x64xf32>
    %767 = arith.truncf %766 : vector<2x64xf32> to vector<2x64xbf16>
    %768 = vector.extract_strided_slice %767 {offsets = [0, 0], sizes = [2, 32], strides = [1, 1]} : vector<2x64xbf16> to vector<2x32xbf16>
    %c64_211 = arith.constant 64 : index
    %c0_212 = arith.constant 0 : index
    %769 = vector.load %arg5[%c64_211, %c0_212] : memref<128x32xbf16, #tpu.memory_space<vmem>>, vector<2x32xbf16>
    tpu.vector_store %arg5[%c64_211, %c0_212], %768 {strides = array<i32>} : memref<128x32xbf16, #tpu.memory_space<vmem>>, vector<2x32xbf16>,
    %770 = vector.extract_strided_slice %767 {offsets = [0, 32], sizes = [2, 32], strides = [1, 1]} : vector<2x64xbf16> to vector<2x32xbf16>
    %c62_213 = arith.constant 62 : index
    %c0_214 = arith.constant 0 : index
    %771 = vector.load %arg6[%c62_213, %c0_214] : memref<128x32xbf16, #tpu.memory_space<vmem>>, vector<2x32xbf16>
    tpu.vector_store %arg6[%c62_213, %c0_214], %770 {strides = array<i32>} : memref<128x32xbf16, #tpu.memory_space<vmem>>, vector<2x32xbf16>,
    %c66_215 = arith.constant 66 : index
    %c0_216 = arith.constant 0 : index
    %772 = vector.load %arg7[%c66_215, %c0_216] : memref<128x256xf32, #tpu.memory_space<vmem>>, vector<2x256xf32>
    %cst_217 = arith.constant dense<0.000000e+00> : vector<2x256xf32>
    %773 = tpu.matmul %767, %10, %cst_217 {dimension_numbers = #tpu.dot_dimension_numbers<[1], [0], [0], [1], [0, 0, 1, 1], [], []>} : vector<2x64xbf16>, vector<64x256xbf16>, vector<2x256xf32> -> vector<2x256xf32>
    %774 = arith.addf %772, %773 : vector<2x256xf32>
    %775 = arith.negf %774 : vector<2x256xf32>
    %776 = math.exp %775 : vector<2x256xf32>
    %cst_218 = arith.constant 1.000000e+00 : f32
    %777 = vector.broadcast %cst_218 : f32 to vector<2x256xf32>
    %778 = arith.addf %777, %776 : vector<2x256xf32>
    %779 = arith.divf %777, %778 : vector<2x256xf32>
    %780 = vector.extract_strided_slice %779 {offsets = [0, 0], sizes = [2, 64], strides = [1, 1]} : vector<2x256xf32> to vector<2x64xf32>
    %781 = vector.extract_strided_slice %779 {offsets = [0, 64], sizes = [2, 64], strides = [1, 1]} : vector<2x256xf32> to vector<2x64xf32>
    %782 = vector.extract_strided_slice %779 {offsets = [0, 128], sizes = [2, 64], strides = [1, 1]} : vector<2x256xf32> to vector<2x64xf32>
    %783 = vector.extract_strided_slice %774 {offsets = [0, 192], sizes = [2, 64], strides = [1, 1]} : vector<2x256xf32> to vector<2x64xf32>
    %784 = math.tanh %783 : vector<2x64xf32>
    %785 = arith.mulf %780, %764 : vector<2x64xf32>
    %786 = arith.mulf %781, %784 : vector<2x64xf32>
    %787 = arith.addf %785, %786 : vector<2x64xf32>
    %788 = math.tanh %787 : vector<2x64xf32>
    %789 = arith.mulf %782, %788 : vector<2x64xf32>
    %790 = arith.truncf %789 : vector<2x64xf32> to vector<2x64xbf16>
    %791 = vector.extract_strided_slice %790 {offsets = [0, 0], sizes = [2, 32], strides = [1, 1]} : vector<2x64xbf16> to vector<2x32xbf16>
    %c66_219 = arith.constant 66 : index
    %c0_220 = arith.constant 0 : index
    %792 = vector.load %arg5[%c66_219, %c0_220] : memref<128x32xbf16, #tpu.memory_space<vmem>>, vector<2x32xbf16>
    tpu.vector_store %arg5[%c66_219, %c0_220], %791 {strides = array<i32>} : memref<128x32xbf16, #tpu.memory_space<vmem>>, vector<2x32xbf16>,
    %793 = vector.extract_strided_slice %790 {offsets = [0, 32], sizes = [2, 32], strides = [1, 1]} : vector<2x64xbf16> to vector<2x32xbf16>
    %c60_221 = arith.constant 60 : index
    %c0_222 = arith.constant 0 : index
    %794 = vector.load %arg6[%c60_221, %c0_222] : memref<128x32xbf16, #tpu.memory_space<vmem>>, vector<2x32xbf16>
    tpu.vector_store %arg6[%c60_221, %c0_222], %793 {strides = array<i32>} : memref<128x32xbf16, #tpu.memory_space<vmem>>, vector<2x32xbf16>,
    %c68_223 = arith.constant 68 : index
    %c0_224 = arith.constant 0 : index
    %795 = vector.load %arg7[%c68_223, %c0_224] : memref<128x256xf32, #tpu.memory_space<vmem>>, vector<2x256xf32>
    %cst_225 = arith.constant dense<0.000000e+00> : vector<2x256xf32>
    %796 = tpu.matmul %790, %10, %cst_225 {dimension_numbers = #tpu.dot_dimension_numbers<[1], [0], [0], [1], [0, 0, 1, 1], [], []>} : vector<2x64xbf16>, vector<64x256xbf16>, vector<2x256xf32> -> vector<2x256xf32>
    %797 = arith.addf %795, %796 : vector<2x256xf32>
    %798 = arith.negf %797 : vector<2x256xf32>
    %799 = math.exp %798 : vector<2x256xf32>
    %cst_226 = arith.constant 1.000000e+00 : f32
    %800 = vector.broadcast %cst_226 : f32 to vector<2x256xf32>
    %801 = arith.addf %800, %799 : vector<2x256xf32>
    %802 = arith.divf %800, %801 : vector<2x256xf32>
    %803 = vector.extract_strided_slice %802 {offsets = [0, 0], sizes = [2, 64], strides = [1, 1]} : vector<2x256xf32> to vector<2x64xf32>
    %804 = vector.extract_strided_slice %802 {offsets = [0, 64], sizes = [2, 64], strides = [1, 1]} : vector<2x256xf32> to vector<2x64xf32>
    %805 = vector.extract_strided_slice %802 {offsets = [0, 128], sizes = [2, 64], strides = [1, 1]} : vector<2x256xf32> to vector<2x64xf32>
    %806 = vector.extract_strided_slice %797 {offsets = [0, 192], sizes = [2, 64], strides = [1, 1]} : vector<2x256xf32> to vector<2x64xf32>
    %807 = math.tanh %806 : vector<2x64xf32>
    %808 = arith.mulf %803, %787 : vector<2x64xf32>
    %809 = arith.mulf %804, %807 : vector<2x64xf32>
    %810 = arith.addf %808, %809 : vector<2x64xf32>
    %811 = math.tanh %810 : vector<2x64xf32>
    %812 = arith.mulf %805, %811 : vector<2x64xf32>
    %813 = arith.truncf %812 : vector<2x64xf32> to vector<2x64xbf16>
    %814 = vector.extract_strided_slice %813 {offsets = [0, 0], sizes = [2, 32], strides = [1, 1]} : vector<2x64xbf16> to vector<2x32xbf16>
    %c68_227 = arith.constant 68 : index
    %c0_228 = arith.constant 0 : index
    %815 = vector.load %arg5[%c68_227, %c0_228] : memref<128x32xbf16, #tpu.memory_space<vmem>>, vector<2x32xbf16>
    tpu.vector_store %arg5[%c68_227, %c0_228], %814 {strides = array<i32>} : memref<128x32xbf16, #tpu.memory_space<vmem>>, vector<2x32xbf16>,
    %816 = vector.extract_strided_slice %813 {offsets = [0, 32], sizes = [2, 32], strides = [1, 1]} : vector<2x64xbf16> to vector<2x32xbf16>
    %c58_229 = arith.constant 58 : index
    %c0_230 = arith.constant 0 : index
    %817 = vector.load %arg6[%c58_229, %c0_230] : memref<128x32xbf16, #tpu.memory_space<vmem>>, vector<2x32xbf16>
    tpu.vector_store %arg6[%c58_229, %c0_230], %816 {strides = array<i32>} : memref<128x32xbf16, #tpu.memory_space<vmem>>, vector<2x32xbf16>,
    %c70_231 = arith.constant 70 : index
    %c0_232 = arith.constant 0 : index
    %818 = vector.load %arg7[%c70_231, %c0_232] : memref<128x256xf32, #tpu.memory_space<vmem>>, vector<2x256xf32>
    %cst_233 = arith.constant dense<0.000000e+00> : vector<2x256xf32>
    %819 = tpu.matmul %813, %10, %cst_233 {dimension_numbers = #tpu.dot_dimension_numbers<[1], [0], [0], [1], [0, 0, 1, 1], [], []>} : vector<2x64xbf16>, vector<64x256xbf16>, vector<2x256xf32> -> vector<2x256xf32>
    %820 = arith.addf %818, %819 : vector<2x256xf32>
    %821 = arith.negf %820 : vector<2x256xf32>
    %822 = math.exp %821 : vector<2x256xf32>
    %cst_234 = arith.constant 1.000000e+00 : f32
    %823 = vector.broadcast %cst_234 : f32 to vector<2x256xf32>
    %824 = arith.addf %823, %822 : vector<2x256xf32>
    %825 = arith.divf %823, %824 : vector<2x256xf32>
    %826 = vector.extract_strided_slice %825 {offsets = [0, 0], sizes = [2, 64], strides = [1, 1]} : vector<2x256xf32> to vector<2x64xf32>
    %827 = vector.extract_strided_slice %825 {offsets = [0, 64], sizes = [2, 64], strides = [1, 1]} : vector<2x256xf32> to vector<2x64xf32>
    %828 = vector.extract_strided_slice %825 {offsets = [0, 128], sizes = [2, 64], strides = [1, 1]} : vector<2x256xf32> to vector<2x64xf32>
    %829 = vector.extract_strided_slice %820 {offsets = [0, 192], sizes = [2, 64], strides = [1, 1]} : vector<2x256xf32> to vector<2x64xf32>
    %830 = math.tanh %829 : vector<2x64xf32>
    %831 = arith.mulf %826, %810 : vector<2x64xf32>
    %832 = arith.mulf %827, %830 : vector<2x64xf32>
    %833 = arith.addf %831, %832 : vector<2x64xf32>
    %834 = math.tanh %833 : vector<2x64xf32>
    %835 = arith.mulf %828, %834 : vector<2x64xf32>
    %836 = arith.truncf %835 : vector<2x64xf32> to vector<2x64xbf16>
    %837 = vector.extract_strided_slice %836 {offsets = [0, 0], sizes = [2, 32], strides = [1, 1]} : vector<2x64xbf16> to vector<2x32xbf16>
    %c70_235 = arith.constant 70 : index
    %c0_236 = arith.constant 0 : index
    %838 = vector.load %arg5[%c70_235, %c0_236] : memref<128x32xbf16, #tpu.memory_space<vmem>>, vector<2x32xbf16>
    tpu.vector_store %arg5[%c70_235, %c0_236], %837 {strides = array<i32>} : memref<128x32xbf16, #tpu.memory_space<vmem>>, vector<2x32xbf16>,
    %839 = vector.extract_strided_slice %836 {offsets = [0, 32], sizes = [2, 32], strides = [1, 1]} : vector<2x64xbf16> to vector<2x32xbf16>
    %c56_237 = arith.constant 56 : index
    %c0_238 = arith.constant 0 : index
    %840 = vector.load %arg6[%c56_237, %c0_238] : memref<128x32xbf16, #tpu.memory_space<vmem>>, vector<2x32xbf16>
    tpu.vector_store %arg6[%c56_237, %c0_238], %839 {strides = array<i32>} : memref<128x32xbf16, #tpu.memory_space<vmem>>, vector<2x32xbf16>,
    %c72_239 = arith.constant 72 : index
    %c0_240 = arith.constant 0 : index
    %841 = vector.load %arg7[%c72_239, %c0_240] : memref<128x256xf32, #tpu.memory_space<vmem>>, vector<2x256xf32>
    %cst_241 = arith.constant dense<0.000000e+00> : vector<2x256xf32>
    %842 = tpu.matmul %836, %10, %cst_241 {dimension_numbers = #tpu.dot_dimension_numbers<[1], [0], [0], [1], [0, 0, 1, 1], [], []>} : vector<2x64xbf16>, vector<64x256xbf16>, vector<2x256xf32> -> vector<2x256xf32>
    %843 = arith.addf %841, %842 : vector<2x256xf32>
    %844 = arith.negf %843 : vector<2x256xf32>
    %845 = math.exp %844 : vector<2x256xf32>
    %cst_242 = arith.constant 1.000000e+00 : f32
    %846 = vector.broadcast %cst_242 : f32 to vector<2x256xf32>
    %847 = arith.addf %846, %845 : vector<2x256xf32>
    %848 = arith.divf %846, %847 : vector<2x256xf32>
    %849 = vector.extract_strided_slice %848 {offsets = [0, 0], sizes = [2, 64], strides = [1, 1]} : vector<2x256xf32> to vector<2x64xf32>
    %850 = vector.extract_strided_slice %848 {offsets = [0, 64], sizes = [2, 64], strides = [1, 1]} : vector<2x256xf32> to vector<2x64xf32>
    %851 = vector.extract_strided_slice %848 {offsets = [0, 128], sizes = [2, 64], strides = [1, 1]} : vector<2x256xf32> to vector<2x64xf32>
    %852 = vector.extract_strided_slice %843 {offsets = [0, 192], sizes = [2, 64], strides = [1, 1]} : vector<2x256xf32> to vector<2x64xf32>
    %853 = math.tanh %852 : vector<2x64xf32>
    %854 = arith.mulf %849, %833 : vector<2x64xf32>
    %855 = arith.mulf %850, %853 : vector<2x64xf32>
    %856 = arith.addf %854, %855 : vector<2x64xf32>
    %857 = math.tanh %856 : vector<2x64xf32>
    %858 = arith.mulf %851, %857 : vector<2x64xf32>
    %859 = arith.truncf %858 : vector<2x64xf32> to vector<2x64xbf16>
    %860 = vector.extract_strided_slice %859 {offsets = [0, 0], sizes = [2, 32], strides = [1, 1]} : vector<2x64xbf16> to vector<2x32xbf16>
    %c72_243 = arith.constant 72 : index
    %c0_244 = arith.constant 0 : index
    %861 = vector.load %arg5[%c72_243, %c0_244] : memref<128x32xbf16, #tpu.memory_space<vmem>>, vector<2x32xbf16>
    tpu.vector_store %arg5[%c72_243, %c0_244], %860 {strides = array<i32>} : memref<128x32xbf16, #tpu.memory_space<vmem>>, vector<2x32xbf16>,
    %862 = vector.extract_strided_slice %859 {offsets = [0, 32], sizes = [2, 32], strides = [1, 1]} : vector<2x64xbf16> to vector<2x32xbf16>
    %c54_245 = arith.constant 54 : index
    %c0_246 = arith.constant 0 : index
    %863 = vector.load %arg6[%c54_245, %c0_246] : memref<128x32xbf16, #tpu.memory_space<vmem>>, vector<2x32xbf16>
    tpu.vector_store %arg6[%c54_245, %c0_246], %862 {strides = array<i32>} : memref<128x32xbf16, #tpu.memory_space<vmem>>, vector<2x32xbf16>,
    %c74_247 = arith.constant 74 : index
    %c0_248 = arith.constant 0 : index
    %864 = vector.load %arg7[%c74_247, %c0_248] : memref<128x256xf32, #tpu.memory_space<vmem>>, vector<2x256xf32>
    %cst_249 = arith.constant dense<0.000000e+00> : vector<2x256xf32>
    %865 = tpu.matmul %859, %10, %cst_249 {dimension_numbers = #tpu.dot_dimension_numbers<[1], [0], [0], [1], [0, 0, 1, 1], [], []>} : vector<2x64xbf16>, vector<64x256xbf16>, vector<2x256xf32> -> vector<2x256xf32>
    %866 = arith.addf %864, %865 : vector<2x256xf32>
    %867 = arith.negf %866 : vector<2x256xf32>
    %868 = math.exp %867 : vector<2x256xf32>
    %cst_250 = arith.constant 1.000000e+00 : f32
    %869 = vector.broadcast %cst_250 : f32 to vector<2x256xf32>
    %870 = arith.addf %869, %868 : vector<2x256xf32>
    %871 = arith.divf %869, %870 : vector<2x256xf32>
    %872 = vector.extract_strided_slice %871 {offsets = [0, 0], sizes = [2, 64], strides = [1, 1]} : vector<2x256xf32> to vector<2x64xf32>
    %873 = vector.extract_strided_slice %871 {offsets = [0, 64], sizes = [2, 64], strides = [1, 1]} : vector<2x256xf32> to vector<2x64xf32>
    %874 = vector.extract_strided_slice %871 {offsets = [0, 128], sizes = [2, 64], strides = [1, 1]} : vector<2x256xf32> to vector<2x64xf32>
    %875 = vector.extract_strided_slice %866 {offsets = [0, 192], sizes = [2, 64], strides = [1, 1]} : vector<2x256xf32> to vector<2x64xf32>
    %876 = math.tanh %875 : vector<2x64xf32>
    %877 = arith.mulf %872, %856 : vector<2x64xf32>
    %878 = arith.mulf %873, %876 : vector<2x64xf32>
    %879 = arith.addf %877, %878 : vector<2x64xf32>
    %880 = math.tanh %879 : vector<2x64xf32>
    %881 = arith.mulf %874, %880 : vector<2x64xf32>
    %882 = arith.truncf %881 : vector<2x64xf32> to vector<2x64xbf16>
    %883 = vector.extract_strided_slice %882 {offsets = [0, 0], sizes = [2, 32], strides = [1, 1]} : vector<2x64xbf16> to vector<2x32xbf16>
    %c74_251 = arith.constant 74 : index
    %c0_252 = arith.constant 0 : index
    %884 = vector.load %arg5[%c74_251, %c0_252] : memref<128x32xbf16, #tpu.memory_space<vmem>>, vector<2x32xbf16>
    tpu.vector_store %arg5[%c74_251, %c0_252], %883 {strides = array<i32>} : memref<128x32xbf16, #tpu.memory_space<vmem>>, vector<2x32xbf16>,
    %885 = vector.extract_strided_slice %882 {offsets = [0, 32], sizes = [2, 32], strides = [1, 1]} : vector<2x64xbf16> to vector<2x32xbf16>
    %c52_253 = arith.constant 52 : index
    %c0_254 = arith.constant 0 : index
    %886 = vector.load %arg6[%c52_253, %c0_254] : memref<128x32xbf16, #tpu.memory_space<vmem>>, vector<2x32xbf16>
    tpu.vector_store %arg6[%c52_253, %c0_254], %885 {strides = array<i32>} : memref<128x32xbf16, #tpu.memory_space<vmem>>, vector<2x32xbf16>,
    %c76_255 = arith.constant 76 : index
    %c0_256 = arith.constant 0 : index
    %887 = vector.load %arg7[%c76_255, %c0_256] : memref<128x256xf32, #tpu.memory_space<vmem>>, vector<2x256xf32>
    %cst_257 = arith.constant dense<0.000000e+00> : vector<2x256xf32>
    %888 = tpu.matmul %882, %10, %cst_257 {dimension_numbers = #tpu.dot_dimension_numbers<[1], [0], [0], [1], [0, 0, 1, 1], [], []>} : vector<2x64xbf16>, vector<64x256xbf16>, vector<2x256xf32> -> vector<2x256xf32>
    %889 = arith.addf %887, %888 : vector<2x256xf32>
    %890 = arith.negf %889 : vector<2x256xf32>
    %891 = math.exp %890 : vector<2x256xf32>
    %cst_258 = arith.constant 1.000000e+00 : f32
    %892 = vector.broadcast %cst_258 : f32 to vector<2x256xf32>
    %893 = arith.addf %892, %891 : vector<2x256xf32>
    %894 = arith.divf %892, %893 : vector<2x256xf32>
    %895 = vector.extract_strided_slice %894 {offsets = [0, 0], sizes = [2, 64], strides = [1, 1]} : vector<2x256xf32> to vector<2x64xf32>
    %896 = vector.extract_strided_slice %894 {offsets = [0, 64], sizes = [2, 64], strides = [1, 1]} : vector<2x256xf32> to vector<2x64xf32>
    %897 = vector.extract_strided_slice %894 {offsets = [0, 128], sizes = [2, 64], strides = [1, 1]} : vector<2x256xf32> to vector<2x64xf32>
    %898 = vector.extract_strided_slice %889 {offsets = [0, 192], sizes = [2, 64], strides = [1, 1]} : vector<2x256xf32> to vector<2x64xf32>
    %899 = math.tanh %898 : vector<2x64xf32>
    %900 = arith.mulf %895, %879 : vector<2x64xf32>
    %901 = arith.mulf %896, %899 : vector<2x64xf32>
    %902 = arith.addf %900, %901 : vector<2x64xf32>
    %903 = math.tanh %902 : vector<2x64xf32>
    %904 = arith.mulf %897, %903 : vector<2x64xf32>
    %905 = arith.truncf %904 : vector<2x64xf32> to vector<2x64xbf16>
    %906 = vector.extract_strided_slice %905 {offsets = [0, 0], sizes = [2, 32], strides = [1, 1]} : vector<2x64xbf16> to vector<2x32xbf16>
    %c76_259 = arith.constant 76 : index
    %c0_260 = arith.constant 0 : index
    %907 = vector.load %arg5[%c76_259, %c0_260] : memref<128x32xbf16, #tpu.memory_space<vmem>>, vector<2x32xbf16>
    tpu.vector_store %arg5[%c76_259, %c0_260], %906 {strides = array<i32>} : memref<128x32xbf16, #tpu.memory_space<vmem>>, vector<2x32xbf16>,
    %908 = vector.extract_strided_slice %905 {offsets = [0, 32], sizes = [2, 32], strides = [1, 1]} : vector<2x64xbf16> to vector<2x32xbf16>
    %c50_261 = arith.constant 50 : index
    %c0_262 = arith.constant 0 : index
    %909 = vector.load %arg6[%c50_261, %c0_262] : memref<128x32xbf16, #tpu.memory_space<vmem>>, vector<2x32xbf16>
    tpu.vector_store %arg6[%c50_261, %c0_262], %908 {strides = array<i32>} : memref<128x32xbf16, #tpu.memory_space<vmem>>, vector<2x32xbf16>,
    %c78_263 = arith.constant 78 : index
    %c0_264 = arith.constant 0 : index
    %910 = vector.load %arg7[%c78_263, %c0_264] : memref<128x256xf32, #tpu.memory_space<vmem>>, vector<2x256xf32>
    %cst_265 = arith.constant dense<0.000000e+00> : vector<2x256xf32>
    %911 = tpu.matmul %905, %10, %cst_265 {dimension_numbers = #tpu.dot_dimension_numbers<[1], [0], [0], [1], [0, 0, 1, 1], [], []>} : vector<2x64xbf16>, vector<64x256xbf16>, vector<2x256xf32> -> vector<2x256xf32>
    %912 = arith.addf %910, %911 : vector<2x256xf32>
    %913 = arith.negf %912 : vector<2x256xf32>
    %914 = math.exp %913 : vector<2x256xf32>
    %cst_266 = arith.constant 1.000000e+00 : f32
    %915 = vector.broadcast %cst_266 : f32 to vector<2x256xf32>
    %916 = arith.addf %915, %914 : vector<2x256xf32>
    %917 = arith.divf %915, %916 : vector<2x256xf32>
    %918 = vector.extract_strided_slice %917 {offsets = [0, 0], sizes = [2, 64], strides = [1, 1]} : vector<2x256xf32> to vector<2x64xf32>
    %919 = vector.extract_strided_slice %917 {offsets = [0, 64], sizes = [2, 64], strides = [1, 1]} : vector<2x256xf32> to vector<2x64xf32>
    %920 = vector.extract_strided_slice %917 {offsets = [0, 128], sizes = [2, 64], strides = [1, 1]} : vector<2x256xf32> to vector<2x64xf32>
    %921 = vector.extract_strided_slice %912 {offsets = [0, 192], sizes = [2, 64], strides = [1, 1]} : vector<2x256xf32> to vector<2x64xf32>
    %922 = math.tanh %921 : vector<2x64xf32>
    %923 = arith.mulf %918, %902 : vector<2x64xf32>
    %924 = arith.mulf %919, %922 : vector<2x64xf32>
    %925 = arith.addf %923, %924 : vector<2x64xf32>
    %926 = math.tanh %925 : vector<2x64xf32>
    %927 = arith.mulf %920, %926 : vector<2x64xf32>
    %928 = arith.truncf %927 : vector<2x64xf32> to vector<2x64xbf16>
    %929 = vector.extract_strided_slice %928 {offsets = [0, 0], sizes = [2, 32], strides = [1, 1]} : vector<2x64xbf16> to vector<2x32xbf16>
    %c78_267 = arith.constant 78 : index
    %c0_268 = arith.constant 0 : index
    %930 = vector.load %arg5[%c78_267, %c0_268] : memref<128x32xbf16, #tpu.memory_space<vmem>>, vector<2x32xbf16>
    tpu.vector_store %arg5[%c78_267, %c0_268], %929 {strides = array<i32>} : memref<128x32xbf16, #tpu.memory_space<vmem>>, vector<2x32xbf16>,
    %931 = vector.extract_strided_slice %928 {offsets = [0, 32], sizes = [2, 32], strides = [1, 1]} : vector<2x64xbf16> to vector<2x32xbf16>
    %c48_269 = arith.constant 48 : index
    %c0_270 = arith.constant 0 : index
    %932 = vector.load %arg6[%c48_269, %c0_270] : memref<128x32xbf16, #tpu.memory_space<vmem>>, vector<2x32xbf16>
    tpu.vector_store %arg6[%c48_269, %c0_270], %931 {strides = array<i32>} : memref<128x32xbf16, #tpu.memory_space<vmem>>, vector<2x32xbf16>,
    %c80_271 = arith.constant 80 : index
    %c0_272 = arith.constant 0 : index
    %933 = vector.load %arg7[%c80_271, %c0_272] : memref<128x256xf32, #tpu.memory_space<vmem>>, vector<2x256xf32>
    %cst_273 = arith.constant dense<0.000000e+00> : vector<2x256xf32>
    %934 = tpu.matmul %928, %10, %cst_273 {dimension_numbers = #tpu.dot_dimension_numbers<[1], [0], [0], [1], [0, 0, 1, 1], [], []>} : vector<2x64xbf16>, vector<64x256xbf16>, vector<2x256xf32> -> vector<2x256xf32>
    %935 = arith.addf %933, %934 : vector<2x256xf32>
    %936 = arith.negf %935 : vector<2x256xf32>
    %937 = math.exp %936 : vector<2x256xf32>
    %cst_274 = arith.constant 1.000000e+00 : f32
    %938 = vector.broadcast %cst_274 : f32 to vector<2x256xf32>
    %939 = arith.addf %938, %937 : vector<2x256xf32>
    %940 = arith.divf %938, %939 : vector<2x256xf32>
    %941 = vector.extract_strided_slice %940 {offsets = [0, 0], sizes = [2, 64], strides = [1, 1]} : vector<2x256xf32> to vector<2x64xf32>
    %942 = vector.extract_strided_slice %940 {offsets = [0, 64], sizes = [2, 64], strides = [1, 1]} : vector<2x256xf32> to vector<2x64xf32>
    %943 = vector.extract_strided_slice %940 {offsets = [0, 128], sizes = [2, 64], strides = [1, 1]} : vector<2x256xf32> to vector<2x64xf32>
    %944 = vector.extract_strided_slice %935 {offsets = [0, 192], sizes = [2, 64], strides = [1, 1]} : vector<2x256xf32> to vector<2x64xf32>
    %945 = math.tanh %944 : vector<2x64xf32>
    %946 = arith.mulf %941, %925 : vector<2x64xf32>
    %947 = arith.mulf %942, %945 : vector<2x64xf32>
    %948 = arith.addf %946, %947 : vector<2x64xf32>
    %949 = math.tanh %948 : vector<2x64xf32>
    %950 = arith.mulf %943, %949 : vector<2x64xf32>
    %951 = arith.truncf %950 : vector<2x64xf32> to vector<2x64xbf16>
    %952 = vector.extract_strided_slice %951 {offsets = [0, 0], sizes = [2, 32], strides = [1, 1]} : vector<2x64xbf16> to vector<2x32xbf16>
    %c80_275 = arith.constant 80 : index
    %c0_276 = arith.constant 0 : index
    %953 = vector.load %arg5[%c80_275, %c0_276] : memref<128x32xbf16, #tpu.memory_space<vmem>>, vector<2x32xbf16>
    tpu.vector_store %arg5[%c80_275, %c0_276], %952 {strides = array<i32>} : memref<128x32xbf16, #tpu.memory_space<vmem>>, vector<2x32xbf16>,
    %954 = vector.extract_strided_slice %951 {offsets = [0, 32], sizes = [2, 32], strides = [1, 1]} : vector<2x64xbf16> to vector<2x32xbf16>
    %c46_277 = arith.constant 46 : index
    %c0_278 = arith.constant 0 : index
    %955 = vector.load %arg6[%c46_277, %c0_278] : memref<128x32xbf16, #tpu.memory_space<vmem>>, vector<2x32xbf16>
    tpu.vector_store %arg6[%c46_277, %c0_278], %954 {strides = array<i32>} : memref<128x32xbf16, #tpu.memory_space<vmem>>, vector<2x32xbf16>,
    %c82_279 = arith.constant 82 : index
    %c0_280 = arith.constant 0 : index
    %956 = vector.load %arg7[%c82_279, %c0_280] : memref<128x256xf32, #tpu.memory_space<vmem>>, vector<2x256xf32>
    %cst_281 = arith.constant dense<0.000000e+00> : vector<2x256xf32>
    %957 = tpu.matmul %951, %10, %cst_281 {dimension_numbers = #tpu.dot_dimension_numbers<[1], [0], [0], [1], [0, 0, 1, 1], [], []>} : vector<2x64xbf16>, vector<64x256xbf16>, vector<2x256xf32> -> vector<2x256xf32>
    %958 = arith.addf %956, %957 : vector<2x256xf32>
    %959 = arith.negf %958 : vector<2x256xf32>
    %960 = math.exp %959 : vector<2x256xf32>
    %cst_282 = arith.constant 1.000000e+00 : f32
    %961 = vector.broadcast %cst_282 : f32 to vector<2x256xf32>
    %962 = arith.addf %961, %960 : vector<2x256xf32>
    %963 = arith.divf %961, %962 : vector<2x256xf32>
    %964 = vector.extract_strided_slice %963 {offsets = [0, 0], sizes = [2, 64], strides = [1, 1]} : vector<2x256xf32> to vector<2x64xf32>
    %965 = vector.extract_strided_slice %963 {offsets = [0, 64], sizes = [2, 64], strides = [1, 1]} : vector<2x256xf32> to vector<2x64xf32>
    %966 = vector.extract_strided_slice %963 {offsets = [0, 128], sizes = [2, 64], strides = [1, 1]} : vector<2x256xf32> to vector<2x64xf32>
    %967 = vector.extract_strided_slice %958 {offsets = [0, 192], sizes = [2, 64], strides = [1, 1]} : vector<2x256xf32> to vector<2x64xf32>
    %968 = math.tanh %967 : vector<2x64xf32>
    %969 = arith.mulf %964, %948 : vector<2x64xf32>
    %970 = arith.mulf %965, %968 : vector<2x64xf32>
    %971 = arith.addf %969, %970 : vector<2x64xf32>
    %972 = math.tanh %971 : vector<2x64xf32>
    %973 = arith.mulf %966, %972 : vector<2x64xf32>
    %974 = arith.truncf %973 : vector<2x64xf32> to vector<2x64xbf16>
    %975 = vector.extract_strided_slice %974 {offsets = [0, 0], sizes = [2, 32], strides = [1, 1]} : vector<2x64xbf16> to vector<2x32xbf16>
    %c82_283 = arith.constant 82 : index
    %c0_284 = arith.constant 0 : index
    %976 = vector.load %arg5[%c82_283, %c0_284] : memref<128x32xbf16, #tpu.memory_space<vmem>>, vector<2x32xbf16>
    tpu.vector_store %arg5[%c82_283, %c0_284], %975 {strides = array<i32>} : memref<128x32xbf16, #tpu.memory_space<vmem>>, vector<2x32xbf16>,
    %977 = vector.extract_strided_slice %974 {offsets = [0, 32], sizes = [2, 32], strides = [1, 1]} : vector<2x64xbf16> to vector<2x32xbf16>
    %c44_285 = arith.constant 44 : index
    %c0_286 = arith.constant 0 : index
    %978 = vector.load %arg6[%c44_285, %c0_286] : memref<128x32xbf16, #tpu.memory_space<vmem>>, vector<2x32xbf16>
    tpu.vector_store %arg6[%c44_285, %c0_286], %977 {strides = array<i32>} : memref<128x32xbf16, #tpu.memory_space<vmem>>, vector<2x32xbf16>,
    %c84_287 = arith.constant 84 : index
    %c0_288 = arith.constant 0 : index
    %979 = vector.load %arg7[%c84_287, %c0_288] : memref<128x256xf32, #tpu.memory_space<vmem>>, vector<2x256xf32>
    %cst_289 = arith.constant dense<0.000000e+00> : vector<2x256xf32>
    %980 = tpu.matmul %974, %10, %cst_289 {dimension_numbers = #tpu.dot_dimension_numbers<[1], [0], [0], [1], [0, 0, 1, 1], [], []>} : vector<2x64xbf16>, vector<64x256xbf16>, vector<2x256xf32> -> vector<2x256xf32>
    %981 = arith.addf %979, %980 : vector<2x256xf32>
    %982 = arith.negf %981 : vector<2x256xf32>
    %983 = math.exp %982 : vector<2x256xf32>
    %cst_290 = arith.constant 1.000000e+00 : f32
    %984 = vector.broadcast %cst_290 : f32 to vector<2x256xf32>
    %985 = arith.addf %984, %983 : vector<2x256xf32>
    %986 = arith.divf %984, %985 : vector<2x256xf32>
    %987 = vector.extract_strided_slice %986 {offsets = [0, 0], sizes = [2, 64], strides = [1, 1]} : vector<2x256xf32> to vector<2x64xf32>
    %988 = vector.extract_strided_slice %986 {offsets = [0, 64], sizes = [2, 64], strides = [1, 1]} : vector<2x256xf32> to vector<2x64xf32>
    %989 = vector.extract_strided_slice %986 {offsets = [0, 128], sizes = [2, 64], strides = [1, 1]} : vector<2x256xf32> to vector<2x64xf32>
    %990 = vector.extract_strided_slice %981 {offsets = [0, 192], sizes = [2, 64], strides = [1, 1]} : vector<2x256xf32> to vector<2x64xf32>
    %991 = math.tanh %990 : vector<2x64xf32>
    %992 = arith.mulf %987, %971 : vector<2x64xf32>
    %993 = arith.mulf %988, %991 : vector<2x64xf32>
    %994 = arith.addf %992, %993 : vector<2x64xf32>
    %995 = math.tanh %994 : vector<2x64xf32>
    %996 = arith.mulf %989, %995 : vector<2x64xf32>
    %997 = arith.truncf %996 : vector<2x64xf32> to vector<2x64xbf16>
    %998 = vector.extract_strided_slice %997 {offsets = [0, 0], sizes = [2, 32], strides = [1, 1]} : vector<2x64xbf16> to vector<2x32xbf16>
    %c84_291 = arith.constant 84 : index
    %c0_292 = arith.constant 0 : index
    %999 = vector.load %arg5[%c84_291, %c0_292] : memref<128x32xbf16, #tpu.memory_space<vmem>>, vector<2x32xbf16>
    tpu.vector_store %arg5[%c84_291, %c0_292], %998 {strides = array<i32>} : memref<128x32xbf16, #tpu.memory_space<vmem>>, vector<2x32xbf16>,
    %1000 = vector.extract_strided_slice %997 {offsets = [0, 32], sizes = [2, 32], strides = [1, 1]} : vector<2x64xbf16> to vector<2x32xbf16>
    %c42_293 = arith.constant 42 : index
    %c0_294 = arith.constant 0 : index
    %1001 = vector.load %arg6[%c42_293, %c0_294] : memref<128x32xbf16, #tpu.memory_space<vmem>>, vector<2x32xbf16>
    tpu.vector_store %arg6[%c42_293, %c0_294], %1000 {strides = array<i32>} : memref<128x32xbf16, #tpu.memory_space<vmem>>, vector<2x32xbf16>,
    %c86_295 = arith.constant 86 : index
    %c0_296 = arith.constant 0 : index
    %1002 = vector.load %arg7[%c86_295, %c0_296] : memref<128x256xf32, #tpu.memory_space<vmem>>, vector<2x256xf32>
    %cst_297 = arith.constant dense<0.000000e+00> : vector<2x256xf32>
    %1003 = tpu.matmul %997, %10, %cst_297 {dimension_numbers = #tpu.dot_dimension_numbers<[1], [0], [0], [1], [0, 0, 1, 1], [], []>} : vector<2x64xbf16>, vector<64x256xbf16>, vector<2x256xf32> -> vector<2x256xf32>
    %1004 = arith.addf %1002, %1003 : vector<2x256xf32>
    %1005 = arith.negf %1004 : vector<2x256xf32>
    %1006 = math.exp %1005 : vector<2x256xf32>
    %cst_298 = arith.constant 1.000000e+00 : f32
    %1007 = vector.broadcast %cst_298 : f32 to vector<2x256xf32>
    %1008 = arith.addf %1007, %1006 : vector<2x256xf32>
    %1009 = arith.divf %1007, %1008 : vector<2x256xf32>
    %1010 = vector.extract_strided_slice %1009 {offsets = [0, 0], sizes = [2, 64], strides = [1, 1]} : vector<2x256xf32> to vector<2x64xf32>
    %1011 = vector.extract_strided_slice %1009 {offsets = [0, 64], sizes = [2, 64], strides = [1, 1]} : vector<2x256xf32> to vector<2x64xf32>
    %1012 = vector.extract_strided_slice %1009 {offsets = [0, 128], sizes = [2, 64], strides = [1, 1]} : vector<2x256xf32> to vector<2x64xf32>
    %1013 = vector.extract_strided_slice %1004 {offsets = [0, 192], sizes = [2, 64], strides = [1, 1]} : vector<2x256xf32> to vector<2x64xf32>
    %1014 = math.tanh %1013 : vector<2x64xf32>
    %1015 = arith.mulf %1010, %994 : vector<2x64xf32>
    %1016 = arith.mulf %1011, %1014 : vector<2x64xf32>
    %1017 = arith.addf %1015, %1016 : vector<2x64xf32>
    %1018 = math.tanh %1017 : vector<2x64xf32>
    %1019 = arith.mulf %1012, %1018 : vector<2x64xf32>
    %1020 = arith.truncf %1019 : vector<2x64xf32> to vector<2x64xbf16>
    %1021 = vector.extract_strided_slice %1020 {offsets = [0, 0], sizes = [2, 32], strides = [1, 1]} : vector<2x64xbf16> to vector<2x32xbf16>
    %c86_299 = arith.constant 86 : index
    %c0_300 = arith.constant 0 : index
    %1022 = vector.load %arg5[%c86_299, %c0_300] : memref<128x32xbf16, #tpu.memory_space<vmem>>, vector<2x32xbf16>
    tpu.vector_store %arg5[%c86_299, %c0_300], %1021 {strides = array<i32>} : memref<128x32xbf16, #tpu.memory_space<vmem>>, vector<2x32xbf16>,
    %1023 = vector.extract_strided_slice %1020 {offsets = [0, 32], sizes = [2, 32], strides = [1, 1]} : vector<2x64xbf16> to vector<2x32xbf16>
    %c40_301 = arith.constant 40 : index
    %c0_302 = arith.constant 0 : index
    %1024 = vector.load %arg6[%c40_301, %c0_302] : memref<128x32xbf16, #tpu.memory_space<vmem>>, vector<2x32xbf16>
    tpu.vector_store %arg6[%c40_301, %c0_302], %1023 {strides = array<i32>} : memref<128x32xbf16, #tpu.memory_space<vmem>>, vector<2x32xbf16>,
    %c88_303 = arith.constant 88 : index
    %c0_304 = arith.constant 0 : index
    %1025 = vector.load %arg7[%c88_303, %c0_304] : memref<128x256xf32, #tpu.memory_space<vmem>>, vector<2x256xf32>
    %cst_305 = arith.constant dense<0.000000e+00> : vector<2x256xf32>
    %1026 = tpu.matmul %1020, %10, %cst_305 {dimension_numbers = #tpu.dot_dimension_numbers<[1], [0], [0], [1], [0, 0, 1, 1], [], []>} : vector<2x64xbf16>, vector<64x256xbf16>, vector<2x256xf32> -> vector<2x256xf32>
    %1027 = arith.addf %1025, %1026 : vector<2x256xf32>
    %1028 = arith.negf %1027 : vector<2x256xf32>
    %1029 = math.exp %1028 : vector<2x256xf32>
    %cst_306 = arith.constant 1.000000e+00 : f32
    %1030 = vector.broadcast %cst_306 : f32 to vector<2x256xf32>
    %1031 = arith.addf %1030, %1029 : vector<2x256xf32>
    %1032 = arith.divf %1030, %1031 : vector<2x256xf32>
    %1033 = vector.extract_strided_slice %1032 {offsets = [0, 0], sizes = [2, 64], strides = [1, 1]} : vector<2x256xf32> to vector<2x64xf32>
    %1034 = vector.extract_strided_slice %1032 {offsets = [0, 64], sizes = [2, 64], strides = [1, 1]} : vector<2x256xf32> to vector<2x64xf32>
    %1035 = vector.extract_strided_slice %1032 {offsets = [0, 128], sizes = [2, 64], strides = [1, 1]} : vector<2x256xf32> to vector<2x64xf32>
    %1036 = vector.extract_strided_slice %1027 {offsets = [0, 192], sizes = [2, 64], strides = [1, 1]} : vector<2x256xf32> to vector<2x64xf32>
    %1037 = math.tanh %1036 : vector<2x64xf32>
    %1038 = arith.mulf %1033, %1017 : vector<2x64xf32>
    %1039 = arith.mulf %1034, %1037 : vector<2x64xf32>
    %1040 = arith.addf %1038, %1039 : vector<2x64xf32>
    %1041 = math.tanh %1040 : vector<2x64xf32>
    %1042 = arith.mulf %1035, %1041 : vector<2x64xf32>
    %1043 = arith.truncf %1042 : vector<2x64xf32> to vector<2x64xbf16>
    %1044 = vector.extract_strided_slice %1043 {offsets = [0, 0], sizes = [2, 32], strides = [1, 1]} : vector<2x64xbf16> to vector<2x32xbf16>
    %c88_307 = arith.constant 88 : index
    %c0_308 = arith.constant 0 : index
    %1045 = vector.load %arg5[%c88_307, %c0_308] : memref<128x32xbf16, #tpu.memory_space<vmem>>, vector<2x32xbf16>
    tpu.vector_store %arg5[%c88_307, %c0_308], %1044 {strides = array<i32>} : memref<128x32xbf16, #tpu.memory_space<vmem>>, vector<2x32xbf16>,
    %1046 = vector.extract_strided_slice %1043 {offsets = [0, 32], sizes = [2, 32], strides = [1, 1]} : vector<2x64xbf16> to vector<2x32xbf16>
    %c38_309 = arith.constant 38 : index
    %c0_310 = arith.constant 0 : index
    %1047 = vector.load %arg6[%c38_309, %c0_310] : memref<128x32xbf16, #tpu.memory_space<vmem>>, vector<2x32xbf16>
    tpu.vector_store %arg6[%c38_309, %c0_310], %1046 {strides = array<i32>} : memref<128x32xbf16, #tpu.memory_space<vmem>>, vector<2x32xbf16>,
    %c90_311 = arith.constant 90 : index
    %c0_312 = arith.constant 0 : index
    %1048 = vector.load %arg7[%c90_311, %c0_312] : memref<128x256xf32, #tpu.memory_space<vmem>>, vector<2x256xf32>
    %cst_313 = arith.constant dense<0.000000e+00> : vector<2x256xf32>
    %1049 = tpu.matmul %1043, %10, %cst_313 {dimension_numbers = #tpu.dot_dimension_numbers<[1], [0], [0], [1], [0, 0, 1, 1], [], []>} : vector<2x64xbf16>, vector<64x256xbf16>, vector<2x256xf32> -> vector<2x256xf32>
    %1050 = arith.addf %1048, %1049 : vector<2x256xf32>
    %1051 = arith.negf %1050 : vector<2x256xf32>
    %1052 = math.exp %1051 : vector<2x256xf32>
    %cst_314 = arith.constant 1.000000e+00 : f32
    %1053 = vector.broadcast %cst_314 : f32 to vector<2x256xf32>
    %1054 = arith.addf %1053, %1052 : vector<2x256xf32>
    %1055 = arith.divf %1053, %1054 : vector<2x256xf32>
    %1056 = vector.extract_strided_slice %1055 {offsets = [0, 0], sizes = [2, 64], strides = [1, 1]} : vector<2x256xf32> to vector<2x64xf32>
    %1057 = vector.extract_strided_slice %1055 {offsets = [0, 64], sizes = [2, 64], strides = [1, 1]} : vector<2x256xf32> to vector<2x64xf32>
    %1058 = vector.extract_strided_slice %1055 {offsets = [0, 128], sizes = [2, 64], strides = [1, 1]} : vector<2x256xf32> to vector<2x64xf32>
    %1059 = vector.extract_strided_slice %1050 {offsets = [0, 192], sizes = [2, 64], strides = [1, 1]} : vector<2x256xf32> to vector<2x64xf32>
    %1060 = math.tanh %1059 : vector<2x64xf32>
    %1061 = arith.mulf %1056, %1040 : vector<2x64xf32>
    %1062 = arith.mulf %1057, %1060 : vector<2x64xf32>
    %1063 = arith.addf %1061, %1062 : vector<2x64xf32>
    %1064 = math.tanh %1063 : vector<2x64xf32>
    %1065 = arith.mulf %1058, %1064 : vector<2x64xf32>
    %1066 = arith.truncf %1065 : vector<2x64xf32> to vector<2x64xbf16>
    %1067 = vector.extract_strided_slice %1066 {offsets = [0, 0], sizes = [2, 32], strides = [1, 1]} : vector<2x64xbf16> to vector<2x32xbf16>
    %c90_315 = arith.constant 90 : index
    %c0_316 = arith.constant 0 : index
    %1068 = vector.load %arg5[%c90_315, %c0_316] : memref<128x32xbf16, #tpu.memory_space<vmem>>, vector<2x32xbf16>
    tpu.vector_store %arg5[%c90_315, %c0_316], %1067 {strides = array<i32>} : memref<128x32xbf16, #tpu.memory_space<vmem>>, vector<2x32xbf16>,
    %1069 = vector.extract_strided_slice %1066 {offsets = [0, 32], sizes = [2, 32], strides = [1, 1]} : vector<2x64xbf16> to vector<2x32xbf16>
    %c36_317 = arith.constant 36 : index
    %c0_318 = arith.constant 0 : index
    %1070 = vector.load %arg6[%c36_317, %c0_318] : memref<128x32xbf16, #tpu.memory_space<vmem>>, vector<2x32xbf16>
    tpu.vector_store %arg6[%c36_317, %c0_318], %1069 {strides = array<i32>} : memref<128x32xbf16, #tpu.memory_space<vmem>>, vector<2x32xbf16>,
    %c92_319 = arith.constant 92 : index
    %c0_320 = arith.constant 0 : index
    %1071 = vector.load %arg7[%c92_319, %c0_320] : memref<128x256xf32, #tpu.memory_space<vmem>>, vector<2x256xf32>
    %cst_321 = arith.constant dense<0.000000e+00> : vector<2x256xf32>
    %1072 = tpu.matmul %1066, %10, %cst_321 {dimension_numbers = #tpu.dot_dimension_numbers<[1], [0], [0], [1], [0, 0, 1, 1], [], []>} : vector<2x64xbf16>, vector<64x256xbf16>, vector<2x256xf32> -> vector<2x256xf32>
    %1073 = arith.addf %1071, %1072 : vector<2x256xf32>
    %1074 = arith.negf %1073 : vector<2x256xf32>
    %1075 = math.exp %1074 : vector<2x256xf32>
    %cst_322 = arith.constant 1.000000e+00 : f32
    %1076 = vector.broadcast %cst_322 : f32 to vector<2x256xf32>
    %1077 = arith.addf %1076, %1075 : vector<2x256xf32>
    %1078 = arith.divf %1076, %1077 : vector<2x256xf32>
    %1079 = vector.extract_strided_slice %1078 {offsets = [0, 0], sizes = [2, 64], strides = [1, 1]} : vector<2x256xf32> to vector<2x64xf32>
    %1080 = vector.extract_strided_slice %1078 {offsets = [0, 64], sizes = [2, 64], strides = [1, 1]} : vector<2x256xf32> to vector<2x64xf32>
    %1081 = vector.extract_strided_slice %1078 {offsets = [0, 128], sizes = [2, 64], strides = [1, 1]} : vector<2x256xf32> to vector<2x64xf32>
    %1082 = vector.extract_strided_slice %1073 {offsets = [0, 192], sizes = [2, 64], strides = [1, 1]} : vector<2x256xf32> to vector<2x64xf32>
    %1083 = math.tanh %1082 : vector<2x64xf32>
    %1084 = arith.mulf %1079, %1063 : vector<2x64xf32>
    %1085 = arith.mulf %1080, %1083 : vector<2x64xf32>
    %1086 = arith.addf %1084, %1085 : vector<2x64xf32>
    %1087 = math.tanh %1086 : vector<2x64xf32>
    %1088 = arith.mulf %1081, %1087 : vector<2x64xf32>
    %1089 = arith.truncf %1088 : vector<2x64xf32> to vector<2x64xbf16>
    %1090 = vector.extract_strided_slice %1089 {offsets = [0, 0], sizes = [2, 32], strides = [1, 1]} : vector<2x64xbf16> to vector<2x32xbf16>
    %c92_323 = arith.constant 92 : index
    %c0_324 = arith.constant 0 : index
    %1091 = vector.load %arg5[%c92_323, %c0_324] : memref<128x32xbf16, #tpu.memory_space<vmem>>, vector<2x32xbf16>
    tpu.vector_store %arg5[%c92_323, %c0_324], %1090 {strides = array<i32>} : memref<128x32xbf16, #tpu.memory_space<vmem>>, vector<2x32xbf16>,
    %1092 = vector.extract_strided_slice %1089 {offsets = [0, 32], sizes = [2, 32], strides = [1, 1]} : vector<2x64xbf16> to vector<2x32xbf16>
    %c34_325 = arith.constant 34 : index
    %c0_326 = arith.constant 0 : index
    %1093 = vector.load %arg6[%c34_325, %c0_326] : memref<128x32xbf16, #tpu.memory_space<vmem>>, vector<2x32xbf16>
    tpu.vector_store %arg6[%c34_325, %c0_326], %1092 {strides = array<i32>} : memref<128x32xbf16, #tpu.memory_space<vmem>>, vector<2x32xbf16>,
    %c94_327 = arith.constant 94 : index
    %c0_328 = arith.constant 0 : index
    %1094 = vector.load %arg7[%c94_327, %c0_328] : memref<128x256xf32, #tpu.memory_space<vmem>>, vector<2x256xf32>
    %cst_329 = arith.constant dense<0.000000e+00> : vector<2x256xf32>
    %1095 = tpu.matmul %1089, %10, %cst_329 {dimension_numbers = #tpu.dot_dimension_numbers<[1], [0], [0], [1], [0, 0, 1, 1], [], []>} : vector<2x64xbf16>, vector<64x256xbf16>, vector<2x256xf32> -> vector<2x256xf32>
    %1096 = arith.addf %1094, %1095 : vector<2x256xf32>
    %1097 = arith.negf %1096 : vector<2x256xf32>
    %1098 = math.exp %1097 : vector<2x256xf32>
    %cst_330 = arith.constant 1.000000e+00 : f32
    %1099 = vector.broadcast %cst_330 : f32 to vector<2x256xf32>
    %1100 = arith.addf %1099, %1098 : vector<2x256xf32>
    %1101 = arith.divf %1099, %1100 : vector<2x256xf32>
    %1102 = vector.extract_strided_slice %1101 {offsets = [0, 0], sizes = [2, 64], strides = [1, 1]} : vector<2x256xf32> to vector<2x64xf32>
    %1103 = vector.extract_strided_slice %1101 {offsets = [0, 64], sizes = [2, 64], strides = [1, 1]} : vector<2x256xf32> to vector<2x64xf32>
    %1104 = vector.extract_strided_slice %1101 {offsets = [0, 128], sizes = [2, 64], strides = [1, 1]} : vector<2x256xf32> to vector<2x64xf32>
    %1105 = vector.extract_strided_slice %1096 {offsets = [0, 192], sizes = [2, 64], strides = [1, 1]} : vector<2x256xf32> to vector<2x64xf32>
    %1106 = math.tanh %1105 : vector<2x64xf32>
    %1107 = arith.mulf %1102, %1086 : vector<2x64xf32>
    %1108 = arith.mulf %1103, %1106 : vector<2x64xf32>
    %1109 = arith.addf %1107, %1108 : vector<2x64xf32>
    %1110 = math.tanh %1109 : vector<2x64xf32>
    %1111 = arith.mulf %1104, %1110 : vector<2x64xf32>
    %1112 = arith.truncf %1111 : vector<2x64xf32> to vector<2x64xbf16>
    %1113 = vector.extract_strided_slice %1112 {offsets = [0, 0], sizes = [2, 32], strides = [1, 1]} : vector<2x64xbf16> to vector<2x32xbf16>
    %c94_331 = arith.constant 94 : index
    %c0_332 = arith.constant 0 : index
    %1114 = vector.load %arg5[%c94_331, %c0_332] : memref<128x32xbf16, #tpu.memory_space<vmem>>, vector<2x32xbf16>
    tpu.vector_store %arg5[%c94_331, %c0_332], %1113 {strides = array<i32>} : memref<128x32xbf16, #tpu.memory_space<vmem>>, vector<2x32xbf16>,
    %1115 = vector.extract_strided_slice %1112 {offsets = [0, 32], sizes = [2, 32], strides = [1, 1]} : vector<2x64xbf16> to vector<2x32xbf16>
    %c32_333 = arith.constant 32 : index
    %c0_334 = arith.constant 0 : index
    %1116 = vector.load %arg6[%c32_333, %c0_334] : memref<128x32xbf16, #tpu.memory_space<vmem>>, vector<2x32xbf16>
    tpu.vector_store %arg6[%c32_333, %c0_334], %1115 {strides = array<i32>} : memref<128x32xbf16, #tpu.memory_space<vmem>>, vector<2x32xbf16>,
    %c96_335 = arith.constant 96 : index
    %c0_336 = arith.constant 0 : index
    %1117 = vector.load %arg7[%c96_335, %c0_336] : memref<128x256xf32, #tpu.memory_space<vmem>>, vector<2x256xf32>
    %cst_337 = arith.constant dense<0.000000e+00> : vector<2x256xf32>
    %1118 = tpu.matmul %1112, %10, %cst_337 {dimension_numbers = #tpu.dot_dimension_numbers<[1], [0], [0], [1], [0, 0, 1, 1], [], []>} : vector<2x64xbf16>, vector<64x256xbf16>, vector<2x256xf32> -> vector<2x256xf32>
    %1119 = arith.addf %1117, %1118 : vector<2x256xf32>
    %1120 = arith.negf %1119 : vector<2x256xf32>
    %1121 = math.exp %1120 : vector<2x256xf32>
    %cst_338 = arith.constant 1.000000e+00 : f32
    %1122 = vector.broadcast %cst_338 : f32 to vector<2x256xf32>
    %1123 = arith.addf %1122, %1121 : vector<2x256xf32>
    %1124 = arith.divf %1122, %1123 : vector<2x256xf32>
    %1125 = vector.extract_strided_slice %1124 {offsets = [0, 0], sizes = [2, 64], strides = [1, 1]} : vector<2x256xf32> to vector<2x64xf32>
    %1126 = vector.extract_strided_slice %1124 {offsets = [0, 64], sizes = [2, 64], strides = [1, 1]} : vector<2x256xf32> to vector<2x64xf32>
    %1127 = vector.extract_strided_slice %1124 {offsets = [0, 128], sizes = [2, 64], strides = [1, 1]} : vector<2x256xf32> to vector<2x64xf32>
    %1128 = vector.extract_strided_slice %1119 {offsets = [0, 192], sizes = [2, 64], strides = [1, 1]} : vector<2x256xf32> to vector<2x64xf32>
    %1129 = math.tanh %1128 : vector<2x64xf32>
    %1130 = arith.mulf %1125, %1109 : vector<2x64xf32>
    %1131 = arith.mulf %1126, %1129 : vector<2x64xf32>
    %1132 = arith.addf %1130, %1131 : vector<2x64xf32>
    %1133 = math.tanh %1132 : vector<2x64xf32>
    %1134 = arith.mulf %1127, %1133 : vector<2x64xf32>
    %1135 = arith.truncf %1134 : vector<2x64xf32> to vector<2x64xbf16>
    %1136 = vector.extract_strided_slice %1135 {offsets = [0, 0], sizes = [2, 32], strides = [1, 1]} : vector<2x64xbf16> to vector<2x32xbf16>
    %c96_339 = arith.constant 96 : index
    %c0_340 = arith.constant 0 : index
    %1137 = vector.load %arg5[%c96_339, %c0_340] : memref<128x32xbf16, #tpu.memory_space<vmem>>, vector<2x32xbf16>
    tpu.vector_store %arg5[%c96_339, %c0_340], %1136 {strides = array<i32>} : memref<128x32xbf16, #tpu.memory_space<vmem>>, vector<2x32xbf16>,
    %1138 = vector.extract_strided_slice %1135 {offsets = [0, 32], sizes = [2, 32], strides = [1, 1]} : vector<2x64xbf16> to vector<2x32xbf16>
    %c30_341 = arith.constant 30 : index
    %c0_342 = arith.constant 0 : index
    %1139 = vector.load %arg6[%c30_341, %c0_342] : memref<128x32xbf16, #tpu.memory_space<vmem>>, vector<2x32xbf16>
    tpu.vector_store %arg6[%c30_341, %c0_342], %1138 {strides = array<i32>} : memref<128x32xbf16, #tpu.memory_space<vmem>>, vector<2x32xbf16>,
    %c98_343 = arith.constant 98 : index
    %c0_344 = arith.constant 0 : index
    %1140 = vector.load %arg7[%c98_343, %c0_344] : memref<128x256xf32, #tpu.memory_space<vmem>>, vector<2x256xf32>
    %cst_345 = arith.constant dense<0.000000e+00> : vector<2x256xf32>
    %1141 = tpu.matmul %1135, %10, %cst_345 {dimension_numbers = #tpu.dot_dimension_numbers<[1], [0], [0], [1], [0, 0, 1, 1], [], []>} : vector<2x64xbf16>, vector<64x256xbf16>, vector<2x256xf32> -> vector<2x256xf32>
    %1142 = arith.addf %1140, %1141 : vector<2x256xf32>
    %1143 = arith.negf %1142 : vector<2x256xf32>
    %1144 = math.exp %1143 : vector<2x256xf32>
    %cst_346 = arith.constant 1.000000e+00 : f32
    %1145 = vector.broadcast %cst_346 : f32 to vector<2x256xf32>
    %1146 = arith.addf %1145, %1144 : vector<2x256xf32>
    %1147 = arith.divf %1145, %1146 : vector<2x256xf32>
    %1148 = vector.extract_strided_slice %1147 {offsets = [0, 0], sizes = [2, 64], strides = [1, 1]} : vector<2x256xf32> to vector<2x64xf32>
    %1149 = vector.extract_strided_slice %1147 {offsets = [0, 64], sizes = [2, 64], strides = [1, 1]} : vector<2x256xf32> to vector<2x64xf32>
    %1150 = vector.extract_strided_slice %1147 {offsets = [0, 128], sizes = [2, 64], strides = [1, 1]} : vector<2x256xf32> to vector<2x64xf32>
    %1151 = vector.extract_strided_slice %1142 {offsets = [0, 192], sizes = [2, 64], strides = [1, 1]} : vector<2x256xf32> to vector<2x64xf32>
    %1152 = math.tanh %1151 : vector<2x64xf32>
    %1153 = arith.mulf %1148, %1132 : vector<2x64xf32>
    %1154 = arith.mulf %1149, %1152 : vector<2x64xf32>
    %1155 = arith.addf %1153, %1154 : vector<2x64xf32>
    %1156 = math.tanh %1155 : vector<2x64xf32>
    %1157 = arith.mulf %1150, %1156 : vector<2x64xf32>
    %1158 = arith.truncf %1157 : vector<2x64xf32> to vector<2x64xbf16>
    %1159 = vector.extract_strided_slice %1158 {offsets = [0, 0], sizes = [2, 32], strides = [1, 1]} : vector<2x64xbf16> to vector<2x32xbf16>
    %c98_347 = arith.constant 98 : index
    %c0_348 = arith.constant 0 : index
    %1160 = vector.load %arg5[%c98_347, %c0_348] : memref<128x32xbf16, #tpu.memory_space<vmem>>, vector<2x32xbf16>
    tpu.vector_store %arg5[%c98_347, %c0_348], %1159 {strides = array<i32>} : memref<128x32xbf16, #tpu.memory_space<vmem>>, vector<2x32xbf16>,
    %1161 = vector.extract_strided_slice %1158 {offsets = [0, 32], sizes = [2, 32], strides = [1, 1]} : vector<2x64xbf16> to vector<2x32xbf16>
    %c28_349 = arith.constant 28 : index
    %c0_350 = arith.constant 0 : index
    %1162 = vector.load %arg6[%c28_349, %c0_350] : memref<128x32xbf16, #tpu.memory_space<vmem>>, vector<2x32xbf16>
    tpu.vector_store %arg6[%c28_349, %c0_350], %1161 {strides = array<i32>} : memref<128x32xbf16, #tpu.memory_space<vmem>>, vector<2x32xbf16>,
    %c100_351 = arith.constant 100 : index
    %c0_352 = arith.constant 0 : index
    %1163 = vector.load %arg7[%c100_351, %c0_352] : memref<128x256xf32, #tpu.memory_space<vmem>>, vector<2x256xf32>
    %cst_353 = arith.constant dense<0.000000e+00> : vector<2x256xf32>
    %1164 = tpu.matmul %1158, %10, %cst_353 {dimension_numbers = #tpu.dot_dimension_numbers<[1], [0], [0], [1], [0, 0, 1, 1], [], []>} : vector<2x64xbf16>, vector<64x256xbf16>, vector<2x256xf32> -> vector<2x256xf32>
    %1165 = arith.addf %1163, %1164 : vector<2x256xf32>
    %1166 = arith.negf %1165 : vector<2x256xf32>
    %1167 = math.exp %1166 : vector<2x256xf32>
    %cst_354 = arith.constant 1.000000e+00 : f32
    %1168 = vector.broadcast %cst_354 : f32 to vector<2x256xf32>
    %1169 = arith.addf %1168, %1167 : vector<2x256xf32>
    %1170 = arith.divf %1168, %1169 : vector<2x256xf32>
    %1171 = vector.extract_strided_slice %1170 {offsets = [0, 0], sizes = [2, 64], strides = [1, 1]} : vector<2x256xf32> to vector<2x64xf32>
    %1172 = vector.extract_strided_slice %1170 {offsets = [0, 64], sizes = [2, 64], strides = [1, 1]} : vector<2x256xf32> to vector<2x64xf32>
    %1173 = vector.extract_strided_slice %1170 {offsets = [0, 128], sizes = [2, 64], strides = [1, 1]} : vector<2x256xf32> to vector<2x64xf32>
    %1174 = vector.extract_strided_slice %1165 {offsets = [0, 192], sizes = [2, 64], strides = [1, 1]} : vector<2x256xf32> to vector<2x64xf32>
    %1175 = math.tanh %1174 : vector<2x64xf32>
    %1176 = arith.mulf %1171, %1155 : vector<2x64xf32>
    %1177 = arith.mulf %1172, %1175 : vector<2x64xf32>
    %1178 = arith.addf %1176, %1177 : vector<2x64xf32>
    %1179 = math.tanh %1178 : vector<2x64xf32>
    %1180 = arith.mulf %1173, %1179 : vector<2x64xf32>
    %1181 = arith.truncf %1180 : vector<2x64xf32> to vector<2x64xbf16>
    %1182 = vector.extract_strided_slice %1181 {offsets = [0, 0], sizes = [2, 32], strides = [1, 1]} : vector<2x64xbf16> to vector<2x32xbf16>
    %c100_355 = arith.constant 100 : index
    %c0_356 = arith.constant 0 : index
    %1183 = vector.load %arg5[%c100_355, %c0_356] : memref<128x32xbf16, #tpu.memory_space<vmem>>, vector<2x32xbf16>
    tpu.vector_store %arg5[%c100_355, %c0_356], %1182 {strides = array<i32>} : memref<128x32xbf16, #tpu.memory_space<vmem>>, vector<2x32xbf16>,
    %1184 = vector.extract_strided_slice %1181 {offsets = [0, 32], sizes = [2, 32], strides = [1, 1]} : vector<2x64xbf16> to vector<2x32xbf16>
    %c26_357 = arith.constant 26 : index
    %c0_358 = arith.constant 0 : index
    %1185 = vector.load %arg6[%c26_357, %c0_358] : memref<128x32xbf16, #tpu.memory_space<vmem>>, vector<2x32xbf16>
    tpu.vector_store %arg6[%c26_357, %c0_358], %1184 {strides = array<i32>} : memref<128x32xbf16, #tpu.memory_space<vmem>>, vector<2x32xbf16>,
    %c102_359 = arith.constant 102 : index
    %c0_360 = arith.constant 0 : index
    %1186 = vector.load %arg7[%c102_359, %c0_360] : memref<128x256xf32, #tpu.memory_space<vmem>>, vector<2x256xf32>
    %cst_361 = arith.constant dense<0.000000e+00> : vector<2x256xf32>
    %1187 = tpu.matmul %1181, %10, %cst_361 {dimension_numbers = #tpu.dot_dimension_numbers<[1], [0], [0], [1], [0, 0, 1, 1], [], []>} : vector<2x64xbf16>, vector<64x256xbf16>, vector<2x256xf32> -> vector<2x256xf32>
    %1188 = arith.addf %1186, %1187 : vector<2x256xf32>
    %1189 = arith.negf %1188 : vector<2x256xf32>
    %1190 = math.exp %1189 : vector<2x256xf32>
    %cst_362 = arith.constant 1.000000e+00 : f32
    %1191 = vector.broadcast %cst_362 : f32 to vector<2x256xf32>
    %1192 = arith.addf %1191, %1190 : vector<2x256xf32>
    %1193 = arith.divf %1191, %1192 : vector<2x256xf32>
    %1194 = vector.extract_strided_slice %1193 {offsets = [0, 0], sizes = [2, 64], strides = [1, 1]} : vector<2x256xf32> to vector<2x64xf32>
    %1195 = vector.extract_strided_slice %1193 {offsets = [0, 64], sizes = [2, 64], strides = [1, 1]} : vector<2x256xf32> to vector<2x64xf32>
    %1196 = vector.extract_strided_slice %1193 {offsets = [0, 128], sizes = [2, 64], strides = [1, 1]} : vector<2x256xf32> to vector<2x64xf32>
    %1197 = vector.extract_strided_slice %1188 {offsets = [0, 192], sizes = [2, 64], strides = [1, 1]} : vector<2x256xf32> to vector<2x64xf32>
    %1198 = math.tanh %1197 : vector<2x64xf32>
    %1199 = arith.mulf %1194, %1178 : vector<2x64xf32>
    %1200 = arith.mulf %1195, %1198 : vector<2x64xf32>
    %1201 = arith.addf %1199, %1200 : vector<2x64xf32>
    %1202 = math.tanh %1201 : vector<2x64xf32>
    %1203 = arith.mulf %1196, %1202 : vector<2x64xf32>
    %1204 = arith.truncf %1203 : vector<2x64xf32> to vector<2x64xbf16>
    %1205 = vector.extract_strided_slice %1204 {offsets = [0, 0], sizes = [2, 32], strides = [1, 1]} : vector<2x64xbf16> to vector<2x32xbf16>
    %c102_363 = arith.constant 102 : index
    %c0_364 = arith.constant 0 : index
    %1206 = vector.load %arg5[%c102_363, %c0_364] : memref<128x32xbf16, #tpu.memory_space<vmem>>, vector<2x32xbf16>
    tpu.vector_store %arg5[%c102_363, %c0_364], %1205 {strides = array<i32>} : memref<128x32xbf16, #tpu.memory_space<vmem>>, vector<2x32xbf16>,
    %1207 = vector.extract_strided_slice %1204 {offsets = [0, 32], sizes = [2, 32], strides = [1, 1]} : vector<2x64xbf16> to vector<2x32xbf16>
    %c24_365 = arith.constant 24 : index
    %c0_366 = arith.constant 0 : index
    %1208 = vector.load %arg6[%c24_365, %c0_366] : memref<128x32xbf16, #tpu.memory_space<vmem>>, vector<2x32xbf16>
    tpu.vector_store %arg6[%c24_365, %c0_366], %1207 {strides = array<i32>} : memref<128x32xbf16, #tpu.memory_space<vmem>>, vector<2x32xbf16>,
    %c104_367 = arith.constant 104 : index
    %c0_368 = arith.constant 0 : index
    %1209 = vector.load %arg7[%c104_367, %c0_368] : memref<128x256xf32, #tpu.memory_space<vmem>>, vector<2x256xf32>
    %cst_369 = arith.constant dense<0.000000e+00> : vector<2x256xf32>
    %1210 = tpu.matmul %1204, %10, %cst_369 {dimension_numbers = #tpu.dot_dimension_numbers<[1], [0], [0], [1], [0, 0, 1, 1], [], []>} : vector<2x64xbf16>, vector<64x256xbf16>, vector<2x256xf32> -> vector<2x256xf32>
    %1211 = arith.addf %1209, %1210 : vector<2x256xf32>
    %1212 = arith.negf %1211 : vector<2x256xf32>
    %1213 = math.exp %1212 : vector<2x256xf32>
    %cst_370 = arith.constant 1.000000e+00 : f32
    %1214 = vector.broadcast %cst_370 : f32 to vector<2x256xf32>
    %1215 = arith.addf %1214, %1213 : vector<2x256xf32>
    %1216 = arith.divf %1214, %1215 : vector<2x256xf32>
    %1217 = vector.extract_strided_slice %1216 {offsets = [0, 0], sizes = [2, 64], strides = [1, 1]} : vector<2x256xf32> to vector<2x64xf32>
    %1218 = vector.extract_strided_slice %1216 {offsets = [0, 64], sizes = [2, 64], strides = [1, 1]} : vector<2x256xf32> to vector<2x64xf32>
    %1219 = vector.extract_strided_slice %1216 {offsets = [0, 128], sizes = [2, 64], strides = [1, 1]} : vector<2x256xf32> to vector<2x64xf32>
    %1220 = vector.extract_strided_slice %1211 {offsets = [0, 192], sizes = [2, 64], strides = [1, 1]} : vector<2x256xf32> to vector<2x64xf32>
    %1221 = math.tanh %1220 : vector<2x64xf32>
    %1222 = arith.mulf %1217, %1201 : vector<2x64xf32>
    %1223 = arith.mulf %1218, %1221 : vector<2x64xf32>
    %1224 = arith.addf %1222, %1223 : vector<2x64xf32>
    %1225 = math.tanh %1224 : vector<2x64xf32>
    %1226 = arith.mulf %1219, %1225 : vector<2x64xf32>
    %1227 = arith.truncf %1226 : vector<2x64xf32> to vector<2x64xbf16>
    %1228 = vector.extract_strided_slice %1227 {offsets = [0, 0], sizes = [2, 32], strides = [1, 1]} : vector<2x64xbf16> to vector<2x32xbf16>
    %c104_371 = arith.constant 104 : index
    %c0_372 = arith.constant 0 : index
    %1229 = vector.load %arg5[%c104_371, %c0_372] : memref<128x32xbf16, #tpu.memory_space<vmem>>, vector<2x32xbf16>
    tpu.vector_store %arg5[%c104_371, %c0_372], %1228 {strides = array<i32>} : memref<128x32xbf16, #tpu.memory_space<vmem>>, vector<2x32xbf16>,
    %1230 = vector.extract_strided_slice %1227 {offsets = [0, 32], sizes = [2, 32], strides = [1, 1]} : vector<2x64xbf16> to vector<2x32xbf16>
    %c22_373 = arith.constant 22 : index
    %c0_374 = arith.constant 0 : index
    %1231 = vector.load %arg6[%c22_373, %c0_374] : memref<128x32xbf16, #tpu.memory_space<vmem>>, vector<2x32xbf16>
    tpu.vector_store %arg6[%c22_373, %c0_374], %1230 {strides = array<i32>} : memref<128x32xbf16, #tpu.memory_space<vmem>>, vector<2x32xbf16>,
    %c106_375 = arith.constant 106 : index
    %c0_376 = arith.constant 0 : index
    %1232 = vector.load %arg7[%c106_375, %c0_376] : memref<128x256xf32, #tpu.memory_space<vmem>>, vector<2x256xf32>
    %cst_377 = arith.constant dense<0.000000e+00> : vector<2x256xf32>
    %1233 = tpu.matmul %1227, %10, %cst_377 {dimension_numbers = #tpu.dot_dimension_numbers<[1], [0], [0], [1], [0, 0, 1, 1], [], []>} : vector<2x64xbf16>, vector<64x256xbf16>, vector<2x256xf32> -> vector<2x256xf32>
    %1234 = arith.addf %1232, %1233 : vector<2x256xf32>
    %1235 = arith.negf %1234 : vector<2x256xf32>
    %1236 = math.exp %1235 : vector<2x256xf32>
    %cst_378 = arith.constant 1.000000e+00 : f32
    %1237 = vector.broadcast %cst_378 : f32 to vector<2x256xf32>
    %1238 = arith.addf %1237, %1236 : vector<2x256xf32>
    %1239 = arith.divf %1237, %1238 : vector<2x256xf32>
    %1240 = vector.extract_strided_slice %1239 {offsets = [0, 0], sizes = [2, 64], strides = [1, 1]} : vector<2x256xf32> to vector<2x64xf32>
    %1241 = vector.extract_strided_slice %1239 {offsets = [0, 64], sizes = [2, 64], strides = [1, 1]} : vector<2x256xf32> to vector<2x64xf32>
    %1242 = vector.extract_strided_slice %1239 {offsets = [0, 128], sizes = [2, 64], strides = [1, 1]} : vector<2x256xf32> to vector<2x64xf32>
    %1243 = vector.extract_strided_slice %1234 {offsets = [0, 192], sizes = [2, 64], strides = [1, 1]} : vector<2x256xf32> to vector<2x64xf32>
    %1244 = math.tanh %1243 : vector<2x64xf32>
    %1245 = arith.mulf %1240, %1224 : vector<2x64xf32>
    %1246 = arith.mulf %1241, %1244 : vector<2x64xf32>
    %1247 = arith.addf %1245, %1246 : vector<2x64xf32>
    %1248 = math.tanh %1247 : vector<2x64xf32>
    %1249 = arith.mulf %1242, %1248 : vector<2x64xf32>
    %1250 = arith.truncf %1249 : vector<2x64xf32> to vector<2x64xbf16>
    %1251 = vector.extract_strided_slice %1250 {offsets = [0, 0], sizes = [2, 32], strides = [1, 1]} : vector<2x64xbf16> to vector<2x32xbf16>
    %c106_379 = arith.constant 106 : index
    %c0_380 = arith.constant 0 : index
    %1252 = vector.load %arg5[%c106_379, %c0_380] : memref<128x32xbf16, #tpu.memory_space<vmem>>, vector<2x32xbf16>
    tpu.vector_store %arg5[%c106_379, %c0_380], %1251 {strides = array<i32>} : memref<128x32xbf16, #tpu.memory_space<vmem>>, vector<2x32xbf16>,
    %1253 = vector.extract_strided_slice %1250 {offsets = [0, 32], sizes = [2, 32], strides = [1, 1]} : vector<2x64xbf16> to vector<2x32xbf16>
    %c20_381 = arith.constant 20 : index
    %c0_382 = arith.constant 0 : index
    %1254 = vector.load %arg6[%c20_381, %c0_382] : memref<128x32xbf16, #tpu.memory_space<vmem>>, vector<2x32xbf16>
    tpu.vector_store %arg6[%c20_381, %c0_382], %1253 {strides = array<i32>} : memref<128x32xbf16, #tpu.memory_space<vmem>>, vector<2x32xbf16>,
    %c108_383 = arith.constant 108 : index
    %c0_384 = arith.constant 0 : index
    %1255 = vector.load %arg7[%c108_383, %c0_384] : memref<128x256xf32, #tpu.memory_space<vmem>>, vector<2x256xf32>
    %cst_385 = arith.constant dense<0.000000e+00> : vector<2x256xf32>
    %1256 = tpu.matmul %1250, %10, %cst_385 {dimension_numbers = #tpu.dot_dimension_numbers<[1], [0], [0], [1], [0, 0, 1, 1], [], []>} : vector<2x64xbf16>, vector<64x256xbf16>, vector<2x256xf32> -> vector<2x256xf32>
    %1257 = arith.addf %1255, %1256 : vector<2x256xf32>
    %1258 = arith.negf %1257 : vector<2x256xf32>
    %1259 = math.exp %1258 : vector<2x256xf32>
    %cst_386 = arith.constant 1.000000e+00 : f32
    %1260 = vector.broadcast %cst_386 : f32 to vector<2x256xf32>
    %1261 = arith.addf %1260, %1259 : vector<2x256xf32>
    %1262 = arith.divf %1260, %1261 : vector<2x256xf32>
    %1263 = vector.extract_strided_slice %1262 {offsets = [0, 0], sizes = [2, 64], strides = [1, 1]} : vector<2x256xf32> to vector<2x64xf32>
    %1264 = vector.extract_strided_slice %1262 {offsets = [0, 64], sizes = [2, 64], strides = [1, 1]} : vector<2x256xf32> to vector<2x64xf32>
    %1265 = vector.extract_strided_slice %1262 {offsets = [0, 128], sizes = [2, 64], strides = [1, 1]} : vector<2x256xf32> to vector<2x64xf32>
    %1266 = vector.extract_strided_slice %1257 {offsets = [0, 192], sizes = [2, 64], strides = [1, 1]} : vector<2x256xf32> to vector<2x64xf32>
    %1267 = math.tanh %1266 : vector<2x64xf32>
    %1268 = arith.mulf %1263, %1247 : vector<2x64xf32>
    %1269 = arith.mulf %1264, %1267 : vector<2x64xf32>
    %1270 = arith.addf %1268, %1269 : vector<2x64xf32>
    %1271 = math.tanh %1270 : vector<2x64xf32>
    %1272 = arith.mulf %1265, %1271 : vector<2x64xf32>
    %1273 = arith.truncf %1272 : vector<2x64xf32> to vector<2x64xbf16>
    %1274 = vector.extract_strided_slice %1273 {offsets = [0, 0], sizes = [2, 32], strides = [1, 1]} : vector<2x64xbf16> to vector<2x32xbf16>
    %c108_387 = arith.constant 108 : index
    %c0_388 = arith.constant 0 : index
    %1275 = vector.load %arg5[%c108_387, %c0_388] : memref<128x32xbf16, #tpu.memory_space<vmem>>, vector<2x32xbf16>
    tpu.vector_store %arg5[%c108_387, %c0_388], %1274 {strides = array<i32>} : memref<128x32xbf16, #tpu.memory_space<vmem>>, vector<2x32xbf16>,
    %1276 = vector.extract_strided_slice %1273 {offsets = [0, 32], sizes = [2, 32], strides = [1, 1]} : vector<2x64xbf16> to vector<2x32xbf16>
    %c18_389 = arith.constant 18 : index
    %c0_390 = arith.constant 0 : index
    %1277 = vector.load %arg6[%c18_389, %c0_390] : memref<128x32xbf16, #tpu.memory_space<vmem>>, vector<2x32xbf16>
    tpu.vector_store %arg6[%c18_389, %c0_390], %1276 {strides = array<i32>} : memref<128x32xbf16, #tpu.memory_space<vmem>>, vector<2x32xbf16>,
    %c110_391 = arith.constant 110 : index
    %c0_392 = arith.constant 0 : index
    %1278 = vector.load %arg7[%c110_391, %c0_392] : memref<128x256xf32, #tpu.memory_space<vmem>>, vector<2x256xf32>
    %cst_393 = arith.constant dense<0.000000e+00> : vector<2x256xf32>
    %1279 = tpu.matmul %1273, %10, %cst_393 {dimension_numbers = #tpu.dot_dimension_numbers<[1], [0], [0], [1], [0, 0, 1, 1], [], []>} : vector<2x64xbf16>, vector<64x256xbf16>, vector<2x256xf32> -> vector<2x256xf32>
    %1280 = arith.addf %1278, %1279 : vector<2x256xf32>
    %1281 = arith.negf %1280 : vector<2x256xf32>
    %1282 = math.exp %1281 : vector<2x256xf32>
    %cst_394 = arith.constant 1.000000e+00 : f32
    %1283 = vector.broadcast %cst_394 : f32 to vector<2x256xf32>
    %1284 = arith.addf %1283, %1282 : vector<2x256xf32>
    %1285 = arith.divf %1283, %1284 : vector<2x256xf32>
    %1286 = vector.extract_strided_slice %1285 {offsets = [0, 0], sizes = [2, 64], strides = [1, 1]} : vector<2x256xf32> to vector<2x64xf32>
    %1287 = vector.extract_strided_slice %1285 {offsets = [0, 64], sizes = [2, 64], strides = [1, 1]} : vector<2x256xf32> to vector<2x64xf32>
    %1288 = vector.extract_strided_slice %1285 {offsets = [0, 128], sizes = [2, 64], strides = [1, 1]} : vector<2x256xf32> to vector<2x64xf32>
    %1289 = vector.extract_strided_slice %1280 {offsets = [0, 192], sizes = [2, 64], strides = [1, 1]} : vector<2x256xf32> to vector<2x64xf32>
    %1290 = math.tanh %1289 : vector<2x64xf32>
    %1291 = arith.mulf %1286, %1270 : vector<2x64xf32>
    %1292 = arith.mulf %1287, %1290 : vector<2x64xf32>
    %1293 = arith.addf %1291, %1292 : vector<2x64xf32>
    %1294 = math.tanh %1293 : vector<2x64xf32>
    %1295 = arith.mulf %1288, %1294 : vector<2x64xf32>
    %1296 = arith.truncf %1295 : vector<2x64xf32> to vector<2x64xbf16>
    %1297 = vector.extract_strided_slice %1296 {offsets = [0, 0], sizes = [2, 32], strides = [1, 1]} : vector<2x64xbf16> to vector<2x32xbf16>
    %c110_395 = arith.constant 110 : index
    %c0_396 = arith.constant 0 : index
    %1298 = vector.load %arg5[%c110_395, %c0_396] : memref<128x32xbf16, #tpu.memory_space<vmem>>, vector<2x32xbf16>
    tpu.vector_store %arg5[%c110_395, %c0_396], %1297 {strides = array<i32>} : memref<128x32xbf16, #tpu.memory_space<vmem>>, vector<2x32xbf16>,
    %1299 = vector.extract_strided_slice %1296 {offsets = [0, 32], sizes = [2, 32], strides = [1, 1]} : vector<2x64xbf16> to vector<2x32xbf16>
    %c16_397 = arith.constant 16 : index
    %c0_398 = arith.constant 0 : index
    %1300 = vector.load %arg6[%c16_397, %c0_398] : memref<128x32xbf16, #tpu.memory_space<vmem>>, vector<2x32xbf16>
    tpu.vector_store %arg6[%c16_397, %c0_398], %1299 {strides = array<i32>} : memref<128x32xbf16, #tpu.memory_space<vmem>>, vector<2x32xbf16>,
    %c112_399 = arith.constant 112 : index
    %c0_400 = arith.constant 0 : index
    %1301 = vector.load %arg7[%c112_399, %c0_400] : memref<128x256xf32, #tpu.memory_space<vmem>>, vector<2x256xf32>
    %cst_401 = arith.constant dense<0.000000e+00> : vector<2x256xf32>
    %1302 = tpu.matmul %1296, %10, %cst_401 {dimension_numbers = #tpu.dot_dimension_numbers<[1], [0], [0], [1], [0, 0, 1, 1], [], []>} : vector<2x64xbf16>, vector<64x256xbf16>, vector<2x256xf32> -> vector<2x256xf32>
    %1303 = arith.addf %1301, %1302 : vector<2x256xf32>
    %1304 = arith.negf %1303 : vector<2x256xf32>
    %1305 = math.exp %1304 : vector<2x256xf32>
    %cst_402 = arith.constant 1.000000e+00 : f32
    %1306 = vector.broadcast %cst_402 : f32 to vector<2x256xf32>
    %1307 = arith.addf %1306, %1305 : vector<2x256xf32>
    %1308 = arith.divf %1306, %1307 : vector<2x256xf32>
    %1309 = vector.extract_strided_slice %1308 {offsets = [0, 0], sizes = [2, 64], strides = [1, 1]} : vector<2x256xf32> to vector<2x64xf32>
    %1310 = vector.extract_strided_slice %1308 {offsets = [0, 64], sizes = [2, 64], strides = [1, 1]} : vector<2x256xf32> to vector<2x64xf32>
    %1311 = vector.extract_strided_slice %1308 {offsets = [0, 128], sizes = [2, 64], strides = [1, 1]} : vector<2x256xf32> to vector<2x64xf32>
    %1312 = vector.extract_strided_slice %1303 {offsets = [0, 192], sizes = [2, 64], strides = [1, 1]} : vector<2x256xf32> to vector<2x64xf32>
    %1313 = math.tanh %1312 : vector<2x64xf32>
    %1314 = arith.mulf %1309, %1293 : vector<2x64xf32>
    %1315 = arith.mulf %1310, %1313 : vector<2x64xf32>
    %1316 = arith.addf %1314, %1315 : vector<2x64xf32>
    %1317 = math.tanh %1316 : vector<2x64xf32>
    %1318 = arith.mulf %1311, %1317 : vector<2x64xf32>
    %1319 = arith.truncf %1318 : vector<2x64xf32> to vector<2x64xbf16>
    %1320 = vector.extract_strided_slice %1319 {offsets = [0, 0], sizes = [2, 32], strides = [1, 1]} : vector<2x64xbf16> to vector<2x32xbf16>
    %c112_403 = arith.constant 112 : index
    %c0_404 = arith.constant 0 : index
    %1321 = vector.load %arg5[%c112_403, %c0_404] : memref<128x32xbf16, #tpu.memory_space<vmem>>, vector<2x32xbf16>
    tpu.vector_store %arg5[%c112_403, %c0_404], %1320 {strides = array<i32>} : memref<128x32xbf16, #tpu.memory_space<vmem>>, vector<2x32xbf16>,
    %1322 = vector.extract_strided_slice %1319 {offsets = [0, 32], sizes = [2, 32], strides = [1, 1]} : vector<2x64xbf16> to vector<2x32xbf16>
    %c14_405 = arith.constant 14 : index
    %c0_406 = arith.constant 0 : index
    %1323 = vector.load %arg6[%c14_405, %c0_406] : memref<128x32xbf16, #tpu.memory_space<vmem>>, vector<2x32xbf16>
    tpu.vector_store %arg6[%c14_405, %c0_406], %1322 {strides = array<i32>} : memref<128x32xbf16, #tpu.memory_space<vmem>>, vector<2x32xbf16>,
    %c114_407 = arith.constant 114 : index
    %c0_408 = arith.constant 0 : index
    %1324 = vector.load %arg7[%c114_407, %c0_408] : memref<128x256xf32, #tpu.memory_space<vmem>>, vector<2x256xf32>
    %cst_409 = arith.constant dense<0.000000e+00> : vector<2x256xf32>
    %1325 = tpu.matmul %1319, %10, %cst_409 {dimension_numbers = #tpu.dot_dimension_numbers<[1], [0], [0], [1], [0, 0, 1, 1], [], []>} : vector<2x64xbf16>, vector<64x256xbf16>, vector<2x256xf32> -> vector<2x256xf32>
    %1326 = arith.addf %1324, %1325 : vector<2x256xf32>
    %1327 = arith.negf %1326 : vector<2x256xf32>
    %1328 = math.exp %1327 : vector<2x256xf32>
    %cst_410 = arith.constant 1.000000e+00 : f32
    %1329 = vector.broadcast %cst_410 : f32 to vector<2x256xf32>
    %1330 = arith.addf %1329, %1328 : vector<2x256xf32>
    %1331 = arith.divf %1329, %1330 : vector<2x256xf32>
    %1332 = vector.extract_strided_slice %1331 {offsets = [0, 0], sizes = [2, 64], strides = [1, 1]} : vector<2x256xf32> to vector<2x64xf32>
    %1333 = vector.extract_strided_slice %1331 {offsets = [0, 64], sizes = [2, 64], strides = [1, 1]} : vector<2x256xf32> to vector<2x64xf32>
    %1334 = vector.extract_strided_slice %1331 {offsets = [0, 128], sizes = [2, 64], strides = [1, 1]} : vector<2x256xf32> to vector<2x64xf32>
    %1335 = vector.extract_strided_slice %1326 {offsets = [0, 192], sizes = [2, 64], strides = [1, 1]} : vector<2x256xf32> to vector<2x64xf32>
    %1336 = math.tanh %1335 : vector<2x64xf32>
    %1337 = arith.mulf %1332, %1316 : vector<2x64xf32>
    %1338 = arith.mulf %1333, %1336 : vector<2x64xf32>
    %1339 = arith.addf %1337, %1338 : vector<2x64xf32>
    %1340 = math.tanh %1339 : vector<2x64xf32>
    %1341 = arith.mulf %1334, %1340 : vector<2x64xf32>
    %1342 = arith.truncf %1341 : vector<2x64xf32> to vector<2x64xbf16>
    %1343 = vector.extract_strided_slice %1342 {offsets = [0, 0], sizes = [2, 32], strides = [1, 1]} : vector<2x64xbf16> to vector<2x32xbf16>
    %c114_411 = arith.constant 114 : index
    %c0_412 = arith.constant 0 : index
    %1344 = vector.load %arg5[%c114_411, %c0_412] : memref<128x32xbf16, #tpu.memory_space<vmem>>, vector<2x32xbf16>
    tpu.vector_store %arg5[%c114_411, %c0_412], %1343 {strides = array<i32>} : memref<128x32xbf16, #tpu.memory_space<vmem>>, vector<2x32xbf16>,
    %1345 = vector.extract_strided_slice %1342 {offsets = [0, 32], sizes = [2, 32], strides = [1, 1]} : vector<2x64xbf16> to vector<2x32xbf16>
    %c12_413 = arith.constant 12 : index
    %c0_414 = arith.constant 0 : index
    %1346 = vector.load %arg6[%c12_413, %c0_414] : memref<128x32xbf16, #tpu.memory_space<vmem>>, vector<2x32xbf16>
    tpu.vector_store %arg6[%c12_413, %c0_414], %1345 {strides = array<i32>} : memref<128x32xbf16, #tpu.memory_space<vmem>>, vector<2x32xbf16>,
    %c116_415 = arith.constant 116 : index
    %c0_416 = arith.constant 0 : index
    %1347 = vector.load %arg7[%c116_415, %c0_416] : memref<128x256xf32, #tpu.memory_space<vmem>>, vector<2x256xf32>
    %cst_417 = arith.constant dense<0.000000e+00> : vector<2x256xf32>
    %1348 = tpu.matmul %1342, %10, %cst_417 {dimension_numbers = #tpu.dot_dimension_numbers<[1], [0], [0], [1], [0, 0, 1, 1], [], []>} : vector<2x64xbf16>, vector<64x256xbf16>, vector<2x256xf32> -> vector<2x256xf32>
    %1349 = arith.addf %1347, %1348 : vector<2x256xf32>
    %1350 = arith.negf %1349 : vector<2x256xf32>
    %1351 = math.exp %1350 : vector<2x256xf32>
    %cst_418 = arith.constant 1.000000e+00 : f32
    %1352 = vector.broadcast %cst_418 : f32 to vector<2x256xf32>
    %1353 = arith.addf %1352, %1351 : vector<2x256xf32>
    %1354 = arith.divf %1352, %1353 : vector<2x256xf32>
    %1355 = vector.extract_strided_slice %1354 {offsets = [0, 0], sizes = [2, 64], strides = [1, 1]} : vector<2x256xf32> to vector<2x64xf32>
    %1356 = vector.extract_strided_slice %1354 {offsets = [0, 64], sizes = [2, 64], strides = [1, 1]} : vector<2x256xf32> to vector<2x64xf32>
    %1357 = vector.extract_strided_slice %1354 {offsets = [0, 128], sizes = [2, 64], strides = [1, 1]} : vector<2x256xf32> to vector<2x64xf32>
    %1358 = vector.extract_strided_slice %1349 {offsets = [0, 192], sizes = [2, 64], strides = [1, 1]} : vector<2x256xf32> to vector<2x64xf32>
    %1359 = math.tanh %1358 : vector<2x64xf32>
    %1360 = arith.mulf %1355, %1339 : vector<2x64xf32>
    %1361 = arith.mulf %1356, %1359 : vector<2x64xf32>
    %1362 = arith.addf %1360, %1361 : vector<2x64xf32>
    %1363 = math.tanh %1362 : vector<2x64xf32>
    %1364 = arith.mulf %1357, %1363 : vector<2x64xf32>
    %1365 = arith.truncf %1364 : vector<2x64xf32> to vector<2x64xbf16>
    %1366 = vector.extract_strided_slice %1365 {offsets = [0, 0], sizes = [2, 32], strides = [1, 1]} : vector<2x64xbf16> to vector<2x32xbf16>
    %c116_419 = arith.constant 116 : index
    %c0_420 = arith.constant 0 : index
    %1367 = vector.load %arg5[%c116_419, %c0_420] : memref<128x32xbf16, #tpu.memory_space<vmem>>, vector<2x32xbf16>
    tpu.vector_store %arg5[%c116_419, %c0_420], %1366 {strides = array<i32>} : memref<128x32xbf16, #tpu.memory_space<vmem>>, vector<2x32xbf16>,
    %1368 = vector.extract_strided_slice %1365 {offsets = [0, 32], sizes = [2, 32], strides = [1, 1]} : vector<2x64xbf16> to vector<2x32xbf16>
    %c10_421 = arith.constant 10 : index
    %c0_422 = arith.constant 0 : index
    %1369 = vector.load %arg6[%c10_421, %c0_422] : memref<128x32xbf16, #tpu.memory_space<vmem>>, vector<2x32xbf16>
    tpu.vector_store %arg6[%c10_421, %c0_422], %1368 {strides = array<i32>} : memref<128x32xbf16, #tpu.memory_space<vmem>>, vector<2x32xbf16>,
    %c118_423 = arith.constant 118 : index
    %c0_424 = arith.constant 0 : index
    %1370 = vector.load %arg7[%c118_423, %c0_424] : memref<128x256xf32, #tpu.memory_space<vmem>>, vector<2x256xf32>
    %cst_425 = arith.constant dense<0.000000e+00> : vector<2x256xf32>
    %1371 = tpu.matmul %1365, %10, %cst_425 {dimension_numbers = #tpu.dot_dimension_numbers<[1], [0], [0], [1], [0, 0, 1, 1], [], []>} : vector<2x64xbf16>, vector<64x256xbf16>, vector<2x256xf32> -> vector<2x256xf32>
    %1372 = arith.addf %1370, %1371 : vector<2x256xf32>
    %1373 = arith.negf %1372 : vector<2x256xf32>
    %1374 = math.exp %1373 : vector<2x256xf32>
    %cst_426 = arith.constant 1.000000e+00 : f32
    %1375 = vector.broadcast %cst_426 : f32 to vector<2x256xf32>
    %1376 = arith.addf %1375, %1374 : vector<2x256xf32>
    %1377 = arith.divf %1375, %1376 : vector<2x256xf32>
    %1378 = vector.extract_strided_slice %1377 {offsets = [0, 0], sizes = [2, 64], strides = [1, 1]} : vector<2x256xf32> to vector<2x64xf32>
    %1379 = vector.extract_strided_slice %1377 {offsets = [0, 64], sizes = [2, 64], strides = [1, 1]} : vector<2x256xf32> to vector<2x64xf32>
    %1380 = vector.extract_strided_slice %1377 {offsets = [0, 128], sizes = [2, 64], strides = [1, 1]} : vector<2x256xf32> to vector<2x64xf32>
    %1381 = vector.extract_strided_slice %1372 {offsets = [0, 192], sizes = [2, 64], strides = [1, 1]} : vector<2x256xf32> to vector<2x64xf32>
    %1382 = math.tanh %1381 : vector<2x64xf32>
    %1383 = arith.mulf %1378, %1362 : vector<2x64xf32>
    %1384 = arith.mulf %1379, %1382 : vector<2x64xf32>
    %1385 = arith.addf %1383, %1384 : vector<2x64xf32>
    %1386 = math.tanh %1385 : vector<2x64xf32>
    %1387 = arith.mulf %1380, %1386 : vector<2x64xf32>
    %1388 = arith.truncf %1387 : vector<2x64xf32> to vector<2x64xbf16>
    %1389 = vector.extract_strided_slice %1388 {offsets = [0, 0], sizes = [2, 32], strides = [1, 1]} : vector<2x64xbf16> to vector<2x32xbf16>
    %c118_427 = arith.constant 118 : index
    %c0_428 = arith.constant 0 : index
    %1390 = vector.load %arg5[%c118_427, %c0_428] : memref<128x32xbf16, #tpu.memory_space<vmem>>, vector<2x32xbf16>
    tpu.vector_store %arg5[%c118_427, %c0_428], %1389 {strides = array<i32>} : memref<128x32xbf16, #tpu.memory_space<vmem>>, vector<2x32xbf16>,
    %1391 = vector.extract_strided_slice %1388 {offsets = [0, 32], sizes = [2, 32], strides = [1, 1]} : vector<2x64xbf16> to vector<2x32xbf16>
    %c8_429 = arith.constant 8 : index
    %c0_430 = arith.constant 0 : index
    %1392 = vector.load %arg6[%c8_429, %c0_430] : memref<128x32xbf16, #tpu.memory_space<vmem>>, vector<2x32xbf16>
    tpu.vector_store %arg6[%c8_429, %c0_430], %1391 {strides = array<i32>} : memref<128x32xbf16, #tpu.memory_space<vmem>>, vector<2x32xbf16>,
    %c120_431 = arith.constant 120 : index
    %c0_432 = arith.constant 0 : index
    %1393 = vector.load %arg7[%c120_431, %c0_432] : memref<128x256xf32, #tpu.memory_space<vmem>>, vector<2x256xf32>
    %cst_433 = arith.constant dense<0.000000e+00> : vector<2x256xf32>
    %1394 = tpu.matmul %1388, %10, %cst_433 {dimension_numbers = #tpu.dot_dimension_numbers<[1], [0], [0], [1], [0, 0, 1, 1], [], []>} : vector<2x64xbf16>, vector<64x256xbf16>, vector<2x256xf32> -> vector<2x256xf32>
    %1395 = arith.addf %1393, %1394 : vector<2x256xf32>
    %1396 = arith.negf %1395 : vector<2x256xf32>
    %1397 = math.exp %1396 : vector<2x256xf32>
    %cst_434 = arith.constant 1.000000e+00 : f32
    %1398 = vector.broadcast %cst_434 : f32 to vector<2x256xf32>
    %1399 = arith.addf %1398, %1397 : vector<2x256xf32>
    %1400 = arith.divf %1398, %1399 : vector<2x256xf32>
    %1401 = vector.extract_strided_slice %1400 {offsets = [0, 0], sizes = [2, 64], strides = [1, 1]} : vector<2x256xf32> to vector<2x64xf32>
    %1402 = vector.extract_strided_slice %1400 {offsets = [0, 64], sizes = [2, 64], strides = [1, 1]} : vector<2x256xf32> to vector<2x64xf32>
    %1403 = vector.extract_strided_slice %1400 {offsets = [0, 128], sizes = [2, 64], strides = [1, 1]} : vector<2x256xf32> to vector<2x64xf32>
    %1404 = vector.extract_strided_slice %1395 {offsets = [0, 192], sizes = [2, 64], strides = [1, 1]} : vector<2x256xf32> to vector<2x64xf32>
    %1405 = math.tanh %1404 : vector<2x64xf32>
    %1406 = arith.mulf %1401, %1385 : vector<2x64xf32>
    %1407 = arith.mulf %1402, %1405 : vector<2x64xf32>
    %1408 = arith.addf %1406, %1407 : vector<2x64xf32>
    %1409 = math.tanh %1408 : vector<2x64xf32>
    %1410 = arith.mulf %1403, %1409 : vector<2x64xf32>
    %1411 = arith.truncf %1410 : vector<2x64xf32> to vector<2x64xbf16>
    %1412 = vector.extract_strided_slice %1411 {offsets = [0, 0], sizes = [2, 32], strides = [1, 1]} : vector<2x64xbf16> to vector<2x32xbf16>
    %c120_435 = arith.constant 120 : index
    %c0_436 = arith.constant 0 : index
    %1413 = vector.load %arg5[%c120_435, %c0_436] : memref<128x32xbf16, #tpu.memory_space<vmem>>, vector<2x32xbf16>
    tpu.vector_store %arg5[%c120_435, %c0_436], %1412 {strides = array<i32>} : memref<128x32xbf16, #tpu.memory_space<vmem>>, vector<2x32xbf16>,
    %1414 = vector.extract_strided_slice %1411 {offsets = [0, 32], sizes = [2, 32], strides = [1, 1]} : vector<2x64xbf16> to vector<2x32xbf16>
    %c6_437 = arith.constant 6 : index
    %c0_438 = arith.constant 0 : index
    %1415 = vector.load %arg6[%c6_437, %c0_438] : memref<128x32xbf16, #tpu.memory_space<vmem>>, vector<2x32xbf16>
    tpu.vector_store %arg6[%c6_437, %c0_438], %1414 {strides = array<i32>} : memref<128x32xbf16, #tpu.memory_space<vmem>>, vector<2x32xbf16>,
    %c122_439 = arith.constant 122 : index
    %c0_440 = arith.constant 0 : index
    %1416 = vector.load %arg7[%c122_439, %c0_440] : memref<128x256xf32, #tpu.memory_space<vmem>>, vector<2x256xf32>
    %cst_441 = arith.constant dense<0.000000e+00> : vector<2x256xf32>
    %1417 = tpu.matmul %1411, %10, %cst_441 {dimension_numbers = #tpu.dot_dimension_numbers<[1], [0], [0], [1], [0, 0, 1, 1], [], []>} : vector<2x64xbf16>, vector<64x256xbf16>, vector<2x256xf32> -> vector<2x256xf32>
    %1418 = arith.addf %1416, %1417 : vector<2x256xf32>
    %1419 = arith.negf %1418 : vector<2x256xf32>
    %1420 = math.exp %1419 : vector<2x256xf32>
    %cst_442 = arith.constant 1.000000e+00 : f32
    %1421 = vector.broadcast %cst_442 : f32 to vector<2x256xf32>
    %1422 = arith.addf %1421, %1420 : vector<2x256xf32>
    %1423 = arith.divf %1421, %1422 : vector<2x256xf32>
    %1424 = vector.extract_strided_slice %1423 {offsets = [0, 0], sizes = [2, 64], strides = [1, 1]} : vector<2x256xf32> to vector<2x64xf32>
    %1425 = vector.extract_strided_slice %1423 {offsets = [0, 64], sizes = [2, 64], strides = [1, 1]} : vector<2x256xf32> to vector<2x64xf32>
    %1426 = vector.extract_strided_slice %1423 {offsets = [0, 128], sizes = [2, 64], strides = [1, 1]} : vector<2x256xf32> to vector<2x64xf32>
    %1427 = vector.extract_strided_slice %1418 {offsets = [0, 192], sizes = [2, 64], strides = [1, 1]} : vector<2x256xf32> to vector<2x64xf32>
    %1428 = math.tanh %1427 : vector<2x64xf32>
    %1429 = arith.mulf %1424, %1408 : vector<2x64xf32>
    %1430 = arith.mulf %1425, %1428 : vector<2x64xf32>
    %1431 = arith.addf %1429, %1430 : vector<2x64xf32>
    %1432 = math.tanh %1431 : vector<2x64xf32>
    %1433 = arith.mulf %1426, %1432 : vector<2x64xf32>
    %1434 = arith.truncf %1433 : vector<2x64xf32> to vector<2x64xbf16>
    %1435 = vector.extract_strided_slice %1434 {offsets = [0, 0], sizes = [2, 32], strides = [1, 1]} : vector<2x64xbf16> to vector<2x32xbf16>
    %c122_443 = arith.constant 122 : index
    %c0_444 = arith.constant 0 : index
    %1436 = vector.load %arg5[%c122_443, %c0_444] : memref<128x32xbf16, #tpu.memory_space<vmem>>, vector<2x32xbf16>
    tpu.vector_store %arg5[%c122_443, %c0_444], %1435 {strides = array<i32>} : memref<128x32xbf16, #tpu.memory_space<vmem>>, vector<2x32xbf16>,
    %1437 = vector.extract_strided_slice %1434 {offsets = [0, 32], sizes = [2, 32], strides = [1, 1]} : vector<2x64xbf16> to vector<2x32xbf16>
    %c4_445 = arith.constant 4 : index
    %c0_446 = arith.constant 0 : index
    %1438 = vector.load %arg6[%c4_445, %c0_446] : memref<128x32xbf16, #tpu.memory_space<vmem>>, vector<2x32xbf16>
    tpu.vector_store %arg6[%c4_445, %c0_446], %1437 {strides = array<i32>} : memref<128x32xbf16, #tpu.memory_space<vmem>>, vector<2x32xbf16>,
    %c124_447 = arith.constant 124 : index
    %c0_448 = arith.constant 0 : index
    %1439 = vector.load %arg7[%c124_447, %c0_448] : memref<128x256xf32, #tpu.memory_space<vmem>>, vector<2x256xf32>
    %cst_449 = arith.constant dense<0.000000e+00> : vector<2x256xf32>
    %1440 = tpu.matmul %1434, %10, %cst_449 {dimension_numbers = #tpu.dot_dimension_numbers<[1], [0], [0], [1], [0, 0, 1, 1], [], []>} : vector<2x64xbf16>, vector<64x256xbf16>, vector<2x256xf32> -> vector<2x256xf32>
    %1441 = arith.addf %1439, %1440 : vector<2x256xf32>
    %1442 = arith.negf %1441 : vector<2x256xf32>
    %1443 = math.exp %1442 : vector<2x256xf32>
    %cst_450 = arith.constant 1.000000e+00 : f32
    %1444 = vector.broadcast %cst_450 : f32 to vector<2x256xf32>
    %1445 = arith.addf %1444, %1443 : vector<2x256xf32>
    %1446 = arith.divf %1444, %1445 : vector<2x256xf32>
    %1447 = vector.extract_strided_slice %1446 {offsets = [0, 0], sizes = [2, 64], strides = [1, 1]} : vector<2x256xf32> to vector<2x64xf32>
    %1448 = vector.extract_strided_slice %1446 {offsets = [0, 64], sizes = [2, 64], strides = [1, 1]} : vector<2x256xf32> to vector<2x64xf32>
    %1449 = vector.extract_strided_slice %1446 {offsets = [0, 128], sizes = [2, 64], strides = [1, 1]} : vector<2x256xf32> to vector<2x64xf32>
    %1450 = vector.extract_strided_slice %1441 {offsets = [0, 192], sizes = [2, 64], strides = [1, 1]} : vector<2x256xf32> to vector<2x64xf32>
    %1451 = math.tanh %1450 : vector<2x64xf32>
    %1452 = arith.mulf %1447, %1431 : vector<2x64xf32>
    %1453 = arith.mulf %1448, %1451 : vector<2x64xf32>
    %1454 = arith.addf %1452, %1453 : vector<2x64xf32>
    %1455 = math.tanh %1454 : vector<2x64xf32>
    %1456 = arith.mulf %1449, %1455 : vector<2x64xf32>
    %1457 = arith.truncf %1456 : vector<2x64xf32> to vector<2x64xbf16>
    %1458 = vector.extract_strided_slice %1457 {offsets = [0, 0], sizes = [2, 32], strides = [1, 1]} : vector<2x64xbf16> to vector<2x32xbf16>
    %c124_451 = arith.constant 124 : index
    %c0_452 = arith.constant 0 : index
    %1459 = vector.load %arg5[%c124_451, %c0_452] : memref<128x32xbf16, #tpu.memory_space<vmem>>, vector<2x32xbf16>
    tpu.vector_store %arg5[%c124_451, %c0_452], %1458 {strides = array<i32>} : memref<128x32xbf16, #tpu.memory_space<vmem>>, vector<2x32xbf16>,
    %1460 = vector.extract_strided_slice %1457 {offsets = [0, 32], sizes = [2, 32], strides = [1, 1]} : vector<2x64xbf16> to vector<2x32xbf16>
    %c2_453 = arith.constant 2 : index
    %c0_454 = arith.constant 0 : index
    %1461 = vector.load %arg6[%c2_453, %c0_454] : memref<128x32xbf16, #tpu.memory_space<vmem>>, vector<2x32xbf16>
    tpu.vector_store %arg6[%c2_453, %c0_454], %1460 {strides = array<i32>} : memref<128x32xbf16, #tpu.memory_space<vmem>>, vector<2x32xbf16>,
    %c126_455 = arith.constant 126 : index
    %c0_456 = arith.constant 0 : index
    %1462 = vector.load %arg7[%c126_455, %c0_456] : memref<128x256xf32, #tpu.memory_space<vmem>>, vector<2x256xf32>
    %cst_457 = arith.constant dense<0.000000e+00> : vector<2x256xf32>
    %1463 = tpu.matmul %1457, %10, %cst_457 {dimension_numbers = #tpu.dot_dimension_numbers<[1], [0], [0], [1], [0, 0, 1, 1], [], []>} : vector<2x64xbf16>, vector<64x256xbf16>, vector<2x256xf32> -> vector<2x256xf32>
    %1464 = arith.addf %1462, %1463 : vector<2x256xf32>
    %1465 = arith.negf %1464 : vector<2x256xf32>
    %1466 = math.exp %1465 : vector<2x256xf32>
    %cst_458 = arith.constant 1.000000e+00 : f32
    %1467 = vector.broadcast %cst_458 : f32 to vector<2x256xf32>
    %1468 = arith.addf %1467, %1466 : vector<2x256xf32>
    %1469 = arith.divf %1467, %1468 : vector<2x256xf32>
    %1470 = vector.extract_strided_slice %1469 {offsets = [0, 0], sizes = [2, 64], strides = [1, 1]} : vector<2x256xf32> to vector<2x64xf32>
    %1471 = vector.extract_strided_slice %1469 {offsets = [0, 64], sizes = [2, 64], strides = [1, 1]} : vector<2x256xf32> to vector<2x64xf32>
    %1472 = vector.extract_strided_slice %1469 {offsets = [0, 128], sizes = [2, 64], strides = [1, 1]} : vector<2x256xf32> to vector<2x64xf32>
    %1473 = vector.extract_strided_slice %1464 {offsets = [0, 192], sizes = [2, 64], strides = [1, 1]} : vector<2x256xf32> to vector<2x64xf32>
    %1474 = math.tanh %1473 : vector<2x64xf32>
    %1475 = arith.mulf %1470, %1454 : vector<2x64xf32>
    %1476 = arith.mulf %1471, %1474 : vector<2x64xf32>
    %1477 = arith.addf %1475, %1476 : vector<2x64xf32>
    %1478 = math.tanh %1477 : vector<2x64xf32>
    %1479 = arith.mulf %1472, %1478 : vector<2x64xf32>
    %1480 = arith.truncf %1479 : vector<2x64xf32> to vector<2x64xbf16>
    %1481 = vector.extract_strided_slice %1480 {offsets = [0, 0], sizes = [2, 32], strides = [1, 1]} : vector<2x64xbf16> to vector<2x32xbf16>
    %c126_459 = arith.constant 126 : index
    %c0_460 = arith.constant 0 : index
    %1482 = vector.load %arg5[%c126_459, %c0_460] : memref<128x32xbf16, #tpu.memory_space<vmem>>, vector<2x32xbf16>
    tpu.vector_store %arg5[%c126_459, %c0_460], %1481 {strides = array<i32>} : memref<128x32xbf16, #tpu.memory_space<vmem>>, vector<2x32xbf16>,
    %1483 = vector.extract_strided_slice %1480 {offsets = [0, 32], sizes = [2, 32], strides = [1, 1]} : vector<2x64xbf16> to vector<2x32xbf16>
    %c0_461 = arith.constant 0 : index
    %c0_462 = arith.constant 0 : index
    %1484 = vector.load %arg6[%c0_461, %c0_462] : memref<128x32xbf16, #tpu.memory_space<vmem>>, vector<2x32xbf16>
    tpu.vector_store %arg6[%c0_461, %c0_462], %1483 {strides = array<i32>} : memref<128x32xbf16, #tpu.memory_space<vmem>>, vector<2x32xbf16>,
    %c0_463 = arith.constant 0 : index
    %c0_464 = arith.constant 0 : index
    %1485 = vector.load %arg8[%c0_463, %c0_464] : memref<2x64xbf16, #tpu.memory_space<vmem>>, vector<2x64xbf16>
    tpu.vector_store %arg8[%c0_463, %c0_464], %1480 {strides = array<i32>} : memref<2x64xbf16, #tpu.memory_space<vmem>>, vector<2x64xbf16>,
    %c0_465 = arith.constant 0 : index
    %c0_466 = arith.constant 0 : index
    %1486 = vector.load %arg9[%c0_465, %c0_466] : memref<2x64xf32, #tpu.memory_space<vmem>>, vector<2x64xf32>
    tpu.vector_store %arg9[%c0_465, %c0_466], %1477 {strides = array<i32>} : memref<2x64xf32, #tpu.memory_space<vmem>>, vector<2x64xf32>,
    return
  }
  func.func @transform_0(%arg0: i32) -> (i32, i32) {
    %c0_i32 = arith.constant 0 : i32
    %c0_i32_0 = arith.constant 0 : i32
    return %arg0, %c0_i32 : i32, i32
  }
  func.func @transform_1(%arg0: i32) -> (i32, i32) {
    %c0_i32 = arith.constant 0 : i32
    %c0_i32_0 = arith.constant 0 : i32
    %c0_i32_1 = arith.constant 0 : i32
    return %c0_i32, %c0_i32_0 : i32, i32
  }
  func.func @transform_2(%arg0: i32) -> (i32, i32) {
    %c0_i32 = arith.constant 0 : i32
    %c0_i32_0 = arith.constant 0 : i32
    %c0_i32_1 = arith.constant 0 : i32
    return %c0_i32, %c0_i32_0 : i32, i32
  }
  func.func @transform_3(%arg0: i32) -> (i32, i32) {
    %c0_i32 = arith.constant 0 : i32
    %c0_i32_0 = arith.constant 0 : i32
    %c0_i32_1 = arith.constant 0 : i32
    return %c0_i32, %c0_i32_0 : i32, i32
  }
  func.func @transform_4(%arg0: i32) -> (i32, i32) {
    %c0_i32 = arith.constant 0 : i32
    %c0_i32_0 = arith.constant 0 : i32
    return %arg0, %c0_i32 : i32, i32
  }
  func.func @transform_5(%arg0: i32) -> (i32, i32) {
    %c3_i32 = arith.constant 3 : i32
    %0 = arith.subi %c3_i32, %arg0 : i32
    %c0_i32 = arith.constant 0 : i32
    %c0_i32_0 = arith.constant 0 : i32
    return %0, %c0_i32 : i32, i32
  }
}

</mosaic_0001>

<llo_original>
// kernel: blstm_forward.3
$region0: #{blstm_forward.3}
  #allocation0 [shape = 'u32[]', space=smem, size = 0x4, offset = 0x4, fixed_abs, tag = 'smem constant byte address 0x4 - core index']
  #allocation1 [shape = 'u32[144,128]{1,0:T(1,128)}', space=vmem, size = 0x12000, scoped, tag = 'internal scratch']
  %s0 = inlined_call_operand.vmem [shape: bf16[512,32], index: 0, kind: input, shape index: {}]
  %s1 = inlined_call_operand.vmem [shape: bf16[512,32], index: 1, kind: input, shape index: {}]
  %s2 = inlined_call_operand.vmem [shape: bf16[32,4], index: 2, kind: input, shape index: {}]
  %s3 = inlined_call_operand.vmem [shape: bf16[32,4], index: 3, kind: input, shape index: {}]
  %s4 = inlined_call_operand.vmem [shape: f32[1,4], index: 4, kind: input, shape index: {}]
  %s5 = inlined_call_operand.vmem [shape: f32[512,4], index: 5, kind: output, shape index: {}]
  %s6 = sld [smem:[#allocation0]]
  $region30: #{blstm_forward.3} parent=0
    _
  %s8 = ssub.s32 1, %s6
  %s9 = scalar_select 0, %s8, %s6
  // Predicated region
  $region2: #{blstm_forward.3} parent=0 // pred_check
    _
  $region3: #{blstm_forward.3} parent=0 // pred_check_branch
    %11 = sbr.rel (0) target = $region5
  $region4: #{blstm_forward.3} parent=0 // pred_region
    _
  $region5: #{blstm_forward.3} parent=0 // pred_fallthru
    _
  // Predicated region
  $region6: #{blstm_forward.3} parent=0 // pred_check
    _
  $region7: #{blstm_forward.3} parent=0 // pred_check_branch
    %13 = sbr.rel (0) target = $region9
  $region8: #{blstm_forward.3} parent=0 // pred_region
    _
  $region9: #{blstm_forward.3} parent=0 // pred_fallthru
    _
  // Predicated region
  $region10: #{blstm_forward.3} parent=0 // pred_check
    _
  $region11: #{blstm_forward.3} parent=0 // pred_check_branch
    %15 = sbr.rel (0) target = $region13
  $region12: #{blstm_forward.3} parent=0 // pred_region
    _
  $region13: #{blstm_forward.3} parent=0 // pred_fallthru
    _
  // Predicated region
  $region14: #{blstm_forward.3} parent=0 // pred_check
    _
  $region15: #{blstm_forward.3} parent=0 // pred_check_branch
    %17 = sbr.rel (0) target = $region17
  $region16: #{blstm_forward.3} parent=0 // pred_region
    _
  $region17: #{blstm_forward.3} parent=0 // pred_fallthru
    _
  // Predicated region
  $region18: #{blstm_forward.3} parent=0 // pred_check
    _
  $region19: #{blstm_forward.3} parent=0 // pred_check_branch
    %19 = sbr.rel (0) target = $region21
  $region20: #{blstm_forward.3} parent=0 // pred_region
    _
  $region21: #{blstm_forward.3} parent=0 // pred_fallthru
    _
  %v21 = vld [vmem:[%s0] sm:$0xf]
  %v22 = vld [vmem:[%s0 + $0x4] sm:$0xf]
  %v23 = vld [vmem:[%s0 + $0x8] sm:$0xf]
  %v24 = vld [vmem:[%s0 + $0xc] sm:$0xf]
  %v25 = vld [vmem:[%s0 + $0x10] sm:$0xf]
  %v26 = vld [vmem:[%s0 + $0x14] sm:$0xf]
  %v27 = vld [vmem:[%s0 + $0x18] sm:$0xf]
  %v28 = vld [vmem:[%s0 + $0x1c] sm:$0xf]
  %v29 = vld [vmem:[%s0 + $0x20] sm:$0xf]
  %v30 = vld [vmem:[%s0 + $0x24] sm:$0xf]
  %v31 = vld [vmem:[%s0 + $0x28] sm:$0xf]
  %v32 = vld [vmem:[%s0 + $0x2c] sm:$0xf]
  %v33 = vld [vmem:[%s0 + $0x30] sm:$0xf]
  %v34 = vld [vmem:[%s0 + $0x34] sm:$0xf]
  %v35 = vld [vmem:[%s0 + $0x38] sm:$0xf]
  %v36 = vld [vmem:[%s0 + $0x3c] sm:$0xf]
  %v37 = vld [vmem:[%s0 + $0x40] sm:$0xf]
  %v38 = vld [vmem:[%s0 + $0x44] sm:$0xf]
  %v39 = vld [vmem:[%s0 + $0x48] sm:$0xf]
  %v40 = vld [vmem:[%s0 + $0x4c] sm:$0xf]
  %v41 = vld [vmem:[%s0 + $0x50] sm:$0xf]
  %v42 = vld [vmem:[%s0 + $0x54] sm:$0xf]
  %v43 = vld [vmem:[%s0 + $0x58] sm:$0xf]
  %v44 = vld [vmem:[%s0 + $0x5c] sm:$0xf]
  %v45 = vld [vmem:[%s0 + $0x60] sm:$0xf]
  %v46 = vld [vmem:[%s0 + $0x64] sm:$0xf]
  %v47 = vld [vmem:[%s0 + $0x68] sm:$0xf]
  %v48 = vld [vmem:[%s0 + $0x6c] sm:$0xf]
  %v49 = vld [vmem:[%s0 + $0x70] sm:$0xf]
  %v50 = vld [vmem:[%s0 + $0x74] sm:$0xf]
  %v51 = vld [vmem:[%s0 + $0x78] sm:$0xf]
  %v52 = vld [vmem:[%s0 + $0x7c] sm:$0xf]
  %v53 = vld [vmem:[%s0 + $0x80] sm:$0xf]
  %v54 = vld [vmem:[%s0 + $0x84] sm:$0xf]
  %v55 = vld [vmem:[%s0 + $0x88] sm:$0xf]
  %v56 = vld [vmem:[%s0 + $0x8c] sm:$0xf]
  %v57 = vld [vmem:[%s0 + $0x90] sm:$0xf]
  %v58 = vld [vmem:[%s0 + $0x94] sm:$0xf]
  %v59 = vld [vmem:[%s0 + $0x98] sm:$0xf]
  %v60 = vld [vmem:[%s0 + $0x9c] sm:$0xf]
  %v61 = vld [vmem:[%s0 + $0xa0] sm:$0xf]
  %v62 = vld [vmem:[%s0 + $0xa4] sm:$0xf]
  %v63 = vld [vmem:[%s0 + $0xa8] sm:$0xf]
  %v64 = vld [vmem:[%s0 + $0xac] sm:$0xf]
  %v65 = vld [vmem:[%s0 + $0xb0] sm:$0xf]
  %v66 = vld [vmem:[%s0 + $0xb4] sm:$0xf]
  %v67 = vld [vmem:[%s0 + $0xb8] sm:$0xf]
  %v68 = vld [vmem:[%s0 + $0xbc] sm:$0xf]
  %v69 = vld [vmem:[%s0 + $0xc0] sm:$0xf]
  %v70 = vld [vmem:[%s0 + $0xc4] sm:$0xf]
  %v71 = vld [vmem:[%s0 + $0xc8] sm:$0xf]
  %v72 = vld [vmem:[%s0 + $0xcc] sm:$0xf]
  %v73 = vld [vmem:[%s0 + $0xd0] sm:$0xf]
  %v74 = vld [vmem:[%s0 + $0xd4] sm:$0xf]
  %v75 = vld [vmem:[%s0 + $0xd8] sm:$0xf]
  %v76 = vld [vmem:[%s0 + $0xdc] sm:$0xf]
  %v77 = vld [vmem:[%s0 + $0xe0] sm:$0xf]
  %v78 = vld [vmem:[%s0 + $0xe4] sm:$0xf]
  %v79 = vld [vmem:[%s0 + $0xe8] sm:$0xf]
  %v80 = vld [vmem:[%s0 + $0xec] sm:$0xf]
  %v81 = vld [vmem:[%s0 + $0xf0] sm:$0xf]
  %v82 = vld [vmem:[%s0 + $0xf4] sm:$0xf]
  %v83 = vld [vmem:[%s0 + $0xf8] sm:$0xf]
  %v84 = vld [vmem:[%s0 + $0xfc] sm:$0xf]
  %v85 = vld [vmem:[%s2] sm:$0xf]
  %v86 = vld [vmem:[%s2 + $0x4] sm:$0xf]
  %v87 = vld [vmem:[%s2 + $0x8] sm:$0xf]
  %v88 = vld [vmem:[%s2 + $0xc] sm:$0xf]
  %v89 = vld [vmem:[%s1] sm:$0xf]
  %v90 = vld [vmem:[%s1 + $0x4] sm:$0xf]
  %v91 = vld [vmem:[%s1 + $0x8] sm:$0xf]
  %v92 = vld [vmem:[%s1 + $0xc] sm:$0xf]
  %v93 = vld [vmem:[%s1 + $0x10] sm:$0xf]
  %v94 = vld [vmem:[%s1 + $0x14] sm:$0xf]
  %v95 = vld [vmem:[%s1 + $0x18] sm:$0xf]
  %v96 = vld [vmem:[%s1 + $0x1c] sm:$0xf]
  %v97 = vld [vmem:[%s1 + $0x20] sm:$0xf]
  %v98 = vld [vmem:[%s1 + $0x24] sm:$0xf]
  %v99 = vld [vmem:[%s1 + $0x28] sm:$0xf]
  %v100 = vld [vmem:[%s1 + $0x2c] sm:$0xf]
  %v101 = vld [vmem:[%s1 + $0x30] sm:$0xf]
  %v102 = vld [vmem:[%s1 + $0x34] sm:$0xf]
  %v103 = vld [vmem:[%s1 + $0x38] sm:$0xf]
  %v104 = vld [vmem:[%s1 + $0x3c] sm:$0xf]
  %v105 = vld [vmem:[%s1 + $0x40] sm:$0xf]
  %v106 = vld [vmem:[%s1 + $0x44] sm:$0xf]
  %v107 = vld [vmem:[%s1 + $0x48] sm:$0xf]
  %v108 = vld [vmem:[%s1 + $0x4c] sm:$0xf]
  %v109 = vld [vmem:[%s1 + $0x50] sm:$0xf]
  %v110 = vld [vmem:[%s1 + $0x54] sm:$0xf]
  %v111 = vld [vmem:[%s1 + $0x58] sm:$0xf]
  %v112 = vld [vmem:[%s1 + $0x5c] sm:$0xf]
  %v113 = vld [vmem:[%s1 + $0x60] sm:$0xf]
  %v114 = vld [vmem:[%s1 + $0x64] sm:$0xf]
  %v115 = vld [vmem:[%s1 + $0x68] sm:$0xf]
  %v116 = vld [vmem:[%s1 + $0x6c] sm:$0xf]
  %v117 = vld [vmem:[%s1 + $0x70] sm:$0xf]
  %v118 = vld [vmem:[%s1 + $0x74] sm:$0xf]
  %v119 = vld [vmem:[%s1 + $0x78] sm:$0xf]
  %v120 = vld [vmem:[%s1 + $0x7c] sm:$0xf]
  %v121 = vld [vmem:[%s1 + $0x80] sm:$0xf]
  %v122 = vld [vmem:[%s1 + $0x84] sm:$0xf]
  %v123 = vld [vmem:[%s1 + $0x88] sm:$0xf]
  %v124 = vld [vmem:[%s1 + $0x8c] sm:$0xf]
  %v125 = vld [vmem:[%s1 + $0x90] sm:$0xf]
  %v126 = vld [vmem:[%s1 + $0x94] sm:$0xf]
  %v127 = vld [vmem:[%s1 + $0x98] sm:$0xf]
  %v128 = vld [vmem:[%s1 + $0x9c] sm:$0xf]
  %v129 = vld [vmem:[%s1 + $0xa0] sm:$0xf]
  %v130 = vld [vmem:[%s1 + $0xa4] sm:$0xf]
  %v131 = vld [vmem:[%s1 + $0xa8] sm:$0xf]
  %v132 = vld [vmem:[%s1 + $0xac] sm:$0xf]
  %v133 = vld [vmem:[%s1 + $0xb0] sm:$0xf]
  %v134 = vld [vmem:[%s1 + $0xb4] sm:$0xf]
  %v135 = vld [vmem:[%s1 + $0xb8] sm:$0xf]
  %v136 = vld [vmem:[%s1 + $0xbc] sm:$0xf]
  %v137 = vld [vmem:[%s1 + $0xc0] sm:$0xf]
  %v138 = vld [vmem:[%s1 + $0xc4] sm:$0xf]
  %v139 = vld [vmem:[%s1 + $0xc8] sm:$0xf]
  %v140 = vld [vmem:[%s1 + $0xcc] sm:$0xf]
  %v141 = vld [vmem:[%s1 + $0xd0] sm:$0xf]
  %v142 = vld [vmem:[%s1 + $0xd4] sm:$0xf]
  %v143 = vld [vmem:[%s1 + $0xd8] sm:$0xf]
  %v144 = vld [vmem:[%s1 + $0xdc] sm:$0xf]
  %v145 = vld [vmem:[%s1 + $0xe0] sm:$0xf]
  %v146 = vld [vmem:[%s1 + $0xe4] sm:$0xf]
  %v147 = vld [vmem:[%s1 + $0xe8] sm:$0xf]
  %v148 = vld [vmem:[%s1 + $0xec] sm:$0xf]
  %v149 = vld [vmem:[%s1 + $0xf0] sm:$0xf]
  %v150 = vld [vmem:[%s1 + $0xf4] sm:$0xf]
  %v151 = vld [vmem:[%s1 + $0xf8] sm:$0xf]
  %v152 = vld [vmem:[%s1 + $0xfc] sm:$0xf]
  %v153 = vld [vmem:[%s3] sm:$0xf]
  %v154 = vld [vmem:[%s3 + $0x4] sm:$0xf]
  %v155 = vld [vmem:[%s3 + $0x8] sm:$0xf]
  %v156 = vld [vmem:[%s3 + $0xc] sm:$0xf]
  %v221 = vunpack.c.l.b16 %v89
  %v222 = vunpack.c.l.b16 %v90
  %v223 = vunpack.c.l.b16 %v91
  %v224 = vunpack.c.l.b16 %v92
  %v225 = vunpack.c.l.b16 %v93
  %v226 = vunpack.c.l.b16 %v94
  %v227 = vunpack.c.l.b16 %v95
  %v228 = vunpack.c.l.b16 %v96
  %v229 = vunpack.c.l.b16 %v97
  %v230 = vunpack.c.l.b16 %v98
  %v231 = vunpack.c.l.b16 %v99
  %v232 = vunpack.c.l.b16 %v100
  %v233 = vunpack.c.l.b16 %v101
  %v234 = vunpack.c.l.b16 %v102
  %v235 = vunpack.c.l.b16 %v103
  %v236 = vunpack.c.l.b16 %v104
  %v237 = vunpack.c.l.b16 %v105
  %v238 = vunpack.c.l.b16 %v106
  %v239 = vunpack.c.l.b16 %v107
  %v240 = vunpack.c.l.b16 %v108
  %v241 = vunpack.c.l.b16 %v109
  %v242 = vunpack.c.l.b16 %v110
  %v243 = vunpack.c.l.b16 %v111
  %v244 = vunpack.c.l.b16 %v112
  %v245 = vunpack.c.l.b16 %v113
  %v246 = vunpack.c.l.b16 %v114
  %v247 = vunpack.c.l.b16 %v115
  %v248 = vunpack.c.l.b16 %v116
  %v249 = vunpack.c.l.b16 %v117
  %v250 = vunpack.c.l.b16 %v118
  %v251 = vunpack.c.l.b16 %v119
  %v252 = vunpack.c.l.b16 %v120
  %v253 = vunpack.c.l.b16 %v121
  %v254 = vunpack.c.l.b16 %v122
  %v255 = vunpack.c.l.b16 %v123
  %v256 = vunpack.c.l.b16 %v124
  %v257 = vunpack.c.l.b16 %v125
  %v258 = vunpack.c.l.b16 %v126
  %v259 = vunpack.c.l.b16 %v127
  %v260 = vunpack.c.l.b16 %v128
  %v261 = vunpack.c.l.b16 %v129
  %v262 = vunpack.c.l.b16 %v130
  %v263 = vunpack.c.l.b16 %v131
  %v264 = vunpack.c.l.b16 %v132
  %v265 = vunpack.c.l.b16 %v133
  %v266 = vunpack.c.l.b16 %v134
  %v267 = vunpack.c.l.b16 %v135
  %v268 = vunpack.c.l.b16 %v136
  %v269 = vunpack.c.l.b16 %v137
  %v270 = vunpack.c.l.b16 %v138
  %v271 = vunpack.c.l.b16 %v139
  %v272 = vunpack.c.l.b16 %v140
  %v273 = vunpack.c.l.b16 %v141
  %v274 = vunpack.c.l.b16 %v142
  %v275 = vunpack.c.l.b16 %v143
  %v276 = vunpack.c.l.b16 %v144
  %v277 = vunpack.c.l.b16 %v145
  %v278 = vunpack.c.l.b16 %v146
  %v279 = vunpack.c.l.b16 %v147
  %v280 = vunpack.c.l.b16 %v148
  %v281 = vunpack.c.l.b16 %v149
  %v282 = vunpack.c.l.b16 %v150
  %v283 = vunpack.c.l.b16 %v151
  %v284 = vunpack.c.l.b16 %v152
  %v285 = vpack.c.b16 %v222, %v221
  %v286 = vpack.c.b16 %v224, %v223
  %v287 = vpack.c.b16 %v226, %v225
  %v288 = vpack.c.b16 %v228, %v227
  %v289 = vpack.c.b16 %v230, %v229
  %v290 = vpack.c.b16 %v232, %v231
  %v291 = vpack.c.b16 %v234, %v233
  %v292 = vpack.c.b16 %v236, %v235
  %v293 = vpack.c.b16 %v238, %v237
  %v294 = vpack.c.b16 %v240, %v239
  %v295 = vpack.c.b16 %v242, %v241
  %v296 = vpack.c.b16 %v244, %v243
  %v297 = vpack.c.b16 %v246, %v245
  %v298 = vpack.c.b16 %v248, %v247
  %v299 = vpack.c.b16 %v250, %v249
  %v300 = vpack.c.b16 %v252, %v251
  %v301 = vpack.c.b16 %v254, %v253
  %v302 = vpack.c.b16 %v256, %v255
  %v303 = vpack.c.b16 %v258, %v257
  %v304 = vpack.c.b16 %v260, %v259
  %v305 = vpack.c.b16 %v262, %v261
  %v306 = vpack.c.b16 %v264, %v263
  %v307 = vpack.c.b16 %v266, %v265
  %v308 = vpack.c.b16 %v268, %v267
  %v309 = vpack.c.b16 %v270, %v269
  %v310 = vpack.c.b16 %v272, %v271
  %v311 = vpack.c.b16 %v274, %v273
  %v312 = vpack.c.b16 %v276, %v275
  %v313 = vpack.c.b16 %v278, %v277
  %v314 = vpack.c.b16 %v280, %v279
  %v315 = vpack.c.b16 %v282, %v281
  %v316 = vpack.c.b16 %v284, %v283
  %v321 = vunpack.c.l.b16 %v153
  %v322 = vunpack.c.l.b16 %v154
  %v323 = vunpack.c.l.b16 %v155
  %v324 = vunpack.c.l.b16 %v156
  %v325 = vpack.c.b16 %v322, %v321
  %v326 = vpack.c.b16 %v324, %v323
  %vm329 = vcmask 261120
  %v331 = vsel %vm329, %v285, 0
  %v334 = vsel %vm329, %v286, 0
  %v337 = vsel %vm329, %v287, 0
  %v340 = vsel %vm329, %v288, 0
  %v343 = vsel %vm329, %v289, 0
  %v346 = vsel %vm329, %v290, 0
  %v349 = vsel %vm329, %v291, 0
  %v352 = vsel %vm329, %v292, 0
  %v355 = vsel %vm329, %v293, 0
  %v358 = vsel %vm329, %v294, 0
  %v361 = vsel %vm329, %v295, 0
  %v364 = vsel %vm329, %v296, 0
  %v367 = vsel %vm329, %v297, 0
  %v370 = vsel %vm329, %v298, 0
  %v373 = vsel %vm329, %v299, 0
  %v376 = vsel %vm329, %v300, 0
  %v379 = vsel %vm329, %v301, 0
  %v382 = vsel %vm329, %v302, 0
  %v385 = vsel %vm329, %v303, 0
  %v388 = vsel %vm329, %v304, 0
  %v391 = vsel %vm329, %v305, 0
  %v394 = vsel %vm329, %v306, 0
  %v397 = vsel %vm329, %v307, 0
  %v400 = vsel %vm329, %v308, 0
  %v403 = vsel %vm329, %v309, 0
  %v406 = vsel %vm329, %v310, 0
  %v409 = vsel %vm329, %v311, 0
  %v412 = vsel %vm329, %v312, 0
  %v415 = vsel %vm329, %v313, 0
  %v418 = vsel %vm329, %v314, 0
  %v421 = vsel %vm329, %v315, 0
  %v424 = vsel %vm329, %v316, 0
  %426 = vmatprep.subr.bf16.mxu0 0
  %427 = vmatpush1.bf16.msra.mxu0 %v325
  %428 = vmatprep.subr.bf16.mxu0 0
  %429 = vmatpush1.bf16.msra.mxu0 %v326
  %430 = vmatprep.subr.bf16.mxu0 0
  %431 = vmatpush1.bf16.msra.mxu0 0
  %432 = vmatprep.subr.bf16.mxu0 0
  %433 = vmatpush1.bf16.msra.mxu0 0
  %434 = vmatprep.subr.bf16.mxu0 0
  %435 = vmatpush1.bf16.msra.mxu0 0
  %436 = vmatprep.subr.bf16.mxu0 0
  %437 = vmatpush1.bf16.msra.mxu0 0
  %438 = vmatprep.subr.bf16.mxu0 0
  %439 = vmatpush1.bf16.msra.mxu0 0
  %440 = vmatprep.subr.bf16.mxu0 0
  %441 = vmatpush1.bf16.msra.mxu0 0
  %442 = vmatprep.subr.bf16.mxu0 0
  %443 = vmatpush1.bf16.msra.mxu0 0
  %444 = vmatprep.subr.bf16.mxu0 0
  %445 = vmatpush1.bf16.msra.mxu0 0
  %446 = vmatprep.subr.bf16.mxu0 0
  %447 = vmatpush1.bf16.msra.mxu0 0
  %448 = vmatprep.subr.bf16.mxu0 0
  %449 = vmatpush1.bf16.msra.mxu0 0
  %450 = vmatprep.subr.bf16.mxu0 0
  %451 = vmatpush1.bf16.msra.mxu0 0
  %452 = vmatprep.subr.bf16.mxu0 0
  %453 = vmatpush1.bf16.msra.mxu0 0
  %454 = vmatprep.subr.bf16.mxu0 0
  %455 = vmatpush1.bf16.msra.mxu0 0
  %456 = vmatprep.subr.bf16.mxu0 0
  %457 = vmatpush1.bf16.msra.mxu0 0
  %458 = vmatprep.mubr.bf16.mxu0 0
  %459 = vmatmul.mubr.bf16.gmra.mrb[0].mxu0 %v331
  %v460 = vpop.f32.mrb[0].mxu0
  %v461 = vadd.f32 0.0, %v460
  %v462 = vpop.f32.mrb[0].mxu0
  %v463 = vpop.f32.mrb[0].mxu0
  %v464 = vadd.f32 0.0, %v463
  %v465 = vpop.f32.mrb[0].mxu0
  %466 = vmatprep.mubr.bf16.mxu0 0
  %467 = vmatmul.mubr.bf16.gmra.mrb[0].mxu0 %v334
  %v468 = vpop.f32.mrb[0].mxu0
  %v469 = vadd.f32 0.0, %v468
  %v470 = vpop.f32.mrb[0].mxu0
  %v471 = vpop.f32.mrb[0].mxu0
  %v472 = vadd.f32 0.0, %v471
  %v473 = vpop.f32.mrb[0].mxu0
  %474 = vmatprep.mubr.bf16.mxu0 0
  %475 = vmatmul.mubr.bf16.gmra.mrb[0].mxu0 %v337
  %v476 = vpop.f32.mrb[0].mxu0
  %v477 = vadd.f32 0.0, %v476
  %v478 = vpop.f32.mrb[0].mxu0
  %v479 = vpop.f32.mrb[0].mxu0
  %v480 = vadd.f32 0.0, %v479
  %v481 = vpop.f32.mrb[0].mxu0
  %482 = vmatprep.mubr.bf16.mxu0 0
  %483 = vmatmul.mubr.bf16.gmra.mrb[0].mxu0 %v340
  %v484 = vpop.f32.mrb[0].mxu0
  %v485 = vadd.f32 0.0, %v484
  %v486 = vpop.f32.mrb[0].mxu0
  %v487 = vpop.f32.mrb[0].mxu0
  %v488 = vadd.f32 0.0, %v487
  %v489 = vpop.f32.mrb[0].mxu0
  %490 = vmatprep.mubr.bf16.mxu0 0
  %491 = vmatmul.mubr.bf16.gmra.mrb[0].mxu0 %v343
  %v492 = vpop.f32.mrb[0].mxu0
  %v493 = vadd.f32 0.0, %v492
  %v494 = vpop.f32.mrb[0].mxu0
  %v495 = vpop.f32.mrb[0].mxu0
  %v496 = vadd.f32 0.0, %v495
  %v497 = vpop.f32.mrb[0].mxu0
  %498 = vmatprep.mubr.bf16.mxu0 0
  %499 = vmatmul.mubr.bf16.gmra.mrb[0].mxu0 %v346
  %v500 = vpop.f32.mrb[0].mxu0
  %v501 = vadd.f32 0.0, %v500
  %v502 = vpop.f32.mrb[0].mxu0
  %v503 = vpop.f32.mrb[0].mxu0
  %v504 = vadd.f32 0.0, %v503
  %v505 = vpop.f32.mrb[0].mxu0
  %506 = vmatprep.mubr.bf16.mxu0 0
  %507 = vmatmul.mubr.bf16.gmra.mrb[0].mxu0 %v349
  %v508 = vpop.f32.mrb[0].mxu0
  %v509 = vadd.f32 0.0, %v508
  %v510 = vpop.f32.mrb[0].mxu0
  %v511 = vpop.f32.mrb[0].mxu0
  %v512 = vadd.f32 0.0, %v511
  %v513 = vpop.f32.mrb[0].mxu0
  %514 = vmatprep.mubr.bf16.mxu0 0
  %515 = vmatmul.mubr.bf16.gmra.mrb[0].mxu0 %v352
  %v516 = vpop.f32.mrb[0].mxu0
  %v517 = vadd.f32 0.0, %v516
  %v518 = vpop.f32.mrb[0].mxu0
  %v519 = vpop.f32.mrb[0].mxu0
  %v520 = vadd.f32 0.0, %v519
  %v521 = vpop.f32.mrb[0].mxu0
  %522 = vmatprep.mubr.bf16.mxu0 0
  %523 = vmatmul.mubr.bf16.gmra.mrb[0].mxu0 %v355
  %v524 = vpop.f32.mrb[0].mxu0
  %v525 = vadd.f32 0.0, %v524
  %v526 = vpop.f32.mrb[0].mxu0
  %v527 = vpop.f32.mrb[0].mxu0
  %v528 = vadd.f32 0.0, %v527
  %v529 = vpop.f32.mrb[0].mxu0
  %530 = vmatprep.mubr.bf16.mxu0 0
  %531 = vmatmul.mubr.bf16.gmra.mrb[0].mxu0 %v358
  %v532 = vpop.f32.mrb[0].mxu0
  %v533 = vadd.f32 0.0, %v532
  %v534 = vpop.f32.mrb[0].mxu0
  %v535 = vpop.f32.mrb[0].mxu0
  %v536 = vadd.f32 0.0, %v535
  %v537 = vpop.f32.mrb[0].mxu0
  %538 = vmatprep.mubr.bf16.mxu0 0
  %539 = vmatmul.mubr.bf16.gmra.mrb[0].mxu0 %v361
  %v540 = vpop.f32.mrb[0].mxu0
  %v541 = vadd.f32 0.0, %v540
  %v542 = vpop.f32.mrb[0].mxu0
  %v543 = vpop.f32.mrb[0].mxu0
  %v544 = vadd.f32 0.0, %v543
  %v545 = vpop.f32.mrb[0].mxu0
  %546 = vmatprep.mubr.bf16.mxu0 0
  %547 = vmatmul.mubr.bf16.gmra.mrb[0].mxu0 %v364
  %v548 = vpop.f32.mrb[0].mxu0
  %v549 = vadd.f32 0.0, %v548
  %v550 = vpop.f32.mrb[0].mxu0
  %v551 = vpop.f32.mrb[0].mxu0
  %v552 = vadd.f32 0.0, %v551
  %v553 = vpop.f32.mrb[0].mxu0
  %554 = vmatprep.mubr.bf16.mxu0 0
  %555 = vmatmul.mubr.bf16.gmra.mrb[0].mxu0 %v367
  %v556 = vpop.f32.mrb[0].mxu0
  %v557 = vadd.f32 0.0, %v556
  %v558 = vpop.f32.mrb[0].mxu0
  %v559 = vpop.f32.mrb[0].mxu0
  %v560 = vadd.f32 0.0, %v559
  %v561 = vpop.f32.mrb[0].mxu0
  %562 = vmatprep.mubr.bf16.mxu0 0
  %563 = vmatmul.mubr.bf16.gmra.mrb[0].mxu0 %v370
  %v564 = vpop.f32.mrb[0].mxu0
  %v565 = vadd.f32 0.0, %v564
  %v566 = vpop.f32.mrb[0].mxu0
  %v567 = vpop.f32.mrb[0].mxu0
  %v568 = vadd.f32 0.0, %v567
  %v569 = vpop.f32.mrb[0].mxu0
  %570 = vmatprep.mubr.bf16.mxu0 0
  %571 = vmatmul.mubr.bf16.gmra.mrb[0].mxu0 %v373
  %v572 = vpop.f32.mrb[0].mxu0
  %v573 = vadd.f32 0.0, %v572
  %v574 = vpop.f32.mrb[0].mxu0
  %v575 = vpop.f32.mrb[0].mxu0
  %v576 = vadd.f32 0.0, %v575
  %v577 = vpop.f32.mrb[0].mxu0
  %578 = vmatprep.mubr.bf16.mxu0 0
  %579 = vmatmul.mubr.bf16.gmra.mrb[0].mxu0 %v376
  %v580 = vpop.f32.mrb[0].mxu0
  %v581 = vadd.f32 0.0, %v580
  %v582 = vpop.f32.mrb[0].mxu0
  %v583 = vpop.f32.mrb[0].mxu0
  %v584 = vadd.f32 0.0, %v583
  %v585 = vpop.f32.mrb[0].mxu0
  %586 = vmatprep.mubr.bf16.mxu0 0
  %587 = vmatmul.mubr.bf16.gmra.mrb[0].mxu0 %v379
  %v588 = vpop.f32.mrb[0].mxu0
  %v589 = vadd.f32 0.0, %v588
  %v590 = vpop.f32.mrb[0].mxu0
  %v591 = vpop.f32.mrb[0].mxu0
  %v592 = vadd.f32 0.0, %v591
  %v593 = vpop.f32.mrb[0].mxu0
  %594 = vmatprep.mubr.bf16.mxu0 0
  %595 = vmatmul.mubr.bf16.gmra.mrb[0].mxu0 %v382
  %v596 = vpop.f32.mrb[0].mxu0
  %v597 = vadd.f32 0.0, %v596
  %v598 = vpop.f32.mrb[0].mxu0
  %v599 = vpop.f32.mrb[0].mxu0
  %v600 = vadd.f32 0.0, %v599
  %v601 = vpop.f32.mrb[0].mxu0
  %602 = vmatprep.mubr.bf16.mxu0 0
  %603 = vmatmul.mubr.bf16.gmra.mrb[0].mxu0 %v385
  %v604 = vpop.f32.mrb[0].mxu0
  %v605 = vadd.f32 0.0, %v604
  %v606 = vpop.f32.mrb[0].mxu0
  %v607 = vpop.f32.mrb[0].mxu0
  %v608 = vadd.f32 0.0, %v607
  %v609 = vpop.f32.mrb[0].mxu0
  %610 = vmatprep.mubr.bf16.mxu0 0
  %611 = vmatmul.mubr.bf16.gmra.mrb[0].mxu0 %v388
  %v612 = vpop.f32.mrb[0].mxu0
  %v613 = vadd.f32 0.0, %v612
  %v614 = vpop.f32.mrb[0].mxu0
  %v615 = vpop.f32.mrb[0].mxu0
  %v616 = vadd.f32 0.0, %v615
  %v617 = vpop.f32.mrb[0].mxu0
  %618 = vmatprep.mubr.bf16.mxu0 0
  %619 = vmatmul.mubr.bf16.gmra.mrb[0].mxu0 %v391
  %v620 = vpop.f32.mrb[0].mxu0
  %v621 = vadd.f32 0.0, %v620
  %v622 = vpop.f32.mrb[0].mxu0
  %v623 = vpop.f32.mrb[0].mxu0
  %v624 = vadd.f32 0.0, %v623
  %v625 = vpop.f32.mrb[0].mxu0
  %626 = vmatprep.mubr.bf16.mxu0 0
  %627 = vmatmul.mubr.bf16.gmra.mrb[0].mxu0 %v394
  %v628 = vpop.f32.mrb[0].mxu0
  %v629 = vadd.f32 0.0, %v628
  %v630 = vpop.f32.mrb[0].mxu0
  %v631 = vpop.f32.mrb[0].mxu0
  %v632 = vadd.f32 0.0, %v631
  %v633 = vpop.f32.mrb[0].mxu0
  %634 = vmatprep.mubr.bf16.mxu0 0
  %635 = vmatmul.mubr.bf16.gmra.mrb[0].mxu0 %v397
  %v636 = vpop.f32.mrb[0].mxu0
  %v637 = vadd.f32 0.0, %v636
  %v638 = vpop.f32.mrb[0].mxu0
  %v639 = vpop.f32.mrb[0].mxu0
  %v640 = vadd.f32 0.0, %v639
  %v641 = vpop.f32.mrb[0].mxu0
  %642 = vmatprep.mubr.bf16.mxu0 0
  %643 = vmatmul.mubr.bf16.gmra.mrb[0].mxu0 %v400
  %v644 = vpop.f32.mrb[0].mxu0
  %v645 = vadd.f32 0.0, %v644
  %v646 = vpop.f32.mrb[0].mxu0
  %v647 = vpop.f32.mrb[0].mxu0
  %v648 = vadd.f32 0.0, %v647
  %v649 = vpop.f32.mrb[0].mxu0
  %650 = vmatprep.mubr.bf16.mxu0 0
  %651 = vmatmul.mubr.bf16.gmra.mrb[0].mxu0 %v403
  %v652 = vpop.f32.mrb[0].mxu0
  %v653 = vadd.f32 0.0, %v652
  %v654 = vpop.f32.mrb[0].mxu0
  %v655 = vpop.f32.mrb[0].mxu0
  %v656 = vadd.f32 0.0, %v655
  %v657 = vpop.f32.mrb[0].mxu0
  %658 = vmatprep.mubr.bf16.mxu0 0
  %659 = vmatmul.mubr.bf16.gmra.mrb[0].mxu0 %v406
  %v660 = vpop.f32.mrb[0].mxu0
  %v661 = vadd.f32 0.0, %v660
  %v662 = vpop.f32.mrb[0].mxu0
  %v663 = vpop.f32.mrb[0].mxu0
  %v664 = vadd.f32 0.0, %v663
  %v665 = vpop.f32.mrb[0].mxu0
  %666 = vmatprep.mubr.bf16.mxu0 0
  %667 = vmatmul.mubr.bf16.gmra.mrb[0].mxu0 %v409
  %v668 = vpop.f32.mrb[0].mxu0
  %v669 = vadd.f32 0.0, %v668
  %v670 = vpop.f32.mrb[0].mxu0
  %v671 = vpop.f32.mrb[0].mxu0
  %v672 = vadd.f32 0.0, %v671
  %v673 = vpop.f32.mrb[0].mxu0
  %674 = vmatprep.mubr.bf16.mxu0 0
  %675 = vmatmul.mubr.bf16.gmra.mrb[0].mxu0 %v412
  %v676 = vpop.f32.mrb[0].mxu0
  %v677 = vadd.f32 0.0, %v676
  %v678 = vpop.f32.mrb[0].mxu0
  %v679 = vpop.f32.mrb[0].mxu0
  %v680 = vadd.f32 0.0, %v679
  %v681 = vpop.f32.mrb[0].mxu0
  %682 = vmatprep.mubr.bf16.mxu0 0
  %683 = vmatmul.mubr.bf16.gmra.mrb[0].mxu0 %v415
  %v684 = vpop.f32.mrb[0].mxu0
  %v685 = vadd.f32 0.0, %v684
  %v686 = vpop.f32.mrb[0].mxu0
  %v687 = vpop.f32.mrb[0].mxu0
  %v688 = vadd.f32 0.0, %v687
  %v689 = vpop.f32.mrb[0].mxu0
  %690 = vmatprep.mubr.bf16.mxu0 0
  %691 = vmatmul.mubr.bf16.gmra.mrb[0].mxu0 %v418
  %v692 = vpop.f32.mrb[0].mxu0
  %v693 = vadd.f32 0.0, %v692
  %v694 = vpop.f32.mrb[0].mxu0
  %v695 = vpop.f32.mrb[0].mxu0
  %v696 = vadd.f32 0.0, %v695
  %v697 = vpop.f32.mrb[0].mxu0
  %698 = vmatprep.mubr.bf16.mxu0 0
  %699 = vmatmul.mubr.bf16.gmra.mrb[0].mxu0 %v421
  %v700 = vpop.f32.mrb[0].mxu0
  %v701 = vadd.f32 0.0, %v700
  %v702 = vpop.f32.mrb[0].mxu0
  %v703 = vpop.f32.mrb[0].mxu0
  %v704 = vadd.f32 0.0, %v703
  %v705 = vpop.f32.mrb[0].mxu0
  %706 = vmatprep.mubr.bf16.mxu0 0
  %707 = vmatmul.mubr.bf16.gmra.mrb[0].mxu0 %v424
  %v708 = vpop.f32.mrb[0].mxu0
  %v709 = vadd.f32 0.0, %v708
  %v710 = vpop.f32.mrb[0].mxu0
  %v711 = vpop.f32.mrb[0].mxu0
  %v712 = vadd.f32 0.0, %v711
  %v713 = vpop.f32.mrb[0].mxu0
  %714 = vdwg.mxu0
  %v779 = vunpack.c.l.b16 %v21
  %v780 = vunpack.c.l.b16 %v22
  %v781 = vunpack.c.l.b16 %v23
  %v782 = vunpack.c.l.b16 %v24
  %v783 = vunpack.c.l.b16 %v25
  %v784 = vunpack.c.l.b16 %v26
  %v785 = vunpack.c.l.b16 %v27
  %v786 = vunpack.c.l.b16 %v28
  %v787 = vunpack.c.l.b16 %v29
  %v788 = vunpack.c.l.b16 %v30
  %v789 = vunpack.c.l.b16 %v31
  %v790 = vunpack.c.l.b16 %v32
  %v791 = vunpack.c.l.b16 %v33
  %v792 = vunpack.c.l.b16 %v34
  %v793 = vunpack.c.l.b16 %v35
  %v794 = vunpack.c.l.b16 %v36
  %v795 = vunpack.c.l.b16 %v37
  %v796 = vunpack.c.l.b16 %v38
  %v797 = vunpack.c.l.b16 %v39
  %v798 = vunpack.c.l.b16 %v40
  %v799 = vunpack.c.l.b16 %v41
  %v800 = vunpack.c.l.b16 %v42
  %v801 = vunpack.c.l.b16 %v43
  %v802 = vunpack.c.l.b16 %v44
  %v803 = vunpack.c.l.b16 %v45
  %v804 = vunpack.c.l.b16 %v46
  %v805 = vunpack.c.l.b16 %v47
  %v806 = vunpack.c.l.b16 %v48
  %v807 = vunpack.c.l.b16 %v49
  %v808 = vunpack.c.l.b16 %v50
  %v809 = vunpack.c.l.b16 %v51
  %v810 = vunpack.c.l.b16 %v52
  %v811 = vunpack.c.l.b16 %v53
  %v812 = vunpack.c.l.b16 %v54
  %v813 = vunpack.c.l.b16 %v55
  %v814 = vunpack.c.l.b16 %v56
  %v815 = vunpack.c.l.b16 %v57
  %v816 = vunpack.c.l.b16 %v58
  %v817 = vunpack.c.l.b16 %v59
  %v818 = vunpack.c.l.b16 %v60
  %v819 = vunpack.c.l.b16 %v61
  %v820 = vunpack.c.l.b16 %v62
  %v821 = vunpack.c.l.b16 %v63
  %v822 = vunpack.c.l.b16 %v64
  %v823 = vunpack.c.l.b16 %v65
  %v824 = vunpack.c.l.b16 %v66
  %v825 = vunpack.c.l.b16 %v67
  %v826 = vunpack.c.l.b16 %v68
  %v827 = vunpack.c.l.b16 %v69
  %v828 = vunpack.c.l.b16 %v70
  %v829 = vunpack.c.l.b16 %v71
  %v830 = vunpack.c.l.b16 %v72
  %v831 = vunpack.c.l.b16 %v73
  %v832 = vunpack.c.l.b16 %v74
  %v833 = vunpack.c.l.b16 %v75
  %v834 = vunpack.c.l.b16 %v76
  %v835 = vunpack.c.l.b16 %v77
  %v836 = vunpack.c.l.b16 %v78
  %v837 = vunpack.c.l.b16 %v79
  %v838 = vunpack.c.l.b16 %v80
  %v839 = vunpack.c.l.b16 %v81
  %v840 = vunpack.c.l.b16 %v82
  %v841 = vunpack.c.l.b16 %v83
  %v842 = vunpack.c.l.b16 %v84
  %v843 = vpack.c.b16 %v780, %v779
  %v844 = vpack.c.b16 %v782, %v781
  %v845 = vpack.c.b16 %v784, %v783
  %v846 = vpack.c.b16 %v786, %v785
  %v847 = vpack.c.b16 %v788, %v787
  %v848 = vpack.c.b16 %v790, %v789
  %v849 = vpack.c.b16 %v792, %v791
  %v850 = vpack.c.b16 %v794, %v793
  %v851 = vpack.c.b16 %v796, %v795
  %v852 = vpack.c.b16 %v798, %v797
  %v853 = vpack.c.b16 %v800, %v799
  %v854 = vpack.c.b16 %v802, %v801
  %v855 = vpack.c.b16 %v804, %v803
  %v856 = vpack.c.b16 %v806, %v805
  %v857 = vpack.c.b16 %v808, %v807
  %v858 = vpack.c.b16 %v810, %v809
  %v859 = vpack.c.b16 %v812, %v811
  %v860 = vpack.c.b16 %v814, %v813
  %v861 = vpack.c.b16 %v816, %v815
  %v862 = vpack.c.b16 %v818, %v817
  %v863 = vpack.c.b16 %v820, %v819
  %v864 = vpack.c.b16 %v822, %v821
  %v865 = vpack.c.b16 %v824, %v823
  %v866 = vpack.c.b16 %v826, %v825
  %v867 = vpack.c.b16 %v828, %v827
  %v868 = vpack.c.b16 %v830, %v829
  %v869 = vpack.c.b16 %v832, %v831
  %v870 = vpack.c.b16 %v834, %v833
  %v871 = vpack.c.b16 %v836, %v835
  %v872 = vpack.c.b16 %v838, %v837
  %v873 = vpack.c.b16 %v840, %v839
  %v874 = vpack.c.b16 %v842, %v841
  %v879 = vunpack.c.l.b16 %v85
  %v880 = vunpack.c.l.b16 %v86
  %v881 = vunpack.c.l.b16 %v87
  %v882 = vunpack.c.l.b16 %v88
  %v883 = vpack.c.b16 %v880, %v879
  %v884 = vpack.c.b16 %v882, %v881
  %v888 = vsel %vm329, %v843, 0
  %v891 = vsel %vm329, %v844, 0
  %v894 = vsel %vm329, %v845, 0
  %v897 = vsel %vm329, %v846, 0
  %v900 = vsel %vm329, %v847, 0
  %v903 = vsel %vm329, %v848, 0
  %v906 = vsel %vm329, %v849, 0
  %v909 = vsel %vm329, %v850, 0
  %v912 = vsel %vm329, %v851, 0
  %v915 = vsel %vm329, %v852, 0
  %v918 = vsel %vm329, %v853, 0
  %v921 = vsel %vm329, %v854, 0
  %v924 = vsel %vm329, %v855, 0
  %v927 = vsel %vm329, %v856, 0
  %v930 = vsel %vm329, %v857, 0
  %v933 = vsel %vm329, %v858, 0
  %v936 = vsel %vm329, %v859, 0
  %v939 = vsel %vm329, %v860, 0
  %v942 = vsel %vm329, %v861, 0
  %v945 = vsel %vm329, %v862, 0
  %v948 = vsel %vm329, %v863, 0
  %v951 = vsel %vm329, %v864, 0
  %v954 = vsel %vm329, %v865, 0
  %v957 = vsel %vm329, %v866, 0
  %v960 = vsel %vm329, %v867, 0
  %v963 = vsel %vm329, %v868, 0
  %v966 = vsel %vm329, %v869, 0
  %v969 = vsel %vm329, %v870, 0
  %v972 = vsel %vm329, %v871, 0
  %v975 = vsel %vm329, %v872, 0
  %v978 = vsel %vm329, %v873, 0
  %v981 = vsel %vm329, %v874, 0
  %983 = vmatprep.subr.bf16.mxu0 0
  %984 = vmatpush1.bf16.msra.mxu0 %v883
  %985 = vmatprep.subr.bf16.mxu0 0
  %986 = vmatpush1.bf16.msra.mxu0 %v884
  %987 = vmatprep.subr.bf16.mxu0 0
  %988 = vmatpush1.bf16.msra.mxu0 0
  %989 = vmatprep.subr.bf16.mxu0 0
  %990 = vmatpush1.bf16.msra.mxu0 0
  %991 = vmatprep.subr.bf16.mxu0 0
  %992 = vmatpush1.bf16.msra.mxu0 0
  %993 = vmatprep.subr.bf16.mxu0 0
  %994 = vmatpush1.bf16.msra.mxu0 0
  %995 = vmatprep.subr.bf16.mxu0 0
  %996 = vmatpush1.bf16.msra.mxu0 0
  %997 = vmatprep.subr.bf16.mxu0 0
  %998 = vmatpush1.bf16.msra.mxu0 0
  %999 = vmatprep.subr.bf16.mxu0 0
  %1000 = vmatpush1.bf16.msra.mxu0 0
  %1001 = vmatprep.subr.bf16.mxu0 0
  %1002 = vmatpush1.bf16.msra.mxu0 0
  %1003 = vmatprep.subr.bf16.mxu0 0
  %1004 = vmatpush1.bf16.msra.mxu0 0
  %1005 = vmatprep.subr.bf16.mxu0 0
  %1006 = vmatpush1.bf16.msra.mxu0 0
  %1007 = vmatprep.subr.bf16.mxu0 0
  %1008 = vmatpush1.bf16.msra.mxu0 0
  %1009 = vmatprep.subr.bf16.mxu0 0
  %1010 = vmatpush1.bf16.msra.mxu0 0
  %1011 = vmatprep.subr.bf16.mxu0 0
  %1012 = vmatpush1.bf16.msra.mxu0 0
  %1013 = vmatprep.subr.bf16.mxu0 0
  %1014 = vmatpush1.bf16.msra.mxu0 0
  %1015 = vmatprep.mubr.bf16.mxu0 0
  %1016 = vmatmul.mubr.bf16.gmra.mrb[0].mxu0 %v888
  %v1017 = vpop.f32.mrb[0].mxu0
  %v1018 = vadd.f32 %v461, %v1017
  %v1019 = vpop.f32.mrb[0].mxu0
  %v1020 = vpop.f32.mrb[0].mxu0
  %v1021 = vadd.f32 %v464, %v1020
  %v1022 = vpop.f32.mrb[0].mxu0
  %1023 = vmatprep.mubr.bf16.mxu0 0
  %1024 = vmatmul.mubr.bf16.gmra.mrb[0].mxu0 %v891
  %v1025 = vpop.f32.mrb[0].mxu0
  %v1026 = vadd.f32 %v469, %v1025
  %v1027 = vpop.f32.mrb[0].mxu0
  %v1028 = vpop.f32.mrb[0].mxu0
  %v1029 = vadd.f32 %v472, %v1028
  %v1030 = vpop.f32.mrb[0].mxu0
  %1031 = vmatprep.mubr.bf16.mxu0 0
  %1032 = vmatmul.mubr.bf16.gmra.mrb[0].mxu0 %v894
  %v1033 = vpop.f32.mrb[0].mxu0
  %v1034 = vadd.f32 %v477, %v1033
  %v1035 = vpop.f32.mrb[0].mxu0
  %v1036 = vpop.f32.mrb[0].mxu0
  %v1037 = vadd.f32 %v480, %v1036
  %v1038 = vpop.f32.mrb[0].mxu0
  %1039 = vmatprep.mubr.bf16.mxu0 0
  %1040 = vmatmul.mubr.bf16.gmra.mrb[0].mxu0 %v897
  %v1041 = vpop.f32.mrb[0].mxu0
  %v1042 = vadd.f32 %v485, %v1041
  %v1043 = vpop.f32.mrb[0].mxu0
  %v1044 = vpop.f32.mrb[0].mxu0
  %v1045 = vadd.f32 %v488, %v1044
  %v1046 = vpop.f32.mrb[0].mxu0
  %1047 = vmatprep.mubr.bf16.mxu0 0
  %1048 = vmatmul.mubr.bf16.gmra.mrb[0].mxu0 %v900
  %v1049 = vpop.f32.mrb[0].mxu0
  %v1050 = vadd.f32 %v493, %v1049
  %v1051 = vpop.f32.mrb[0].mxu0
  %v1052 = vpop.f32.mrb[0].mxu0
  %v1053 = vadd.f32 %v496, %v1052
  %v1054 = vpop.f32.mrb[0].mxu0
  %1055 = vmatprep.mubr.bf16.mxu0 0
  %1056 = vmatmul.mubr.bf16.gmra.mrb[0].mxu0 %v903
  %v1057 = vpop.f32.mrb[0].mxu0
  %v1058 = vadd.f32 %v501, %v1057
  %v1059 = vpop.f32.mrb[0].mxu0
  %v1060 = vpop.f32.mrb[0].mxu0
  %v1061 = vadd.f32 %v504, %v1060
  %v1062 = vpop.f32.mrb[0].mxu0
  %1063 = vmatprep.mubr.bf16.mxu0 0
  %1064 = vmatmul.mubr.bf16.gmra.mrb[0].mxu0 %v906
  %v1065 = vpop.f32.mrb[0].mxu0
  %v1066 = vadd.f32 %v509, %v1065
  %v1067 = vpop.f32.mrb[0].mxu0
  %v1068 = vpop.f32.mrb[0].mxu0
  %v1069 = vadd.f32 %v512, %v1068
  %v1070 = vpop.f32.mrb[0].mxu0
  %1071 = vmatprep.mubr.bf16.mxu0 0
  %1072 = vmatmul.mubr.bf16.gmra.mrb[0].mxu0 %v909
  %v1073 = vpop.f32.mrb[0].mxu0
  %v1074 = vadd.f32 %v517, %v1073
  %v1075 = vpop.f32.mrb[0].mxu0
  %v1076 = vpop.f32.mrb[0].mxu0
  %v1077 = vadd.f32 %v520, %v1076
  %v1078 = vpop.f32.mrb[0].mxu0
  %1079 = vmatprep.mubr.bf16.mxu0 0
  %1080 = vmatmul.mubr.bf16.gmra.mrb[0].mxu0 %v912
  %v1081 = vpop.f32.mrb[0].mxu0
  %v1082 = vadd.f32 %v525, %v1081
  %v1083 = vpop.f32.mrb[0].mxu0
  %v1084 = vpop.f32.mrb[0].mxu0
  %v1085 = vadd.f32 %v528, %v1084
  %v1086 = vpop.f32.mrb[0].mxu0
  %1087 = vmatprep.mubr.bf16.mxu0 0
  %1088 = vmatmul.mubr.bf16.gmra.mrb[0].mxu0 %v915
  %v1089 = vpop.f32.mrb[0].mxu0
  %v1090 = vadd.f32 %v533, %v1089
  %v1091 = vpop.f32.mrb[0].mxu0
  %v1092 = vpop.f32.mrb[0].mxu0
  %v1093 = vadd.f32 %v536, %v1092
  %v1094 = vpop.f32.mrb[0].mxu0
  %1095 = vmatprep.mubr.bf16.mxu0 0
  %1096 = vmatmul.mubr.bf16.gmra.mrb[0].mxu0 %v918
  %v1097 = vpop.f32.mrb[0].mxu0
  %v1098 = vadd.f32 %v541, %v1097
  %v1099 = vpop.f32.mrb[0].mxu0
  %v1100 = vpop.f32.mrb[0].mxu0
  %v1101 = vadd.f32 %v544, %v1100
  %v1102 = vpop.f32.mrb[0].mxu0
  %1103 = vmatprep.mubr.bf16.mxu0 0
  %1104 = vmatmul.mubr.bf16.gmra.mrb[0].mxu0 %v921
  %v1105 = vpop.f32.mrb[0].mxu0
  %v1106 = vadd.f32 %v549, %v1105
  %v1107 = vpop.f32.mrb[0].mxu0
  %v1108 = vpop.f32.mrb[0].mxu0
  %v1109 = vadd.f32 %v552, %v1108
  %v1110 = vpop.f32.mrb[0].mxu0
  %1111 = vmatprep.mubr.bf16.mxu0 0
  %1112 = vmatmul.mubr.bf16.gmra.mrb[0].mxu0 %v924
  %v1113 = vpop.f32.mrb[0].mxu0
  %v1114 = vadd.f32 %v557, %v1113
  %v1115 = vpop.f32.mrb[0].mxu0
  %v1116 = vpop.f32.mrb[0].mxu0
  %v1117 = vadd.f32 %v560, %v1116
  %v1118 = vpop.f32.mrb[0].mxu0
  %1119 = vmatprep.mubr.bf16.mxu0 0
  %1120 = vmatmul.mubr.bf16.gmra.mrb[0].mxu0 %v927
  %v1121 = vpop.f32.mrb[0].mxu0
  %v1122 = vadd.f32 %v565, %v1121
  %v1123 = vpop.f32.mrb[0].mxu0
  %v1124 = vpop.f32.mrb[0].mxu0
  %v1125 = vadd.f32 %v568, %v1124
  %v1126 = vpop.f32.mrb[0].mxu0
  %1127 = vmatprep.mubr.bf16.mxu0 0
  %1128 = vmatmul.mubr.bf16.gmra.mrb[0].mxu0 %v930
  %v1129 = vpop.f32.mrb[0].mxu0
  %v1130 = vadd.f32 %v573, %v1129
  %v1131 = vpop.f32.mrb[0].mxu0
  %v1132 = vpop.f32.mrb[0].mxu0
  %v1133 = vadd.f32 %v576, %v1132
  %v1134 = vpop.f32.mrb[0].mxu0
  %1135 = vmatprep.mubr.bf16.mxu0 0
  %1136 = vmatmul.mubr.bf16.gmra.mrb[0].mxu0 %v933
  %v1137 = vpop.f32.mrb[0].mxu0
  %v1138 = vadd.f32 %v581, %v1137
  %v1139 = vpop.f32.mrb[0].mxu0
  %v1140 = vpop.f32.mrb[0].mxu0
  %v1141 = vadd.f32 %v584, %v1140
  %v1142 = vpop.f32.mrb[0].mxu0
  %1143 = vmatprep.mubr.bf16.mxu0 0
  %1144 = vmatmul.mubr.bf16.gmra.mrb[0].mxu0 %v936
  %v1145 = vpop.f32.mrb[0].mxu0
  %v1146 = vadd.f32 %v589, %v1145
  %v1147 = vpop.f32.mrb[0].mxu0
  %v1148 = vpop.f32.mrb[0].mxu0
  %v1149 = vadd.f32 %v592, %v1148
  %v1150 = vpop.f32.mrb[0].mxu0
  %1151 = vmatprep.mubr.bf16.mxu0 0
  %1152 = vmatmul.mubr.bf16.gmra.mrb[0].mxu0 %v939
  %v1153 = vpop.f32.mrb[0].mxu0
  %v1154 = vadd.f32 %v597, %v1153
  %v1155 = vpop.f32.mrb[0].mxu0
  %v1156 = vpop.f32.mrb[0].mxu0
  %v1157 = vadd.f32 %v600, %v1156
  %v1158 = vpop.f32.mrb[0].mxu0
  %1159 = vmatprep.mubr.bf16.mxu0 0
  %1160 = vmatmul.mubr.bf16.gmra.mrb[0].mxu0 %v942
  %v1161 = vpop.f32.mrb[0].mxu0
  %v1162 = vadd.f32 %v605, %v1161
  %v1163 = vpop.f32.mrb[0].mxu0
  %v1164 = vpop.f32.mrb[0].mxu0
  %v1165 = vadd.f32 %v608, %v1164
  %v1166 = vpop.f32.mrb[0].mxu0
  %1167 = vmatprep.mubr.bf16.mxu0 0
  %1168 = vmatmul.mubr.bf16.gmra.mrb[0].mxu0 %v945
  %v1169 = vpop.f32.mrb[0].mxu0
  %v1170 = vadd.f32 %v613, %v1169
  %v1171 = vpop.f32.mrb[0].mxu0
  %v1172 = vpop.f32.mrb[0].mxu0
  %v1173 = vadd.f32 %v616, %v1172
  %v1174 = vpop.f32.mrb[0].mxu0
  %1175 = vmatprep.mubr.bf16.mxu0 0
  %1176 = vmatmul.mubr.bf16.gmra.mrb[0].mxu0 %v948
  %v1177 = vpop.f32.mrb[0].mxu0
  %v1178 = vadd.f32 %v621, %v1177
  %v1179 = vpop.f32.mrb[0].mxu0
  %v1180 = vpop.f32.mrb[0].mxu0
  %v1181 = vadd.f32 %v624, %v1180
  %v1182 = vpop.f32.mrb[0].mxu0
  %1183 = vmatprep.mubr.bf16.mxu0 0
  %1184 = vmatmul.mubr.bf16.gmra.mrb[0].mxu0 %v951
  %v1185 = vpop.f32.mrb[0].mxu0
  %v1186 = vadd.f32 %v629, %v1185
  %v1187 = vpop.f32.mrb[0].mxu0
  %v1188 = vpop.f32.mrb[0].mxu0
  %v1189 = vadd.f32 %v632, %v1188
  %v1190 = vpop.f32.mrb[0].mxu0
  %1191 = vmatprep.mubr.bf16.mxu0 0
  %1192 = vmatmul.mubr.bf16.gmra.mrb[0].mxu0 %v954
  %v1193 = vpop.f32.mrb[0].mxu0
  %v1194 = vadd.f32 %v637, %v1193
  %v1195 = vpop.f32.mrb[0].mxu0
  %v1196 = vpop.f32.mrb[0].mxu0
  %v1197 = vadd.f32 %v640, %v1196
  %v1198 = vpop.f32.mrb[0].mxu0
  %1199 = vmatprep.mubr.bf16.mxu0 0
  %1200 = vmatmul.mubr.bf16.gmra.mrb[0].mxu0 %v957
  %v1201 = vpop.f32.mrb[0].mxu0
  %v1202 = vadd.f32 %v645, %v1201
  %v1203 = vpop.f32.mrb[0].mxu0
  %v1204 = vpop.f32.mrb[0].mxu0
  %v1205 = vadd.f32 %v648, %v1204
  %v1206 = vpop.f32.mrb[0].mxu0
  %1207 = vmatprep.mubr.bf16.mxu0 0
  %1208 = vmatmul.mubr.bf16.gmra.mrb[0].mxu0 %v960
  %v1209 = vpop.f32.mrb[0].mxu0
  %v1210 = vadd.f32 %v653, %v1209
  %v1211 = vpop.f32.mrb[0].mxu0
  %v1212 = vpop.f32.mrb[0].mxu0
  %v1213 = vadd.f32 %v656, %v1212
  %v1214 = vpop.f32.mrb[0].mxu0
  %1215 = vmatprep.mubr.bf16.mxu0 0
  %1216 = vmatmul.mubr.bf16.gmra.mrb[0].mxu0 %v963
  %v1217 = vpop.f32.mrb[0].mxu0
  %v1218 = vadd.f32 %v661, %v1217
  %v1219 = vpop.f32.mrb[0].mxu0
  %v1220 = vpop.f32.mrb[0].mxu0
  %v1221 = vadd.f32 %v664, %v1220
  %v1222 = vpop.f32.mrb[0].mxu0
  %1223 = vmatprep.mubr.bf16.mxu0 0
  %1224 = vmatmul.mubr.bf16.gmra.mrb[0].mxu0 %v966
  %v1225 = vpop.f32.mrb[0].mxu0
  %v1226 = vadd.f32 %v669, %v1225
  %v1227 = vpop.f32.mrb[0].mxu0
  %v1228 = vpop.f32.mrb[0].mxu0
  %v1229 = vadd.f32 %v672, %v1228
  %v1230 = vpop.f32.mrb[0].mxu0
  %1231 = vmatprep.mubr.bf16.mxu0 0
  %1232 = vmatmul.mubr.bf16.gmra.mrb[0].mxu0 %v969
  %v1233 = vpop.f32.mrb[0].mxu0
  %v1234 = vadd.f32 %v677, %v1233
  %v1235 = vpop.f32.mrb[0].mxu0
  %v1236 = vpop.f32.mrb[0].mxu0
  %v1237 = vadd.f32 %v680, %v1236
  %v1238 = vpop.f32.mrb[0].mxu0
  %1239 = vmatprep.mubr.bf16.mxu0 0
  %1240 = vmatmul.mubr.bf16.gmra.mrb[0].mxu0 %v972
  %v1241 = vpop.f32.mrb[0].mxu0
  %v1242 = vadd.f32 %v685, %v1241
  %v1243 = vpop.f32.mrb[0].mxu0
  %v1244 = vpop.f32.mrb[0].mxu0
  %v1245 = vadd.f32 %v688, %v1244
  %v1246 = vpop.f32.mrb[0].mxu0
  %1247 = vmatprep.mubr.bf16.mxu0 0
  %1248 = vmatmul.mubr.bf16.gmra.mrb[0].mxu0 %v975
  %v1249 = vpop.f32.mrb[0].mxu0
  %v1250 = vadd.f32 %v693, %v1249
  %v1251 = vpop.f32.mrb[0].mxu0
  %v1252 = vpop.f32.mrb[0].mxu0
  %v1253 = vadd.f32 %v696, %v1252
  %v1254 = vpop.f32.mrb[0].mxu0
  %1255 = vmatprep.mubr.bf16.mxu0 0
  %1256 = vmatmul.mubr.bf16.gmra.mrb[0].mxu0 %v978
  %v1257 = vpop.f32.mrb[0].mxu0
  %v1258 = vadd.f32 %v701, %v1257
  %v1259 = vpop.f32.mrb[0].mxu0
  %v1260 = vpop.f32.mrb[0].mxu0
  %v1261 = vadd.f32 %v704, %v1260
  %v1262 = vpop.f32.mrb[0].mxu0
  %1263 = vmatprep.mubr.bf16.mxu0 0
  %1264 = vmatmul.mubr.bf16.gmra.mrb[0].mxu0 %v981
  %v1265 = vpop.f32.mrb[0].mxu0
  %v1266 = vadd.f32 %v709, %v1265
  %v1267 = vpop.f32.mrb[0].mxu0
  %v1268 = vpop.f32.mrb[0].mxu0
  %v1269 = vadd.f32 %v712, %v1268
  %v1270 = vpop.f32.mrb[0].mxu0
  %1271 = vdwg.mxu0
  %v1272 = vld [vmem:[%s4] sm:$0x1]
  %v1274 = vlaneseq
  %v1275 = vshrl.u32 %v1274, 7
  %v1276 = vsub.s32 0, %v1275
  %v1277 = vrot.slane %v1272, %v1276
  %v1279 = vadd.f32 %v1018, %v1277
  %v1280 = vadd.f32 %v1021, %v1277
  %v1281 = vadd.f32 %v1026, %v1277
  %v1282 = vadd.f32 %v1029, %v1277
  %v1283 = vadd.f32 %v1034, %v1277
  %v1284 = vadd.f32 %v1037, %v1277
  %v1285 = vadd.f32 %v1042, %v1277
  %v1286 = vadd.f32 %v1045, %v1277
  %v1287 = vadd.f32 %v1050, %v1277
  %v1288 = vadd.f32 %v1053, %v1277
  %v1289 = vadd.f32 %v1058, %v1277
  %v1290 = vadd.f32 %v1061, %v1277
  %v1291 = vadd.f32 %v1066, %v1277
  %v1292 = vadd.f32 %v1069, %v1277
  %v1293 = vadd.f32 %v1074, %v1277
  %v1294 = vadd.f32 %v1077, %v1277
  %v1295 = vadd.f32 %v1082, %v1277
  %v1296 = vadd.f32 %v1085, %v1277
  %v1297 = vadd.f32 %v1090, %v1277
  %v1298 = vadd.f32 %v1093, %v1277
  %v1299 = vadd.f32 %v1098, %v1277
  %v1300 = vadd.f32 %v1101, %v1277
  %v1301 = vadd.f32 %v1106, %v1277
  %v1302 = vadd.f32 %v1109, %v1277
  %v1303 = vadd.f32 %v1114, %v1277
  %v1304 = vadd.f32 %v1117, %v1277
  %v1305 = vadd.f32 %v1122, %v1277
  %v1306 = vadd.f32 %v1125, %v1277
  %v1307 = vadd.f32 %v1130, %v1277
  %v1308 = vadd.f32 %v1133, %v1277
  %v1309 = vadd.f32 %v1138, %v1277
  %v1310 = vadd.f32 %v1141, %v1277
  %v1311 = vadd.f32 %v1146, %v1277
  %v1312 = vadd.f32 %v1149, %v1277
  %v1313 = vadd.f32 %v1154, %v1277
  %v1314 = vadd.f32 %v1157, %v1277
  %v1315 = vadd.f32 %v1162, %v1277
  %v1316 = vadd.f32 %v1165, %v1277
  %v1317 = vadd.f32 %v1170, %v1277
  %v1318 = vadd.f32 %v1173, %v1277
  %v1319 = vadd.f32 %v1178, %v1277
  %v1320 = vadd.f32 %v1181, %v1277
  %v1321 = vadd.f32 %v1186, %v1277
  %v1322 = vadd.f32 %v1189, %v1277
  %v1323 = vadd.f32 %v1194, %v1277
  %v1324 = vadd.f32 %v1197, %v1277
  %v1325 = vadd.f32 %v1202, %v1277
  %v1326 = vadd.f32 %v1205, %v1277
  %v1327 = vadd.f32 %v1210, %v1277
  %v1328 = vadd.f32 %v1213, %v1277
  %v1329 = vadd.f32 %v1218, %v1277
  %v1330 = vadd.f32 %v1221, %v1277
  %v1331 = vadd.f32 %v1226, %v1277
  %v1332 = vadd.f32 %v1229, %v1277
  %v1333 = vadd.f32 %v1234, %v1277
  %v1334 = vadd.f32 %v1237, %v1277
  %v1335 = vadd.f32 %v1242, %v1277
  %v1336 = vadd.f32 %v1245, %v1277
  %v1337 = vadd.f32 %v1250, %v1277
  %v1338 = vadd.f32 %v1253, %v1277
  %v1339 = vadd.f32 %v1258, %v1277
  %v1340 = vadd.f32 %v1261, %v1277
  %v1341 = vadd.f32 %v1266, %v1277
  %v1342 = vadd.f32 %v1269, %v1277
  %v1343 = vmax.f32 %v1279, 0.0
  %v1344 = vmax.f32 %v1280, 0.0
  %v1345 = vmax.f32 %v1281, 0.0
  %v1346 = vmax.f32 %v1282, 0.0
  %v1347 = vmax.f32 %v1283, 0.0
  %v1348 = vmax.f32 %v1284, 0.0
  %v1349 = vmax.f32 %v1285, 0.0
  %v1350 = vmax.f32 %v1286, 0.0
  %v1351 = vmax.f32 %v1287, 0.0
  %v1352 = vmax.f32 %v1288, 0.0
  %v1353 = vmax.f32 %v1289, 0.0
  %v1354 = vmax.f32 %v1290, 0.0
  %v1355 = vmax.f32 %v1291, 0.0
  %v1356 = vmax.f32 %v1292, 0.0
  %v1357 = vmax.f32 %v1293, 0.0
  %v1358 = vmax.f32 %v1294, 0.0
  %v1359 = vmax.f32 %v1295, 0.0
  %v1360 = vmax.f32 %v1296, 0.0
  %v1361 = vmax.f32 %v1297, 0.0
  %v1362 = vmax.f32 %v1298, 0.0
  %v1363 = vmax.f32 %v1299, 0.0
  %v1364 = vmax.f32 %v1300, 0.0
  %v1365 = vmax.f32 %v1301, 0.0
  %v1366 = vmax.f32 %v1302, 0.0
  %v1367 = vmax.f32 %v1303, 0.0
  %v1368 = vmax.f32 %v1304, 0.0
  %v1369 = vmax.f32 %v1305, 0.0
  %v1370 = vmax.f32 %v1306, 0.0
  %v1371 = vmax.f32 %v1307, 0.0
  %v1372 = vmax.f32 %v1308, 0.0
  %v1373 = vmax.f32 %v1309, 0.0
  %v1374 = vmax.f32 %v1310, 0.0
  %v1375 = vmax.f32 %v1311, 0.0
  %v1376 = vmax.f32 %v1312, 0.0
  %v1377 = vmax.f32 %v1313, 0.0
  %v1378 = vmax.f32 %v1314, 0.0
  %v1379 = vmax.f32 %v1315, 0.0
  %v1380 = vmax.f32 %v1316, 0.0
  %v1381 = vmax.f32 %v1317, 0.0
  %v1382 = vmax.f32 %v1318, 0.0
  %v1383 = vmax.f32 %v1319, 0.0
  %v1384 = vmax.f32 %v1320, 0.0
  %v1385 = vmax.f32 %v1321, 0.0
  %v1386 = vmax.f32 %v1322, 0.0
  %v1387 = vmax.f32 %v1323, 0.0
  %v1388 = vmax.f32 %v1324, 0.0
  %v1389 = vmax.f32 %v1325, 0.0
  %v1390 = vmax.f32 %v1326, 0.0
  %v1391 = vmax.f32 %v1327, 0.0
  %v1392 = vmax.f32 %v1328, 0.0
  %v1393 = vmax.f32 %v1329, 0.0
  %v1394 = vmax.f32 %v1330, 0.0
  %v1395 = vmax.f32 %v1331, 0.0
  %v1396 = vmax.f32 %v1332, 0.0
  %v1397 = vmax.f32 %v1333, 0.0
  %v1398 = vmax.f32 %v1334, 0.0
  %v1399 = vmax.f32 %v1335, 0.0
  %v1400 = vmax.f32 %v1336, 0.0
  %v1401 = vmax.f32 %v1337, 0.0
  %v1402 = vmax.f32 %v1338, 0.0
  %v1403 = vmax.f32 %v1339, 0.0
  %v1404 = vmax.f32 %v1340, 0.0
  %v1405 = vmax.f32 %v1341, 0.0
  %v1406 = vmax.f32 %v1342, 0.0
  %vm1407 = vcmask 31744
  %1408 = vst.msk [vmem:[%s5] sm:$0xff] %vm1407, %v1343
  %1409 = vst.msk [vmem:[%s5 + $0x8] sm:$0xff] %vm1407, %v1344
  %1410 = vst.msk [vmem:[%s5 + $0x10] sm:$0xff] %vm1407, %v1345
  %1411 = vst.msk [vmem:[%s5 + $0x18] sm:$0xff] %vm1407, %v1346
  %1412 = vst.msk [vmem:[%s5 + $0x20] sm:$0xff] %vm1407, %v1347
  %1413 = vst.msk [vmem:[%s5 + $0x28] sm:$0xff] %vm1407, %v1348
  %1414 = vst.msk [vmem:[%s5 + $0x30] sm:$0xff] %vm1407, %v1349
  %1415 = vst.msk [vmem:[%s5 + $0x38] sm:$0xff] %vm1407, %v1350
  %1416 = vst.msk [vmem:[%s5 + $0x40] sm:$0xff] %vm1407, %v1351
  %1417 = vst.msk [vmem:[%s5 + $0x48] sm:$0xff] %vm1407, %v1352
  %1418 = vst.msk [vmem:[%s5 + $0x50] sm:$0xff] %vm1407, %v1353
  %1419 = vst.msk [vmem:[%s5 + $0x58] sm:$0xff] %vm1407, %v1354
  %1420 = vst.msk [vmem:[%s5 + $0x60] sm:$0xff] %vm1407, %v1355
  %1421 = vst.msk [vmem:[%s5 + $0x68] sm:$0xff] %vm1407, %v1356
  %1422 = vst.msk [vmem:[%s5 + $0x70] sm:$0xff] %vm1407, %v1357
  %1423 = vst.msk [vmem:[%s5 + $0x78] sm:$0xff] %vm1407, %v1358
  %1424 = vst.msk [vmem:[%s5 + $0x80] sm:$0xff] %vm1407, %v1359
  %1425 = vst.msk [vmem:[%s5 + $0x88] sm:$0xff] %vm1407, %v1360
  %1426 = vst.msk [vmem:[%s5 + $0x90] sm:$0xff] %vm1407, %v1361
  %1427 = vst.msk [vmem:[%s5 + $0x98] sm:$0xff] %vm1407, %v1362
  %1428 = vst.msk [vmem:[%s5 + $0xa0] sm:$0xff] %vm1407, %v1363
  %1429 = vst.msk [vmem:[%s5 + $0xa8] sm:$0xff] %vm1407, %v1364
  %1430 = vst.msk [vmem:[%s5 + $0xb0] sm:$0xff] %vm1407, %v1365
  %1431 = vst.msk [vmem:[%s5 + $0xb8] sm:$0xff] %vm1407, %v1366
  %1432 = vst.msk [vmem:[%s5 + $0xc0] sm:$0xff] %vm1407, %v1367
  %1433 = vst.msk [vmem:[%s5 + $0xc8] sm:$0xff] %vm1407, %v1368
  %1434 = vst.msk [vmem:[%s5 + $0xd0] sm:$0xff] %vm1407, %v1369
  %1435 = vst.msk [vmem:[%s5 + $0xd8] sm:$0xff] %vm1407, %v1370
  %1436 = vst.msk [vmem:[%s5 + $0xe0] sm:$0xff] %vm1407, %v1371
  %1437 = vst.msk [vmem:[%s5 + $0xe8] sm:$0xff] %vm1407, %v1372
  %1438 = vst.msk [vmem:[%s5 + $0xf0] sm:$0xff] %vm1407, %v1373
  %1439 = vst.msk [vmem:[%s5 + $0xf8] sm:$0xff] %vm1407, %v1374
  %1440 = vst.msk [vmem:[%s5 + $0x100] sm:$0xff] %vm1407, %v1375
  %1441 = vst.msk [vmem:[%s5 + $0x108] sm:$0xff] %vm1407, %v1376
  %1442 = vst.msk [vmem:[%s5 + $0x110] sm:$0xff] %vm1407, %v1377
  %1443 = vst.msk [vmem:[%s5 + $0x118] sm:$0xff] %vm1407, %v1378
  %1444 = vst.msk [vmem:[%s5 + $0x120] sm:$0xff] %vm1407, %v1379
  %1445 = vst.msk [vmem:[%s5 + $0x128] sm:$0xff] %vm1407, %v1380
  %1446 = vst.msk [vmem:[%s5 + $0x130] sm:$0xff] %vm1407, %v1381
  %1447 = vst.msk [vmem:[%s5 + $0x138] sm:$0xff] %vm1407, %v1382
  %1448 = vst.msk [vmem:[%s5 + $0x140] sm:$0xff] %vm1407, %v1383
  %1449 = vst.msk [vmem:[%s5 + $0x148] sm:$0xff] %vm1407, %v1384
  %1450 = vst.msk [vmem:[%s5 + $0x150] sm:$0xff] %vm1407, %v1385
  %1451 = vst.msk [vmem:[%s5 + $0x158] sm:$0xff] %vm1407, %v1386
  %1452 = vst.msk [vmem:[%s5 + $0x160] sm:$0xff] %vm1407, %v1387
  %1453 = vst.msk [vmem:[%s5 + $0x168] sm:$0xff] %vm1407, %v1388
  %1454 = vst.msk [vmem:[%s5 + $0x170] sm:$0xff] %vm1407, %v1389
  %1455 = vst.msk [vmem:[%s5 + $0x178] sm:$0xff] %vm1407, %v1390
  %1456 = vst.msk [vmem:[%s5 + $0x180] sm:$0xff] %vm1407, %v1391
  %1457 = vst.msk [vmem:[%s5 + $0x188] sm:$0xff] %vm1407, %v1392
  %1458 = vst.msk [vmem:[%s5 + $0x190] sm:$0xff] %vm1407, %v1393
  %1459 = vst.msk [vmem:[%s5 + $0x198] sm:$0xff] %vm1407, %v1394
  %1460 = vst.msk [vmem:[%s5 + $0x1a0] sm:$0xff] %vm1407, %v1395
  %1461 = vst.msk [vmem:[%s5 + $0x1a8] sm:$0xff] %vm1407, %v1396
  %1462 = vst.msk [vmem:[%s5 + $0x1b0] sm:$0xff] %vm1407, %v1397
  %1463 = vst.msk [vmem:[%s5 + $0x1b8] sm:$0xff] %vm1407, %v1398
  %1464 = vst.msk [vmem:[%s5 + $0x1c0] sm:$0xff] %vm1407, %v1399
  %1465 = vst.msk [vmem:[%s5 + $0x1c8] sm:$0xff] %vm1407, %v1400
  %1466 = vst.msk [vmem:[%s5 + $0x1d0] sm:$0xff] %vm1407, %v1401
  %1467 = vst.msk [vmem:[%s5 + $0x1d8] sm:$0xff] %vm1407, %v1402
  %1468 = vst.msk [vmem:[%s5 + $0x1e0] sm:$0xff] %vm1407, %v1403
  %1469 = vst.msk [vmem:[%s5 + $0x1e8] sm:$0xff] %vm1407, %v1404
  %1470 = vst.msk [vmem:[%s5 + $0x1f0] sm:$0xff] %vm1407, %v1405
  %1471 = vst.msk [vmem:[%s5 + $0x1f8] sm:$0xff] %vm1407, %v1406
  // Predicated region
  $region22: #{blstm_forward.3} parent=0 // pred_check
    _
  $region23: #{blstm_forward.3} parent=0 // pred_check_branch
    %1473 = sbr.rel (0) target = $region25
  $region24: #{blstm_forward.3} parent=0 // pred_region
    _
  $region25: #{blstm_forward.3} parent=0 // pred_fallthru
    _
  // Predicated region
  $region26: #{blstm_forward.3} parent=0 // pred_check
    _
  $region27: #{blstm_forward.3} parent=0 // pred_check_branch
    %1475 = sbr.rel (0) target = $region29
  $region28: #{blstm_forward.3} parent=0 // pred_region
    _
  $region29: #{blstm_forward.3} parent=0 // pred_fallthru
    _

// kernel: blstm_forward.2
$region0: #{blstm_forward.2}
  #allocation0 [shape = 'u32[]', space=smem, size = 0x4, offset = 0x4, fixed_abs, tag = 'smem constant byte address 0x4 - core index']
  #allocation1 [shape = 'u32[144,128]{1,0:T(1,128)}', space=vmem, size = 0x12000, scoped, tag = 'internal scratch']
  #allocation2 [shape = 'f32[128,256]{1,0:T(8,128)}', space=vmem, size = 0x20000, scoped, tag = 'scratch operand']
  #allocation3 [shape = 'bf16[2,64]{1,0:T(2,128)(2,1)}', space=vmem, size = 0x200, scoped, tag = 'scratch operand']
  #allocation4 [shape = 'f32[2,64]{1,0:T(2,128)}', space=vmem, size = 0x400, scoped, tag = 'scratch operand']
  %s0 = inlined_call_operand.vmem [shape: bf16[512,8], index: 0, kind: input, shape index: {}]
  %s1 = inlined_call_operand.vmem [shape: bf16[8,256], index: 1, kind: input, shape index: {}]
  %s2 = inlined_call_operand.vmem [shape: f32[1,256], index: 2, kind: input, shape index: {}]
  %s3 = inlined_call_operand.vmem [shape: bf16[64,256], index: 3, kind: input, shape index: {}]
  %s4 = inlined_call_operand.vmem [shape: bf16[512,32], index: 4, kind: output, shape index: {0}]
  %s5 = inlined_call_operand.vmem [shape: bf16[512,32], index: 5, kind: output, shape index: {1}]
  %6 = xla_tuple %s4, %s5
  %s7 = sld [smem:[#allocation0]]
  $region61: #{blstm_forward.2} parent=0
    _
  %s9 = ssub.s32 1, %s7
  %s10 = scalar_select 0, %s9, %s7
  loop: start=0, step=1, limit=6
  $region2: #{blstm_forward.2} parent=0 // loop_pre_header
    _
  $region3: #{blstm_forward.2} parent=0 // loop_header
    %s12 = sphi 0, %s16
    %p13 = scmp.ge.s32.totalorder %s12, 6
    %s22 = sphi 0, %s24
    %s25 = sphi 0, %s22
    %s26 = sphi 0, %s25
    %s42 = sphi 0, %s26
    %s46 = sphi 0, %s46
    %s48 = sphi 0, %s46
    %s49 = sphi 0, %s48
    %s63 = sphi 0, %s49
    %s67 = sphi 0, %s67
    %s69 = sphi 0, %s67
    %s70 = sphi 0, %s69
    %s84 = sphi 0, %s70
    %s88 = sphi 0, %s88
    %s90 = sphi 0, %s88
    %s91 = sphi 0, %s90
    %s105 = sphi 0, %s91
    %s111 = sphi 0, %s113
    %s114 = sphi 0, %s111
    %s115 = sphi 0, %s114
    %s131 = sphi 0, %s115
    %s139 = sphi 0, %s141
    %s142 = sphi 0, %s139
    %s143 = sphi 0, %s142
    %s159 = sphi 0, %s143
  $region4: #{blstm_forward.2} parent=0 // loop_header_branch
    %15 = sbr.rel (%p13) target = $region8
  $region5: #{blstm_forward.2} parent=0 // loop_body
    %s17 = ssub.s32 %s12, 1
    %s18 = ssub.s32 %s12, 2
    %s19 = sadd.s32 %s12, 1
    %s20 = ssub.s32 %s12, %s19
    %p21 = scmp.eq.s32.totalorder %s20, 0
    %s23 = sadd.s32 %s22, 1
    %s24 = scalar_select %p21, %s22, %s23
    %p27 = pneg %p21
    %p28 = scmp.eq.s32.totalorder %s12, 3
    %p29 = por %p27, %p28
    %p30 = scmp.ne.s32.totalorder %s22, %s25
    %p31 = scmp.eq.s32.totalorder %s12, 0
    %p32 = por %p30, %p31
    %p33 = scmp.ne.s32.totalorder %s22, %s25
    %p34 = scmp.eq.s32.totalorder %s17, 3
    %p35 = por %p33, %p34
    %p36 = scmp.ne.s32.totalorder %s25, %s26
    %p37 = scmp.eq.s32.totalorder %s17, 0
    %p38 = por %p36, %p37
    %p39 = scmp.ne.s32.totalorder %s25, %s26
    %p40 = scmp.eq.s32.totalorder %s18, 3
    %p41 = por %p39, %p40
    %p43 = scmp.ne.s32.totalorder %s26, %s42
    %p44 = scmp.eq.s32.totalorder %s18, 0
    %p45 = por %p43, %p44
    %s47 = sadd.s32 %s46, 1
    %p50 = scmp.eq.s32.totalorder %s12, 3
    %p51 = scmp.ne.s32.totalorder %s46, %s48
    %p52 = scmp.eq.s32.totalorder %s12, 0
    %p53 = por %p51, %p52
    %p54 = scmp.ne.s32.totalorder %s46, %s48
    %p55 = scmp.eq.s32.totalorder %s17, 3
    %p56 = por %p54, %p55
    %p57 = scmp.ne.s32.totalorder %s48, %s49
    %p58 = scmp.eq.s32.totalorder %s17, 0
    %p59 = por %p57, %p58
    %p60 = scmp.ne.s32.totalorder %s48, %s49
    %p61 = scmp.eq.s32.totalorder %s18, 3
    %p62 = por %p60, %p61
    %p64 = scmp.ne.s32.totalorder %s49, %s63
    %p65 = scmp.eq.s32.totalorder %s18, 0
    %p66 = por %p64, %p65
    %s68 = sadd.s32 %s67, 1
    %p71 = scmp.eq.s32.totalorder %s12, 3
    %p72 = scmp.ne.s32.totalorder %s67, %s69
    %p73 = scmp.eq.s32.totalorder %s12, 0
    %p74 = por %p72, %p73
    %p75 = scmp.ne.s32.totalorder %s67, %s69
    %p76 = scmp.eq.s32.totalorder %s17, 3
    %p77 = por %p75, %p76
    %p78 = scmp.ne.s32.totalorder %s69, %s70
    %p79 = scmp.eq.s32.totalorder %s17, 0
    %p80 = por %p78, %p79
    %p81 = scmp.ne.s32.totalorder %s69, %s70
    %p82 = scmp.eq.s32.totalorder %s18, 3
    %p83 = por %p81, %p82
    %p85 = scmp.ne.s32.totalorder %s70, %s84
    %p86 = scmp.eq.s32.totalorder %s18, 0
    %p87 = por %p85, %p86
    %s89 = sadd.s32 %s88, 1
    %p92 = scmp.eq.s32.totalorder %s12, 3
    %p93 = scmp.ne.s32.totalorder %s88, %s90
    %p94 = scmp.eq.s32.totalorder %s12, 0
    %p95 = por %p93, %p94
    %p96 = scmp.ne.s32.totalorder %s88, %s90
    %p97 = scmp.eq.s32.totalorder %s17, 3
    %p98 = por %p96, %p97
    %p99 = scmp.ne.s32.totalorder %s90, %s91
    %p100 = scmp.eq.s32.totalorder %s17, 0
    %p101 = por %p99, %p100
    %p102 = scmp.ne.s32.totalorder %s90, %s91
    %p103 = scmp.eq.s32.totalorder %s18, 3
    %p104 = por %p102, %p103
    %p106 = scmp.ne.s32.totalorder %s91, %s105
    %p107 = scmp.eq.s32.totalorder %s18, 0
    %p108 = por %p106, %p107
    %s109 = ssub.s32 %s12, %s19
    %p110 = scmp.eq.s32.totalorder %s109, 0
    %s112 = sadd.s32 %s111, 1
    %s113 = scalar_select %p110, %s111, %s112
    %p116 = pneg %p110
    %p117 = scmp.eq.s32.totalorder %s12, 3
    %p118 = por %p116, %p117
    %p119 = scmp.ne.s32.totalorder %s111, %s114
    %p120 = scmp.eq.s32.totalorder %s12, 0
    %p121 = por %p119, %p120
    %p122 = scmp.ne.s32.totalorder %s111, %s114
    %p123 = scmp.eq.s32.totalorder %s17, 3
    %p124 = por %p122, %p123
    %p125 = scmp.ne.s32.totalorder %s114, %s115
    %p126 = scmp.eq.s32.totalorder %s17, 0
    %p127 = por %p125, %p126
    %p128 = scmp.ne.s32.totalorder %s114, %s115
    %p129 = scmp.eq.s32.totalorder %s18, 3
    %p130 = por %p128, %p129
    %p132 = scmp.ne.s32.totalorder %s115, %s131
    %p133 = scmp.eq.s32.totalorder %s18, 0
    %p134 = por %p132, %p133
    %s135 = ssub.s32 3, %s12
    %s136 = ssub.s32 3, %s19
    %s137 = ssub.s32 %s135, %s136
    %p138 = scmp.eq.s32.totalorder %s137, 0
    %s140 = sadd.s32 %s139, 1
    %s141 = scalar_select %p138, %s139, %s140
    %p144 = pneg %p138
    %p145 = scmp.eq.s32.totalorder %s12, 3
    %p146 = por %p144, %p145
    %p147 = scmp.ne.s32.totalorder %s139, %s142
    %p148 = scmp.eq.s32.totalorder %s12, 0
    %p149 = por %p147, %p148
    %p150 = scmp.ne.s32.totalorder %s139, %s142
    %p151 = scmp.eq.s32.totalorder %s17, 3
    %p152 = por %p150, %p151
    %p153 = scmp.ne.s32.totalorder %s142, %s143
    %p154 = scmp.eq.s32.totalorder %s17, 0
    %p155 = por %p153, %p154
    %p156 = scmp.ne.s32.totalorder %s142, %s143
    %p157 = scmp.eq.s32.totalorder %s18, 3
    %p158 = por %p156, %p157
    %p160 = scmp.ne.s32.totalorder %s143, %s159
    %p161 = scmp.eq.s32.totalorder %s18, 0
    %p162 = por %p160, %p161
    %p163 = scmp.le.s32.totalorder 1, %s12
    %p164 = scmp.lt.s32.totalorder %s12, 5
    %p165 = pnand %p163, %p164
    %p166 = pneg %p165
    // Predicated region
    $region9: #{blstm_forward.2} parent=5 // pred_check
      _
    $region10: #{blstm_forward.2} parent=5 // pred_check_branch
      %168 = sbr.rel (%p165) target = $region12
    $region11: #{blstm_forward.2} parent=5 // pred_region
      %s169 = ssub.s32 %s12, 1
      // Predicated region
      $region13: #{blstm_forward.2} parent=11 // pred_check
        %p170 = pneg %p59
      $region14: #{blstm_forward.2} parent=11 // pred_check_branch
        %172 = sbr.rel (%p170) target = $region16
      $region15: #{blstm_forward.2} parent=11 // pred_region
        _
      $region16: #{blstm_forward.2} parent=11 // pred_fallthru
        _
      // Predicated region
      $region17: #{blstm_forward.2} parent=11 // pred_check
        %p173 = pneg %p80
      $region18: #{blstm_forward.2} parent=11 // pred_check_branch
        %175 = sbr.rel (%p173) target = $region20
      $region19: #{blstm_forward.2} parent=11 // pred_region
        _
      $region20: #{blstm_forward.2} parent=11 // pred_fallthru
        _
      // Predicated region
      $region21: #{blstm_forward.2} parent=11 // pred_check
        %p176 = pneg %p101
      $region22: #{blstm_forward.2} parent=11 // pred_check_branch
        %178 = sbr.rel (%p176) target = $region24
      $region23: #{blstm_forward.2} parent=11 // pred_region
        _
      $region24: #{blstm_forward.2} parent=11 // pred_fallthru
        _
    $region12: #{blstm_forward.2} parent=5 // pred_fallthru
      _
    %p179 = scmp.lt.s32.totalorder %s12, 4
    // Predicated region
    $region25: #{blstm_forward.2} parent=5 // pred_check
      %p180 = pneg %p179
    $region26: #{blstm_forward.2} parent=5 // pred_check_branch
      %182 = sbr.rel (%p180) target = $region28
    $region27: #{blstm_forward.2} parent=5 // pred_region
      // Predicated region
      $region29: #{blstm_forward.2} parent=27 // pred_check
        %p183 = pneg %p32
      $region30: #{blstm_forward.2} parent=27 // pred_check_branch
        %185 = sbr.rel (%p183) target = $region32
      $region31: #{blstm_forward.2} parent=27 // pred_region
        %s186 = smul.u32 16, %s12
        %p187 = scmp.lt.s32.totalorder %s186, 63
        %s188 = scalar_select %p187, %s186, 63
        %s189 = smul.addr %s188, 4
        %s190 = scalar_lea.vmem %s0, %s189
        %s191 = smul.u32 16, %s12
      $region32: #{blstm_forward.2} parent=27 // pred_fallthru
        _
    $region28: #{blstm_forward.2} parent=5 // pred_fallthru
      _
    %p192 = scmp.le.s32.totalorder 1, %s12
    %p193 = scmp.lt.s32.totalorder %s12, 5
    %p194 = pnand %p192, %p193
    %p195 = pneg %p194
    // Predicated region
    $region33: #{blstm_forward.2} parent=5 // pred_check
      _
    $region34: #{blstm_forward.2} parent=5 // pred_check_branch
      %197 = sbr.rel (%p194) target = $region36
    $region35: #{blstm_forward.2} parent=5 // pred_region
      %s198 = ssub.s32 %s12, 1
      %s199 = smul.u32 16, %s17
      %p200 = scmp.lt.s32.totalorder %s199, 63
      %s201 = scalar_select %p200, %s199, 63
      %s202 = smul.addr %s201, 4
      %s203 = scalar_lea.vmem %s0, %s202
      %p204 = pneg %p38
      %p205 = pneg %p35
      %p206 = pneg %p59
      %p207 = pneg %p56
      %p208 = pneg %p80
      %p209 = pneg %p77
      %p210 = pneg %p101
      %p211 = pneg %p98
      %p212 = pneg %p127
      %p213 = pneg %p124
      %s214 = smul.u32 16, %s17
      %p215 = scmp.lt.s32.totalorder %s214, 63
      %s216 = scalar_select %p215, %s214, 63
      %s217 = smul.addr %s216, 4
      %s218 = scalar_lea.vmem %s4, %s217
      %p219 = pneg %p155
      %p220 = pneg %p152
      %s221 = ssub.s32 3, %s17
      %s222 = smul.u32 16, %s221
      %p223 = scmp.lt.s32.totalorder %s222, 63
      %s224 = scalar_select %p223, %s222, 63
      %s225 = smul.addr %s224, 4
      %s226 = scalar_lea.vmem %s5, %s225
      %s227 = smul.u32 16, %s17
      %p228 = scmp.lt.s32.totalorder %s227, 63
      %s229 = scalar_select %p228, %s227, 63
      %s230 = smul.addr %s229, 4
      %s231 = scalar_lea.vmem %s0, %s230
      %s232 = smul.u32 16, %s17
      %s233 = smul.u32 16, %s17
      %p234 = scmp.lt.s32.totalorder %s233, 63
      %s235 = scalar_select %p234, %s233, 63
      %s236 = smul.addr %s235, 4
      %s237 = scalar_lea.vmem %s4, %s236
      %s238 = smul.u32 16, %s17
      %s239 = ssub.s32 3, %s17
      %s240 = smul.u32 16, %s239
      %p241 = scmp.lt.s32.totalorder %s240, 63
      %s242 = scalar_select %p241, %s240, 63
      %s243 = smul.addr %s242, 4
      %s244 = scalar_lea.vmem %s5, %s243
      %s245 = ssub.s32 3, %s17
      %s246 = smul.u32 16, %s245
      %p248 = scmp.eq.s32.totalorder %s17, 0
      // Predicated region
      $region37: #{blstm_forward.2} parent=35 // pred_check
        %p249 = pneg %p248
      $region38: #{blstm_forward.2} parent=35 // pred_check_branch
        %251 = sbr.rel (%p249) target = $region40
      $region39: #{blstm_forward.2} parent=35 // pred_region
        %vm252 = vcmask 516096
        %253 = vst.msk [vmem:[#allocation3] sm:$0x1] %vm252, 0
        %vm254 = vcmask 517120
        %255 = vst.msk [vmem:[#allocation4] sm:$0x3] %vm254, 0.0
      $region40: #{blstm_forward.2} parent=35 // pred_fallthru
        _
      %v256 = vld [vmem:[%s231] sm:$0xf]
      %v257 = vld [vmem:[%s231 + $0x4] sm:$0xf]
      %v258 = vld [vmem:[%s231 + $0x8] sm:$0xf]
      %v259 = vld [vmem:[%s231 + $0xc] sm:$0xf]
      %v260 = vld [vmem:[%s231 + $0x10] sm:$0xf]
      %v261 = vld [vmem:[%s231 + $0x14] sm:$0xf]
      %v262 = vld [vmem:[%s231 + $0x18] sm:$0xf]
      %v263 = vld [vmem:[%s231 + $0x1c] sm:$0xf]
      %v264 = vld [vmem:[%s231 + $0x20] sm:$0xf]
      %v265 = vld [vmem:[%s231 + $0x24] sm:$0xf]
      %v266 = vld [vmem:[%s231 + $0x28] sm:$0xf]
      %v267 = vld [vmem:[%s231 + $0x2c] sm:$0xf]
      %v268 = vld [vmem:[%s231 + $0x30] sm:$0xf]
      %v269 = vld [vmem:[%s231 + $0x34] sm:$0xf]
      %v270 = vld [vmem:[%s231 + $0x38] sm:$0xf]
      %v271 = vld [vmem:[%s231 + $0x3c] sm:$0xf]
      %v272 = vld [vmem:[%s1] sm:$0xff]
      %v273 = vld [vmem:[%s2] sm:$0x3]
      %v275 = vlaneseq
      %v276 = vshrl.u32 %v275, 7
      %v277 = vsub.s32 0, %v276
      %v278 = vrot.slane %v273, %v277
      %v279 = vlaneseq
      %v280 = vshrl.u32 %v279, 7
      %v281 = vsub.s32 1, %v280
      %v282 = vrot.slane %v273, %v281
      %v301 = vunpack.c.l.b16 %v256
      %v302 = vunpack.c.l.b16 %v257
      %v303 = vunpack.c.l.b16 %v258
      %v304 = vunpack.c.l.b16 %v259
      %v305 = vunpack.c.l.b16 %v260
      %v306 = vunpack.c.l.b16 %v261
      %v307 = vunpack.c.l.b16 %v262
      %v308 = vunpack.c.l.b16 %v263
      %v309 = vunpack.c.l.b16 %v264
      %v310 = vunpack.c.l.b16 %v265
      %v311 = vunpack.c.l.b16 %v266
      %v312 = vunpack.c.l.b16 %v267
      %v313 = vunpack.c.l.b16 %v268
      %v314 = vunpack.c.l.b16 %v269
      %v315 = vunpack.c.l.b16 %v270
      %v316 = vunpack.c.l.b16 %v271
      %v317 = vpack.c.b16 %v302, %v301
      %v318 = vpack.c.b16 %v304, %v303
      %v319 = vpack.c.b16 %v306, %v305
      %v320 = vpack.c.b16 %v308, %v307
      %v321 = vpack.c.b16 %v310, %v309
      %v322 = vpack.c.b16 %v312, %v311
      %v323 = vpack.c.b16 %v314, %v313
      %v324 = vpack.c.b16 %v316, %v315
      %v326 = vunpack.c.l.b16 %v272
      %v327 = vunpack.c.h.b16 %v272
      %v328 = vpack.c.b16 %v326, %v326
      %v329 = vpack.c.b16 %v327, %v327
      %vm330 = vcmask 64512
      %v332 = vsel %vm330, %v317, 0
      %v335 = vsel %vm330, %v318, 0
      %v338 = vsel %vm330, %v319, 0
      %v341 = vsel %vm330, %v320, 0
      %v344 = vsel %vm330, %v321, 0
      %v347 = vsel %vm330, %v322, 0
      %v350 = vsel %vm330, %v323, 0
      %v353 = vsel %vm330, %v324, 0
      %vm355 = vcmask 1043456
      %v357 = vsel %vm355, %v328, 0
      %v360 = vsel %vm355, %v329, 0
      %362 = vmatprep.subr.bf16.mxu0 %v360
      %363 = vmatpush1.bf16.msra.mxu0 %v357
      %364 = vmatprep.subr.bf16.mxu0 0
      %365 = vmatpush1.bf16.msra.mxu0 0
      %366 = vmatprep.subr.bf16.mxu0 0
      %367 = vmatpush1.bf16.msra.mxu0 0
      %368 = vmatprep.subr.bf16.mxu0 0
      %369 = vmatpush1.bf16.msra.mxu0 0
      %370 = vmatprep.subr.bf16.mxu0 0
      %371 = vmatpush1.bf16.msra.mxu0 0
      %372 = vmatprep.subr.bf16.mxu0 0
      %373 = vmatpush1.bf16.msra.mxu0 0
      %374 = vmatprep.subr.bf16.mxu0 0
      %375 = vmatpush1.bf16.msra.mxu0 0
      %376 = vmatprep.subr.bf16.mxu0 0
      %377 = vmatpush1.bf16.msra.mxu0 0
      %378 = vmatprep.subr.bf16.mxu0 0
      %379 = vmatpush1.bf16.msra.mxu0 0
      %380 = vmatprep.subr.bf16.mxu0 0
      %381 = vmatpush1.bf16.msra.mxu0 0
      %382 = vmatprep.subr.bf16.mxu0 0
      %383 = vmatpush1.bf16.msra.mxu0 0
      %384 = vmatprep.subr.bf16.mxu0 0
      %385 = vmatpush1.bf16.msra.mxu0 0
      %386 = vmatprep.subr.bf16.mxu0 0
      %387 = vmatpush1.bf16.msra.mxu0 0
      %388 = vmatprep.subr.bf16.mxu0 0
      %389 = vmatpush1.bf16.msra.mxu0 0
      %390 = vmatprep.subr.bf16.mxu0 0
      %391 = vmatpush1.bf16.msra.mxu0 0
      %392 = vmatprep.subr.bf16.mxu0 0
      %393 = vmatpush1.bf16.msra.mxu0 0
      %394 = vmatprep.mubr.bf16.mxu0 0
      %395 = vmatmul.mubr.bf16.gmra.mrb[0].mxu0 %v332
      %v396 = vpop.f32.mrb[0].mxu0
      %v397 = vadd.f32 %v278, %v396
      %v398 = vpop.f32.mrb[0].mxu0
      %v399 = vadd.f32 %v282, %v398
      %v400 = vpop.f32.mrb[0].mxu0
      %v401 = vadd.f32 %v278, %v400
      %v402 = vpop.f32.mrb[0].mxu0
      %v403 = vadd.f32 %v282, %v402
      %404 = vmatprep.mubr.bf16.mxu0 0
      %405 = vmatmul.mubr.bf16.gmra.mrb[0].mxu0 %v335
      %v406 = vpop.f32.mrb[0].mxu0
      %v407 = vadd.f32 %v278, %v406
      %v408 = vpop.f32.mrb[0].mxu0
      %v409 = vadd.f32 %v282, %v408
      %v410 = vpop.f32.mrb[0].mxu0
      %v411 = vadd.f32 %v278, %v410
      %v412 = vpop.f32.mrb[0].mxu0
      %v413 = vadd.f32 %v282, %v412
      %414 = vmatprep.mubr.bf16.mxu0 0
      %415 = vmatmul.mubr.bf16.gmra.mrb[0].mxu0 %v338
      %v416 = vpop.f32.mrb[0].mxu0
      %v417 = vadd.f32 %v278, %v416
      %v418 = vpop.f32.mrb[0].mxu0
      %v419 = vadd.f32 %v282, %v418
      %v420 = vpop.f32.mrb[0].mxu0
      %v421 = vadd.f32 %v278, %v420
      %v422 = vpop.f32.mrb[0].mxu0
      %v423 = vadd.f32 %v282, %v422
      %424 = vmatprep.mubr.bf16.mxu0 0
      %425 = vmatmul.mubr.bf16.gmra.mrb[0].mxu0 %v341
      %v426 = vpop.f32.mrb[0].mxu0
      %v427 = vadd.f32 %v278, %v426
      %v428 = vpop.f32.mrb[0].mxu0
      %v429 = vadd.f32 %v282, %v428
      %v430 = vpop.f32.mrb[0].mxu0
      %v431 = vadd.f32 %v278, %v430
      %v432 = vpop.f32.mrb[0].mxu0
      %v433 = vadd.f32 %v282, %v432
      %434 = vmatprep.mubr.bf16.mxu0 0
      %435 = vmatmul.mubr.bf16.gmra.mrb[0].mxu0 %v344
      %v436 = vpop.f32.mrb[0].mxu0
      %v437 = vadd.f32 %v278, %v436
      %v438 = vpop.f32.mrb[0].mxu0
      %v439 = vadd.f32 %v282, %v438
      %v440 = vpop.f32.mrb[0].mxu0
      %v441 = vadd.f32 %v278, %v440
      %v442 = vpop.f32.mrb[0].mxu0
      %v443 = vadd.f32 %v282, %v442
      %444 = vmatprep.mubr.bf16.mxu0 0
      %445 = vmatmul.mubr.bf16.gmra.mrb[0].mxu0 %v347
      %v446 = vpop.f32.mrb[0].mxu0
      %v447 = vadd.f32 %v278, %v446
      %v448 = vpop.f32.mrb[0].mxu0
      %v449 = vadd.f32 %v282, %v448
      %v450 = vpop.f32.mrb[0].mxu0
      %v451 = vadd.f32 %v278, %v450
      %v452 = vpop.f32.mrb[0].mxu0
      %v453 = vadd.f32 %v282, %v452
      %454 = vmatprep.mubr.bf16.mxu0 0
      %455 = vmatmul.mubr.bf16.gmra.mrb[0].mxu0 %v350
      %v456 = vpop.f32.mrb[0].mxu0
      %v457 = vadd.f32 %v278, %v456
      %v458 = vpop.f32.mrb[0].mxu0
      %v459 = vadd.f32 %v282, %v458
      %v460 = vpop.f32.mrb[0].mxu0
      %v461 = vadd.f32 %v278, %v460
      %v462 = vpop.f32.mrb[0].mxu0
      %v463 = vadd.f32 %v282, %v462
      %464 = vmatprep.mubr.bf16.mxu0 0
      %465 = vmatmul.mubr.bf16.gmra.mrb[0].mxu0 %v353
      %v466 = vpop.f32.mrb[0].mxu0
      %v467 = vadd.f32 %v278, %v466
      %v468 = vpop.f32.mrb[0].mxu0
      %v469 = vadd.f32 %v282, %v468
      %v470 = vpop.f32.mrb[0].mxu0
      %v471 = vadd.f32 %v278, %v470
      %v472 = vpop.f32.mrb[0].mxu0
      %v473 = vadd.f32 %v282, %v472
      %474 = vdwg.mxu0
      %475 = vst [vmem:[#allocation2] sm:$0xff] %v397
      %476 = vst [vmem:[#allocation2 + $0x8] sm:$0xff] %v399
      %477 = vst [vmem:[#allocation2 + $0x10] sm:$0xff] %v401
      %478 = vst [vmem:[#allocation2 + $0x18] sm:$0xff] %v403
      %479 = vst [vmem:[#allocation2 + $0x20] sm:$0xff] %v407
      %480 = vst [vmem:[#allocation2 + $0x28] sm:$0xff] %v409
      %481 = vst [vmem:[#allocation2 + $0x30] sm:$0xff] %v411
      %482 = vst [vmem:[#allocation2 + $0x38] sm:$0xff] %v413
      %483 = vst [vmem:[#allocation2 + $0x40] sm:$0xff] %v417
      %484 = vst [vmem:[#allocation2 + $0x48] sm:$0xff] %v419
      %485 = vst [vmem:[#allocation2 + $0x50] sm:$0xff] %v421
      %486 = vst [vmem:[#allocation2 + $0x58] sm:$0xff] %v423
      %487 = vst [vmem:[#allocation2 + $0x60] sm:$0xff] %v427
      %488 = vst [vmem:[#allocation2 + $0x68] sm:$0xff] %v429
      %489 = vst [vmem:[#allocation2 + $0x70] sm:$0xff] %v431
      %490 = vst [vmem:[#allocation2 + $0x78] sm:$0xff] %v433
      %491 = vst [vmem:[#allocation2 + $0x80] sm:$0xff] %v437
      %492 = vst [vmem:[#allocation2 + $0x88] sm:$0xff] %v439
      %493 = vst [vmem:[#allocation2 + $0x90] sm:$0xff] %v441
      %494 = vst [vmem:[#allocation2 + $0x98] sm:$0xff] %v443
      %495 = vst [vmem:[#allocation2 + $0xa0] sm:$0xff] %v447
      %496 = vst [vmem:[#allocation2 + $0xa8] sm:$0xff] %v449
      %497 = vst [vmem:[#allocation2 + $0xb0] sm:$0xff] %v451
      %498 = vst [vmem:[#allocation2 + $0xb8] sm:$0xff] %v453
      %499 = vst [vmem:[#allocation2 + $0xc0] sm:$0xff] %v457
      %500 = vst [vmem:[#allocation2 + $0xc8] sm:$0xff] %v459
      %501 = vst [vmem:[#allocation2 + $0xd0] sm:$0xff] %v461
      %502 = vst [vmem:[#allocation2 + $0xd8] sm:$0xff] %v463
      %503 = vst [vmem:[#allocation2 + $0xe0] sm:$0xff] %v467
      %504 = vst [vmem:[#allocation2 + $0xe8] sm:$0xff] %v469
      %505 = vst [vmem:[#allocation2 + $0xf0] sm:$0xff] %v471
      %506 = vst [vmem:[#allocation2 + $0xf8] sm:$0xff] %v473
      %v507 = vld [vmem:[%s3] sm:$0xff]
      %v508 = vld [vmem:[%s3 + $0x8] sm:$0xff]
      %v509 = vld [vmem:[%s3 + $0x10] sm:$0xff]
      %v510 = vld [vmem:[%s3 + $0x18] sm:$0xff]
      %v511 = vld [vmem:[%s3 + $0x20] sm:$0xff]
      %v512 = vld [vmem:[%s3 + $0x28] sm:$0xff]
      %v513 = vld [vmem:[%s3 + $0x30] sm:$0xff]
      %v514 = vld [vmem:[%s3 + $0x38] sm:$0xff]
      %v515 = vld [vmem:[#allocation3] sm:$0x1]
      %v516 = vld [vmem:[#allocation4] sm:$0x3]
      %v517 = vld [vmem:[#allocation2] sm:$0x3]
      %v518 = vld [vmem:[#allocation2 + $0x8] sm:$0x3]
      %v527 = vunpack.c.l.b16 %v507
      %v528 = vunpack.c.h.b16 %v507
      %v529 = vunpack.c.l.b16 %v508
      %v530 = vunpack.c.h.b16 %v508
      %v531 = vunpack.c.l.b16 %v509
      %v532 = vunpack.c.h.b16 %v509
      %v533 = vunpack.c.l.b16 %v510
      %v534 = vunpack.c.h.b16 %v510
      %v535 = vunpack.c.l.b16 %v511
      %v536 = vunpack.c.h.b16 %v511
      %v537 = vunpack.c.l.b16 %v512
      %v538 = vunpack.c.h.b16 %v512
      %v539 = vunpack.c.l.b16 %v513
      %v540 = vunpack.c.h.b16 %v513
      %v541 = vunpack.c.l.b16 %v514
      %v542 = vunpack.c.h.b16 %v514
      %v543 = vpack.c.b16 %v529, %v527
      %v544 = vpack.c.b16 %v530, %v528
      %v545 = vpack.c.b16 %v533, %v531
      %v546 = vpack.c.b16 %v534, %v532
      %v547 = vpack.c.b16 %v537, %v535
      %v548 = vpack.c.b16 %v538, %v536
      %v549 = vpack.c.b16 %v541, %v539
      %v550 = vpack.c.b16 %v542, %v540
      %vm559 = vcmask 523264
      %v561 = vsel %vm559, %v515, 0
      %563 = vmatprep.subr.bf16.mxu0 %v544
      %564 = vmatpush1.bf16.msra.mxu0 %v543
      %565 = vmatprep.subr.bf16.mxu0 %v546
      %566 = vmatpush1.bf16.msra.mxu0 %v545
      %567 = vmatprep.subr.bf16.mxu0 %v548
      %568 = vmatpush1.bf16.msra.mxu0 %v547
      %569 = vmatprep.subr.bf16.mxu0 %v550
      %570 = vmatpush1.bf16.msra.mxu0 %v549
      %571 = vmatprep.subr.bf16.mxu0 0
      %572 = vmatpush1.bf16.msra.mxu0 0
      %573 = vmatprep.subr.bf16.mxu0 0
      %574 = vmatpush1.bf16.msra.mxu0 0
      %575 = vmatprep.subr.bf16.mxu0 0
      %576 = vmatpush1.bf16.msra.mxu0 0
      %577 = vmatprep.subr.bf16.mxu0 0
      %578 = vmatpush1.bf16.msra.mxu0 0
      %579 = vmatprep.subr.bf16.mxu0 0
      %580 = vmatpush1.bf16.msra.mxu0 0
      %581 = vmatprep.subr.bf16.mxu0 0
      %582 = vmatpush1.bf16.msra.mxu0 0
      %583 = vmatprep.subr.bf16.mxu0 0
      %584 = vmatpush1.bf16.msra.mxu0 0
      %585 = vmatprep.subr.bf16.mxu0 0
      %586 = vmatpush1.bf16.msra.mxu0 0
      %587 = vmatprep.subr.bf16.mxu0 0
      %588 = vmatpush1.bf16.msra.mxu0 0
      %589 = vmatprep.subr.bf16.mxu0 0
      %590 = vmatpush1.bf16.msra.mxu0 0
      %591 = vmatprep.subr.bf16.mxu0 0
      %592 = vmatpush1.bf16.msra.mxu0 0
      %593 = vmatprep.subr.bf16.mxu0 0
      %594 = vmatpush1.bf16.msra.mxu0 0
      %595 = vmatprep.mubr.bf16.mxu0 0
      %596 = vmatmul.mubr.bf16.gmra.mrb[0].mxu0 %v561
      %v597 = vpop.f32.mrb[0].mxu0
      %v598 = vadd.f32 0.0, %v597
      %v599 = vpop.f32.mrb[0].mxu0
      %v600 = vadd.f32 0.0, %v599
      %v601 = vpop.f32.mrb[0].mxu0
      %v602 = vpop.f32.mrb[0].mxu0
      %603 = vdwg.mxu0
      %v604 = vadd.f32 %v517, %v598
      %v605 = vadd.f32 %v518, %v600
      %v606 = vxor.u32 %v604, 2147483648
      %v607 = vxor.u32 %v605, 2147483648
      %v608 = vmul.f32 %v606, 1.442695
      %v609 = vpow.pop %v608
      %v610 = vmul.f32 %v607, 1.442695
      %v611 = vpow.pop %v610
      %v612 = vadd.f32 %v609, 1.0
      %v613 = vadd.f32 %v611, 1.0
      %v614 = vrcp.pop %v612
      %v615 = vmul.f32 1.0, %v614
      %v616 = vrcp.pop %v613
      %v617 = vmul.f32 1.0, %v616
      %v618 = vtanh.pop %v605
      %v619 = vmul.f32 %v615, %v516
      %v620 = vmul.f32 %v615, %v618
      %622 = vrot.lane.b32.xlu0 %v620, 64
      %v623 = vpop.permute.xlu0 %622
      %v625 = vadd.f32 %v619, %v623
      %v626 = vtanh.pop %v625
      %v627 = vmul.f32 %v617, %v626
      %v628 = vpack.c.bf16 %v627, %v627
      %vm629 = vcmask 253952
      %630 = vst.msk [vmem:[%s237] sm:$0x1] %vm629, %v628
      %v632 = vunpack.c.l.b16 %v628
      %v633 = vpack.c.b16 %v632, %v632
      %v634 = vrot.slane %v633, 5
      %635 = vrot.lane.b32.xlu0 %v634, 96
      %v636 = vpop.permute.xlu0 %635
      %vm638 = vcmask 257027
      %639 = vst.msk [vmem:[%s244 + $0x3c] sm:$0x8] %vm638, %v636
      %v640 = vld [vmem:[#allocation2] sm:$0xc]
      %v641 = vld [vmem:[#allocation2 + $0x8] sm:$0xc]
      %v643 = vsel %vm559, %v628, 0
      %645 = vmatprep.subr.bf16.mxu0 %v544
      %646 = vmatpush1.bf16.msra.mxu0 %v543
      %647 = vmatprep.subr.bf16.mxu0 %v546
      %648 = vmatpush1.bf16.msra.mxu0 %v545
      %649 = vmatprep.subr.bf16.mxu0 %v548
      %650 = vmatpush1.bf16.msra.mxu0 %v547
      %651 = vmatprep.subr.bf16.mxu0 %v550
      %652 = vmatpush1.bf16.msra.mxu0 %v549
      %653 = vmatprep.subr.bf16.mxu0 0
      %654 = vmatpush1.bf16.msra.mxu0 0
      %655 = vmatprep.subr.bf16.mxu0 0
      %656 = vmatpush1.bf16.msra.mxu0 0
      %657 = vmatprep.subr.bf16.mxu0 0
      %658 = vmatpush1.bf16.msra.mxu0 0
      %659 = vmatprep.subr.bf16.mxu0 0
      %660 = vmatpush1.bf16.msra.mxu0 0
      %661 = vmatprep.subr.bf16.mxu0 0
      %662 = vmatpush1.bf16.msra.mxu0 0
      %663 = vmatprep.subr.bf16.mxu0 0
      %664 = vmatpush1.bf16.msra.mxu0 0
      %665 = vmatprep.subr.bf16.mxu0 0
      %666 = vmatpush1.bf16.msra.mxu0 0
      %667 = vmatprep.subr.bf16.mxu0 0
      %668 = vmatpush1.bf16.msra.mxu0 0
      %669 = vmatprep.subr.bf16.mxu0 0
      %670 = vmatpush1.bf16.msra.mxu0 0
      %671 = vmatprep.subr.bf16.mxu0 0
      %672 = vmatpush1.bf16.msra.mxu0 0
      %673 = vmatprep.subr.bf16.mxu0 0
      %674 = vmatpush1.bf16.msra.mxu0 0
      %675 = vmatprep.subr.bf16.mxu0 0
      %676 = vmatpush1.bf16.msra.mxu0 0
      %677 = vmatprep.mubr.bf16.mxu0 0
      %678 = vmatmul.mubr.bf16.gmra.mrb[0].mxu0 %v643
      %v679 = vpop.f32.mrb[0].mxu0
      %v680 = vadd.f32 0.0, %v679
      %v681 = vpop.f32.mrb[0].mxu0
      %v682 = vadd.f32 0.0, %v681
      %v683 = vpop.f32.mrb[0].mxu0
      %v684 = vpop.f32.mrb[0].mxu0
      %685 = vdwg.mxu0
      %v688 = vrot.slane %v680, 6
      %v689 = vrot.slane %v682, 6
      %v692 = vadd.f32 %v640, %v688
      %v693 = vadd.f32 %v641, %v689
      %v694 = vxor.u32 %v692, 2147483648
      %v695 = vxor.u32 %v693, 2147483648
      %v696 = vmul.f32 %v694, 1.442695
      %v697 = vpow.pop %v696
      %v698 = vmul.f32 %v695, 1.442695
      %v699 = vpow.pop %v698
      %v700 = vadd.f32 %v697, 1.0
      %v701 = vadd.f32 %v699, 1.0
      %v702 = vrcp.pop %v700
      %v703 = vmul.f32 1.0, %v702
      %v704 = vrcp.pop %v701
      %v705 = vmul.f32 1.0, %v704
      %v706 = vtanh.pop %v693
      %v708 = vrot.slane %v625, 6
      %v710 = vmul.f32 %v703, %v708
      %v711 = vmul.f32 %v703, %v706
      %713 = vrot.lane.b32.xlu0 %v711, 64
      %v714 = vpop.permute.xlu0 %713
      %v716 = vadd.f32 %v710, %v714
      %v717 = vtanh.pop %v716
      %v718 = vmul.f32 %v705, %v717
      %v719 = vpack.c.bf16 %v718, %v718
      %vm720 = vcmask 254977
      %721 = vst.msk [vmem:[%s237] sm:$0x2] %vm720, %v719
      %v723 = vunpack.c.l.b16 %v719
      %v724 = vpack.c.b16 %v723, %v723
      %v725 = vrot.slane %v724, 7
      %726 = vrot.lane.b32.xlu0 %v725, 96
      %v727 = vpop.permute.xlu0 %726
      %vm729 = vcmask 256002
      %730 = vst.msk [vmem:[%s244 + $0x3c] sm:$0x4] %vm729, %v727
      %v731 = vld [vmem:[#allocation2] sm:$0x30]
      %v732 = vld [vmem:[#allocation2 + $0x8] sm:$0x30]
      %v733 = vrot.slane %v719, 1
      %v735 = vsel %vm559, %v733, 0
      %737 = vmatprep.subr.bf16.mxu0 %v544
      %738 = vmatpush1.bf16.msra.mxu0 %v543
      %739 = vmatprep.subr.bf16.mxu0 %v546
      %740 = vmatpush1.bf16.msra.mxu0 %v545
      %741 = vmatprep.subr.bf16.mxu0 %v548
      %742 = vmatpush1.bf16.msra.mxu0 %v547
      %743 = vmatprep.subr.bf16.mxu0 %v550
      %744 = vmatpush1.bf16.msra.mxu0 %v549
      %745 = vmatprep.subr.bf16.mxu0 0
      %746 = vmatpush1.bf16.msra.mxu0 0
      %747 = vmatprep.subr.bf16.mxu0 0
      %748 = vmatpush1.bf16.msra.mxu0 0
      %749 = vmatprep.subr.bf16.mxu0 0
      %750 = vmatpush1.bf16.msra.mxu0 0
      %751 = vmatprep.subr.bf16.mxu0 0
      %752 = vmatpush1.bf16.msra.mxu0 0
      %753 = vmatprep.subr.bf16.mxu0 0
      %754 = vmatpush1.bf16.msra.mxu0 0
      %755 = vmatprep.subr.bf16.mxu0 0
      %756 = vmatpush1.bf16.msra.mxu0 0
      %757 = vmatprep.subr.bf16.mxu0 0
      %758 = vmatpush1.bf16.msra.mxu0 0
      %759 = vmatprep.subr.bf16.mxu0 0
      %760 = vmatpush1.bf16.msra.mxu0 0
      %761 = vmatprep.subr.bf16.mxu0 0
      %762 = vmatpush1.bf16.msra.mxu0 0
      %763 = vmatprep.subr.bf16.mxu0 0
      %764 = vmatpush1.bf16.msra.mxu0 0
      %765 = vmatprep.subr.bf16.mxu0 0
      %766 = vmatpush1.bf16.msra.mxu0 0
      %767 = vmatprep.subr.bf16.mxu0 0
      %768 = vmatpush1.bf16.msra.mxu0 0
      %769 = vmatprep.mubr.bf16.mxu0 0
      %770 = vmatmul.mubr.bf16.gmra.mrb[0].mxu0 %v735
      %v771 = vpop.f32.mrb[0].mxu0
      %v772 = vadd.f32 0.0, %v771
      %v773 = vpop.f32.mrb[0].mxu0
      %v774 = vadd.f32 0.0, %v773
      %v775 = vpop.f32.mrb[0].mxu0
      %v776 = vpop.f32.mrb[0].mxu0
      %777 = vdwg.mxu0
      %v780 = vrot.slane %v772, 4
      %v781 = vrot.slane %v774, 4
      %v784 = vadd.f32 %v731, %v780
      %v785 = vadd.f32 %v732, %v781
      %v786 = vxor.u32 %v784, 2147483648
      %v787 = vxor.u32 %v785, 2147483648
      %v788 = vmul.f32 %v786, 1.442695
      %v789 = vpow.pop %v788
      %v790 = vmul.f32 %v787, 1.442695
      %v791 = vpow.pop %v790
      %v792 = vadd.f32 %v789, 1.0
      %v793 = vadd.f32 %v791, 1.0
      %v794 = vrcp.pop %v792
      %v795 = vmul.f32 1.0, %v794
      %v796 = vrcp.pop %v793
      %v797 = vmul.f32 1.0, %v796
      %v798 = vtanh.pop %v785
      %v800 = vrot.slane %v716, 6
      %v802 = vmul.f32 %v795, %v800
      %v803 = vmul.f32 %v795, %v798
      %805 = vrot.lane.b32.xlu0 %v803, 64
      %v806 = vpop.permute.xlu0 %805
      %v808 = vadd.f32 %v802, %v806
      %v809 = vtanh.pop %v808
      %v810 = vmul.f32 %v797, %v809
      %v811 = vpack.c.bf16 %v810, %v810
      %812 = vst.msk [vmem:[%s237] sm:$0x4] %vm729, %v811
      %v814 = vunpack.c.l.b16 %v811
      %v815 = vpack.c.b16 %v814, %v814
      %v816 = vrot.slane %v815, 5
      %v817 = vrot.slane %v816, 4
      %818 = vrot.lane.b32.xlu0 %v817, 96
      %v819 = vpop.permute.xlu0 %818
      %821 = vst.msk [vmem:[%s244 + $0x3c] sm:$0x2] %vm720, %v819
      %v822 = vld [vmem:[#allocation2] sm:$0xc0]
      %v823 = vld [vmem:[#allocation2 + $0x8] sm:$0xc0]
      %v824 = vrot.slane %v811, 2
      %v826 = vsel %vm559, %v824, 0
      %828 = vmatprep.subr.bf16.mxu0 %v544
      %829 = vmatpush1.bf16.msra.mxu0 %v543
      %830 = vmatprep.subr.bf16.mxu0 %v546
      %831 = vmatpush1.bf16.msra.mxu0 %v545
      %832 = vmatprep.subr.bf16.mxu0 %v548
      %833 = vmatpush1.bf16.msra.mxu0 %v547
      %834 = vmatprep.subr.bf16.mxu0 %v550
      %835 = vmatpush1.bf16.msra.mxu0 %v549
      %836 = vmatprep.subr.bf16.mxu0 0
      %837 = vmatpush1.bf16.msra.mxu0 0
      %838 = vmatprep.subr.bf16.mxu0 0
      %839 = vmatpush1.bf16.msra.mxu0 0
      %840 = vmatprep.subr.bf16.mxu0 0
      %841 = vmatpush1.bf16.msra.mxu0 0
      %842 = vmatprep.subr.bf16.mxu0 0
      %843 = vmatpush1.bf16.msra.mxu0 0
      %844 = vmatprep.subr.bf16.mxu0 0
      %845 = vmatpush1.bf16.msra.mxu0 0
      %846 = vmatprep.subr.bf16.mxu0 0
      %847 = vmatpush1.bf16.msra.mxu0 0
      %848 = vmatprep.subr.bf16.mxu0 0
      %849 = vmatpush1.bf16.msra.mxu0 0
      %850 = vmatprep.subr.bf16.mxu0 0
      %851 = vmatpush1.bf16.msra.mxu0 0
      %852 = vmatprep.subr.bf16.mxu0 0
      %853 = vmatpush1.bf16.msra.mxu0 0
      %854 = vmatprep.subr.bf16.mxu0 0
      %855 = vmatpush1.bf16.msra.mxu0 0
      %856 = vmatprep.subr.bf16.mxu0 0
      %857 = vmatpush1.bf16.msra.mxu0 0
      %858 = vmatprep.subr.bf16.mxu0 0
      %859 = vmatpush1.bf16.msra.mxu0 0
      %860 = vmatprep.mubr.bf16.mxu0 0
      %861 = vmatmul.mubr.bf16.gmra.mrb[0].mxu0 %v826
      %v862 = vpop.f32.mrb[0].mxu0
      %v863 = vadd.f32 0.0, %v862
      %v864 = vpop.f32.mrb[0].mxu0
      %v865 = vadd.f32 0.0, %v864
      %v866 = vpop.f32.mrb[0].mxu0
      %v867 = vpop.f32.mrb[0].mxu0
      %868 = vdwg.mxu0
      %v871 = vrot.slane %v863, 2
      %v872 = vrot.slane %v865, 2
      %v875 = vadd.f32 %v822, %v871
      %v876 = vadd.f32 %v823, %v872
      %v877 = vxor.u32 %v875, 2147483648
      %v878 = vxor.u32 %v876, 2147483648
      %v879 = vmul.f32 %v877, 1.442695
      %v880 = vpow.pop %v879
      %v881 = vmul.f32 %v878, 1.442695
      %v882 = vpow.pop %v881
      %v883 = vadd.f32 %v880, 1.0
      %v884 = vadd.f32 %v882, 1.0
      %v885 = vrcp.pop %v883
      %v886 = vmul.f32 1.0, %v885
      %v887 = vrcp.pop %v884
      %v888 = vmul.f32 1.0, %v887
      %v889 = vtanh.pop %v876
      %v891 = vrot.slane %v808, 6
      %v893 = vmul.f32 %v886, %v891
      %v894 = vmul.f32 %v886, %v889
      %896 = vrot.lane.b32.xlu0 %v894, 64
      %v897 = vpop.permute.xlu0 %896
      %v899 = vadd.f32 %v893, %v897
      %v900 = vtanh.pop %v899
      %v901 = vmul.f32 %v888, %v900
      %v902 = vpack.c.bf16 %v901, %v901
      %903 = vst.msk [vmem:[%s237] sm:$0x8] %vm638, %v902
      %v905 = vunpack.c.l.b16 %v902
      %v906 = vpack.c.b16 %v905, %v905
      %v907 = vrot.slane %v906, 7
      %v908 = vrot.slane %v907, 4
      %909 = vrot.lane.b32.xlu0 %v908, 96
      %v910 = vpop.permute.xlu0 %909
      %912 = vst.msk [vmem:[%s244 + $0x3c] sm:$0x1] %vm629, %v910
      %v913 = vld [vmem:[#allocation2 + $0x10] sm:$0x3]
      %v914 = vld [vmem:[#allocation2 + $0x18] sm:$0x3]
      %v915 = vrot.slane %v902, 3
      %v917 = vsel %vm559, %v915, 0
      %919 = vmatprep.subr.bf16.mxu0 %v544
      %920 = vmatpush1.bf16.msra.mxu0 %v543
      %921 = vmatprep.subr.bf16.mxu0 %v546
      %922 = vmatpush1.bf16.msra.mxu0 %v545
      %923 = vmatprep.subr.bf16.mxu0 %v548
      %924 = vmatpush1.bf16.msra.mxu0 %v547
      %925 = vmatprep.subr.bf16.mxu0 %v550
      %926 = vmatpush1.bf16.msra.mxu0 %v549
      %927 = vmatprep.subr.bf16.mxu0 0
      %928 = vmatpush1.bf16.msra.mxu0 0
      %929 = vmatprep.subr.bf16.mxu0 0
      %930 = vmatpush1.bf16.msra.mxu0 0
      %931 = vmatprep.subr.bf16.mxu0 0
      %932 = vmatpush1.bf16.msra.mxu0 0
      %933 = vmatprep.subr.bf16.mxu0 0
      %934 = vmatpush1.bf16.msra.mxu0 0
      %935 = vmatprep.subr.bf16.mxu0 0
      %936 = vmatpush1.bf16.msra.mxu0 0
      %937 = vmatprep.subr.bf16.mxu0 0
      %938 = vmatpush1.bf16.msra.mxu0 0
      %939 = vmatprep.subr.bf16.mxu0 0
      %940 = vmatpush1.bf16.msra.mxu0 0
      %941 = vmatprep.subr.bf16.mxu0 0
      %942 = vmatpush1.bf16.msra.mxu0 0
      %943 = vmatprep.subr.bf16.mxu0 0
      %944 = vmatpush1.bf16.msra.mxu0 0
      %945 = vmatprep.subr.bf16.mxu0 0
      %946 = vmatpush1.bf16.msra.mxu0 0
      %947 = vmatprep.subr.bf16.mxu0 0
      %948 = vmatpush1.bf16.msra.mxu0 0
      %949 = vmatprep.subr.bf16.mxu0 0
      %950 = vmatpush1.bf16.msra.mxu0 0
      %951 = vmatprep.mubr.bf16.mxu0 0
      %952 = vmatmul.mubr.bf16.gmra.mrb[0].mxu0 %v917
      %v953 = vpop.f32.mrb[0].mxu0
      %v954 = vadd.f32 0.0, %v953
      %v955 = vpop.f32.mrb[0].mxu0
      %v956 = vadd.f32 0.0, %v955
      %v957 = vpop.f32.mrb[0].mxu0
      %v958 = vpop.f32.mrb[0].mxu0
      %959 = vdwg.mxu0
      %v960 = vadd.f32 %v913, %v954
      %v961 = vadd.f32 %v914, %v956
      %v962 = vxor.u32 %v960, 2147483648
      %v963 = vxor.u32 %v961, 2147483648
      %v964 = vmul.f32 %v962, 1.442695
      %v965 = vpow.pop %v964
      %v966 = vmul.f32 %v963, 1.442695
      %v967 = vpow.pop %v966
      %v968 = vadd.f32 %v965, 1.0
      %v969 = vadd.f32 %v967, 1.0
      %v970 = vrcp.pop %v968
      %v971 = vmul.f32 1.0, %v970
      %v972 = vrcp.pop %v969
      %v973 = vmul.f32 1.0, %v972
      %v974 = vtanh.pop %v961
      %v976 = vrot.slane %v899, 6
      %v978 = vmul.f32 %v971, %v976
      %v979 = vmul.f32 %v971, %v974
      %981 = vrot.lane.b32.xlu0 %v979, 64
      %v982 = vpop.permute.xlu0 %981
      %v984 = vadd.f32 %v978, %v982
      %v985 = vtanh.pop %v984
      %v986 = vmul.f32 %v973, %v985
      %v987 = vpack.c.bf16 %v986, %v986
      %988 = vst.msk [vmem:[%s237 + $0x4] sm:$0x1] %vm629, %v987
      %v990 = vunpack.c.l.b16 %v987
      %v991 = vpack.c.b16 %v990, %v990
      %v992 = vrot.slane %v991, 5
      %993 = vrot.lane.b32.xlu0 %v992, 96
      %v994 = vpop.permute.xlu0 %993
      %996 = vst.msk [vmem:[%s244 + $0x38] sm:$0x8] %vm638, %v994
      %v997 = vld [vmem:[#allocation2 + $0x10] sm:$0xc]
      %v998 = vld [vmem:[#allocation2 + $0x18] sm:$0xc]
      %v1000 = vsel %vm559, %v987, 0
      %1002 = vmatprep.subr.bf16.mxu0 %v544
      %1003 = vmatpush1.bf16.msra.mxu0 %v543
      %1004 = vmatprep.subr.bf16.mxu0 %v546
      %1005 = vmatpush1.bf16.msra.mxu0 %v545
      %1006 = vmatprep.subr.bf16.mxu0 %v548
      %1007 = vmatpush1.bf16.msra.mxu0 %v547
      %1008 = vmatprep.subr.bf16.mxu0 %v550
      %1009 = vmatpush1.bf16.msra.mxu0 %v549
      %1010 = vmatprep.subr.bf16.mxu0 0
      %1011 = vmatpush1.bf16.msra.mxu0 0
      %1012 = vmatprep.subr.bf16.mxu0 0
      %1013 = vmatpush1.bf16.msra.mxu0 0
      %1014 = vmatprep.subr.bf16.mxu0 0
      %1015 = vmatpush1.bf16.msra.mxu0 0
      %1016 = vmatprep.subr.bf16.mxu0 0
      %1017 = vmatpush1.bf16.msra.mxu0 0
      %1018 = vmatprep.subr.bf16.mxu0 0
      %1019 = vmatpush1.bf16.msra.mxu0 0
      %1020 = vmatprep.subr.bf16.mxu0 0
      %1021 = vmatpush1.bf16.msra.mxu0 0
      %1022 = vmatprep.subr.bf16.mxu0 0
      %1023 = vmatpush1.bf16.msra.mxu0 0
      %1024 = vmatprep.subr.bf16.mxu0 0
      %1025 = vmatpush1.bf16.msra.mxu0 0
      %1026 = vmatprep.subr.bf16.mxu0 0
      %1027 = vmatpush1.bf16.msra.mxu0 0
      %1028 = vmatprep.subr.bf16.mxu0 0
      %1029 = vmatpush1.bf16.msra.mxu0 0
      %1030 = vmatprep.subr.bf16.mxu0 0
      %1031 = vmatpush1.bf16.msra.mxu0 0
      %1032 = vmatprep.subr.bf16.mxu0 0
      %1033 = vmatpush1.bf16.msra.mxu0 0
      %1034 = vmatprep.mubr.bf16.mxu0 0
      %1035 = vmatmul.mubr.bf16.gmra.mrb[0].mxu0 %v1000
      %v1036 = vpop.f32.mrb[0].mxu0
      %v1037 = vadd.f32 0.0, %v1036
      %v1038 = vpop.f32.mrb[0].mxu0
      %v1039 = vadd.f32 0.0, %v1038
      %v1040 = vpop.f32.mrb[0].mxu0
      %v1041 = vpop.f32.mrb[0].mxu0
      %1042 = vdwg.mxu0
      %v1045 = vrot.slane %v1037, 6
      %v1046 = vrot.slane %v1039, 6
      %v1049 = vadd.f32 %v997, %v1045
      %v1050 = vadd.f32 %v998, %v1046
      %v1051 = vxor.u32 %v1049, 2147483648
      %v1052 = vxor.u32 %v1050, 2147483648
      %v1053 = vmul.f32 %v1051, 1.442695
      %v1054 = vpow.pop %v1053
      %v1055 = vmul.f32 %v1052, 1.442695
      %v1056 = vpow.pop %v1055
      %v1057 = vadd.f32 %v1054, 1.0
      %v1058 = vadd.f32 %v1056, 1.0
      %v1059 = vrcp.pop %v1057
      %v1060 = vmul.f32 1.0, %v1059
      %v1061 = vrcp.pop %v1058
      %v1062 = vmul.f32 1.0, %v1061
      %v1063 = vtanh.pop %v1050
      %v1065 = vrot.slane %v984, 6
      %v1067 = vmul.f32 %v1060, %v1065
      %v1068 = vmul.f32 %v1060, %v1063
      %1070 = vrot.lane.b32.xlu0 %v1068, 64
      %v1071 = vpop.permute.xlu0 %1070
      %v1073 = vadd.f32 %v1067, %v1071
      %v1074 = vtanh.pop %v1073
      %v1075 = vmul.f32 %v1062, %v1074
      %v1076 = vpack.c.bf16 %v1075, %v1075
      %1077 = vst.msk [vmem:[%s237 + $0x4] sm:$0x2] %vm720, %v1076
      %v1079 = vunpack.c.l.b16 %v1076
      %v1080 = vpack.c.b16 %v1079, %v1079
      %v1081 = vrot.slane %v1080, 7
      %1082 = vrot.lane.b32.xlu0 %v1081, 96
      %v1083 = vpop.permute.xlu0 %1082
      %1085 = vst.msk [vmem:[%s244 + $0x38] sm:$0x4] %vm729, %v1083
      %v1086 = vld [vmem:[#allocation2 + $0x10] sm:$0x30]
      %v1087 = vld [vmem:[#allocation2 + $0x18] sm:$0x30]
      %v1088 = vrot.slane %v1076, 1
      %v1090 = vsel %vm559, %v1088, 0
      %1092 = vmatprep.subr.bf16.mxu0 %v544
      %1093 = vmatpush1.bf16.msra.mxu0 %v543
      %1094 = vmatprep.subr.bf16.mxu0 %v546
      %1095 = vmatpush1.bf16.msra.mxu0 %v545
      %1096 = vmatprep.subr.bf16.mxu0 %v548
      %1097 = vmatpush1.bf16.msra.mxu0 %v547
      %1098 = vmatprep.subr.bf16.mxu0 %v550
      %1099 = vmatpush1.bf16.msra.mxu0 %v549
      %1100 = vmatprep.subr.bf16.mxu0 0
      %1101 = vmatpush1.bf16.msra.mxu0 0
      %1102 = vmatprep.subr.bf16.mxu0 0
      %1103 = vmatpush1.bf16.msra.mxu0 0
      %1104 = vmatprep.subr.bf16.mxu0 0
      %1105 = vmatpush1.bf16.msra.mxu0 0
      %1106 = vmatprep.subr.bf16.mxu0 0
      %1107 = vmatpush1.bf16.msra.mxu0 0
      %1108 = vmatprep.subr.bf16.mxu0 0
      %1109 = vmatpush1.bf16.msra.mxu0 0
      %1110 = vmatprep.subr.bf16.mxu0 0
      %1111 = vmatpush1.bf16.msra.mxu0 0
      %1112 = vmatprep.subr.bf16.mxu0 0
      %1113 = vmatpush1.bf16.msra.mxu0 0
      %1114 = vmatprep.subr.bf16.mxu0 0
      %1115 = vmatpush1.bf16.msra.mxu0 0
      %1116 = vmatprep.subr.bf16.mxu0 0
      %1117 = vmatpush1.bf16.msra.mxu0 0
      %1118 = vmatprep.subr.bf16.mxu0 0
      %1119 = vmatpush1.bf16.msra.mxu0 0
      %1120 = vmatprep.subr.bf16.mxu0 0
      %1121 = vmatpush1.bf16.msra.mxu0 0
      %1122 = vmatprep.subr.bf16.mxu0 0
      %1123 = vmatpush1.bf16.msra.mxu0 0
      %1124 = vmatprep.mubr.bf16.mxu0 0
      %1125 = vmatmul.mubr.bf16.gmra.mrb[0].mxu0 %v1090
      %v1126 = vpop.f32.mrb[0].mxu0
      %v1127 = vadd.f32 0.0, %v1126
      %v1128 = vpop.f32.mrb[0].mxu0
      %v1129 = vadd.f32 0.0, %v1128
      %v1130 = vpop.f32.mrb[0].mxu0
      %v1131 = vpop.f32.mrb[0].mxu0
      %1132 = vdwg.mxu0
      %v1135 = vrot.slane %v1127, 4
      %v1136 = vrot.slane %v1129, 4
      %v1139 = vadd.f32 %v1086, %v1135
      %v1140 = vadd.f32 %v1087, %v1136
      %v1141 = vxor.u32 %v1139, 2147483648
      %v1142 = vxor.u32 %v1140, 2147483648
      %v1143 = vmul.f32 %v1141, 1.442695
      %v1144 = vpow.pop %v1143
      %v1145 = vmul.f32 %v1142, 1.442695
      %v1146 = vpow.pop %v1145
      %v1147 = vadd.f32 %v1144, 1.0
      %v1148 = vadd.f32 %v1146, 1.0
      %v1149 = vrcp.pop %v1147
      %v1150 = vmul.f32 1.0, %v1149
      %v1151 = vrcp.pop %v1148
      %v1152 = vmul.f32 1.0, %v1151
      %v1153 = vtanh.pop %v1140
      %v1155 = vrot.slane %v1073, 6
      %v1157 = vmul.f32 %v1150, %v1155
      %v1158 = vmul.f32 %v1150, %v1153
      %1160 = vrot.lane.b32.xlu0 %v1158, 64
      %v1161 = vpop.permute.xlu0 %1160
      %v1163 = vadd.f32 %v1157, %v1161
      %v1164 = vtanh.pop %v1163
      %v1165 = vmul.f32 %v1152, %v1164
      %v1166 = vpack.c.bf16 %v1165, %v1165
      %1167 = vst.msk [vmem:[%s237 + $0x4] sm:$0x4] %vm729, %v1166
      %v1169 = vunpack.c.l.b16 %v1166
      %v1170 = vpack.c.b16 %v1169, %v1169
      %v1171 = vrot.slane %v1170, 5
      %v1172 = vrot.slane %v1171, 4
      %1173 = vrot.lane.b32.xlu0 %v1172, 96
      %v1174 = vpop.permute.xlu0 %1173
      %1176 = vst.msk [vmem:[%s244 + $0x38] sm:$0x2] %vm720, %v1174
      %v1177 = vld [vmem:[#allocation2 + $0x10] sm:$0xc0]
      %v1178 = vld [vmem:[#allocation2 + $0x18] sm:$0xc0]
      %v1179 = vrot.slane %v1166, 2
      %v1181 = vsel %vm559, %v1179, 0
      %1183 = vmatprep.subr.bf16.mxu0 %v544
      %1184 = vmatpush1.bf16.msra.mxu0 %v543
      %1185 = vmatprep.subr.bf16.mxu0 %v546
      %1186 = vmatpush1.bf16.msra.mxu0 %v545
      %1187 = vmatprep.subr.bf16.mxu0 %v548
      %1188 = vmatpush1.bf16.msra.mxu0 %v547
      %1189 = vmatprep.subr.bf16.mxu0 %v550
      %1190 = vmatpush1.bf16.msra.mxu0 %v549
      %1191 = vmatprep.subr.bf16.mxu0 0
      %1192 = vmatpush1.bf16.msra.mxu0 0
      %1193 = vmatprep.subr.bf16.mxu0 0
      %1194 = vmatpush1.bf16.msra.mxu0 0
      %1195 = vmatprep.subr.bf16.mxu0 0
      %1196 = vmatpush1.bf16.msra.mxu0 0
      %1197 = vmatprep.subr.bf16.mxu0 0
      %1198 = vmatpush1.bf16.msra.mxu0 0
      %1199 = vmatprep.subr.bf16.mxu0 0
      %1200 = vmatpush1.bf16.msra.mxu0 0
      %1201 = vmatprep.subr.bf16.mxu0 0
      %1202 = vmatpush1.bf16.msra.mxu0 0
      %1203 = vmatprep.subr.bf16.mxu0 0
      %1204 = vmatpush1.bf16.msra.mxu0 0
      %1205 = vmatprep.subr.bf16.mxu0 0
      %1206 = vmatpush1.bf16.msra.mxu0 0
      %1207 = vmatprep.subr.bf16.mxu0 0
      %1208 = vmatpush1.bf16.msra.mxu0 0
      %1209 = vmatprep.subr.bf16.mxu0 0
      %1210 = vmatpush1.bf16.msra.mxu0 0
      %1211 = vmatprep.subr.bf16.mxu0 0
      %1212 = vmatpush1.bf16.msra.mxu0 0
      %1213 = vmatprep.subr.bf16.mxu0 0
      %1214 = vmatpush1.bf16.msra.mxu0 0
      %1215 = vmatprep.mubr.bf16.mxu0 0
      %1216 = vmatmul.mubr.bf16.gmra.mrb[0].mxu0 %v1181
      %v1217 = vpop.f32.mrb[0].mxu0
      %v1218 = vadd.f32 0.0, %v1217
      %v1219 = vpop.f32.mrb[0].mxu0
      %v1220 = vadd.f32 0.0, %v1219
      %v1221 = vpop.f32.mrb[0].mxu0
      %v1222 = vpop.f32.mrb[0].mxu0
      %1223 = vdwg.mxu0
      %v1226 = vrot.slane %v1218, 2
      %v1227 = vrot.slane %v1220, 2
      %v1230 = vadd.f32 %v1177, %v1226
      %v1231 = vadd.f32 %v1178, %v1227
      %v1232 = vxor.u32 %v1230, 2147483648
      %v1233 = vxor.u32 %v1231, 2147483648
      %v1234 = vmul.f32 %v1232, 1.442695
      %v1235 = vpow.pop %v1234
      %v1236 = vmul.f32 %v1233, 1.442695
      %v1237 = vpow.pop %v1236
      %v1238 = vadd.f32 %v1235, 1.0
      %v1239 = vadd.f32 %v1237, 1.0
      %v1240 = vrcp.pop %v1238
      %v1241 = vmul.f32 1.0, %v1240
      %v1242 = vrcp.pop %v1239
      %v1243 = vmul.f32 1.0, %v1242
      %v1244 = vtanh.pop %v1231
      %v1246 = vrot.slane %v1163, 6
      %v1248 = vmul.f32 %v1241, %v1246
      %v1249 = vmul.f32 %v1241, %v1244
      %1251 = vrot.lane.b32.xlu0 %v1249, 64
      %v1252 = vpop.permute.xlu0 %1251
      %v1254 = vadd.f32 %v1248, %v1252
      %v1255 = vtanh.pop %v1254
      %v1256 = vmul.f32 %v1243, %v1255
      %v1257 = vpack.c.bf16 %v1256, %v1256
      %1258 = vst.msk [vmem:[%s237 + $0x4] sm:$0x8] %vm638, %v1257
      %v1260 = vunpack.c.l.b16 %v1257
      %v1261 = vpack.c.b16 %v1260, %v1260
      %v1262 = vrot.slane %v1261, 7
      %v1263 = vrot.slane %v1262, 4
      %1264 = vrot.lane.b32.xlu0 %v1263, 96
      %v1265 = vpop.permute.xlu0 %1264
      %1267 = vst.msk [vmem:[%s244 + $0x38] sm:$0x1] %vm629, %v1265
      %v1268 = vld [vmem:[#allocation2 + $0x20] sm:$0x3]
      %v1269 = vld [vmem:[#allocation2 + $0x28] sm:$0x3]
      %v1270 = vrot.slane %v1257, 3
      %v1272 = vsel %vm559, %v1270, 0
      %1274 = vmatprep.subr.bf16.mxu0 %v544
      %1275 = vmatpush1.bf16.msra.mxu0 %v543
      %1276 = vmatprep.subr.bf16.mxu0 %v546
      %1277 = vmatpush1.bf16.msra.mxu0 %v545
      %1278 = vmatprep.subr.bf16.mxu0 %v548
      %1279 = vmatpush1.bf16.msra.mxu0 %v547
      %1280 = vmatprep.subr.bf16.mxu0 %v550
      %1281 = vmatpush1.bf16.msra.mxu0 %v549
      %1282 = vmatprep.subr.bf16.mxu0 0
      %1283 = vmatpush1.bf16.msra.mxu0 0
      %1284 = vmatprep.subr.bf16.mxu0 0
      %1285 = vmatpush1.bf16.msra.mxu0 0
      %1286 = vmatprep.subr.bf16.mxu0 0
      %1287 = vmatpush1.bf16.msra.mxu0 0
      %1288 = vmatprep.subr.bf16.mxu0 0
      %1289 = vmatpush1.bf16.msra.mxu0 0
      %1290 = vmatprep.subr.bf16.mxu0 0
      %1291 = vmatpush1.bf16.msra.mxu0 0
      %1292 = vmatprep.subr.bf16.mxu0 0
      %1293 = vmatpush1.bf16.msra.mxu0 0
      %1294 = vmatprep.subr.bf16.mxu0 0
      %1295 = vmatpush1.bf16.msra.mxu0 0
      %1296 = vmatprep.subr.bf16.mxu0 0
      %1297 = vmatpush1.bf16.msra.mxu0 0
      %1298 = vmatprep.subr.bf16.mxu0 0
      %1299 = vmatpush1.bf16.msra.mxu0 0
      %1300 = vmatprep.subr.bf16.mxu0 0
      %1301 = vmatpush1.bf16.msra.mxu0 0
      %1302 = vmatprep.subr.bf16.mxu0 0
      %1303 = vmatpush1.bf16.msra.mxu0 0
      %1304 = vmatprep.subr.bf16.mxu0 0
      %1305 = vmatpush1.bf16.msra.mxu0 0
      %1306 = vmatprep.mubr.bf16.mxu0 0
      %1307 = vmatmul.mubr.bf16.gmra.mrb[0].mxu0 %v1272
      %v1308 = vpop.f32.mrb[0].mxu0
      %v1309 = vadd.f32 0.0, %v1308
      %v1310 = vpop.f32.mrb[0].mxu0
      %v1311 = vadd.f32 0.0, %v1310
      %v1312 = vpop.f32.mrb[0].mxu0
      %v1313 = vpop.f32.mrb[0].mxu0
      %1314 = vdwg.mxu0
      %v1315 = vadd.f32 %v1268, %v1309
      %v1316 = vadd.f32 %v1269, %v1311
      %v1317 = vxor.u32 %v1315, 2147483648
      %v1318 = vxor.u32 %v1316, 2147483648
      %v1319 = vmul.f32 %v1317, 1.442695
      %v1320 = vpow.pop %v1319
      %v1321 = vmul.f32 %v1318, 1.442695
      %v1322 = vpow.pop %v1321
      %v1323 = vadd.f32 %v1320, 1.0
      %v1324 = vadd.f32 %v1322, 1.0
      %v1325 = vrcp.pop %v1323
      %v1326 = vmul.f32 1.0, %v1325
      %v1327 = vrcp.pop %v1324
      %v1328 = vmul.f32 1.0, %v1327
      %v1329 = vtanh.pop %v1316
      %v1331 = vrot.slane %v1254, 6
      %v1333 = vmul.f32 %v1326, %v1331
      %v1334 = vmul.f32 %v1326, %v1329
      %1336 = vrot.lane.b32.xlu0 %v1334, 64
      %v1337 = vpop.permute.xlu0 %1336
      %v1339 = vadd.f32 %v1333, %v1337
      %v1340 = vtanh.pop %v1339
      %v1341 = vmul.f32 %v1328, %v1340
      %v1342 = vpack.c.bf16 %v1341, %v1341
      %1343 = vst.msk [vmem:[%s237 + $0x8] sm:$0x1] %vm629, %v1342
      %v1345 = vunpack.c.l.b16 %v1342
      %v1346 = vpack.c.b16 %v1345, %v1345
      %v1347 = vrot.slane %v1346, 5
      %1348 = vrot.lane.b32.xlu0 %v1347, 96
      %v1349 = vpop.permute.xlu0 %1348
      %1351 = vst.msk [vmem:[%s244 + $0x34] sm:$0x8] %vm638, %v1349
      %v1352 = vld [vmem:[#allocation2 + $0x20] sm:$0xc]
      %v1353 = vld [vmem:[#allocation2 + $0x28] sm:$0xc]
      %v1355 = vsel %vm559, %v1342, 0
      %1357 = vmatprep.subr.bf16.mxu0 %v544
      %1358 = vmatpush1.bf16.msra.mxu0 %v543
      %1359 = vmatprep.subr.bf16.mxu0 %v546
      %1360 = vmatpush1.bf16.msra.mxu0 %v545
      %1361 = vmatprep.subr.bf16.mxu0 %v548
      %1362 = vmatpush1.bf16.msra.mxu0 %v547
      %1363 = vmatprep.subr.bf16.mxu0 %v550
      %1364 = vmatpush1.bf16.msra.mxu0 %v549
      %1365 = vmatprep.subr.bf16.mxu0 0
      %1366 = vmatpush1.bf16.msra.mxu0 0
      %1367 = vmatprep.subr.bf16.mxu0 0
      %1368 = vmatpush1.bf16.msra.mxu0 0
      %1369 = vmatprep.subr.bf16.mxu0 0
      %1370 = vmatpush1.bf16.msra.mxu0 0
      %1371 = vmatprep.subr.bf16.mxu0 0
      %1372 = vmatpush1.bf16.msra.mxu0 0
      %1373 = vmatprep.subr.bf16.mxu0 0
      %1374 = vmatpush1.bf16.msra.mxu0 0
      %1375 = vmatprep.subr.bf16.mxu0 0
      %1376 = vmatpush1.bf16.msra.mxu0 0
      %1377 = vmatprep.subr.bf16.mxu0 0
      %1378 = vmatpush1.bf16.msra.mxu0 0
      %1379 = vmatprep.subr.bf16.mxu0 0
      %1380 = vmatpush1.bf16.msra.mxu0 0
      %1381 = vmatprep.subr.bf16.mxu0 0
      %1382 = vmatpush1.bf16.msra.mxu0 0
      %1383 = vmatprep.subr.bf16.mxu0 0
      %1384 = vmatpush1.bf16.msra.mxu0 0
      %1385 = vmatprep.subr.bf16.mxu0 0
      %1386 = vmatpush1.bf16.msra.mxu0 0
      %1387 = vmatprep.subr.bf16.mxu0 0
      %1388 = vmatpush1.bf16.msra.mxu0 0
      %1389 = vmatprep.mubr.bf16.mxu0 0
      %1390 = vmatmul.mubr.bf16.gmra.mrb[0].mxu0 %v1355
      %v1391 = vpop.f32.mrb[0].mxu0
      %v1392 = vadd.f32 0.0, %v1391
      %v1393 = vpop.f32.mrb[0].mxu0
      %v1394 = vadd.f32 0.0, %v1393
      %v1395 = vpop.f32.mrb[0].mxu0
      %v1396 = vpop.f32.mrb[0].mxu0
      %1397 = vdwg.mxu0
      %v1400 = vrot.slane %v1392, 6
      %v1401 = vrot.slane %v1394, 6
      %v1404 = vadd.f32 %v1352, %v1400
      %v1405 = vadd.f32 %v1353, %v1401
      %v1406 = vxor.u32 %v1404, 2147483648
      %v1407 = vxor.u32 %v1405, 2147483648
      %v1408 = vmul.f32 %v1406, 1.442695
      %v1409 = vpow.pop %v1408
      %v1410 = vmul.f32 %v1407, 1.442695
      %v1411 = vpow.pop %v1410
      %v1412 = vadd.f32 %v1409, 1.0
      %v1413 = vadd.f32 %v1411, 1.0
      %v1414 = vrcp.pop %v1412
      %v1415 = vmul.f32 1.0, %v1414
      %v1416 = vrcp.pop %v1413
      %v1417 = vmul.f32 1.0, %v1416
      %v1418 = vtanh.pop %v1405
      %v1420 = vrot.slane %v1339, 6
      %v1422 = vmul.f32 %v1415, %v1420
      %v1423 = vmul.f32 %v1415, %v1418
      %1425 = vrot.lane.b32.xlu0 %v1423, 64
      %v1426 = vpop.permute.xlu0 %1425
      %v1428 = vadd.f32 %v1422, %v1426
      %v1429 = vtanh.pop %v1428
      %v1430 = vmul.f32 %v1417, %v1429
      %v1431 = vpack.c.bf16 %v1430, %v1430
      %1432 = vst.msk [vmem:[%s237 + $0x8] sm:$0x2] %vm720, %v1431
      %v1434 = vunpack.c.l.b16 %v1431
      %v1435 = vpack.c.b16 %v1434, %v1434
      %v1436 = vrot.slane %v1435, 7
      %1437 = vrot.lane.b32.xlu0 %v1436, 96
      %v1438 = vpop.permute.xlu0 %1437
      %1440 = vst.msk [vmem:[%s244 + $0x34] sm:$0x4] %vm729, %v1438
      %v1441 = vld [vmem:[#allocation2 + $0x20] sm:$0x30]
      %v1442 = vld [vmem:[#allocation2 + $0x28] sm:$0x30]
      %v1443 = vrot.slane %v1431, 1
      %v1445 = vsel %vm559, %v1443, 0
      %1447 = vmatprep.subr.bf16.mxu0 %v544
      %1448 = vmatpush1.bf16.msra.mxu0 %v543
      %1449 = vmatprep.subr.bf16.mxu0 %v546
      %1450 = vmatpush1.bf16.msra.mxu0 %v545
      %1451 = vmatprep.subr.bf16.mxu0 %v548
      %1452 = vmatpush1.bf16.msra.mxu0 %v547
      %1453 = vmatprep.subr.bf16.mxu0 %v550
      %1454 = vmatpush1.bf16.msra.mxu0 %v549
      %1455 = vmatprep.subr.bf16.mxu0 0
      %1456 = vmatpush1.bf16.msra.mxu0 0
      %1457 = vmatprep.subr.bf16.mxu0 0
      %1458 = vmatpush1.bf16.msra.mxu0 0
      %1459 = vmatprep.subr.bf16.mxu0 0
      %1460 = vmatpush1.bf16.msra.mxu0 0
      %1461 = vmatprep.subr.bf16.mxu0 0
      %1462 = vmatpush1.bf16.msra.mxu0 0
      %1463 = vmatprep.subr.bf16.mxu0 0
      %1464 = vmatpush1.bf16.msra.mxu0 0
      %1465 = vmatprep.subr.bf16.mxu0 0
      %1466 = vmatpush1.bf16.msra.mxu0 0
      %1467 = vmatprep.subr.bf16.mxu0 0
      %1468 = vmatpush1.bf16.msra.mxu0 0
      %1469 = vmatprep.subr.bf16.mxu0 0
      %1470 = vmatpush1.bf16.msra.mxu0 0
      %1471 = vmatprep.subr.bf16.mxu0 0
      %1472 = vmatpush1.bf16.msra.mxu0 0
      %1473 = vmatprep.subr.bf16.mxu0 0
      %1474 = vmatpush1.bf16.msra.mxu0 0
      %1475 = vmatprep.subr.bf16.mxu0 0
      %1476 = vmatpush1.bf16.msra.mxu0 0
      %1477 = vmatprep.subr.bf16.mxu0 0
      %1478 = vmatpush1.bf16.msra.mxu0 0
      %1479 = vmatprep.mubr.bf16.mxu0 0
      %1480 = vmatmul.mubr.bf16.gmra.mrb[0].mxu0 %v1445
      %v1481 = vpop.f32.mrb[0].mxu0
      %v1482 = vadd.f32 0.0, %v1481
      %v1483 = vpop.f32.mrb[0].mxu0
      %v1484 = vadd.f32 0.0, %v1483
      %v1485 = vpop.f32.mrb[0].mxu0
      %v1486 = vpop.f32.mrb[0].mxu0
      %1487 = vdwg.mxu0
      %v1490 = vrot.slane %v1482, 4
      %v1491 = vrot.slane %v1484, 4
      %v1494 = vadd.f32 %v1441, %v1490
      %v1495 = vadd.f32 %v1442, %v1491
      %v1496 = vxor.u32 %v1494, 2147483648
      %v1497 = vxor.u32 %v1495, 2147483648
      %v1498 = vmul.f32 %v1496, 1.442695
      %v1499 = vpow.pop %v1498
      %v1500 = vmul.f32 %v1497, 1.442695
      %v1501 = vpow.pop %v1500
      %v1502 = vadd.f32 %v1499, 1.0
      %v1503 = vadd.f32 %v1501, 1.0
      %v1504 = vrcp.pop %v1502
      %v1505 = vmul.f32 1.0, %v1504
      %v1506 = vrcp.pop %v1503
      %v1507 = vmul.f32 1.0, %v1506
      %v1508 = vtanh.pop %v1495
      %v1510 = vrot.slane %v1428, 6
      %v1512 = vmul.f32 %v1505, %v1510
      %v1513 = vmul.f32 %v1505, %v1508
      %1515 = vrot.lane.b32.xlu0 %v1513, 64
      %v1516 = vpop.permute.xlu0 %1515
      %v1518 = vadd.f32 %v1512, %v1516
      %v1519 = vtanh.pop %v1518
      %v1520 = vmul.f32 %v1507, %v1519
      %v1521 = vpack.c.bf16 %v1520, %v1520
      %1522 = vst.msk [vmem:[%s237 + $0x8] sm:$0x4] %vm729, %v1521
      %v1524 = vunpack.c.l.b16 %v1521
      %v1525 = vpack.c.b16 %v1524, %v1524
      %v1526 = vrot.slane %v1525, 5
      %v1527 = vrot.slane %v1526, 4
      %1528 = vrot.lane.b32.xlu0 %v1527, 96
      %v1529 = vpop.permute.xlu0 %1528
      %1531 = vst.msk [vmem:[%s244 + $0x34] sm:$0x2] %vm720, %v1529
      %v1532 = vld [vmem:[#allocation2 + $0x20] sm:$0xc0]
      %v1533 = vld [vmem:[#allocation2 + $0x28] sm:$0xc0]
      %v1534 = vrot.slane %v1521, 2
      %v1536 = vsel %vm559, %v1534, 0
      %1538 = vmatprep.subr.bf16.mxu0 %v544
      %1539 = vmatpush1.bf16.msra.mxu0 %v543
      %1540 = vmatprep.subr.bf16.mxu0 %v546
      %1541 = vmatpush1.bf16.msra.mxu0 %v545
      %1542 = vmatprep.subr.bf16.mxu0 %v548
      %1543 = vmatpush1.bf16.msra.mxu0 %v547
      %1544 = vmatprep.subr.bf16.mxu0 %v550
      %1545 = vmatpush1.bf16.msra.mxu0 %v549
      %1546 = vmatprep.subr.bf16.mxu0 0
      %1547 = vmatpush1.bf16.msra.mxu0 0
      %1548 = vmatprep.subr.bf16.mxu0 0
      %1549 = vmatpush1.bf16.msra.mxu0 0
      %1550 = vmatprep.subr.bf16.mxu0 0
      %1551 = vmatpush1.bf16.msra.mxu0 0
      %1552 = vmatprep.subr.bf16.mxu0 0
      %1553 = vmatpush1.bf16.msra.mxu0 0
      %1554 = vmatprep.subr.bf16.mxu0 0
      %1555 = vmatpush1.bf16.msra.mxu0 0
      %1556 = vmatprep.subr.bf16.mxu0 0
      %1557 = vmatpush1.bf16.msra.mxu0 0
      %1558 = vmatprep.subr.bf16.mxu0 0
      %1559 = vmatpush1.bf16.msra.mxu0 0
      %1560 = vmatprep.subr.bf16.mxu0 0
      %1561 = vmatpush1.bf16.msra.mxu0 0
      %1562 = vmatprep.subr.bf16.mxu0 0
      %1563 = vmatpush1.bf16.msra.mxu0 0
      %1564 = vmatprep.subr.bf16.mxu0 0
      %1565 = vmatpush1.bf16.msra.mxu0 0
      %1566 = vmatprep.subr.bf16.mxu0 0
      %1567 = vmatpush1.bf16.msra.mxu0 0
      %1568 = vmatprep.subr.bf16.mxu0 0
      %1569 = vmatpush1.bf16.msra.mxu0 0
      %1570 = vmatprep.mubr.bf16.mxu0 0
      %1571 = vmatmul.mubr.bf16.gmra.mrb[0].mxu0 %v1536
      %v1572 = vpop.f32.mrb[0].mxu0
      %v1573 = vadd.f32 0.0, %v1572
      %v1574 = vpop.f32.mrb[0].mxu0
      %v1575 = vadd.f32 0.0, %v1574
      %v1576 = vpop.f32.mrb[0].mxu0
      %v1577 = vpop.f32.mrb[0].mxu0
      %1578 = vdwg.mxu0
      %v1581 = vrot.slane %v1573, 2
      %v1582 = vrot.slane %v1575, 2
      %v1585 = vadd.f32 %v1532, %v1581
      %v1586 = vadd.f32 %v1533, %v1582
      %v1587 = vxor.u32 %v1585, 2147483648
      %v1588 = vxor.u32 %v1586, 2147483648
      %v1589 = vmul.f32 %v1587, 1.442695
      %v1590 = vpow.pop %v1589
      %v1591 = vmul.f32 %v1588, 1.442695
      %v1592 = vpow.pop %v1591
      %v1593 = vadd.f32 %v1590, 1.0
      %v1594 = vadd.f32 %v1592, 1.0
      %v1595 = vrcp.pop %v1593
      %v1596 = vmul.f32 1.0, %v1595
      %v1597 = vrcp.pop %v1594
      %v1598 = vmul.f32 1.0, %v1597
      %v1599 = vtanh.pop %v1586
      %v1601 = vrot.slane %v1518, 6
      %v1603 = vmul.f32 %v1596, %v1601
      %v1604 = vmul.f32 %v1596, %v1599
      %1606 = vrot.lane.b32.xlu0 %v1604, 64
      %v1607 = vpop.permute.xlu0 %1606
      %v1609 = vadd.f32 %v1603, %v1607
      %v1610 = vtanh.pop %v1609
      %v1611 = vmul.f32 %v1598, %v1610
      %v1612 = vpack.c.bf16 %v1611, %v1611
      %1613 = vst.msk [vmem:[%s237 + $0x8] sm:$0x8] %vm638, %v1612
      %v1615 = vunpack.c.l.b16 %v1612
      %v1616 = vpack.c.b16 %v1615, %v1615
      %v1617 = vrot.slane %v1616, 7
      %v1618 = vrot.slane %v1617, 4
      %1619 = vrot.lane.b32.xlu0 %v1618, 96
      %v1620 = vpop.permute.xlu0 %1619
      %1622 = vst.msk [vmem:[%s244 + $0x34] sm:$0x1] %vm629, %v1620
      %v1623 = vld [vmem:[#allocation2 + $0x30] sm:$0x3]
      %v1624 = vld [vmem:[#allocation2 + $0x38] sm:$0x3]
      %v1625 = vrot.slane %v1612, 3
      %v1627 = vsel %vm559, %v1625, 0
      %1629 = vmatprep.subr.bf16.mxu0 %v544
      %1630 = vmatpush1.bf16.msra.mxu0 %v543
      %1631 = vmatprep.subr.bf16.mxu0 %v546
      %1632 = vmatpush1.bf16.msra.mxu0 %v545
      %1633 = vmatprep.subr.bf16.mxu0 %v548
      %1634 = vmatpush1.bf16.msra.mxu0 %v547
      %1635 = vmatprep.subr.bf16.mxu0 %v550
      %1636 = vmatpush1.bf16.msra.mxu0 %v549
      %1637 = vmatprep.subr.bf16.mxu0 0
      %1638 = vmatpush1.bf16.msra.mxu0 0
      %1639 = vmatprep.subr.bf16.mxu0 0
      %1640 = vmatpush1.bf16.msra.mxu0 0
      %1641 = vmatprep.subr.bf16.mxu0 0
      %1642 = vmatpush1.bf16.msra.mxu0 0
      %1643 = vmatprep.subr.bf16.mxu0 0
      %1644 = vmatpush1.bf16.msra.mxu0 0
      %1645 = vmatprep.subr.bf16.mxu0 0
      %1646 = vmatpush1.bf16.msra.mxu0 0
      %1647 = vmatprep.subr.bf16.mxu0 0
      %1648 = vmatpush1.bf16.msra.mxu0 0
      %1649 = vmatprep.subr.bf16.mxu0 0
      %1650 = vmatpush1.bf16.msra.mxu0 0
      %1651 = vmatprep.subr.bf16.mxu0 0
      %1652 = vmatpush1.bf16.msra.mxu0 0
      %1653 = vmatprep.subr.bf16.mxu0 0
      %1654 = vmatpush1.bf16.msra.mxu0 0
      %1655 = vmatprep.subr.bf16.mxu0 0
      %1656 = vmatpush1.bf16.msra.mxu0 0
      %1657 = vmatprep.subr.bf16.mxu0 0
      %1658 = vmatpush1.bf16.msra.mxu0 0
      %1659 = vmatprep.subr.bf16.mxu0 0
      %1660 = vmatpush1.bf16.msra.mxu0 0
      %1661 = vmatprep.mubr.bf16.mxu0 0
      %1662 = vmatmul.mubr.bf16.gmra.mrb[0].mxu0 %v1627
      %v1663 = vpop.f32.mrb[0].mxu0
      %v1664 = vadd.f32 0.0, %v1663
      %v1665 = vpop.f32.mrb[0].mxu0
      %v1666 = vadd.f32 0.0, %v1665
      %v1667 = vpop.f32.mrb[0].mxu0
      %v1668 = vpop.f32.mrb[0].mxu0
      %1669 = vdwg.mxu0
      %v1670 = vadd.f32 %v1623, %v1664
      %v1671 = vadd.f32 %v1624, %v1666
      %v1672 = vxor.u32 %v1670, 2147483648
      %v1673 = vxor.u32 %v1671, 2147483648
      %v1674 = vmul.f32 %v1672, 1.442695
      %v1675 = vpow.pop %v1674
      %v1676 = vmul.f32 %v1673, 1.442695
      %v1677 = vpow.pop %v1676
      %v1678 = vadd.f32 %v1675, 1.0
      %v1679 = vadd.f32 %v1677, 1.0
      %v1680 = vrcp.pop %v1678
      %v1681 = vmul.f32 1.0, %v1680
      %v1682 = vrcp.pop %v1679
      %v1683 = vmul.f32 1.0, %v1682
      %v1684 = vtanh.pop %v1671
      %v1686 = vrot.slane %v1609, 6
      %v1688 = vmul.f32 %v1681, %v1686
      %v1689 = vmul.f32 %v1681, %v1684
      %1691 = vrot.lane.b32.xlu0 %v1689, 64
      %v1692 = vpop.permute.xlu0 %1691
      %v1694 = vadd.f32 %v1688, %v1692
      %v1695 = vtanh.pop %v1694
      %v1696 = vmul.f32 %v1683, %v1695
      %v1697 = vpack.c.bf16 %v1696, %v1696
      %1698 = vst.msk [vmem:[%s237 + $0xc] sm:$0x1] %vm629, %v1697
      %v1700 = vunpack.c.l.b16 %v1697
      %v1701 = vpack.c.b16 %v1700, %v1700
      %v1702 = vrot.slane %v1701, 5
      %1703 = vrot.lane.b32.xlu0 %v1702, 96
      %v1704 = vpop.permute.xlu0 %1703
      %1706 = vst.msk [vmem:[%s244 + $0x30] sm:$0x8] %vm638, %v1704
      %v1707 = vld [vmem:[#allocation2 + $0x30] sm:$0xc]
      %v1708 = vld [vmem:[#allocation2 + $0x38] sm:$0xc]
      %v1710 = vsel %vm559, %v1697, 0
      %1712 = vmatprep.subr.bf16.mxu0 %v544
      %1713 = vmatpush1.bf16.msra.mxu0 %v543
      %1714 = vmatprep.subr.bf16.mxu0 %v546
      %1715 = vmatpush1.bf16.msra.mxu0 %v545
      %1716 = vmatprep.subr.bf16.mxu0 %v548
      %1717 = vmatpush1.bf16.msra.mxu0 %v547
      %1718 = vmatprep.subr.bf16.mxu0 %v550
      %1719 = vmatpush1.bf16.msra.mxu0 %v549
      %1720 = vmatprep.subr.bf16.mxu0 0
      %1721 = vmatpush1.bf16.msra.mxu0 0
      %1722 = vmatprep.subr.bf16.mxu0 0
      %1723 = vmatpush1.bf16.msra.mxu0 0
      %1724 = vmatprep.subr.bf16.mxu0 0
      %1725 = vmatpush1.bf16.msra.mxu0 0
      %1726 = vmatprep.subr.bf16.mxu0 0
      %1727 = vmatpush1.bf16.msra.mxu0 0
      %1728 = vmatprep.subr.bf16.mxu0 0
      %1729 = vmatpush1.bf16.msra.mxu0 0
      %1730 = vmatprep.subr.bf16.mxu0 0
      %1731 = vmatpush1.bf16.msra.mxu0 0
      %1732 = vmatprep.subr.bf16.mxu0 0
      %1733 = vmatpush1.bf16.msra.mxu0 0
      %1734 = vmatprep.subr.bf16.mxu0 0
      %1735 = vmatpush1.bf16.msra.mxu0 0
      %1736 = vmatprep.subr.bf16.mxu0 0
      %1737 = vmatpush1.bf16.msra.mxu0 0
      %1738 = vmatprep.subr.bf16.mxu0 0
      %1739 = vmatpush1.bf16.msra.mxu0 0
      %1740 = vmatprep.subr.bf16.mxu0 0
      %1741 = vmatpush1.bf16.msra.mxu0 0
      %1742 = vmatprep.subr.bf16.mxu0 0
      %1743 = vmatpush1.bf16.msra.mxu0 0
      %1744 = vmatprep.mubr.bf16.mxu0 0
      %1745 = vmatmul.mubr.bf16.gmra.mrb[0].mxu0 %v1710
      %v1746 = vpop.f32.mrb[0].mxu0
      %v1747 = vadd.f32 0.0, %v1746
      %v1748 = vpop.f32.mrb[0].mxu0
      %v1749 = vadd.f32 0.0, %v1748
      %v1750 = vpop.f32.mrb[0].mxu0
      %v1751 = vpop.f32.mrb[0].mxu0
      %1752 = vdwg.mxu0
      %v1755 = vrot.slane %v1747, 6
      %v1756 = vrot.slane %v1749, 6
      %v1759 = vadd.f32 %v1707, %v1755
      %v1760 = vadd.f32 %v1708, %v1756
      %v1761 = vxor.u32 %v1759, 2147483648
      %v1762 = vxor.u32 %v1760, 2147483648
      %v1763 = vmul.f32 %v1761, 1.442695
      %v1764 = vpow.pop %v1763
      %v1765 = vmul.f32 %v1762, 1.442695
      %v1766 = vpow.pop %v1765
      %v1767 = vadd.f32 %v1764, 1.0
      %v1768 = vadd.f32 %v1766, 1.0
      %v1769 = vrcp.pop %v1767
      %v1770 = vmul.f32 1.0, %v1769
      %v1771 = vrcp.pop %v1768
      %v1772 = vmul.f32 1.0, %v1771
      %v1773 = vtanh.pop %v1760
      %v1775 = vrot.slane %v1694, 6
      %v1777 = vmul.f32 %v1770, %v1775
      %v1778 = vmul.f32 %v1770, %v1773
      %1780 = vrot.lane.b32.xlu0 %v1778, 64
      %v1781 = vpop.permute.xlu0 %1780
      %v1783 = vadd.f32 %v1777, %v1781
      %v1784 = vtanh.pop %v1783
      %v1785 = vmul.f32 %v1772, %v1784
      %v1786 = vpack.c.bf16 %v1785, %v1785
      %1787 = vst.msk [vmem:[%s237 + $0xc] sm:$0x2] %vm720, %v1786
      %v1789 = vunpack.c.l.b16 %v1786
      %v1790 = vpack.c.b16 %v1789, %v1789
      %v1791 = vrot.slane %v1790, 7
      %1792 = vrot.lane.b32.xlu0 %v1791, 96
      %v1793 = vpop.permute.xlu0 %1792
      %1795 = vst.msk [vmem:[%s244 + $0x30] sm:$0x4] %vm729, %v1793
      %v1796 = vld [vmem:[#allocation2 + $0x30] sm:$0x30]
      %v1797 = vld [vmem:[#allocation2 + $0x38] sm:$0x30]
      %v1798 = vrot.slane %v1786, 1
      %v1800 = vsel %vm559, %v1798, 0
      %1802 = vmatprep.subr.bf16.mxu0 %v544
      %1803 = vmatpush1.bf16.msra.mxu0 %v543
      %1804 = vmatprep.subr.bf16.mxu0 %v546
      %1805 = vmatpush1.bf16.msra.mxu0 %v545
      %1806 = vmatprep.subr.bf16.mxu0 %v548
      %1807 = vmatpush1.bf16.msra.mxu0 %v547
      %1808 = vmatprep.subr.bf16.mxu0 %v550
      %1809 = vmatpush1.bf16.msra.mxu0 %v549
      %1810 = vmatprep.subr.bf16.mxu0 0
      %1811 = vmatpush1.bf16.msra.mxu0 0
      %1812 = vmatprep.subr.bf16.mxu0 0
      %1813 = vmatpush1.bf16.msra.mxu0 0
      %1814 = vmatprep.subr.bf16.mxu0 0
      %1815 = vmatpush1.bf16.msra.mxu0 0
      %1816 = vmatprep.subr.bf16.mxu0 0
      %1817 = vmatpush1.bf16.msra.mxu0 0
      %1818 = vmatprep.subr.bf16.mxu0 0
      %1819 = vmatpush1.bf16.msra.mxu0 0
      %1820 = vmatprep.subr.bf16.mxu0 0
      %1821 = vmatpush1.bf16.msra.mxu0 0
      %1822 = vmatprep.subr.bf16.mxu0 0
      %1823 = vmatpush1.bf16.msra.mxu0 0
      %1824 = vmatprep.subr.bf16.mxu0 0
      %1825 = vmatpush1.bf16.msra.mxu0 0
      %1826 = vmatprep.subr.bf16.mxu0 0
      %1827 = vmatpush1.bf16.msra.mxu0 0
      %1828 = vmatprep.subr.bf16.mxu0 0
      %1829 = vmatpush1.bf16.msra.mxu0 0
      %1830 = vmatprep.subr.bf16.mxu0 0
      %1831 = vmatpush1.bf16.msra.mxu0 0
      %1832 = vmatprep.subr.bf16.mxu0 0
      %1833 = vmatpush1.bf16.msra.mxu0 0
      %1834 = vmatprep.mubr.bf16.mxu0 0
      %1835 = vmatmul.mubr.bf16.gmra.mrb[0].mxu0 %v1800
      %v1836 = vpop.f32.mrb[0].mxu0
      %v1837 = vadd.f32 0.0, %v1836
      %v1838 = vpop.f32.mrb[0].mxu0
      %v1839 = vadd.f32 0.0, %v1838
      %v1840 = vpop.f32.mrb[0].mxu0
      %v1841 = vpop.f32.mrb[0].mxu0
      %1842 = vdwg.mxu0
      %v1845 = vrot.slane %v1837, 4
      %v1846 = vrot.slane %v1839, 4
      %v1849 = vadd.f32 %v1796, %v1845
      %v1850 = vadd.f32 %v1797, %v1846
      %v1851 = vxor.u32 %v1849, 2147483648
      %v1852 = vxor.u32 %v1850, 2147483648
      %v1853 = vmul.f32 %v1851, 1.442695
      %v1854 = vpow.pop %v1853
      %v1855 = vmul.f32 %v1852, 1.442695
      %v1856 = vpow.pop %v1855
      %v1857 = vadd.f32 %v1854, 1.0
      %v1858 = vadd.f32 %v1856, 1.0
      %v1859 = vrcp.pop %v1857
      %v1860 = vmul.f32 1.0, %v1859
      %v1861 = vrcp.pop %v1858
      %v1862 = vmul.f32 1.0, %v1861
      %v1863 = vtanh.pop %v1850
      %v1865 = vrot.slane %v1783, 6
      %v1867 = vmul.f32 %v1860, %v1865
      %v1868 = vmul.f32 %v1860, %v1863
      %1870 = vrot.lane.b32.xlu0 %v1868, 64
      %v1871 = vpop.permute.xlu0 %1870
      %v1873 = vadd.f32 %v1867, %v1871
      %v1874 = vtanh.pop %v1873
      %v1875 = vmul.f32 %v1862, %v1874
      %v1876 = vpack.c.bf16 %v1875, %v1875
      %1877 = vst.msk [vmem:[%s237 + $0xc] sm:$0x4] %vm729, %v1876
      %v1879 = vunpack.c.l.b16 %v1876
      %v1880 = vpack.c.b16 %v1879, %v1879
      %v1881 = vrot.slane %v1880, 5
      %v1882 = vrot.slane %v1881, 4
      %1883 = vrot.lane.b32.xlu0 %v1882, 96
      %v1884 = vpop.permute.xlu0 %1883
      %1886 = vst.msk [vmem:[%s244 + $0x30] sm:$0x2] %vm720, %v1884
      %v1887 = vld [vmem:[#allocation2 + $0x30] sm:$0xc0]
      %v1888 = vld [vmem:[#allocation2 + $0x38] sm:$0xc0]
      %v1889 = vrot.slane %v1876, 2
      %v1891 = vsel %vm559, %v1889, 0
      %1893 = vmatprep.subr.bf16.mxu0 %v544
      %1894 = vmatpush1.bf16.msra.mxu0 %v543
      %1895 = vmatprep.subr.bf16.mxu0 %v546
      %1896 = vmatpush1.bf16.msra.mxu0 %v545
      %1897 = vmatprep.subr.bf16.mxu0 %v548
      %1898 = vmatpush1.bf16.msra.mxu0 %v547
      %1899 = vmatprep.subr.bf16.mxu0 %v550
      %1900 = vmatpush1.bf16.msra.mxu0 %v549
      %1901 = vmatprep.subr.bf16.mxu0 0
      %1902 = vmatpush1.bf16.msra.mxu0 0
      %1903 = vmatprep.subr.bf16.mxu0 0
      %1904 = vmatpush1.bf16.msra.mxu0 0
      %1905 = vmatprep.subr.bf16.mxu0 0
      %1906 = vmatpush1.bf16.msra.mxu0 0
      %1907 = vmatprep.subr.bf16.mxu0 0
      %1908 = vmatpush1.bf16.msra.mxu0 0
      %1909 = vmatprep.subr.bf16.mxu0 0
      %1910 = vmatpush1.bf16.msra.mxu0 0
      %1911 = vmatprep.subr.bf16.mxu0 0
      %1912 = vmatpush1.bf16.msra.mxu0 0
      %1913 = vmatprep.subr.bf16.mxu0 0
      %1914 = vmatpush1.bf16.msra.mxu0 0
      %1915 = vmatprep.subr.bf16.mxu0 0
      %1916 = vmatpush1.bf16.msra.mxu0 0
      %1917 = vmatprep.subr.bf16.mxu0 0
      %1918 = vmatpush1.bf16.msra.mxu0 0
      %1919 = vmatprep.subr.bf16.mxu0 0
      %1920 = vmatpush1.bf16.msra.mxu0 0
      %1921 = vmatprep.subr.bf16.mxu0 0
      %1922 = vmatpush1.bf16.msra.mxu0 0
      %1923 = vmatprep.subr.bf16.mxu0 0
      %1924 = vmatpush1.bf16.msra.mxu0 0
      %1925 = vmatprep.mubr.bf16.mxu0 0
      %1926 = vmatmul.mubr.bf16.gmra.mrb[0].mxu0 %v1891
      %v1927 = vpop.f32.mrb[0].mxu0
      %v1928 = vadd.f32 0.0, %v1927
      %v1929 = vpop.f32.mrb[0].mxu0
      %v1930 = vadd.f32 0.0, %v1929
      %v1931 = vpop.f32.mrb[0].mxu0
      %v1932 = vpop.f32.mrb[0].mxu0
      %1933 = vdwg.mxu0
      %v1936 = vrot.slane %v1928, 2
      %v1937 = vrot.slane %v1930, 2
      %v1940 = vadd.f32 %v1887, %v1936
      %v1941 = vadd.f32 %v1888, %v1937
      %v1942 = vxor.u32 %v1940, 2147483648
      %v1943 = vxor.u32 %v1941, 2147483648
      %v1944 = vmul.f32 %v1942, 1.442695
      %v1945 = vpow.pop %v1944
      %v1946 = vmul.f32 %v1943, 1.442695
      %v1947 = vpow.pop %v1946
      %v1948 = vadd.f32 %v1945, 1.0
      %v1949 = vadd.f32 %v1947, 1.0
      %v1950 = vrcp.pop %v1948
      %v1951 = vmul.f32 1.0, %v1950
      %v1952 = vrcp.pop %v1949
      %v1953 = vmul.f32 1.0, %v1952
      %v1954 = vtanh.pop %v1941
      %v1956 = vrot.slane %v1873, 6
      %v1958 = vmul.f32 %v1951, %v1956
      %v1959 = vmul.f32 %v1951, %v1954
      %1961 = vrot.lane.b32.xlu0 %v1959, 64
      %v1962 = vpop.permute.xlu0 %1961
      %v1964 = vadd.f32 %v1958, %v1962
      %v1965 = vtanh.pop %v1964
      %v1966 = vmul.f32 %v1953, %v1965
      %v1967 = vpack.c.bf16 %v1966, %v1966
      %1968 = vst.msk [vmem:[%s237 + $0xc] sm:$0x8] %vm638, %v1967
      %v1970 = vunpack.c.l.b16 %v1967
      %v1971 = vpack.c.b16 %v1970, %v1970
      %v1972 = vrot.slane %v1971, 7
      %v1973 = vrot.slane %v1972, 4
      %1974 = vrot.lane.b32.xlu0 %v1973, 96
      %v1975 = vpop.permute.xlu0 %1974
      %1977 = vst.msk [vmem:[%s244 + $0x30] sm:$0x1] %vm629, %v1975
      %v1978 = vld [vmem:[#allocation2 + $0x40] sm:$0x3]
      %v1979 = vld [vmem:[#allocation2 + $0x48] sm:$0x3]
      %v1980 = vrot.slane %v1967, 3
      %v1982 = vsel %vm559, %v1980, 0
      %1984 = vmatprep.subr.bf16.mxu0 %v544
      %1985 = vmatpush1.bf16.msra.mxu0 %v543
      %1986 = vmatprep.subr.bf16.mxu0 %v546
      %1987 = vmatpush1.bf16.msra.mxu0 %v545
      %1988 = vmatprep.subr.bf16.mxu0 %v548
      %1989 = vmatpush1.bf16.msra.mxu0 %v547
      %1990 = vmatprep.subr.bf16.mxu0 %v550
      %1991 = vmatpush1.bf16.msra.mxu0 %v549
      %1992 = vmatprep.subr.bf16.mxu0 0
      %1993 = vmatpush1.bf16.msra.mxu0 0
      %1994 = vmatprep.subr.bf16.mxu0 0
      %1995 = vmatpush1.bf16.msra.mxu0 0
      %1996 = vmatprep.subr.bf16.mxu0 0
      %1997 = vmatpush1.bf16.msra.mxu0 0
      %1998 = vmatprep.subr.bf16.mxu0 0
      %1999 = vmatpush1.bf16.msra.mxu0 0
      %2000 = vmatprep.subr.bf16.mxu0 0
      %2001 = vmatpush1.bf16.msra.mxu0 0
      %2002 = vmatprep.subr.bf16.mxu0 0
      %2003 = vmatpush1.bf16.msra.mxu0 0
      %2004 = vmatprep.subr.bf16.mxu0 0
      %2005 = vmatpush1.bf16.msra.mxu0 0
      %2006 = vmatprep.subr.bf16.mxu0 0
      %2007 = vmatpush1.bf16.msra.mxu0 0
      %2008 = vmatprep.subr.bf16.mxu0 0
      %2009 = vmatpush1.bf16.msra.mxu0 0
      %2010 = vmatprep.subr.bf16.mxu0 0
      %2011 = vmatpush1.bf16.msra.mxu0 0
      %2012 = vmatprep.subr.bf16.mxu0 0
      %2013 = vmatpush1.bf16.msra.mxu0 0
      %2014 = vmatprep.subr.bf16.mxu0 0
      %2015 = vmatpush1.bf16.msra.mxu0 0
      %2016 = vmatprep.mubr.bf16.mxu0 0
      %2017 = vmatmul.mubr.bf16.gmra.mrb[0].mxu0 %v1982
      %v2018 = vpop.f32.mrb[0].mxu0
      %v2019 = vadd.f32 0.0, %v2018
      %v2020 = vpop.f32.mrb[0].mxu0
      %v2021 = vadd.f32 0.0, %v2020
      %v2022 = vpop.f32.mrb[0].mxu0
      %v2023 = vpop.f32.mrb[0].mxu0
      %2024 = vdwg.mxu0
      %v2025 = vadd.f32 %v1978, %v2019
      %v2026 = vadd.f32 %v1979, %v2021
      %v2027 = vxor.u32 %v2025, 2147483648
      %v2028 = vxor.u32 %v2026, 2147483648
      %v2029 = vmul.f32 %v2027, 1.442695
      %v2030 = vpow.pop %v2029
      %v2031 = vmul.f32 %v2028, 1.442695
      %v2032 = vpow.pop %v2031
      %v2033 = vadd.f32 %v2030, 1.0
      %v2034 = vadd.f32 %v2032, 1.0
      %v2035 = vrcp.pop %v2033
      %v2036 = vmul.f32 1.0, %v2035
      %v2037 = vrcp.pop %v2034
      %v2038 = vmul.f32 1.0, %v2037
      %v2039 = vtanh.pop %v2026
      %v2041 = vrot.slane %v1964, 6
      %v2043 = vmul.f32 %v2036, %v2041
      %v2044 = vmul.f32 %v2036, %v2039
      %2046 = vrot.lane.b32.xlu0 %v2044, 64
      %v2047 = vpop.permute.xlu0 %2046
      %v2049 = vadd.f32 %v2043, %v2047
      %v2050 = vtanh.pop %v2049
      %v2051 = vmul.f32 %v2038, %v2050
      %v2052 = vpack.c.bf16 %v2051, %v2051
      %2053 = vst.msk [vmem:[%s237 + $0x10] sm:$0x1] %vm629, %v2052
      %v2055 = vunpack.c.l.b16 %v2052
      %v2056 = vpack.c.b16 %v2055, %v2055
      %v2057 = vrot.slane %v2056, 5
      %2058 = vrot.lane.b32.xlu0 %v2057, 96
      %v2059 = vpop.permute.xlu0 %2058
      %2061 = vst.msk [vmem:[%s244 + $0x2c] sm:$0x8] %vm638, %v2059
      %v2062 = vld [vmem:[#allocation2 + $0x40] sm:$0xc]
      %v2063 = vld [vmem:[#allocation2 + $0x48] sm:$0xc]
      %v2065 = vsel %vm559, %v2052, 0
      %2067 = vmatprep.subr.bf16.mxu0 %v544
      %2068 = vmatpush1.bf16.msra.mxu0 %v543
      %2069 = vmatprep.subr.bf16.mxu0 %v546
      %2070 = vmatpush1.bf16.msra.mxu0 %v545
      %2071 = vmatprep.subr.bf16.mxu0 %v548
      %2072 = vmatpush1.bf16.msra.mxu0 %v547
      %2073 = vmatprep.subr.bf16.mxu0 %v550
      %2074 = vmatpush1.bf16.msra.mxu0 %v549
      %2075 = vmatprep.subr.bf16.mxu0 0
      %2076 = vmatpush1.bf16.msra.mxu0 0
      %2077 = vmatprep.subr.bf16.mxu0 0
      %2078 = vmatpush1.bf16.msra.mxu0 0
      %2079 = vmatprep.subr.bf16.mxu0 0
      %2080 = vmatpush1.bf16.msra.mxu0 0
      %2081 = vmatprep.subr.bf16.mxu0 0
      %2082 = vmatpush1.bf16.msra.mxu0 0
      %2083 = vmatprep.subr.bf16.mxu0 0
      %2084 = vmatpush1.bf16.msra.mxu0 0
      %2085 = vmatprep.subr.bf16.mxu0 0
      %2086 = vmatpush1.bf16.msra.mxu0 0
      %2087 = vmatprep.subr.bf16.mxu0 0
      %2088 = vmatpush1.bf16.msra.mxu0 0
      %2089 = vmatprep.subr.bf16.mxu0 0
      %2090 = vmatpush1.bf16.msra.mxu0 0
      %2091 = vmatprep.subr.bf16.mxu0 0
      %2092 = vmatpush1.bf16.msra.mxu0 0
      %2093 = vmatprep.subr.bf16.mxu0 0
      %2094 = vmatpush1.bf16.msra.mxu0 0
      %2095 = vmatprep.subr.bf16.mxu0 0
      %2096 = vmatpush1.bf16.msra.mxu0 0
      %2097 = vmatprep.subr.bf16.mxu0 0
      %2098 = vmatpush1.bf16.msra.mxu0 0
      %2099 = vmatprep.mubr.bf16.mxu0 0
      %2100 = vmatmul.mubr.bf16.gmra.mrb[0].mxu0 %v2065
      %v2101 = vpop.f32.mrb[0].mxu0
      %v2102 = vadd.f32 0.0, %v2101
      %v2103 = vpop.f32.mrb[0].mxu0
      %v2104 = vadd.f32 0.0, %v2103
      %v2105 = vpop.f32.mrb[0].mxu0
      %v2106 = vpop.f32.mrb[0].mxu0
      %2107 = vdwg.mxu0
      %v2110 = vrot.slane %v2102, 6
      %v2111 = vrot.slane %v2104, 6
      %v2114 = vadd.f32 %v2062, %v2110
      %v2115 = vadd.f32 %v2063, %v2111
      %v2116 = vxor.u32 %v2114, 2147483648
      %v2117 = vxor.u32 %v2115, 2147483648
      %v2118 = vmul.f32 %v2116, 1.442695
      %v2119 = vpow.pop %v2118
      %v2120 = vmul.f32 %v2117, 1.442695
      %v2121 = vpow.pop %v2120
      %v2122 = vadd.f32 %v2119, 1.0
      %v2123 = vadd.f32 %v2121, 1.0
      %v2124 = vrcp.pop %v2122
      %v2125 = vmul.f32 1.0, %v2124
      %v2126 = vrcp.pop %v2123
      %v2127 = vmul.f32 1.0, %v2126
      %v2128 = vtanh.pop %v2115
      %v2130 = vrot.slane %v2049, 6
      %v2132 = vmul.f32 %v2125, %v2130
      %v2133 = vmul.f32 %v2125, %v2128
      %2135 = vrot.lane.b32.xlu0 %v2133, 64
      %v2136 = vpop.permute.xlu0 %2135
      %v2138 = vadd.f32 %v2132, %v2136
      %v2139 = vtanh.pop %v2138
      %v2140 = vmul.f32 %v2127, %v2139
      %v2141 = vpack.c.bf16 %v2140, %v2140
      %2142 = vst.msk [vmem:[%s237 + $0x10] sm:$0x2] %vm720, %v2141
      %v2144 = vunpack.c.l.b16 %v2141
      %v2145 = vpack.c.b16 %v2144, %v2144
      %v2146 = vrot.slane %v2145, 7
      %2147 = vrot.lane.b32.xlu0 %v2146, 96
      %v2148 = vpop.permute.xlu0 %2147
      %2150 = vst.msk [vmem:[%s244 + $0x2c] sm:$0x4] %vm729, %v2148
      %v2151 = vld [vmem:[#allocation2 + $0x40] sm:$0x30]
      %v2152 = vld [vmem:[#allocation2 + $0x48] sm:$0x30]
      %v2153 = vrot.slane %v2141, 1
      %v2155 = vsel %vm559, %v2153, 0
      %2157 = vmatprep.subr.bf16.mxu0 %v544
      %2158 = vmatpush1.bf16.msra.mxu0 %v543
      %2159 = vmatprep.subr.bf16.mxu0 %v546
      %2160 = vmatpush1.bf16.msra.mxu0 %v545
      %2161 = vmatprep.subr.bf16.mxu0 %v548
      %2162 = vmatpush1.bf16.msra.mxu0 %v547
      %2163 = vmatprep.subr.bf16.mxu0 %v550
      %2164 = vmatpush1.bf16.msra.mxu0 %v549
      %2165 = vmatprep.subr.bf16.mxu0 0
      %2166 = vmatpush1.bf16.msra.mxu0 0
      %2167 = vmatprep.subr.bf16.mxu0 0
      %2168 = vmatpush1.bf16.msra.mxu0 0
      %2169 = vmatprep.subr.bf16.mxu0 0
      %2170 = vmatpush1.bf16.msra.mxu0 0
      %2171 = vmatprep.subr.bf16.mxu0 0
      %2172 = vmatpush1.bf16.msra.mxu0 0
      %2173 = vmatprep.subr.bf16.mxu0 0
      %2174 = vmatpush1.bf16.msra.mxu0 0
      %2175 = vmatprep.subr.bf16.mxu0 0
      %2176 = vmatpush1.bf16.msra.mxu0 0
      %2177 = vmatprep.subr.bf16.mxu0 0
      %2178 = vmatpush1.bf16.msra.mxu0 0
      %2179 = vmatprep.subr.bf16.mxu0 0
      %2180 = vmatpush1.bf16.msra.mxu0 0
      %2181 = vmatprep.subr.bf16.mxu0 0
      %2182 = vmatpush1.bf16.msra.mxu0 0
      %2183 = vmatprep.subr.bf16.mxu0 0
      %2184 = vmatpush1.bf16.msra.mxu0 0
      %2185 = vmatprep.subr.bf16.mxu0 0
      %2186 = vmatpush1.bf16.msra.mxu0 0
      %2187 = vmatprep.subr.bf16.mxu0 0
      %2188 = vmatpush1.bf16.msra.mxu0 0
      %2189 = vmatprep.mubr.bf16.mxu0 0
      %2190 = vmatmul.mubr.bf16.gmra.mrb[0].mxu0 %v2155
      %v2191 = vpop.f32.mrb[0].mxu0
      %v2192 = vadd.f32 0.0, %v2191
      %v2193 = vpop.f32.mrb[0].mxu0
      %v2194 = vadd.f32 0.0, %v2193
      %v2195 = vpop.f32.mrb[0].mxu0
      %v2196 = vpop.f32.mrb[0].mxu0
      %2197 = vdwg.mxu0
      %v2200 = vrot.slane %v2192, 4
      %v2201 = vrot.slane %v2194, 4
      %v2204 = vadd.f32 %v2151, %v2200
      %v2205 = vadd.f32 %v2152, %v2201
      %v2206 = vxor.u32 %v2204, 2147483648
      %v2207 = vxor.u32 %v2205, 2147483648
      %v2208 = vmul.f32 %v2206, 1.442695
      %v2209 = vpow.pop %v2208
      %v2210 = vmul.f32 %v2207, 1.442695
      %v2211 = vpow.pop %v2210
      %v2212 = vadd.f32 %v2209, 1.0
      %v2213 = vadd.f32 %v2211, 1.0
      %v2214 = vrcp.pop %v2212
      %v2215 = vmul.f32 1.0, %v2214
      %v2216 = vrcp.pop %v2213
      %v2217 = vmul.f32 1.0, %v2216
      %v2218 = vtanh.pop %v2205
      %v2220 = vrot.slane %v2138, 6
      %v2222 = vmul.f32 %v2215, %v2220
      %v2223 = vmul.f32 %v2215, %v2218
      %2225 = vrot.lane.b32.xlu0 %v2223, 64
      %v2226 = vpop.permute.xlu0 %2225
      %v2228 = vadd.f32 %v2222, %v2226
      %v2229 = vtanh.pop %v2228
      %v2230 = vmul.f32 %v2217, %v2229
      %v2231 = vpack.c.bf16 %v2230, %v2230
      %2232 = vst.msk [vmem:[%s237 + $0x10] sm:$0x4] %vm729, %v2231
      %v2234 = vunpack.c.l.b16 %v2231
      %v2235 = vpack.c.b16 %v2234, %v2234
      %v2236 = vrot.slane %v2235, 5
      %v2237 = vrot.slane %v2236, 4
      %2238 = vrot.lane.b32.xlu0 %v2237, 96
      %v2239 = vpop.permute.xlu0 %2238
      %2241 = vst.msk [vmem:[%s244 + $0x2c] sm:$0x2] %vm720, %v2239
      %v2242 = vld [vmem:[#allocation2 + $0x40] sm:$0xc0]
      %v2243 = vld [vmem:[#allocation2 + $0x48] sm:$0xc0]
      %v2244 = vrot.slane %v2231, 2
      %v2246 = vsel %vm559, %v2244, 0
      %2248 = vmatprep.subr.bf16.mxu0 %v544
      %2249 = vmatpush1.bf16.msra.mxu0 %v543
      %2250 = vmatprep.subr.bf16.mxu0 %v546
      %2251 = vmatpush1.bf16.msra.mxu0 %v545
      %2252 = vmatprep.subr.bf16.mxu0 %v548
      %2253 = vmatpush1.bf16.msra.mxu0 %v547
      %2254 = vmatprep.subr.bf16.mxu0 %v550
      %2255 = vmatpush1.bf16.msra.mxu0 %v549
      %2256 = vmatprep.subr.bf16.mxu0 0
      %2257 = vmatpush1.bf16.msra.mxu0 0
      %2258 = vmatprep.subr.bf16.mxu0 0
      %2259 = vmatpush1.bf16.msra.mxu0 0
      %2260 = vmatprep.subr.bf16.mxu0 0
      %2261 = vmatpush1.bf16.msra.mxu0 0
      %2262 = vmatprep.subr.bf16.mxu0 0
      %2263 = vmatpush1.bf16.msra.mxu0 0
      %2264 = vmatprep.subr.bf16.mxu0 0
      %2265 = vmatpush1.bf16.msra.mxu0 0
      %2266 = vmatprep.subr.bf16.mxu0 0
      %2267 = vmatpush1.bf16.msra.mxu0 0
      %2268 = vmatprep.subr.bf16.mxu0 0
      %2269 = vmatpush1.bf16.msra.mxu0 0
      %2270 = vmatprep.subr.bf16.mxu0 0
      %2271 = vmatpush1.bf16.msra.mxu0 0
      %2272 = vmatprep.subr.bf16.mxu0 0
      %2273 = vmatpush1.bf16.msra.mxu0 0
      %2274 = vmatprep.subr.bf16.mxu0 0
      %2275 = vmatpush1.bf16.msra.mxu0 0
      %2276 = vmatprep.subr.bf16.mxu0 0
      %2277 = vmatpush1.bf16.msra.mxu0 0
      %2278 = vmatprep.subr.bf16.mxu0 0
      %2279 = vmatpush1.bf16.msra.mxu0 0
      %2280 = vmatprep.mubr.bf16.mxu0 0
      %2281 = vmatmul.mubr.bf16.gmra.mrb[0].mxu0 %v2246
      %v2282 = vpop.f32.mrb[0].mxu0
      %v2283 = vadd.f32 0.0, %v2282
      %v2284 = vpop.f32.mrb[0].mxu0
      %v2285 = vadd.f32 0.0, %v2284
      %v2286 = vpop.f32.mrb[0].mxu0
      %v2287 = vpop.f32.mrb[0].mxu0
      %2288 = vdwg.mxu0
      %v2291 = vrot.slane %v2283, 2
      %v2292 = vrot.slane %v2285, 2
      %v2295 = vadd.f32 %v2242, %v2291
      %v2296 = vadd.f32 %v2243, %v2292
      %v2297 = vxor.u32 %v2295, 2147483648
      %v2298 = vxor.u32 %v2296, 2147483648
      %v2299 = vmul.f32 %v2297, 1.442695
      %v2300 = vpow.pop %v2299
      %v2301 = vmul.f32 %v2298, 1.442695
      %v2302 = vpow.pop %v2301
      %v2303 = vadd.f32 %v2300, 1.0
      %v2304 = vadd.f32 %v2302, 1.0
      %v2305 = vrcp.pop %v2303
      %v2306 = vmul.f32 1.0, %v2305
      %v2307 = vrcp.pop %v2304
      %v2308 = vmul.f32 1.0, %v2307
      %v2309 = vtanh.pop %v2296
      %v2311 = vrot.slane %v2228, 6
      %v2313 = vmul.f32 %v2306, %v2311
      %v2314 = vmul.f32 %v2306, %v2309
      %2316 = vrot.lane.b32.xlu0 %v2314, 64
      %v2317 = vpop.permute.xlu0 %2316
      %v2319 = vadd.f32 %v2313, %v2317
      %v2320 = vtanh.pop %v2319
      %v2321 = vmul.f32 %v2308, %v2320
      %v2322 = vpack.c.bf16 %v2321, %v2321
      %2323 = vst.msk [vmem:[%s237 + $0x10] sm:$0x8] %vm638, %v2322
      %v2325 = vunpack.c.l.b16 %v2322
      %v2326 = vpack.c.b16 %v2325, %v2325
      %v2327 = vrot.slane %v2326, 7
      %v2328 = vrot.slane %v2327, 4
      %2329 = vrot.lane.b32.xlu0 %v2328, 96
      %v2330 = vpop.permute.xlu0 %2329
      %2332 = vst.msk [vmem:[%s244 + $0x2c] sm:$0x1] %vm629, %v2330
      %v2333 = vld [vmem:[#allocation2 + $0x50] sm:$0x3]
      %v2334 = vld [vmem:[#allocation2 + $0x58] sm:$0x3]
      %v2335 = vrot.slane %v2322, 3
      %v2337 = vsel %vm559, %v2335, 0
      %2339 = vmatprep.subr.bf16.mxu0 %v544
      %2340 = vmatpush1.bf16.msra.mxu0 %v543
      %2341 = vmatprep.subr.bf16.mxu0 %v546
      %2342 = vmatpush1.bf16.msra.mxu0 %v545
      %2343 = vmatprep.subr.bf16.mxu0 %v548
      %2344 = vmatpush1.bf16.msra.mxu0 %v547
      %2345 = vmatprep.subr.bf16.mxu0 %v550
      %2346 = vmatpush1.bf16.msra.mxu0 %v549
      %2347 = vmatprep.subr.bf16.mxu0 0
      %2348 = vmatpush1.bf16.msra.mxu0 0
      %2349 = vmatprep.subr.bf16.mxu0 0
      %2350 = vmatpush1.bf16.msra.mxu0 0
      %2351 = vmatprep.subr.bf16.mxu0 0
      %2352 = vmatpush1.bf16.msra.mxu0 0
      %2353 = vmatprep.subr.bf16.mxu0 0
      %2354 = vmatpush1.bf16.msra.mxu0 0
      %2355 = vmatprep.subr.bf16.mxu0 0
      %2356 = vmatpush1.bf16.msra.mxu0 0
      %2357 = vmatprep.subr.bf16.mxu0 0
      %2358 = vmatpush1.bf16.msra.mxu0 0
      %2359 = vmatprep.subr.bf16.mxu0 0
      %2360 = vmatpush1.bf16.msra.mxu0 0
      %2361 = vmatprep.subr.bf16.mxu0 0
      %2362 = vmatpush1.bf16.msra.mxu0 0
      %2363 = vmatprep.subr.bf16.mxu0 0
      %2364 = vmatpush1.bf16.msra.mxu0 0
      %2365 = vmatprep.subr.bf16.mxu0 0
      %2366 = vmatpush1.bf16.msra.mxu0 0
      %2367 = vmatprep.subr.bf16.mxu0 0
      %2368 = vmatpush1.bf16.msra.mxu0 0
      %2369 = vmatprep.subr.bf16.mxu0 0
      %2370 = vmatpush1.bf16.msra.mxu0 0
      %2371 = vmatprep.mubr.bf16.mxu0 0
      %2372 = vmatmul.mubr.bf16.gmra.mrb[0].mxu0 %v2337
      %v2373 = vpop.f32.mrb[0].mxu0
      %v2374 = vadd.f32 0.0, %v2373
      %v2375 = vpop.f32.mrb[0].mxu0
      %v2376 = vadd.f32 0.0, %v2375
      %v2377 = vpop.f32.mrb[0].mxu0
      %v2378 = vpop.f32.mrb[0].mxu0
      %2379 = vdwg.mxu0
      %v2380 = vadd.f32 %v2333, %v2374
      %v2381 = vadd.f32 %v2334, %v2376
      %v2382 = vxor.u32 %v2380, 2147483648
      %v2383 = vxor.u32 %v2381, 2147483648
      %v2384 = vmul.f32 %v2382, 1.442695
      %v2385 = vpow.pop %v2384
      %v2386 = vmul.f32 %v2383, 1.442695
      %v2387 = vpow.pop %v2386
      %v2388 = vadd.f32 %v2385, 1.0
      %v2389 = vadd.f32 %v2387, 1.0
      %v2390 = vrcp.pop %v2388
      %v2391 = vmul.f32 1.0, %v2390
      %v2392 = vrcp.pop %v2389
      %v2393 = vmul.f32 1.0, %v2392
      %v2394 = vtanh.pop %v2381
      %v2396 = vrot.slane %v2319, 6
      %v2398 = vmul.f32 %v2391, %v2396
      %v2399 = vmul.f32 %v2391, %v2394
      %2401 = vrot.lane.b32.xlu0 %v2399, 64
      %v2402 = vpop.permute.xlu0 %2401
      %v2404 = vadd.f32 %v2398, %v2402
      %v2405 = vtanh.pop %v2404
      %v2406 = vmul.f32 %v2393, %v2405
      %v2407 = vpack.c.bf16 %v2406, %v2406
      %2408 = vst.msk [vmem:[%s237 + $0x14] sm:$0x1] %vm629, %v2407
      %v2410 = vunpack.c.l.b16 %v2407
      %v2411 = vpack.c.b16 %v2410, %v2410
      %v2412 = vrot.slane %v2411, 5
      %2413 = vrot.lane.b32.xlu0 %v2412, 96
      %v2414 = vpop.permute.xlu0 %2413
      %2416 = vst.msk [vmem:[%s244 + $0x28] sm:$0x8] %vm638, %v2414
      %v2417 = vld [vmem:[#allocation2 + $0x50] sm:$0xc]
      %v2418 = vld [vmem:[#allocation2 + $0x58] sm:$0xc]
      %v2420 = vsel %vm559, %v2407, 0
      %2422 = vmatprep.subr.bf16.mxu0 %v544
      %2423 = vmatpush1.bf16.msra.mxu0 %v543
      %2424 = vmatprep.subr.bf16.mxu0 %v546
      %2425 = vmatpush1.bf16.msra.mxu0 %v545
      %2426 = vmatprep.subr.bf16.mxu0 %v548
      %2427 = vmatpush1.bf16.msra.mxu0 %v547
      %2428 = vmatprep.subr.bf16.mxu0 %v550
      %2429 = vmatpush1.bf16.msra.mxu0 %v549
      %2430 = vmatprep.subr.bf16.mxu0 0
      %2431 = vmatpush1.bf16.msra.mxu0 0
      %2432 = vmatprep.subr.bf16.mxu0 0
      %2433 = vmatpush1.bf16.msra.mxu0 0
      %2434 = vmatprep.subr.bf16.mxu0 0
      %2435 = vmatpush1.bf16.msra.mxu0 0
      %2436 = vmatprep.subr.bf16.mxu0 0
      %2437 = vmatpush1.bf16.msra.mxu0 0
      %2438 = vmatprep.subr.bf16.mxu0 0
      %2439 = vmatpush1.bf16.msra.mxu0 0
      %2440 = vmatprep.subr.bf16.mxu0 0
      %2441 = vmatpush1.bf16.msra.mxu0 0
      %2442 = vmatprep.subr.bf16.mxu0 0
      %2443 = vmatpush1.bf16.msra.mxu0 0
      %2444 = vmatprep.subr.bf16.mxu0 0
      %2445 = vmatpush1.bf16.msra.mxu0 0
      %2446 = vmatprep.subr.bf16.mxu0 0
      %2447 = vmatpush1.bf16.msra.mxu0 0
      %2448 = vmatprep.subr.bf16.mxu0 0
      %2449 = vmatpush1.bf16.msra.mxu0 0
      %2450 = vmatprep.subr.bf16.mxu0 0
      %2451 = vmatpush1.bf16.msra.mxu0 0
      %2452 = vmatprep.subr.bf16.mxu0 0
      %2453 = vmatpush1.bf16.msra.mxu0 0
      %2454 = vmatprep.mubr.bf16.mxu0 0
      %2455 = vmatmul.mubr.bf16.gmra.mrb[0].mxu0 %v2420
      %v2456 = vpop.f32.mrb[0].mxu0
      %v2457 = vadd.f32 0.0, %v2456
      %v2458 = vpop.f32.mrb[0].mxu0
      %v2459 = vadd.f32 0.0, %v2458
      %v2460 = vpop.f32.mrb[0].mxu0
      %v2461 = vpop.f32.mrb[0].mxu0
      %2462 = vdwg.mxu0
      %v2465 = vrot.slane %v2457, 6
      %v2466 = vrot.slane %v2459, 6
      %v2469 = vadd.f32 %v2417, %v2465
      %v2470 = vadd.f32 %v2418, %v2466
      %v2471 = vxor.u32 %v2469, 2147483648
      %v2472 = vxor.u32 %v2470, 2147483648
      %v2473 = vmul.f32 %v2471, 1.442695
      %v2474 = vpow.pop %v2473
      %v2475 = vmul.f32 %v2472, 1.442695
      %v2476 = vpow.pop %v2475
      %v2477 = vadd.f32 %v2474, 1.0
      %v2478 = vadd.f32 %v2476, 1.0
      %v2479 = vrcp.pop %v2477
      %v2480 = vmul.f32 1.0, %v2479
      %v2481 = vrcp.pop %v2478
      %v2482 = vmul.f32 1.0, %v2481
      %v2483 = vtanh.pop %v2470
      %v2485 = vrot.slane %v2404, 6
      %v2487 = vmul.f32 %v2480, %v2485
      %v2488 = vmul.f32 %v2480, %v2483
      %2490 = vrot.lane.b32.xlu0 %v2488, 64
      %v2491 = vpop.permute.xlu0 %2490
      %v2493 = vadd.f32 %v2487, %v2491
      %v2494 = vtanh.pop %v2493
      %v2495 = vmul.f32 %v2482, %v2494
      %v2496 = vpack.c.bf16 %v2495, %v2495
      %2497 = vst.msk [vmem:[%s237 + $0x14] sm:$0x2] %vm720, %v2496
      %v2499 = vunpack.c.l.b16 %v2496
      %v2500 = vpack.c.b16 %v2499, %v2499
      %v2501 = vrot.slane %v2500, 7
      %2502 = vrot.lane.b32.xlu0 %v2501, 96
      %v2503 = vpop.permute.xlu0 %2502
      %2505 = vst.msk [vmem:[%s244 + $0x28] sm:$0x4] %vm729, %v2503
      %v2506 = vld [vmem:[#allocation2 + $0x50] sm:$0x30]
      %v2507 = vld [vmem:[#allocation2 + $0x58] sm:$0x30]
      %v2508 = vrot.slane %v2496, 1
      %v2510 = vsel %vm559, %v2508, 0
      %2512 = vmatprep.subr.bf16.mxu0 %v544
      %2513 = vmatpush1.bf16.msra.mxu0 %v543
      %2514 = vmatprep.subr.bf16.mxu0 %v546
      %2515 = vmatpush1.bf16.msra.mxu0 %v545
      %2516 = vmatprep.subr.bf16.mxu0 %v548
      %2517 = vmatpush1.bf16.msra.mxu0 %v547
      %2518 = vmatprep.subr.bf16.mxu0 %v550
      %2519 = vmatpush1.bf16.msra.mxu0 %v549
      %2520 = vmatprep.subr.bf16.mxu0 0
      %2521 = vmatpush1.bf16.msra.mxu0 0
      %2522 = vmatprep.subr.bf16.mxu0 0
      %2523 = vmatpush1.bf16.msra.mxu0 0
      %2524 = vmatprep.subr.bf16.mxu0 0
      %2525 = vmatpush1.bf16.msra.mxu0 0
      %2526 = vmatprep.subr.bf16.mxu0 0
      %2527 = vmatpush1.bf16.msra.mxu0 0
      %2528 = vmatprep.subr.bf16.mxu0 0
      %2529 = vmatpush1.bf16.msra.mxu0 0
      %2530 = vmatprep.subr.bf16.mxu0 0
      %2531 = vmatpush1.bf16.msra.mxu0 0
      %2532 = vmatprep.subr.bf16.mxu0 0
      %2533 = vmatpush1.bf16.msra.mxu0 0
      %2534 = vmatprep.subr.bf16.mxu0 0
      %2535 = vmatpush1.bf16.msra.mxu0 0
      %2536 = vmatprep.subr.bf16.mxu0 0
      %2537 = vmatpush1.bf16.msra.mxu0 0
      %2538 = vmatprep.subr.bf16.mxu0 0
      %2539 = vmatpush1.bf16.msra.mxu0 0
      %2540 = vmatprep.subr.bf16.mxu0 0
      %2541 = vmatpush1.bf16.msra.mxu0 0
      %2542 = vmatprep.subr.bf16.mxu0 0
      %2543 = vmatpush1.bf16.msra.mxu0 0
      %2544 = vmatprep.mubr.bf16.mxu0 0
      %2545 = vmatmul.mubr.bf16.gmra.mrb[0].mxu0 %v2510
      %v2546 = vpop.f32.mrb[0].mxu0
      %v2547 = vadd.f32 0.0, %v2546
      %v2548 = vpop.f32.mrb[0].mxu0
      %v2549 = vadd.f32 0.0, %v2548
      %v2550 = vpop.f32.mrb[0].mxu0
      %v2551 = vpop.f32.mrb[0].mxu0
      %2552 = vdwg.mxu0
      %v2555 = vrot.slane %v2547, 4
      %v2556 = vrot.slane %v2549, 4
      %v2559 = vadd.f32 %v2506, %v2555
      %v2560 = vadd.f32 %v2507, %v2556
      %v2561 = vxor.u32 %v2559, 2147483648
      %v2562 = vxor.u32 %v2560, 2147483648
      %v2563 = vmul.f32 %v2561, 1.442695
      %v2564 = vpow.pop %v2563
      %v2565 = vmul.f32 %v2562, 1.442695
      %v2566 = vpow.pop %v2565
      %v2567 = vadd.f32 %v2564, 1.0
      %v2568 = vadd.f32 %v2566, 1.0
      %v2569 = vrcp.pop %v2567
      %v2570 = vmul.f32 1.0, %v2569
      %v2571 = vrcp.pop %v2568
      %v2572 = vmul.f32 1.0, %v2571
      %v2573 = vtanh.pop %v2560
      %v2575 = vrot.slane %v2493, 6
      %v2577 = vmul.f32 %v2570, %v2575
      %v2578 = vmul.f32 %v2570, %v2573
      %2580 = vrot.lane.b32.xlu0 %v2578, 64
      %v2581 = vpop.permute.xlu0 %2580
      %v2583 = vadd.f32 %v2577, %v2581
      %v2584 = vtanh.pop %v2583
      %v2585 = vmul.f32 %v2572, %v2584
      %v2586 = vpack.c.bf16 %v2585, %v2585
      %2587 = vst.msk [vmem:[%s237 + $0x14] sm:$0x4] %vm729, %v2586
      %v2589 = vunpack.c.l.b16 %v2586
      %v2590 = vpack.c.b16 %v2589, %v2589
      %v2591 = vrot.slane %v2590, 5
      %v2592 = vrot.slane %v2591, 4
      %2593 = vrot.lane.b32.xlu0 %v2592, 96
      %v2594 = vpop.permute.xlu0 %2593
      %2596 = vst.msk [vmem:[%s244 + $0x28] sm:$0x2] %vm720, %v2594
      %v2597 = vld [vmem:[#allocation2 + $0x50] sm:$0xc0]
      %v2598 = vld [vmem:[#allocation2 + $0x58] sm:$0xc0]
      %v2599 = vrot.slane %v2586, 2
      %v2601 = vsel %vm559, %v2599, 0
      %2603 = vmatprep.subr.bf16.mxu0 %v544
      %2604 = vmatpush1.bf16.msra.mxu0 %v543
      %2605 = vmatprep.subr.bf16.mxu0 %v546
      %2606 = vmatpush1.bf16.msra.mxu0 %v545
      %2607 = vmatprep.subr.bf16.mxu0 %v548
      %2608 = vmatpush1.bf16.msra.mxu0 %v547
      %2609 = vmatprep.subr.bf16.mxu0 %v550
      %2610 = vmatpush1.bf16.msra.mxu0 %v549
      %2611 = vmatprep.subr.bf16.mxu0 0
      %2612 = vmatpush1.bf16.msra.mxu0 0
      %2613 = vmatprep.subr.bf16.mxu0 0
      %2614 = vmatpush1.bf16.msra.mxu0 0
      %2615 = vmatprep.subr.bf16.mxu0 0
      %2616 = vmatpush1.bf16.msra.mxu0 0
      %2617 = vmatprep.subr.bf16.mxu0 0
      %2618 = vmatpush1.bf16.msra.mxu0 0
      %2619 = vmatprep.subr.bf16.mxu0 0
      %2620 = vmatpush1.bf16.msra.mxu0 0
      %2621 = vmatprep.subr.bf16.mxu0 0
      %2622 = vmatpush1.bf16.msra.mxu0 0
      %2623 = vmatprep.subr.bf16.mxu0 0
      %2624 = vmatpush1.bf16.msra.mxu0 0
      %2625 = vmatprep.subr.bf16.mxu0 0
      %2626 = vmatpush1.bf16.msra.mxu0 0
      %2627 = vmatprep.subr.bf16.mxu0 0
      %2628 = vmatpush1.bf16.msra.mxu0 0
      %2629 = vmatprep.subr.bf16.mxu0 0
      %2630 = vmatpush1.bf16.msra.mxu0 0
      %2631 = vmatprep.subr.bf16.mxu0 0
      %2632 = vmatpush1.bf16.msra.mxu0 0
      %2633 = vmatprep.subr.bf16.mxu0 0
      %2634 = vmatpush1.bf16.msra.mxu0 0
      %2635 = vmatprep.mubr.bf16.mxu0 0
      %2636 = vmatmul.mubr.bf16.gmra.mrb[0].mxu0 %v2601
      %v2637 = vpop.f32.mrb[0].mxu0
      %v2638 = vadd.f32 0.0, %v2637
      %v2639 = vpop.f32.mrb[0].mxu0
      %v2640 = vadd.f32 0.0, %v2639
      %v2641 = vpop.f32.mrb[0].mxu0
      %v2642 = vpop.f32.mrb[0].mxu0
      %2643 = vdwg.mxu0
      %v2646 = vrot.slane %v2638, 2
      %v2647 = vrot.slane %v2640, 2
      %v2650 = vadd.f32 %v2597, %v2646
      %v2651 = vadd.f32 %v2598, %v2647
      %v2652 = vxor.u32 %v2650, 2147483648
      %v2653 = vxor.u32 %v2651, 2147483648
      %v2654 = vmul.f32 %v2652, 1.442695
      %v2655 = vpow.pop %v2654
      %v2656 = vmul.f32 %v2653, 1.442695
      %v2657 = vpow.pop %v2656
      %v2658 = vadd.f32 %v2655, 1.0
      %v2659 = vadd.f32 %v2657, 1.0
      %v2660 = vrcp.pop %v2658
      %v2661 = vmul.f32 1.0, %v2660
      %v2662 = vrcp.pop %v2659
      %v2663 = vmul.f32 1.0, %v2662
      %v2664 = vtanh.pop %v2651
      %v2666 = vrot.slane %v2583, 6
      %v2668 = vmul.f32 %v2661, %v2666
      %v2669 = vmul.f32 %v2661, %v2664
      %2671 = vrot.lane.b32.xlu0 %v2669, 64
      %v2672 = vpop.permute.xlu0 %2671
      %v2674 = vadd.f32 %v2668, %v2672
      %v2675 = vtanh.pop %v2674
      %v2676 = vmul.f32 %v2663, %v2675
      %v2677 = vpack.c.bf16 %v2676, %v2676
      %2678 = vst.msk [vmem:[%s237 + $0x14] sm:$0x8] %vm638, %v2677
      %v2680 = vunpack.c.l.b16 %v2677
      %v2681 = vpack.c.b16 %v2680, %v2680
      %v2682 = vrot.slane %v2681, 7
      %v2683 = vrot.slane %v2682, 4
      %2684 = vrot.lane.b32.xlu0 %v2683, 96
      %v2685 = vpop.permute.xlu0 %2684
      %2687 = vst.msk [vmem:[%s244 + $0x28] sm:$0x1] %vm629, %v2685
      %v2688 = vld [vmem:[#allocation2 + $0x60] sm:$0x3]
      %v2689 = vld [vmem:[#allocation2 + $0x68] sm:$0x3]
      %v2690 = vrot.slane %v2677, 3
      %v2692 = vsel %vm559, %v2690, 0
      %2694 = vmatprep.subr.bf16.mxu0 %v544
      %2695 = vmatpush1.bf16.msra.mxu0 %v543
      %2696 = vmatprep.subr.bf16.mxu0 %v546
      %2697 = vmatpush1.bf16.msra.mxu0 %v545
      %2698 = vmatprep.subr.bf16.mxu0 %v548
      %2699 = vmatpush1.bf16.msra.mxu0 %v547
      %2700 = vmatprep.subr.bf16.mxu0 %v550
      %2701 = vmatpush1.bf16.msra.mxu0 %v549
      %2702 = vmatprep.subr.bf16.mxu0 0
      %2703 = vmatpush1.bf16.msra.mxu0 0
      %2704 = vmatprep.subr.bf16.mxu0 0
      %2705 = vmatpush1.bf16.msra.mxu0 0
      %2706 = vmatprep.subr.bf16.mxu0 0
      %2707 = vmatpush1.bf16.msra.mxu0 0
      %2708 = vmatprep.subr.bf16.mxu0 0
      %2709 = vmatpush1.bf16.msra.mxu0 0
      %2710 = vmatprep.subr.bf16.mxu0 0
      %2711 = vmatpush1.bf16.msra.mxu0 0
      %2712 = vmatprep.subr.bf16.mxu0 0
      %2713 = vmatpush1.bf16.msra.mxu0 0
      %2714 = vmatprep.subr.bf16.mxu0 0
      %2715 = vmatpush1.bf16.msra.mxu0 0
      %2716 = vmatprep.subr.bf16.mxu0 0
      %2717 = vmatpush1.bf16.msra.mxu0 0
      %2718 = vmatprep.subr.bf16.mxu0 0
      %2719 = vmatpush1.bf16.msra.mxu0 0
      %2720 = vmatprep.subr.bf16.mxu0 0
      %2721 = vmatpush1.bf16.msra.mxu0 0
      %2722 = vmatprep.subr.bf16.mxu0 0
      %2723 = vmatpush1.bf16.msra.mxu0 0
      %2724 = vmatprep.subr.bf16.mxu0 0
      %2725 = vmatpush1.bf16.msra.mxu0 0
      %2726 = vmatprep.mubr.bf16.mxu0 0
      %2727 = vmatmul.mubr.bf16.gmra.mrb[0].mxu0 %v2692
      %v2728 = vpop.f32.mrb[0].mxu0
      %v2729 = vadd.f32 0.0, %v2728
      %v2730 = vpop.f32.mrb[0].mxu0
      %v2731 = vadd.f32 0.0, %v2730
      %v2732 = vpop.f32.mrb[0].mxu0
      %v2733 = vpop.f32.mrb[0].mxu0
      %2734 = vdwg.mxu0
      %v2735 = vadd.f32 %v2688, %v2729
      %v2736 = vadd.f32 %v2689, %v2731
      %v2737 = vxor.u32 %v2735, 2147483648
      %v2738 = vxor.u32 %v2736, 2147483648
      %v2739 = vmul.f32 %v2737, 1.442695
      %v2740 = vpow.pop %v2739
      %v2741 = vmul.f32 %v2738, 1.442695
      %v2742 = vpow.pop %v2741
      %v2743 = vadd.f32 %v2740, 1.0
      %v2744 = vadd.f32 %v2742, 1.0
      %v2745 = vrcp.pop %v2743
      %v2746 = vmul.f32 1.0, %v2745
      %v2747 = vrcp.pop %v2744
      %v2748 = vmul.f32 1.0, %v2747
      %v2749 = vtanh.pop %v2736
      %v2751 = vrot.slane %v2674, 6
      %v2753 = vmul.f32 %v2746, %v2751
      %v2754 = vmul.f32 %v2746, %v2749
      %2756 = vrot.lane.b32.xlu0 %v2754, 64
      %v2757 = vpop.permute.xlu0 %2756
      %v2759 = vadd.f32 %v2753, %v2757
      %v2760 = vtanh.pop %v2759
      %v2761 = vmul.f32 %v2748, %v2760
      %v2762 = vpack.c.bf16 %v2761, %v2761
      %2763 = vst.msk [vmem:[%s237 + $0x18] sm:$0x1] %vm629, %v2762
      %v2765 = vunpack.c.l.b16 %v2762
      %v2766 = vpack.c.b16 %v2765, %v2765
      %v2767 = vrot.slane %v2766, 5
      %2768 = vrot.lane.b32.xlu0 %v2767, 96
      %v2769 = vpop.permute.xlu0 %2768
      %2771 = vst.msk [vmem:[%s244 + $0x24] sm:$0x8] %vm638, %v2769
      %v2772 = vld [vmem:[#allocation2 + $0x60] sm:$0xc]
      %v2773 = vld [vmem:[#allocation2 + $0x68] sm:$0xc]
      %v2775 = vsel %vm559, %v2762, 0
      %2777 = vmatprep.subr.bf16.mxu0 %v544
      %2778 = vmatpush1.bf16.msra.mxu0 %v543
      %2779 = vmatprep.subr.bf16.mxu0 %v546
      %2780 = vmatpush1.bf16.msra.mxu0 %v545
      %2781 = vmatprep.subr.bf16.mxu0 %v548
      %2782 = vmatpush1.bf16.msra.mxu0 %v547
      %2783 = vmatprep.subr.bf16.mxu0 %v550
      %2784 = vmatpush1.bf16.msra.mxu0 %v549
      %2785 = vmatprep.subr.bf16.mxu0 0
      %2786 = vmatpush1.bf16.msra.mxu0 0
      %2787 = vmatprep.subr.bf16.mxu0 0
      %2788 = vmatpush1.bf16.msra.mxu0 0
      %2789 = vmatprep.subr.bf16.mxu0 0
      %2790 = vmatpush1.bf16.msra.mxu0 0
      %2791 = vmatprep.subr.bf16.mxu0 0
      %2792 = vmatpush1.bf16.msra.mxu0 0
      %2793 = vmatprep.subr.bf16.mxu0 0
      %2794 = vmatpush1.bf16.msra.mxu0 0
      %2795 = vmatprep.subr.bf16.mxu0 0
      %2796 = vmatpush1.bf16.msra.mxu0 0
      %2797 = vmatprep.subr.bf16.mxu0 0
      %2798 = vmatpush1.bf16.msra.mxu0 0
      %2799 = vmatprep.subr.bf16.mxu0 0
      %2800 = vmatpush1.bf16.msra.mxu0 0
      %2801 = vmatprep.subr.bf16.mxu0 0
      %2802 = vmatpush1.bf16.msra.mxu0 0
      %2803 = vmatprep.subr.bf16.mxu0 0
      %2804 = vmatpush1.bf16.msra.mxu0 0
      %2805 = vmatprep.subr.bf16.mxu0 0
      %2806 = vmatpush1.bf16.msra.mxu0 0
      %2807 = vmatprep.subr.bf16.mxu0 0
      %2808 = vmatpush1.bf16.msra.mxu0 0
      %2809 = vmatprep.mubr.bf16.mxu0 0
      %2810 = vmatmul.mubr.bf16.gmra.mrb[0].mxu0 %v2775
      %v2811 = vpop.f32.mrb[0].mxu0
      %v2812 = vadd.f32 0.0, %v2811
      %v2813 = vpop.f32.mrb[0].mxu0
      %v2814 = vadd.f32 0.0, %v2813
      %v2815 = vpop.f32.mrb[0].mxu0
      %v2816 = vpop.f32.mrb[0].mxu0
      %2817 = vdwg.mxu0
      %v2820 = vrot.slane %v2812, 6
      %v2821 = vrot.slane %v2814, 6
      %v2824 = vadd.f32 %v2772, %v2820
      %v2825 = vadd.f32 %v2773, %v2821
      %v2826 = vxor.u32 %v2824, 2147483648
      %v2827 = vxor.u32 %v2825, 2147483648
      %v2828 = vmul.f32 %v2826, 1.442695
      %v2829 = vpow.pop %v2828
      %v2830 = vmul.f32 %v2827, 1.442695
      %v2831 = vpow.pop %v2830
      %v2832 = vadd.f32 %v2829, 1.0
      %v2833 = vadd.f32 %v2831, 1.0
      %v2834 = vrcp.pop %v2832
      %v2835 = vmul.f32 1.0, %v2834
      %v2836 = vrcp.pop %v2833
      %v2837 = vmul.f32 1.0, %v2836
      %v2838 = vtanh.pop %v2825
      %v2840 = vrot.slane %v2759, 6
      %v2842 = vmul.f32 %v2835, %v2840
      %v2843 = vmul.f32 %v2835, %v2838
      %2845 = vrot.lane.b32.xlu0 %v2843, 64
      %v2846 = vpop.permute.xlu0 %2845
      %v2848 = vadd.f32 %v2842, %v2846
      %v2849 = vtanh.pop %v2848
      %v2850 = vmul.f32 %v2837, %v2849
      %v2851 = vpack.c.bf16 %v2850, %v2850
      %2852 = vst.msk [vmem:[%s237 + $0x18] sm:$0x2] %vm720, %v2851
      %v2854 = vunpack.c.l.b16 %v2851
      %v2855 = vpack.c.b16 %v2854, %v2854
      %v2856 = vrot.slane %v2855, 7
      %2857 = vrot.lane.b32.xlu0 %v2856, 96
      %v2858 = vpop.permute.xlu0 %2857
      %2860 = vst.msk [vmem:[%s244 + $0x24] sm:$0x4] %vm729, %v2858
      %v2861 = vld [vmem:[#allocation2 + $0x60] sm:$0x30]
      %v2862 = vld [vmem:[#allocation2 + $0x68] sm:$0x30]
      %v2863 = vrot.slane %v2851, 1
      %v2865 = vsel %vm559, %v2863, 0
      %2867 = vmatprep.subr.bf16.mxu0 %v544
      %2868 = vmatpush1.bf16.msra.mxu0 %v543
      %2869 = vmatprep.subr.bf16.mxu0 %v546
      %2870 = vmatpush1.bf16.msra.mxu0 %v545
      %2871 = vmatprep.subr.bf16.mxu0 %v548
      %2872 = vmatpush1.bf16.msra.mxu0 %v547
      %2873 = vmatprep.subr.bf16.mxu0 %v550
      %2874 = vmatpush1.bf16.msra.mxu0 %v549
      %2875 = vmatprep.subr.bf16.mxu0 0
      %2876 = vmatpush1.bf16.msra.mxu0 0
      %2877 = vmatprep.subr.bf16.mxu0 0
      %2878 = vmatpush1.bf16.msra.mxu0 0
      %2879 = vmatprep.subr.bf16.mxu0 0
      %2880 = vmatpush1.bf16.msra.mxu0 0
      %2881 = vmatprep.subr.bf16.mxu0 0
      %2882 = vmatpush1.bf16.msra.mxu0 0
      %2883 = vmatprep.subr.bf16.mxu0 0
      %2884 = vmatpush1.bf16.msra.mxu0 0
      %2885 = vmatprep.subr.bf16.mxu0 0
      %2886 = vmatpush1.bf16.msra.mxu0 0
      %2887 = vmatprep.subr.bf16.mxu0 0
      %2888 = vmatpush1.bf16.msra.mxu0 0
      %2889 = vmatprep.subr.bf16.mxu0 0
      %2890 = vmatpush1.bf16.msra.mxu0 0
      %2891 = vmatprep.subr.bf16.mxu0 0
      %2892 = vmatpush1.bf16.msra.mxu0 0
      %2893 = vmatprep.subr.bf16.mxu0 0
      %2894 = vmatpush1.bf16.msra.mxu0 0
      %2895 = vmatprep.subr.bf16.mxu0 0
      %2896 = vmatpush1.bf16.msra.mxu0 0
      %2897 = vmatprep.subr.bf16.mxu0 0
      %2898 = vmatpush1.bf16.msra.mxu0 0
      %2899 = vmatprep.mubr.bf16.mxu0 0
      %2900 = vmatmul.mubr.bf16.gmra.mrb[0].mxu0 %v2865
      %v2901 = vpop.f32.mrb[0].mxu0
      %v2902 = vadd.f32 0.0, %v2901
      %v2903 = vpop.f32.mrb[0].mxu0
      %v2904 = vadd.f32 0.0, %v2903
      %v2905 = vpop.f32.mrb[0].mxu0
      %v2906 = vpop.f32.mrb[0].mxu0
      %2907 = vdwg.mxu0
      %v2910 = vrot.slane %v2902, 4
      %v2911 = vrot.slane %v2904, 4
      %v2914 = vadd.f32 %v2861, %v2910
      %v2915 = vadd.f32 %v2862, %v2911
      %v2916 = vxor.u32 %v2914, 2147483648
      %v2917 = vxor.u32 %v2915, 2147483648
      %v2918 = vmul.f32 %v2916, 1.442695
      %v2919 = vpow.pop %v2918
      %v2920 = vmul.f32 %v2917, 1.442695
      %v2921 = vpow.pop %v2920
      %v2922 = vadd.f32 %v2919, 1.0
      %v2923 = vadd.f32 %v2921, 1.0
      %v2924 = vrcp.pop %v2922
      %v2925 = vmul.f32 1.0, %v2924
      %v2926 = vrcp.pop %v2923
      %v2927 = vmul.f32 1.0, %v2926
      %v2928 = vtanh.pop %v2915
      %v2930 = vrot.slane %v2848, 6
      %v2932 = vmul.f32 %v2925, %v2930
      %v2933 = vmul.f32 %v2925, %v2928
      %2935 = vrot.lane.b32.xlu0 %v2933, 64
      %v2936 = vpop.permute.xlu0 %2935
      %v2938 = vadd.f32 %v2932, %v2936
      %v2939 = vtanh.pop %v2938
      %v2940 = vmul.f32 %v2927, %v2939
      %v2941 = vpack.c.bf16 %v2940, %v2940
      %2942 = vst.msk [vmem:[%s237 + $0x18] sm:$0x4] %vm729, %v2941
      %v2944 = vunpack.c.l.b16 %v2941
      %v2945 = vpack.c.b16 %v2944, %v2944
      %v2946 = vrot.slane %v2945, 5
      %v2947 = vrot.slane %v2946, 4
      %2948 = vrot.lane.b32.xlu0 %v2947, 96
      %v2949 = vpop.permute.xlu0 %2948
      %2951 = vst.msk [vmem:[%s244 + $0x24] sm:$0x2] %vm720, %v2949
      %v2952 = vld [vmem:[#allocation2 + $0x60] sm:$0xc0]
      %v2953 = vld [vmem:[#allocation2 + $0x68] sm:$0xc0]
      %v2954 = vrot.slane %v2941, 2
      %v2956 = vsel %vm559, %v2954, 0
      %2958 = vmatprep.subr.bf16.mxu0 %v544
      %2959 = vmatpush1.bf16.msra.mxu0 %v543
      %2960 = vmatprep.subr.bf16.mxu0 %v546
      %2961 = vmatpush1.bf16.msra.mxu0 %v545
      %2962 = vmatprep.subr.bf16.mxu0 %v548
      %2963 = vmatpush1.bf16.msra.mxu0 %v547
      %2964 = vmatprep.subr.bf16.mxu0 %v550
      %2965 = vmatpush1.bf16.msra.mxu0 %v549
      %2966 = vmatprep.subr.bf16.mxu0 0
      %2967 = vmatpush1.bf16.msra.mxu0 0
      %2968 = vmatprep.subr.bf16.mxu0 0
      %2969 = vmatpush1.bf16.msra.mxu0 0
      %2970 = vmatprep.subr.bf16.mxu0 0
      %2971 = vmatpush1.bf16.msra.mxu0 0
      %2972 = vmatprep.subr.bf16.mxu0 0
      %2973 = vmatpush1.bf16.msra.mxu0 0
      %2974 = vmatprep.subr.bf16.mxu0 0
      %2975 = vmatpush1.bf16.msra.mxu0 0
      %2976 = vmatprep.subr.bf16.mxu0 0
      %2977 = vmatpush1.bf16.msra.mxu0 0
      %2978 = vmatprep.subr.bf16.mxu0 0
      %2979 = vmatpush1.bf16.msra.mxu0 0
      %2980 = vmatprep.subr.bf16.mxu0 0
      %2981 = vmatpush1.bf16.msra.mxu0 0
      %2982 = vmatprep.subr.bf16.mxu0 0
      %2983 = vmatpush1.bf16.msra.mxu0 0
      %2984 = vmatprep.subr.bf16.mxu0 0
      %2985 = vmatpush1.bf16.msra.mxu0 0
      %2986 = vmatprep.subr.bf16.mxu0 0
      %2987 = vmatpush1.bf16.msra.mxu0 0
      %2988 = vmatprep.subr.bf16.mxu0 0
      %2989 = vmatpush1.bf16.msra.mxu0 0
      %2990 = vmatprep.mubr.bf16.mxu0 0
      %2991 = vmatmul.mubr.bf16.gmra.mrb[0].mxu0 %v2956
      %v2992 = vpop.f32.mrb[0].mxu0
      %v2993 = vadd.f32 0.0, %v2992
      %v2994 = vpop.f32.mrb[0].mxu0
      %v2995 = vadd.f32 0.0, %v2994
      %v2996 = vpop.f32.mrb[0].mxu0
      %v2997 = vpop.f32.mrb[0].mxu0
      %2998 = vdwg.mxu0
      %v3001 = vrot.slane %v2993, 2
      %v3002 = vrot.slane %v2995, 2
      %v3005 = vadd.f32 %v2952, %v3001
      %v3006 = vadd.f32 %v2953, %v3002
      %v3007 = vxor.u32 %v3005, 2147483648
      %v3008 = vxor.u32 %v3006, 2147483648
      %v3009 = vmul.f32 %v3007, 1.442695
      %v3010 = vpow.pop %v3009
      %v3011 = vmul.f32 %v3008, 1.442695
      %v3012 = vpow.pop %v3011
      %v3013 = vadd.f32 %v3010, 1.0
      %v3014 = vadd.f32 %v3012, 1.0
      %v3015 = vrcp.pop %v3013
      %v3016 = vmul.f32 1.0, %v3015
      %v3017 = vrcp.pop %v3014
      %v3018 = vmul.f32 1.0, %v3017
      %v3019 = vtanh.pop %v3006
      %v3021 = vrot.slane %v2938, 6
      %v3023 = vmul.f32 %v3016, %v3021
      %v3024 = vmul.f32 %v3016, %v3019
      %3026 = vrot.lane.b32.xlu0 %v3024, 64
      %v3027 = vpop.permute.xlu0 %3026
      %v3029 = vadd.f32 %v3023, %v3027
      %v3030 = vtanh.pop %v3029
      %v3031 = vmul.f32 %v3018, %v3030
      %v3032 = vpack.c.bf16 %v3031, %v3031
      %3033 = vst.msk [vmem:[%s237 + $0x18] sm:$0x8] %vm638, %v3032
      %v3035 = vunpack.c.l.b16 %v3032
      %v3036 = vpack.c.b16 %v3035, %v3035
      %v3037 = vrot.slane %v3036, 7
      %v3038 = vrot.slane %v3037, 4
      %3039 = vrot.lane.b32.xlu0 %v3038, 96
      %v3040 = vpop.permute.xlu0 %3039
      %3042 = vst.msk [vmem:[%s244 + $0x24] sm:$0x1] %vm629, %v3040
      %v3043 = vld [vmem:[#allocation2 + $0x70] sm:$0x3]
      %v3044 = vld [vmem:[#allocation2 + $0x78] sm:$0x3]
      %v3045 = vrot.slane %v3032, 3
      %v3047 = vsel %vm559, %v3045, 0
      %3049 = vmatprep.subr.bf16.mxu0 %v544
      %3050 = vmatpush1.bf16.msra.mxu0 %v543
      %3051 = vmatprep.subr.bf16.mxu0 %v546
      %3052 = vmatpush1.bf16.msra.mxu0 %v545
      %3053 = vmatprep.subr.bf16.mxu0 %v548
      %3054 = vmatpush1.bf16.msra.mxu0 %v547
      %3055 = vmatprep.subr.bf16.mxu0 %v550
      %3056 = vmatpush1.bf16.msra.mxu0 %v549
      %3057 = vmatprep.subr.bf16.mxu0 0
      %3058 = vmatpush1.bf16.msra.mxu0 0
      %3059 = vmatprep.subr.bf16.mxu0 0
      %3060 = vmatpush1.bf16.msra.mxu0 0
      %3061 = vmatprep.subr.bf16.mxu0 0
      %3062 = vmatpush1.bf16.msra.mxu0 0
      %3063 = vmatprep.subr.bf16.mxu0 0
      %3064 = vmatpush1.bf16.msra.mxu0 0
      %3065 = vmatprep.subr.bf16.mxu0 0
      %3066 = vmatpush1.bf16.msra.mxu0 0
      %3067 = vmatprep.subr.bf16.mxu0 0
      %3068 = vmatpush1.bf16.msra.mxu0 0
      %3069 = vmatprep.subr.bf16.mxu0 0
      %3070 = vmatpush1.bf16.msra.mxu0 0
      %3071 = vmatprep.subr.bf16.mxu0 0
      %3072 = vmatpush1.bf16.msra.mxu0 0
      %3073 = vmatprep.subr.bf16.mxu0 0
      %3074 = vmatpush1.bf16.msra.mxu0 0
      %3075 = vmatprep.subr.bf16.mxu0 0
      %3076 = vmatpush1.bf16.msra.mxu0 0
      %3077 = vmatprep.subr.bf16.mxu0 0
      %3078 = vmatpush1.bf16.msra.mxu0 0
      %3079 = vmatprep.subr.bf16.mxu0 0
      %3080 = vmatpush1.bf16.msra.mxu0 0
      %3081 = vmatprep.mubr.bf16.mxu0 0
      %3082 = vmatmul.mubr.bf16.gmra.mrb[0].mxu0 %v3047
      %v3083 = vpop.f32.mrb[0].mxu0
      %v3084 = vadd.f32 0.0, %v3083
      %v3085 = vpop.f32.mrb[0].mxu0
      %v3086 = vadd.f32 0.0, %v3085
      %v3087 = vpop.f32.mrb[0].mxu0
      %v3088 = vpop.f32.mrb[0].mxu0
      %3089 = vdwg.mxu0
      %v3090 = vadd.f32 %v3043, %v3084
      %v3091 = vadd.f32 %v3044, %v3086
      %v3092 = vxor.u32 %v3090, 2147483648
      %v3093 = vxor.u32 %v3091, 2147483648
      %v3094 = vmul.f32 %v3092, 1.442695
      %v3095 = vpow.pop %v3094
      %v3096 = vmul.f32 %v3093, 1.442695
      %v3097 = vpow.pop %v3096
      %v3098 = vadd.f32 %v3095, 1.0
      %v3099 = vadd.f32 %v3097, 1.0
      %v3100 = vrcp.pop %v3098
      %v3101 = vmul.f32 1.0, %v3100
      %v3102 = vrcp.pop %v3099
      %v3103 = vmul.f32 1.0, %v3102
      %v3104 = vtanh.pop %v3091
      %v3106 = vrot.slane %v3029, 6
      %v3108 = vmul.f32 %v3101, %v3106
      %v3109 = vmul.f32 %v3101, %v3104
      %3111 = vrot.lane.b32.xlu0 %v3109, 64
      %v3112 = vpop.permute.xlu0 %3111
      %v3114 = vadd.f32 %v3108, %v3112
      %v3115 = vtanh.pop %v3114
      %v3116 = vmul.f32 %v3103, %v3115
      %v3117 = vpack.c.bf16 %v3116, %v3116
      %3118 = vst.msk [vmem:[%s237 + $0x1c] sm:$0x1] %vm629, %v3117
      %v3120 = vunpack.c.l.b16 %v3117
      %v3121 = vpack.c.b16 %v3120, %v3120
      %v3122 = vrot.slane %v3121, 5
      %3123 = vrot.lane.b32.xlu0 %v3122, 96
      %v3124 = vpop.permute.xlu0 %3123
      %3126 = vst.msk [vmem:[%s244 + $0x20] sm:$0x8] %vm638, %v3124
      %v3127 = vld [vmem:[#allocation2 + $0x70] sm:$0xc]
      %v3128 = vld [vmem:[#allocation2 + $0x78] sm:$0xc]
      %v3130 = vsel %vm559, %v3117, 0
      %3132 = vmatprep.subr.bf16.mxu0 %v544
      %3133 = vmatpush1.bf16.msra.mxu0 %v543
      %3134 = vmatprep.subr.bf16.mxu0 %v546
      %3135 = vmatpush1.bf16.msra.mxu0 %v545
      %3136 = vmatprep.subr.bf16.mxu0 %v548
      %3137 = vmatpush1.bf16.msra.mxu0 %v547
      %3138 = vmatprep.subr.bf16.mxu0 %v550
      %3139 = vmatpush1.bf16.msra.mxu0 %v549
      %3140 = vmatprep.subr.bf16.mxu0 0
      %3141 = vmatpush1.bf16.msra.mxu0 0
      %3142 = vmatprep.subr.bf16.mxu0 0
      %3143 = vmatpush1.bf16.msra.mxu0 0
      %3144 = vmatprep.subr.bf16.mxu0 0
      %3145 = vmatpush1.bf16.msra.mxu0 0
      %3146 = vmatprep.subr.bf16.mxu0 0
      %3147 = vmatpush1.bf16.msra.mxu0 0
      %3148 = vmatprep.subr.bf16.mxu0 0
      %3149 = vmatpush1.bf16.msra.mxu0 0
      %3150 = vmatprep.subr.bf16.mxu0 0
      %3151 = vmatpush1.bf16.msra.mxu0 0
      %3152 = vmatprep.subr.bf16.mxu0 0
      %3153 = vmatpush1.bf16.msra.mxu0 0
      %3154 = vmatprep.subr.bf16.mxu0 0
      %3155 = vmatpush1.bf16.msra.mxu0 0
      %3156 = vmatprep.subr.bf16.mxu0 0
      %3157 = vmatpush1.bf16.msra.mxu0 0
      %3158 = vmatprep.subr.bf16.mxu0 0
      %3159 = vmatpush1.bf16.msra.mxu0 0
      %3160 = vmatprep.subr.bf16.mxu0 0
      %3161 = vmatpush1.bf16.msra.mxu0 0
      %3162 = vmatprep.subr.bf16.mxu0 0
      %3163 = vmatpush1.bf16.msra.mxu0 0
      %3164 = vmatprep.mubr.bf16.mxu0 0
      %3165 = vmatmul.mubr.bf16.gmra.mrb[0].mxu0 %v3130
      %v3166 = vpop.f32.mrb[0].mxu0
      %v3167 = vadd.f32 0.0, %v3166
      %v3168 = vpop.f32.mrb[0].mxu0
      %v3169 = vadd.f32 0.0, %v3168
      %v3170 = vpop.f32.mrb[0].mxu0
      %v3171 = vpop.f32.mrb[0].mxu0
      %3172 = vdwg.mxu0
      %v3175 = vrot.slane %v3167, 6
      %v3176 = vrot.slane %v3169, 6
      %v3179 = vadd.f32 %v3127, %v3175
      %v3180 = vadd.f32 %v3128, %v3176
      %v3181 = vxor.u32 %v3179, 2147483648
      %v3182 = vxor.u32 %v3180, 2147483648
      %v3183 = vmul.f32 %v3181, 1.442695
      %v3184 = vpow.pop %v3183
      %v3185 = vmul.f32 %v3182, 1.442695
      %v3186 = vpow.pop %v3185
      %v3187 = vadd.f32 %v3184, 1.0
      %v3188 = vadd.f32 %v3186, 1.0
      %v3189 = vrcp.pop %v3187
      %v3190 = vmul.f32 1.0, %v3189
      %v3191 = vrcp.pop %v3188
      %v3192 = vmul.f32 1.0, %v3191
      %v3193 = vtanh.pop %v3180
      %v3195 = vrot.slane %v3114, 6
      %v3197 = vmul.f32 %v3190, %v3195
      %v3198 = vmul.f32 %v3190, %v3193
      %3200 = vrot.lane.b32.xlu0 %v3198, 64
      %v3201 = vpop.permute.xlu0 %3200
      %v3203 = vadd.f32 %v3197, %v3201
      %v3204 = vtanh.pop %v3203
      %v3205 = vmul.f32 %v3192, %v3204
      %v3206 = vpack.c.bf16 %v3205, %v3205
      %3207 = vst.msk [vmem:[%s237 + $0x1c] sm:$0x2] %vm720, %v3206
      %v3209 = vunpack.c.l.b16 %v3206
      %v3210 = vpack.c.b16 %v3209, %v3209
      %v3211 = vrot.slane %v3210, 7
      %3212 = vrot.lane.b32.xlu0 %v3211, 96
      %v3213 = vpop.permute.xlu0 %3212
      %3215 = vst.msk [vmem:[%s244 + $0x20] sm:$0x4] %vm729, %v3213
      %v3216 = vld [vmem:[#allocation2 + $0x70] sm:$0x30]
      %v3217 = vld [vmem:[#allocation2 + $0x78] sm:$0x30]
      %v3218 = vrot.slane %v3206, 1
      %v3220 = vsel %vm559, %v3218, 0
      %3222 = vmatprep.subr.bf16.mxu0 %v544
      %3223 = vmatpush1.bf16.msra.mxu0 %v543
      %3224 = vmatprep.subr.bf16.mxu0 %v546
      %3225 = vmatpush1.bf16.msra.mxu0 %v545
      %3226 = vmatprep.subr.bf16.mxu0 %v548
      %3227 = vmatpush1.bf16.msra.mxu0 %v547
      %3228 = vmatprep.subr.bf16.mxu0 %v550
      %3229 = vmatpush1.bf16.msra.mxu0 %v549
      %3230 = vmatprep.subr.bf16.mxu0 0
      %3231 = vmatpush1.bf16.msra.mxu0 0
      %3232 = vmatprep.subr.bf16.mxu0 0
      %3233 = vmatpush1.bf16.msra.mxu0 0
      %3234 = vmatprep.subr.bf16.mxu0 0
      %3235 = vmatpush1.bf16.msra.mxu0 0
      %3236 = vmatprep.subr.bf16.mxu0 0
      %3237 = vmatpush1.bf16.msra.mxu0 0
      %3238 = vmatprep.subr.bf16.mxu0 0
      %3239 = vmatpush1.bf16.msra.mxu0 0
      %3240 = vmatprep.subr.bf16.mxu0 0
      %3241 = vmatpush1.bf16.msra.mxu0 0
      %3242 = vmatprep.subr.bf16.mxu0 0
      %3243 = vmatpush1.bf16.msra.mxu0 0
      %3244 = vmatprep.subr.bf16.mxu0 0
      %3245 = vmatpush1.bf16.msra.mxu0 0
      %3246 = vmatprep.subr.bf16.mxu0 0
      %3247 = vmatpush1.bf16.msra.mxu0 0
      %3248 = vmatprep.subr.bf16.mxu0 0
      %3249 = vmatpush1.bf16.msra.mxu0 0
      %3250 = vmatprep.subr.bf16.mxu0 0
      %3251 = vmatpush1.bf16.msra.mxu0 0
      %3252 = vmatprep.subr.bf16.mxu0 0
      %3253 = vmatpush1.bf16.msra.mxu0 0
      %3254 = vmatprep.mubr.bf16.mxu0 0
      %3255 = vmatmul.mubr.bf16.gmra.mrb[0].mxu0 %v3220
      %v3256 = vpop.f32.mrb[0].mxu0
      %v3257 = vadd.f32 0.0, %v3256
      %v3258 = vpop.f32.mrb[0].mxu0
      %v3259 = vadd.f32 0.0, %v3258
      %v3260 = vpop.f32.mrb[0].mxu0
      %v3261 = vpop.f32.mrb[0].mxu0
      %3262 = vdwg.mxu0
      %v3265 = vrot.slane %v3257, 4
      %v3266 = vrot.slane %v3259, 4
      %v3269 = vadd.f32 %v3216, %v3265
      %v3270 = vadd.f32 %v3217, %v3266
      %v3271 = vxor.u32 %v3269, 2147483648
      %v3272 = vxor.u32 %v3270, 2147483648
      %v3273 = vmul.f32 %v3271, 1.442695
      %v3274 = vpow.pop %v3273
      %v3275 = vmul.f32 %v3272, 1.442695
      %v3276 = vpow.pop %v3275
      %v3277 = vadd.f32 %v3274, 1.0
      %v3278 = vadd.f32 %v3276, 1.0
      %v3279 = vrcp.pop %v3277
      %v3280 = vmul.f32 1.0, %v3279
      %v3281 = vrcp.pop %v3278
      %v3282 = vmul.f32 1.0, %v3281
      %v3283 = vtanh.pop %v3270
      %v3285 = vrot.slane %v3203, 6
      %v3287 = vmul.f32 %v3280, %v3285
      %v3288 = vmul.f32 %v3280, %v3283
      %3290 = vrot.lane.b32.xlu0 %v3288, 64
      %v3291 = vpop.permute.xlu0 %3290
      %v3293 = vadd.f32 %v3287, %v3291
      %v3294 = vtanh.pop %v3293
      %v3295 = vmul.f32 %v3282, %v3294
      %v3296 = vpack.c.bf16 %v3295, %v3295
      %3297 = vst.msk [vmem:[%s237 + $0x1c] sm:$0x4] %vm729, %v3296
      %v3299 = vunpack.c.l.b16 %v3296
      %v3300 = vpack.c.b16 %v3299, %v3299
      %v3301 = vrot.slane %v3300, 5
      %v3302 = vrot.slane %v3301, 4
      %3303 = vrot.lane.b32.xlu0 %v3302, 96
      %v3304 = vpop.permute.xlu0 %3303
      %3306 = vst.msk [vmem:[%s244 + $0x20] sm:$0x2] %vm720, %v3304
      %v3307 = vld [vmem:[#allocation2 + $0x70] sm:$0xc0]
      %v3308 = vld [vmem:[#allocation2 + $0x78] sm:$0xc0]
      %v3309 = vrot.slane %v3296, 2
      %v3311 = vsel %vm559, %v3309, 0
      %3313 = vmatprep.subr.bf16.mxu0 %v544
      %3314 = vmatpush1.bf16.msra.mxu0 %v543
      %3315 = vmatprep.subr.bf16.mxu0 %v546
      %3316 = vmatpush1.bf16.msra.mxu0 %v545
      %3317 = vmatprep.subr.bf16.mxu0 %v548
      %3318 = vmatpush1.bf16.msra.mxu0 %v547
      %3319 = vmatprep.subr.bf16.mxu0 %v550
      %3320 = vmatpush1.bf16.msra.mxu0 %v549
      %3321 = vmatprep.subr.bf16.mxu0 0
      %3322 = vmatpush1.bf16.msra.mxu0 0
      %3323 = vmatprep.subr.bf16.mxu0 0
      %3324 = vmatpush1.bf16.msra.mxu0 0
      %3325 = vmatprep.subr.bf16.mxu0 0
      %3326 = vmatpush1.bf16.msra.mxu0 0
      %3327 = vmatprep.subr.bf16.mxu0 0
      %3328 = vmatpush1.bf16.msra.mxu0 0
      %3329 = vmatprep.subr.bf16.mxu0 0
      %3330 = vmatpush1.bf16.msra.mxu0 0
      %3331 = vmatprep.subr.bf16.mxu0 0
      %3332 = vmatpush1.bf16.msra.mxu0 0
      %3333 = vmatprep.subr.bf16.mxu0 0
      %3334 = vmatpush1.bf16.msra.mxu0 0
      %3335 = vmatprep.subr.bf16.mxu0 0
      %3336 = vmatpush1.bf16.msra.mxu0 0
      %3337 = vmatprep.subr.bf16.mxu0 0
      %3338 = vmatpush1.bf16.msra.mxu0 0
      %3339 = vmatprep.subr.bf16.mxu0 0
      %3340 = vmatpush1.bf16.msra.mxu0 0
      %3341 = vmatprep.subr.bf16.mxu0 0
      %3342 = vmatpush1.bf16.msra.mxu0 0
      %3343 = vmatprep.subr.bf16.mxu0 0
      %3344 = vmatpush1.bf16.msra.mxu0 0
      %3345 = vmatprep.mubr.bf16.mxu0 0
      %3346 = vmatmul.mubr.bf16.gmra.mrb[0].mxu0 %v3311
      %v3347 = vpop.f32.mrb[0].mxu0
      %v3348 = vadd.f32 0.0, %v3347
      %v3349 = vpop.f32.mrb[0].mxu0
      %v3350 = vadd.f32 0.0, %v3349
      %v3351 = vpop.f32.mrb[0].mxu0
      %v3352 = vpop.f32.mrb[0].mxu0
      %3353 = vdwg.mxu0
      %v3356 = vrot.slane %v3348, 2
      %v3357 = vrot.slane %v3350, 2
      %v3360 = vadd.f32 %v3307, %v3356
      %v3361 = vadd.f32 %v3308, %v3357
      %v3362 = vxor.u32 %v3360, 2147483648
      %v3363 = vxor.u32 %v3361, 2147483648
      %v3364 = vmul.f32 %v3362, 1.442695
      %v3365 = vpow.pop %v3364
      %v3366 = vmul.f32 %v3363, 1.442695
      %v3367 = vpow.pop %v3366
      %v3368 = vadd.f32 %v3365, 1.0
      %v3369 = vadd.f32 %v3367, 1.0
      %v3370 = vrcp.pop %v3368
      %v3371 = vmul.f32 1.0, %v3370
      %v3372 = vrcp.pop %v3369
      %v3373 = vmul.f32 1.0, %v3372
      %v3374 = vtanh.pop %v3361
      %v3376 = vrot.slane %v3293, 6
      %v3378 = vmul.f32 %v3371, %v3376
      %v3379 = vmul.f32 %v3371, %v3374
      %3381 = vrot.lane.b32.xlu0 %v3379, 64
      %v3382 = vpop.permute.xlu0 %3381
      %v3384 = vadd.f32 %v3378, %v3382
      %v3385 = vtanh.pop %v3384
      %v3386 = vmul.f32 %v3373, %v3385
      %v3387 = vpack.c.bf16 %v3386, %v3386
      %3388 = vst.msk [vmem:[%s237 + $0x1c] sm:$0x8] %vm638, %v3387
      %v3390 = vunpack.c.l.b16 %v3387
      %v3391 = vpack.c.b16 %v3390, %v3390
      %v3392 = vrot.slane %v3391, 7
      %v3393 = vrot.slane %v3392, 4
      %3394 = vrot.lane.b32.xlu0 %v3393, 96
      %v3395 = vpop.permute.xlu0 %3394
      %3397 = vst.msk [vmem:[%s244 + $0x20] sm:$0x1] %vm629, %v3395
      %v3398 = vld [vmem:[#allocation2 + $0x80] sm:$0x3]
      %v3399 = vld [vmem:[#allocation2 + $0x88] sm:$0x3]
      %v3400 = vrot.slane %v3387, 3
      %v3402 = vsel %vm559, %v3400, 0
      %3404 = vmatprep.subr.bf16.mxu0 %v544
      %3405 = vmatpush1.bf16.msra.mxu0 %v543
      %3406 = vmatprep.subr.bf16.mxu0 %v546
      %3407 = vmatpush1.bf16.msra.mxu0 %v545
      %3408 = vmatprep.subr.bf16.mxu0 %v548
      %3409 = vmatpush1.bf16.msra.mxu0 %v547
      %3410 = vmatprep.subr.bf16.mxu0 %v550
      %3411 = vmatpush1.bf16.msra.mxu0 %v549
      %3412 = vmatprep.subr.bf16.mxu0 0
      %3413 = vmatpush1.bf16.msra.mxu0 0
      %3414 = vmatprep.subr.bf16.mxu0 0
      %3415 = vmatpush1.bf16.msra.mxu0 0
      %3416 = vmatprep.subr.bf16.mxu0 0
      %3417 = vmatpush1.bf16.msra.mxu0 0
      %3418 = vmatprep.subr.bf16.mxu0 0
      %3419 = vmatpush1.bf16.msra.mxu0 0
      %3420 = vmatprep.subr.bf16.mxu0 0
      %3421 = vmatpush1.bf16.msra.mxu0 0
      %3422 = vmatprep.subr.bf16.mxu0 0
      %3423 = vmatpush1.bf16.msra.mxu0 0
      %3424 = vmatprep.subr.bf16.mxu0 0
      %3425 = vmatpush1.bf16.msra.mxu0 0
      %3426 = vmatprep.subr.bf16.mxu0 0
      %3427 = vmatpush1.bf16.msra.mxu0 0
      %3428 = vmatprep.subr.bf16.mxu0 0
      %3429 = vmatpush1.bf16.msra.mxu0 0
      %3430 = vmatprep.subr.bf16.mxu0 0
      %3431 = vmatpush1.bf16.msra.mxu0 0
      %3432 = vmatprep.subr.bf16.mxu0 0
      %3433 = vmatpush1.bf16.msra.mxu0 0
      %3434 = vmatprep.subr.bf16.mxu0 0
      %3435 = vmatpush1.bf16.msra.mxu0 0
      %3436 = vmatprep.mubr.bf16.mxu0 0
      %3437 = vmatmul.mubr.bf16.gmra.mrb[0].mxu0 %v3402
      %v3438 = vpop.f32.mrb[0].mxu0
      %v3439 = vadd.f32 0.0, %v3438
      %v3440 = vpop.f32.mrb[0].mxu0
      %v3441 = vadd.f32 0.0, %v3440
      %v3442 = vpop.f32.mrb[0].mxu0
      %v3443 = vpop.f32.mrb[0].mxu0
      %3444 = vdwg.mxu0
      %v3445 = vadd.f32 %v3398, %v3439
      %v3446 = vadd.f32 %v3399, %v3441
      %v3447 = vxor.u32 %v3445, 2147483648
      %v3448 = vxor.u32 %v3446, 2147483648
      %v3449 = vmul.f32 %v3447, 1.442695
      %v3450 = vpow.pop %v3449
      %v3451 = vmul.f32 %v3448, 1.442695
      %v3452 = vpow.pop %v3451
      %v3453 = vadd.f32 %v3450, 1.0
      %v3454 = vadd.f32 %v3452, 1.0
      %v3455 = vrcp.pop %v3453
      %v3456 = vmul.f32 1.0, %v3455
      %v3457 = vrcp.pop %v3454
      %v3458 = vmul.f32 1.0, %v3457
      %v3459 = vtanh.pop %v3446
      %v3461 = vrot.slane %v3384, 6
      %v3463 = vmul.f32 %v3456, %v3461
      %v3464 = vmul.f32 %v3456, %v3459
      %3466 = vrot.lane.b32.xlu0 %v3464, 64
      %v3467 = vpop.permute.xlu0 %3466
      %v3469 = vadd.f32 %v3463, %v3467
      %v3470 = vtanh.pop %v3469
      %v3471 = vmul.f32 %v3458, %v3470
      %v3472 = vpack.c.bf16 %v3471, %v3471
      %3473 = vst.msk [vmem:[%s237 + $0x20] sm:$0x1] %vm629, %v3472
      %v3475 = vunpack.c.l.b16 %v3472
      %v3476 = vpack.c.b16 %v3475, %v3475
      %v3477 = vrot.slane %v3476, 5
      %3478 = vrot.lane.b32.xlu0 %v3477, 96
      %v3479 = vpop.permute.xlu0 %3478
      %3481 = vst.msk [vmem:[%s244 + $0x1c] sm:$0x8] %vm638, %v3479
      %v3482 = vld [vmem:[#allocation2 + $0x80] sm:$0xc]
      %v3483 = vld [vmem:[#allocation2 + $0x88] sm:$0xc]
      %v3485 = vsel %vm559, %v3472, 0
      %3487 = vmatprep.subr.bf16.mxu0 %v544
      %3488 = vmatpush1.bf16.msra.mxu0 %v543
      %3489 = vmatprep.subr.bf16.mxu0 %v546
      %3490 = vmatpush1.bf16.msra.mxu0 %v545
      %3491 = vmatprep.subr.bf16.mxu0 %v548
      %3492 = vmatpush1.bf16.msra.mxu0 %v547
      %3493 = vmatprep.subr.bf16.mxu0 %v550
      %3494 = vmatpush1.bf16.msra.mxu0 %v549
      %3495 = vmatprep.subr.bf16.mxu0 0
      %3496 = vmatpush1.bf16.msra.mxu0 0
      %3497 = vmatprep.subr.bf16.mxu0 0
      %3498 = vmatpush1.bf16.msra.mxu0 0
      %3499 = vmatprep.subr.bf16.mxu0 0
      %3500 = vmatpush1.bf16.msra.mxu0 0
      %3501 = vmatprep.subr.bf16.mxu0 0
      %3502 = vmatpush1.bf16.msra.mxu0 0
      %3503 = vmatprep.subr.bf16.mxu0 0
      %3504 = vmatpush1.bf16.msra.mxu0 0
      %3505 = vmatprep.subr.bf16.mxu0 0
      %3506 = vmatpush1.bf16.msra.mxu0 0
      %3507 = vmatprep.subr.bf16.mxu0 0
      %3508 = vmatpush1.bf16.msra.mxu0 0
      %3509 = vmatprep.subr.bf16.mxu0 0
      %3510 = vmatpush1.bf16.msra.mxu0 0
      %3511 = vmatprep.subr.bf16.mxu0 0
      %3512 = vmatpush1.bf16.msra.mxu0 0
      %3513 = vmatprep.subr.bf16.mxu0 0
      %3514 = vmatpush1.bf16.msra.mxu0 0
      %3515 = vmatprep.subr.bf16.mxu0 0
      %3516 = vmatpush1.bf16.msra.mxu0 0
      %3517 = vmatprep.subr.bf16.mxu0 0
      %3518 = vmatpush1.bf16.msra.mxu0 0
      %3519 = vmatprep.mubr.bf16.mxu0 0
      %3520 = vmatmul.mubr.bf16.gmra.mrb[0].mxu0 %v3485
      %v3521 = vpop.f32.mrb[0].mxu0
      %v3522 = vadd.f32 0.0, %v3521
      %v3523 = vpop.f32.mrb[0].mxu0
      %v3524 = vadd.f32 0.0, %v3523
      %v3525 = vpop.f32.mrb[0].mxu0
      %v3526 = vpop.f32.mrb[0].mxu0
      %3527 = vdwg.mxu0
      %v3530 = vrot.slane %v3522, 6
      %v3531 = vrot.slane %v3524, 6
      %v3534 = vadd.f32 %v3482, %v3530
      %v3535 = vadd.f32 %v3483, %v3531
      %v3536 = vxor.u32 %v3534, 2147483648
      %v3537 = vxor.u32 %v3535, 2147483648
      %v3538 = vmul.f32 %v3536, 1.442695
      %v3539 = vpow.pop %v3538
      %v3540 = vmul.f32 %v3537, 1.442695
      %v3541 = vpow.pop %v3540
      %v3542 = vadd.f32 %v3539, 1.0
      %v3543 = vadd.f32 %v3541, 1.0
      %v3544 = vrcp.pop %v3542
      %v3545 = vmul.f32 1.0, %v3544
      %v3546 = vrcp.pop %v3543
      %v3547 = vmul.f32 1.0, %v3546
      %v3548 = vtanh.pop %v3535
      %v3550 = vrot.slane %v3469, 6
      %v3552 = vmul.f32 %v3545, %v3550
      %v3553 = vmul.f32 %v3545, %v3548
      %3555 = vrot.lane.b32.xlu0 %v3553, 64
      %v3556 = vpop.permute.xlu0 %3555
      %v3558 = vadd.f32 %v3552, %v3556
      %v3559 = vtanh.pop %v3558
      %v3560 = vmul.f32 %v3547, %v3559
      %v3561 = vpack.c.bf16 %v3560, %v3560
      %3562 = vst.msk [vmem:[%s237 + $0x20] sm:$0x2] %vm720, %v3561
      %v3564 = vunpack.c.l.b16 %v3561
      %v3565 = vpack.c.b16 %v3564, %v3564
      %v3566 = vrot.slane %v3565, 7
      %3567 = vrot.lane.b32.xlu0 %v3566, 96
      %v3568 = vpop.permute.xlu0 %3567
      %3570 = vst.msk [vmem:[%s244 + $0x1c] sm:$0x4] %vm729, %v3568
      %v3571 = vld [vmem:[#allocation2 + $0x80] sm:$0x30]
      %v3572 = vld [vmem:[#allocation2 + $0x88] sm:$0x30]
      %v3573 = vrot.slane %v3561, 1
      %v3575 = vsel %vm559, %v3573, 0
      %3577 = vmatprep.subr.bf16.mxu0 %v544
      %3578 = vmatpush1.bf16.msra.mxu0 %v543
      %3579 = vmatprep.subr.bf16.mxu0 %v546
      %3580 = vmatpush1.bf16.msra.mxu0 %v545
      %3581 = vmatprep.subr.bf16.mxu0 %v548
      %3582 = vmatpush1.bf16.msra.mxu0 %v547
      %3583 = vmatprep.subr.bf16.mxu0 %v550
      %3584 = vmatpush1.bf16.msra.mxu0 %v549
      %3585 = vmatprep.subr.bf16.mxu0 0
      %3586 = vmatpush1.bf16.msra.mxu0 0
      %3587 = vmatprep.subr.bf16.mxu0 0
      %3588 = vmatpush1.bf16.msra.mxu0 0
      %3589 = vmatprep.subr.bf16.mxu0 0
      %3590 = vmatpush1.bf16.msra.mxu0 0
      %3591 = vmatprep.subr.bf16.mxu0 0
      %3592 = vmatpush1.bf16.msra.mxu0 0
      %3593 = vmatprep.subr.bf16.mxu0 0
      %3594 = vmatpush1.bf16.msra.mxu0 0
      %3595 = vmatprep.subr.bf16.mxu0 0
      %3596 = vmatpush1.bf16.msra.mxu0 0
      %3597 = vmatprep.subr.bf16.mxu0 0
      %3598 = vmatpush1.bf16.msra.mxu0 0
      %3599 = vmatprep.subr.bf16.mxu0 0
      %3600 = vmatpush1.bf16.msra.mxu0 0
      %3601 = vmatprep.subr.bf16.mxu0 0
      %3602 = vmatpush1.bf16.msra.mxu0 0
      %3603 = vmatprep.subr.bf16.mxu0 0
      %3604 = vmatpush1.bf16.msra.mxu0 0
      %3605 = vmatprep.subr.bf16.mxu0 0
      %3606 = vmatpush1.bf16.msra.mxu0 0
      %3607 = vmatprep.subr.bf16.mxu0 0
      %3608 = vmatpush1.bf16.msra.mxu0 0
      %3609 = vmatprep.mubr.bf16.mxu0 0
      %3610 = vmatmul.mubr.bf16.gmra.mrb[0].mxu0 %v3575
      %v3611 = vpop.f32.mrb[0].mxu0
      %v3612 = vadd.f32 0.0, %v3611
      %v3613 = vpop.f32.mrb[0].mxu0
      %v3614 = vadd.f32 0.0, %v3613
      %v3615 = vpop.f32.mrb[0].mxu0
      %v3616 = vpop.f32.mrb[0].mxu0
      %3617 = vdwg.mxu0
      %v3620 = vrot.slane %v3612, 4
      %v3621 = vrot.slane %v3614, 4
      %v3624 = vadd.f32 %v3571, %v3620
      %v3625 = vadd.f32 %v3572, %v3621
      %v3626 = vxor.u32 %v3624, 2147483648
      %v3627 = vxor.u32 %v3625, 2147483648
      %v3628 = vmul.f32 %v3626, 1.442695
      %v3629 = vpow.pop %v3628
      %v3630 = vmul.f32 %v3627, 1.442695
      %v3631 = vpow.pop %v3630
      %v3632 = vadd.f32 %v3629, 1.0
      %v3633 = vadd.f32 %v3631, 1.0
      %v3634 = vrcp.pop %v3632
      %v3635 = vmul.f32 1.0, %v3634
      %v3636 = vrcp.pop %v3633
      %v3637 = vmul.f32 1.0, %v3636
      %v3638 = vtanh.pop %v3625
      %v3640 = vrot.slane %v3558, 6
      %v3642 = vmul.f32 %v3635, %v3640
      %v3643 = vmul.f32 %v3635, %v3638
      %3645 = vrot.lane.b32.xlu0 %v3643, 64
      %v3646 = vpop.permute.xlu0 %3645
      %v3648 = vadd.f32 %v3642, %v3646
      %v3649 = vtanh.pop %v3648
      %v3650 = vmul.f32 %v3637, %v3649
      %v3651 = vpack.c.bf16 %v3650, %v3650
      %3652 = vst.msk [vmem:[%s237 + $0x20] sm:$0x4] %vm729, %v3651
      %v3654 = vunpack.c.l.b16 %v3651
      %v3655 = vpack.c.b16 %v3654, %v3654
      %v3656 = vrot.slane %v3655, 5
      %v3657 = vrot.slane %v3656, 4
      %3658 = vrot.lane.b32.xlu0 %v3657, 96
      %v3659 = vpop.permute.xlu0 %3658
      %3661 = vst.msk [vmem:[%s244 + $0x1c] sm:$0x2] %vm720, %v3659
      %v3662 = vld [vmem:[#allocation2 + $0x80] sm:$0xc0]
      %v3663 = vld [vmem:[#allocation2 + $0x88] sm:$0xc0]
      %v3664 = vrot.slane %v3651, 2
      %v3666 = vsel %vm559, %v3664, 0
      %3668 = vmatprep.subr.bf16.mxu0 %v544
      %3669 = vmatpush1.bf16.msra.mxu0 %v543
      %3670 = vmatprep.subr.bf16.mxu0 %v546
      %3671 = vmatpush1.bf16.msra.mxu0 %v545
      %3672 = vmatprep.subr.bf16.mxu0 %v548
      %3673 = vmatpush1.bf16.msra.mxu0 %v547
      %3674 = vmatprep.subr.bf16.mxu0 %v550
      %3675 = vmatpush1.bf16.msra.mxu0 %v549
      %3676 = vmatprep.subr.bf16.mxu0 0
      %3677 = vmatpush1.bf16.msra.mxu0 0
      %3678 = vmatprep.subr.bf16.mxu0 0
      %3679 = vmatpush1.bf16.msra.mxu0 0
      %3680 = vmatprep.subr.bf16.mxu0 0
      %3681 = vmatpush1.bf16.msra.mxu0 0
      %3682 = vmatprep.subr.bf16.mxu0 0
      %3683 = vmatpush1.bf16.msra.mxu0 0
      %3684 = vmatprep.subr.bf16.mxu0 0
      %3685 = vmatpush1.bf16.msra.mxu0 0
      %3686 = vmatprep.subr.bf16.mxu0 0
      %3687 = vmatpush1.bf16.msra.mxu0 0
      %3688 = vmatprep.subr.bf16.mxu0 0
      %3689 = vmatpush1.bf16.msra.mxu0 0
      %3690 = vmatprep.subr.bf16.mxu0 0
      %3691 = vmatpush1.bf16.msra.mxu0 0
      %3692 = vmatprep.subr.bf16.mxu0 0
      %3693 = vmatpush1.bf16.msra.mxu0 0
      %3694 = vmatprep.subr.bf16.mxu0 0
      %3695 = vmatpush1.bf16.msra.mxu0 0
      %3696 = vmatprep.subr.bf16.mxu0 0
      %3697 = vmatpush1.bf16.msra.mxu0 0
      %3698 = vmatprep.subr.bf16.mxu0 0
      %3699 = vmatpush1.bf16.msra.mxu0 0
      %3700 = vmatprep.mubr.bf16.mxu0 0
      %3701 = vmatmul.mubr.bf16.gmra.mrb[0].mxu0 %v3666
      %v3702 = vpop.f32.mrb[0].mxu0
      %v3703 = vadd.f32 0.0, %v3702
      %v3704 = vpop.f32.mrb[0].mxu0
      %v3705 = vadd.f32 0.0, %v3704
      %v3706 = vpop.f32.mrb[0].mxu0
      %v3707 = vpop.f32.mrb[0].mxu0
      %3708 = vdwg.mxu0
      %v3711 = vrot.slane %v3703, 2
      %v3712 = vrot.slane %v3705, 2
      %v3715 = vadd.f32 %v3662, %v3711
      %v3716 = vadd.f32 %v3663, %v3712
      %v3717 = vxor.u32 %v3715, 2147483648
      %v3718 = vxor.u32 %v3716, 2147483648
      %v3719 = vmul.f32 %v3717, 1.442695
      %v3720 = vpow.pop %v3719
      %v3721 = vmul.f32 %v3718, 1.442695
      %v3722 = vpow.pop %v3721
      %v3723 = vadd.f32 %v3720, 1.0
      %v3724 = vadd.f32 %v3722, 1.0
      %v3725 = vrcp.pop %v3723
      %v3726 = vmul.f32 1.0, %v3725
      %v3727 = vrcp.pop %v3724
      %v3728 = vmul.f32 1.0, %v3727
      %v3729 = vtanh.pop %v3716
      %v3731 = vrot.slane %v3648, 6
      %v3733 = vmul.f32 %v3726, %v3731
      %v3734 = vmul.f32 %v3726, %v3729
      %3736 = vrot.lane.b32.xlu0 %v3734, 64
      %v3737 = vpop.permute.xlu0 %3736
      %v3739 = vadd.f32 %v3733, %v3737
      %v3740 = vtanh.pop %v3739
      %v3741 = vmul.f32 %v3728, %v3740
      %v3742 = vpack.c.bf16 %v3741, %v3741
      %3743 = vst.msk [vmem:[%s237 + $0x20] sm:$0x8] %vm638, %v3742
      %v3745 = vunpack.c.l.b16 %v3742
      %v3746 = vpack.c.b16 %v3745, %v3745
      %v3747 = vrot.slane %v3746, 7
      %v3748 = vrot.slane %v3747, 4
      %3749 = vrot.lane.b32.xlu0 %v3748, 96
      %v3750 = vpop.permute.xlu0 %3749
      %3752 = vst.msk [vmem:[%s244 + $0x1c] sm:$0x1] %vm629, %v3750
      %v3753 = vld [vmem:[#allocation2 + $0x90] sm:$0x3]
      %v3754 = vld [vmem:[#allocation2 + $0x98] sm:$0x3]
      %v3755 = vrot.slane %v3742, 3
      %v3757 = vsel %vm559, %v3755, 0
      %3759 = vmatprep.subr.bf16.mxu0 %v544
      %3760 = vmatpush1.bf16.msra.mxu0 %v543
      %3761 = vmatprep.subr.bf16.mxu0 %v546
      %3762 = vmatpush1.bf16.msra.mxu0 %v545
      %3763 = vmatprep.subr.bf16.mxu0 %v548
      %3764 = vmatpush1.bf16.msra.mxu0 %v547
      %3765 = vmatprep.subr.bf16.mxu0 %v550
      %3766 = vmatpush1.bf16.msra.mxu0 %v549
      %3767 = vmatprep.subr.bf16.mxu0 0
      %3768 = vmatpush1.bf16.msra.mxu0 0
      %3769 = vmatprep.subr.bf16.mxu0 0
      %3770 = vmatpush1.bf16.msra.mxu0 0
      %3771 = vmatprep.subr.bf16.mxu0 0
      %3772 = vmatpush1.bf16.msra.mxu0 0
      %3773 = vmatprep.subr.bf16.mxu0 0
      %3774 = vmatpush1.bf16.msra.mxu0 0
      %3775 = vmatprep.subr.bf16.mxu0 0
      %3776 = vmatpush1.bf16.msra.mxu0 0
      %3777 = vmatprep.subr.bf16.mxu0 0
      %3778 = vmatpush1.bf16.msra.mxu0 0
      %3779 = vmatprep.subr.bf16.mxu0 0
      %3780 = vmatpush1.bf16.msra.mxu0 0
      %3781 = vmatprep.subr.bf16.mxu0 0
      %3782 = vmatpush1.bf16.msra.mxu0 0
      %3783 = vmatprep.subr.bf16.mxu0 0
      %3784 = vmatpush1.bf16.msra.mxu0 0
      %3785 = vmatprep.subr.bf16.mxu0 0
      %3786 = vmatpush1.bf16.msra.mxu0 0
      %3787 = vmatprep.subr.bf16.mxu0 0
      %3788 = vmatpush1.bf16.msra.mxu0 0
      %3789 = vmatprep.subr.bf16.mxu0 0
      %3790 = vmatpush1.bf16.msra.mxu0 0
      %3791 = vmatprep.mubr.bf16.mxu0 0
      %3792 = vmatmul.mubr.bf16.gmra.mrb[0].mxu0 %v3757
      %v3793 = vpop.f32.mrb[0].mxu0
      %v3794 = vadd.f32 0.0, %v3793
      %v3795 = vpop.f32.mrb[0].mxu0
      %v3796 = vadd.f32 0.0, %v3795
      %v3797 = vpop.f32.mrb[0].mxu0
      %v3798 = vpop.f32.mrb[0].mxu0
      %3799 = vdwg.mxu0
      %v3800 = vadd.f32 %v3753, %v3794
      %v3801 = vadd.f32 %v3754, %v3796
      %v3802 = vxor.u32 %v3800, 2147483648
      %v3803 = vxor.u32 %v3801, 2147483648
      %v3804 = vmul.f32 %v3802, 1.442695
      %v3805 = vpow.pop %v3804
      %v3806 = vmul.f32 %v3803, 1.442695
      %v3807 = vpow.pop %v3806
      %v3808 = vadd.f32 %v3805, 1.0
      %v3809 = vadd.f32 %v3807, 1.0
      %v3810 = vrcp.pop %v3808
      %v3811 = vmul.f32 1.0, %v3810
      %v3812 = vrcp.pop %v3809
      %v3813 = vmul.f32 1.0, %v3812
      %v3814 = vtanh.pop %v3801
      %v3816 = vrot.slane %v3739, 6
      %v3818 = vmul.f32 %v3811, %v3816
      %v3819 = vmul.f32 %v3811, %v3814
      %3821 = vrot.lane.b32.xlu0 %v3819, 64
      %v3822 = vpop.permute.xlu0 %3821
      %v3824 = vadd.f32 %v3818, %v3822
      %v3825 = vtanh.pop %v3824
      %v3826 = vmul.f32 %v3813, %v3825
      %v3827 = vpack.c.bf16 %v3826, %v3826
      %3828 = vst.msk [vmem:[%s237 + $0x24] sm:$0x1] %vm629, %v3827
      %v3830 = vunpack.c.l.b16 %v3827
      %v3831 = vpack.c.b16 %v3830, %v3830
      %v3832 = vrot.slane %v3831, 5
      %3833 = vrot.lane.b32.xlu0 %v3832, 96
      %v3834 = vpop.permute.xlu0 %3833
      %3836 = vst.msk [vmem:[%s244 + $0x18] sm:$0x8] %vm638, %v3834
      %v3837 = vld [vmem:[#allocation2 + $0x90] sm:$0xc]
      %v3838 = vld [vmem:[#allocation2 + $0x98] sm:$0xc]
      %v3840 = vsel %vm559, %v3827, 0
      %3842 = vmatprep.subr.bf16.mxu0 %v544
      %3843 = vmatpush1.bf16.msra.mxu0 %v543
      %3844 = vmatprep.subr.bf16.mxu0 %v546
      %3845 = vmatpush1.bf16.msra.mxu0 %v545
      %3846 = vmatprep.subr.bf16.mxu0 %v548
      %3847 = vmatpush1.bf16.msra.mxu0 %v547
      %3848 = vmatprep.subr.bf16.mxu0 %v550
      %3849 = vmatpush1.bf16.msra.mxu0 %v549
      %3850 = vmatprep.subr.bf16.mxu0 0
      %3851 = vmatpush1.bf16.msra.mxu0 0
      %3852 = vmatprep.subr.bf16.mxu0 0
      %3853 = vmatpush1.bf16.msra.mxu0 0
      %3854 = vmatprep.subr.bf16.mxu0 0
      %3855 = vmatpush1.bf16.msra.mxu0 0
      %3856 = vmatprep.subr.bf16.mxu0 0
      %3857 = vmatpush1.bf16.msra.mxu0 0
      %3858 = vmatprep.subr.bf16.mxu0 0
      %3859 = vmatpush1.bf16.msra.mxu0 0
      %3860 = vmatprep.subr.bf16.mxu0 0
      %3861 = vmatpush1.bf16.msra.mxu0 0
      %3862 = vmatprep.subr.bf16.mxu0 0
      %3863 = vmatpush1.bf16.msra.mxu0 0
      %3864 = vmatprep.subr.bf16.mxu0 0
      %3865 = vmatpush1.bf16.msra.mxu0 0
      %3866 = vmatprep.subr.bf16.mxu0 0
      %3867 = vmatpush1.bf16.msra.mxu0 0
      %3868 = vmatprep.subr.bf16.mxu0 0
      %3869 = vmatpush1.bf16.msra.mxu0 0
      %3870 = vmatprep.subr.bf16.mxu0 0
      %3871 = vmatpush1.bf16.msra.mxu0 0
      %3872 = vmatprep.subr.bf16.mxu0 0
      %3873 = vmatpush1.bf16.msra.mxu0 0
      %3874 = vmatprep.mubr.bf16.mxu0 0
      %3875 = vmatmul.mubr.bf16.gmra.mrb[0].mxu0 %v3840
      %v3876 = vpop.f32.mrb[0].mxu0
      %v3877 = vadd.f32 0.0, %v3876
      %v3878 = vpop.f32.mrb[0].mxu0
      %v3879 = vadd.f32 0.0, %v3878
      %v3880 = vpop.f32.mrb[0].mxu0
      %v3881 = vpop.f32.mrb[0].mxu0
      %3882 = vdwg.mxu0
      %v3885 = vrot.slane %v3877, 6
      %v3886 = vrot.slane %v3879, 6
      %v3889 = vadd.f32 %v3837, %v3885
      %v3890 = vadd.f32 %v3838, %v3886
      %v3891 = vxor.u32 %v3889, 2147483648
      %v3892 = vxor.u32 %v3890, 2147483648
      %v3893 = vmul.f32 %v3891, 1.442695
      %v3894 = vpow.pop %v3893
      %v3895 = vmul.f32 %v3892, 1.442695
      %v3896 = vpow.pop %v3895
      %v3897 = vadd.f32 %v3894, 1.0
      %v3898 = vadd.f32 %v3896, 1.0
      %v3899 = vrcp.pop %v3897
      %v3900 = vmul.f32 1.0, %v3899
      %v3901 = vrcp.pop %v3898
      %v3902 = vmul.f32 1.0, %v3901
      %v3903 = vtanh.pop %v3890
      %v3905 = vrot.slane %v3824, 6
      %v3907 = vmul.f32 %v3900, %v3905
      %v3908 = vmul.f32 %v3900, %v3903
      %3910 = vrot.lane.b32.xlu0 %v3908, 64
      %v3911 = vpop.permute.xlu0 %3910
      %v3913 = vadd.f32 %v3907, %v3911
      %v3914 = vtanh.pop %v3913
      %v3915 = vmul.f32 %v3902, %v3914
      %v3916 = vpack.c.bf16 %v3915, %v3915
      %3917 = vst.msk [vmem:[%s237 + $0x24] sm:$0x2] %vm720, %v3916
      %v3919 = vunpack.c.l.b16 %v3916
      %v3920 = vpack.c.b16 %v3919, %v3919
      %v3921 = vrot.slane %v3920, 7
      %3922 = vrot.lane.b32.xlu0 %v3921, 96
      %v3923 = vpop.permute.xlu0 %3922
      %3925 = vst.msk [vmem:[%s244 + $0x18] sm:$0x4] %vm729, %v3923
      %v3926 = vld [vmem:[#allocation2 + $0x90] sm:$0x30]
      %v3927 = vld [vmem:[#allocation2 + $0x98] sm:$0x30]
      %v3928 = vrot.slane %v3916, 1
      %v3930 = vsel %vm559, %v3928, 0
      %3932 = vmatprep.subr.bf16.mxu0 %v544
      %3933 = vmatpush1.bf16.msra.mxu0 %v543
      %3934 = vmatprep.subr.bf16.mxu0 %v546
      %3935 = vmatpush1.bf16.msra.mxu0 %v545
      %3936 = vmatprep.subr.bf16.mxu0 %v548
      %3937 = vmatpush1.bf16.msra.mxu0 %v547
      %3938 = vmatprep.subr.bf16.mxu0 %v550
      %3939 = vmatpush1.bf16.msra.mxu0 %v549
      %3940 = vmatprep.subr.bf16.mxu0 0
      %3941 = vmatpush1.bf16.msra.mxu0 0
      %3942 = vmatprep.subr.bf16.mxu0 0
      %3943 = vmatpush1.bf16.msra.mxu0 0
      %3944 = vmatprep.subr.bf16.mxu0 0
      %3945 = vmatpush1.bf16.msra.mxu0 0
      %3946 = vmatprep.subr.bf16.mxu0 0
      %3947 = vmatpush1.bf16.msra.mxu0 0
      %3948 = vmatprep.subr.bf16.mxu0 0
      %3949 = vmatpush1.bf16.msra.mxu0 0
      %3950 = vmatprep.subr.bf16.mxu0 0
      %3951 = vmatpush1.bf16.msra.mxu0 0
      %3952 = vmatprep.subr.bf16.mxu0 0
      %3953 = vmatpush1.bf16.msra.mxu0 0
      %3954 = vmatprep.subr.bf16.mxu0 0
      %3955 = vmatpush1.bf16.msra.mxu0 0
      %3956 = vmatprep.subr.bf16.mxu0 0
      %3957 = vmatpush1.bf16.msra.mxu0 0
      %3958 = vmatprep.subr.bf16.mxu0 0
      %3959 = vmatpush1.bf16.msra.mxu0 0
      %3960 = vmatprep.subr.bf16.mxu0 0
      %3961 = vmatpush1.bf16.msra.mxu0 0
      %3962 = vmatprep.subr.bf16.mxu0 0
      %3963 = vmatpush1.bf16.msra.mxu0 0
      %3964 = vmatprep.mubr.bf16.mxu0 0
      %3965 = vmatmul.mubr.bf16.gmra.mrb[0].mxu0 %v3930
      %v3966 = vpop.f32.mrb[0].mxu0
      %v3967 = vadd.f32 0.0, %v3966
      %v3968 = vpop.f32.mrb[0].mxu0
      %v3969 = vadd.f32 0.0, %v3968
      %v3970 = vpop.f32.mrb[0].mxu0
      %v3971 = vpop.f32.mrb[0].mxu0
      %3972 = vdwg.mxu0
      %v3975 = vrot.slane %v3967, 4
      %v3976 = vrot.slane %v3969, 4
      %v3979 = vadd.f32 %v3926, %v3975
      %v3980 = vadd.f32 %v3927, %v3976
      %v3981 = vxor.u32 %v3979, 2147483648
      %v3982 = vxor.u32 %v3980, 2147483648
      %v3983 = vmul.f32 %v3981, 1.442695
      %v3984 = vpow.pop %v3983
      %v3985 = vmul.f32 %v3982, 1.442695
      %v3986 = vpow.pop %v3985
      %v3987 = vadd.f32 %v3984, 1.0
      %v3988 = vadd.f32 %v3986, 1.0
      %v3989 = vrcp.pop %v3987
      %v3990 = vmul.f32 1.0, %v3989
      %v3991 = vrcp.pop %v3988
      %v3992 = vmul.f32 1.0, %v3991
      %v3993 = vtanh.pop %v3980
      %v3995 = vrot.slane %v3913, 6
      %v3997 = vmul.f32 %v3990, %v3995
      %v3998 = vmul.f32 %v3990, %v3993
      %4000 = vrot.lane.b32.xlu0 %v3998, 64
      %v4001 = vpop.permute.xlu0 %4000
      %v4003 = vadd.f32 %v3997, %v4001
      %v4004 = vtanh.pop %v4003
      %v4005 = vmul.f32 %v3992, %v4004
      %v4006 = vpack.c.bf16 %v4005, %v4005
      %4007 = vst.msk [vmem:[%s237 + $0x24] sm:$0x4] %vm729, %v4006
      %v4009 = vunpack.c.l.b16 %v4006
      %v4010 = vpack.c.b16 %v4009, %v4009
      %v4011 = vrot.slane %v4010, 5
      %v4012 = vrot.slane %v4011, 4
      %4013 = vrot.lane.b32.xlu0 %v4012, 96
      %v4014 = vpop.permute.xlu0 %4013
      %4016 = vst.msk [vmem:[%s244 + $0x18] sm:$0x2] %vm720, %v4014
      %v4017 = vld [vmem:[#allocation2 + $0x90] sm:$0xc0]
      %v4018 = vld [vmem:[#allocation2 + $0x98] sm:$0xc0]
      %v4019 = vrot.slane %v4006, 2
      %v4021 = vsel %vm559, %v4019, 0
      %4023 = vmatprep.subr.bf16.mxu0 %v544
      %4024 = vmatpush1.bf16.msra.mxu0 %v543
      %4025 = vmatprep.subr.bf16.mxu0 %v546
      %4026 = vmatpush1.bf16.msra.mxu0 %v545
      %4027 = vmatprep.subr.bf16.mxu0 %v548
      %4028 = vmatpush1.bf16.msra.mxu0 %v547
      %4029 = vmatprep.subr.bf16.mxu0 %v550
      %4030 = vmatpush1.bf16.msra.mxu0 %v549
      %4031 = vmatprep.subr.bf16.mxu0 0
      %4032 = vmatpush1.bf16.msra.mxu0 0
      %4033 = vmatprep.subr.bf16.mxu0 0
      %4034 = vmatpush1.bf16.msra.mxu0 0
      %4035 = vmatprep.subr.bf16.mxu0 0
      %4036 = vmatpush1.bf16.msra.mxu0 0
      %4037 = vmatprep.subr.bf16.mxu0 0
      %4038 = vmatpush1.bf16.msra.mxu0 0
      %4039 = vmatprep.subr.bf16.mxu0 0
      %4040 = vmatpush1.bf16.msra.mxu0 0
      %4041 = vmatprep.subr.bf16.mxu0 0
      %4042 = vmatpush1.bf16.msra.mxu0 0
      %4043 = vmatprep.subr.bf16.mxu0 0
      %4044 = vmatpush1.bf16.msra.mxu0 0
      %4045 = vmatprep.subr.bf16.mxu0 0
      %4046 = vmatpush1.bf16.msra.mxu0 0
      %4047 = vmatprep.subr.bf16.mxu0 0
      %4048 = vmatpush1.bf16.msra.mxu0 0
      %4049 = vmatprep.subr.bf16.mxu0 0
      %4050 = vmatpush1.bf16.msra.mxu0 0
      %4051 = vmatprep.subr.bf16.mxu0 0
      %4052 = vmatpush1.bf16.msra.mxu0 0
      %4053 = vmatprep.subr.bf16.mxu0 0
      %4054 = vmatpush1.bf16.msra.mxu0 0
      %4055 = vmatprep.mubr.bf16.mxu0 0
      %4056 = vmatmul.mubr.bf16.gmra.mrb[0].mxu0 %v4021
      %v4057 = vpop.f32.mrb[0].mxu0
      %v4058 = vadd.f32 0.0, %v4057
      %v4059 = vpop.f32.mrb[0].mxu0
      %v4060 = vadd.f32 0.0, %v4059
      %v4061 = vpop.f32.mrb[0].mxu0
      %v4062 = vpop.f32.mrb[0].mxu0
      %4063 = vdwg.mxu0
      %v4066 = vrot.slane %v4058, 2
      %v4067 = vrot.slane %v4060, 2
      %v4070 = vadd.f32 %v4017, %v4066
      %v4071 = vadd.f32 %v4018, %v4067
      %v4072 = vxor.u32 %v4070, 2147483648
      %v4073 = vxor.u32 %v4071, 2147483648
      %v4074 = vmul.f32 %v4072, 1.442695
      %v4075 = vpow.pop %v4074
      %v4076 = vmul.f32 %v4073, 1.442695
      %v4077 = vpow.pop %v4076
      %v4078 = vadd.f32 %v4075, 1.0
      %v4079 = vadd.f32 %v4077, 1.0
      %v4080 = vrcp.pop %v4078
      %v4081 = vmul.f32 1.0, %v4080
      %v4082 = vrcp.pop %v4079
      %v4083 = vmul.f32 1.0, %v4082
      %v4084 = vtanh.pop %v4071
      %v4086 = vrot.slane %v4003, 6
      %v4088 = vmul.f32 %v4081, %v4086
      %v4089 = vmul.f32 %v4081, %v4084
      %4091 = vrot.lane.b32.xlu0 %v4089, 64
      %v4092 = vpop.permute.xlu0 %4091
      %v4094 = vadd.f32 %v4088, %v4092
      %v4095 = vtanh.pop %v4094
      %v4096 = vmul.f32 %v4083, %v4095
      %v4097 = vpack.c.bf16 %v4096, %v4096
      %4098 = vst.msk [vmem:[%s237 + $0x24] sm:$0x8] %vm638, %v4097
      %v4100 = vunpack.c.l.b16 %v4097
      %v4101 = vpack.c.b16 %v4100, %v4100
      %v4102 = vrot.slane %v4101, 7
      %v4103 = vrot.slane %v4102, 4
      %4104 = vrot.lane.b32.xlu0 %v4103, 96
      %v4105 = vpop.permute.xlu0 %4104
      %4107 = vst.msk [vmem:[%s244 + $0x18] sm:$0x1] %vm629, %v4105
      %v4108 = vld [vmem:[#allocation2 + $0xa0] sm:$0x3]
      %v4109 = vld [vmem:[#allocation2 + $0xa8] sm:$0x3]
      %v4110 = vrot.slane %v4097, 3
      %v4112 = vsel %vm559, %v4110, 0
      %4114 = vmatprep.subr.bf16.mxu0 %v544
      %4115 = vmatpush1.bf16.msra.mxu0 %v543
      %4116 = vmatprep.subr.bf16.mxu0 %v546
      %4117 = vmatpush1.bf16.msra.mxu0 %v545
      %4118 = vmatprep.subr.bf16.mxu0 %v548
      %4119 = vmatpush1.bf16.msra.mxu0 %v547
      %4120 = vmatprep.subr.bf16.mxu0 %v550
      %4121 = vmatpush1.bf16.msra.mxu0 %v549
      %4122 = vmatprep.subr.bf16.mxu0 0
      %4123 = vmatpush1.bf16.msra.mxu0 0
      %4124 = vmatprep.subr.bf16.mxu0 0
      %4125 = vmatpush1.bf16.msra.mxu0 0
      %4126 = vmatprep.subr.bf16.mxu0 0
      %4127 = vmatpush1.bf16.msra.mxu0 0
      %4128 = vmatprep.subr.bf16.mxu0 0
      %4129 = vmatpush1.bf16.msra.mxu0 0
      %4130 = vmatprep.subr.bf16.mxu0 0
      %4131 = vmatpush1.bf16.msra.mxu0 0
      %4132 = vmatprep.subr.bf16.mxu0 0
      %4133 = vmatpush1.bf16.msra.mxu0 0
      %4134 = vmatprep.subr.bf16.mxu0 0
      %4135 = vmatpush1.bf16.msra.mxu0 0
      %4136 = vmatprep.subr.bf16.mxu0 0
      %4137 = vmatpush1.bf16.msra.mxu0 0
      %4138 = vmatprep.subr.bf16.mxu0 0
      %4139 = vmatpush1.bf16.msra.mxu0 0
      %4140 = vmatprep.subr.bf16.mxu0 0
      %4141 = vmatpush1.bf16.msra.mxu0 0
      %4142 = vmatprep.subr.bf16.mxu0 0
      %4143 = vmatpush1.bf16.msra.mxu0 0
      %4144 = vmatprep.subr.bf16.mxu0 0
      %4145 = vmatpush1.bf16.msra.mxu0 0
      %4146 = vmatprep.mubr.bf16.mxu0 0
      %4147 = vmatmul.mubr.bf16.gmra.mrb[0].mxu0 %v4112
      %v4148 = vpop.f32.mrb[0].mxu0
      %v4149 = vadd.f32 0.0, %v4148
      %v4150 = vpop.f32.mrb[0].mxu0
      %v4151 = vadd.f32 0.0, %v4150
      %v4152 = vpop.f32.mrb[0].mxu0
      %v4153 = vpop.f32.mrb[0].mxu0
      %4154 = vdwg.mxu0
      %v4155 = vadd.f32 %v4108, %v4149
      %v4156 = vadd.f32 %v4109, %v4151
      %v4157 = vxor.u32 %v4155, 2147483648
      %v4158 = vxor.u32 %v4156, 2147483648
      %v4159 = vmul.f32 %v4157, 1.442695
      %v4160 = vpow.pop %v4159
      %v4161 = vmul.f32 %v4158, 1.442695
      %v4162 = vpow.pop %v4161
      %v4163 = vadd.f32 %v4160, 1.0
      %v4164 = vadd.f32 %v4162, 1.0
      %v4165 = vrcp.pop %v4163
      %v4166 = vmul.f32 1.0, %v4165
      %v4167 = vrcp.pop %v4164
      %v4168 = vmul.f32 1.0, %v4167
      %v4169 = vtanh.pop %v4156
      %v4171 = vrot.slane %v4094, 6
      %v4173 = vmul.f32 %v4166, %v4171
      %v4174 = vmul.f32 %v4166, %v4169
      %4176 = vrot.lane.b32.xlu0 %v4174, 64
      %v4177 = vpop.permute.xlu0 %4176
      %v4179 = vadd.f32 %v4173, %v4177
      %v4180 = vtanh.pop %v4179
      %v4181 = vmul.f32 %v4168, %v4180
      %v4182 = vpack.c.bf16 %v4181, %v4181
      %4183 = vst.msk [vmem:[%s237 + $0x28] sm:$0x1] %vm629, %v4182
      %v4185 = vunpack.c.l.b16 %v4182
      %v4186 = vpack.c.b16 %v4185, %v4185
      %v4187 = vrot.slane %v4186, 5
      %4188 = vrot.lane.b32.xlu0 %v4187, 96
      %v4189 = vpop.permute.xlu0 %4188
      %4191 = vst.msk [vmem:[%s244 + $0x14] sm:$0x8] %vm638, %v4189
      %v4192 = vld [vmem:[#allocation2 + $0xa0] sm:$0xc]
      %v4193 = vld [vmem:[#allocation2 + $0xa8] sm:$0xc]
      %v4195 = vsel %vm559, %v4182, 0
      %4197 = vmatprep.subr.bf16.mxu0 %v544
      %4198 = vmatpush1.bf16.msra.mxu0 %v543
      %4199 = vmatprep.subr.bf16.mxu0 %v546
      %4200 = vmatpush1.bf16.msra.mxu0 %v545
      %4201 = vmatprep.subr.bf16.mxu0 %v548
      %4202 = vmatpush1.bf16.msra.mxu0 %v547
      %4203 = vmatprep.subr.bf16.mxu0 %v550
      %4204 = vmatpush1.bf16.msra.mxu0 %v549
      %4205 = vmatprep.subr.bf16.mxu0 0
      %4206 = vmatpush1.bf16.msra.mxu0 0
      %4207 = vmatprep.subr.bf16.mxu0 0
      %4208 = vmatpush1.bf16.msra.mxu0 0
      %4209 = vmatprep.subr.bf16.mxu0 0
      %4210 = vmatpush1.bf16.msra.mxu0 0
      %4211 = vmatprep.subr.bf16.mxu0 0
      %4212 = vmatpush1.bf16.msra.mxu0 0
      %4213 = vmatprep.subr.bf16.mxu0 0
      %4214 = vmatpush1.bf16.msra.mxu0 0
      %4215 = vmatprep.subr.bf16.mxu0 0
      %4216 = vmatpush1.bf16.msra.mxu0 0
      %4217 = vmatprep.subr.bf16.mxu0 0
      %4218 = vmatpush1.bf16.msra.mxu0 0
      %4219 = vmatprep.subr.bf16.mxu0 0
      %4220 = vmatpush1.bf16.msra.mxu0 0
      %4221 = vmatprep.subr.bf16.mxu0 0
      %4222 = vmatpush1.bf16.msra.mxu0 0
      %4223 = vmatprep.subr.bf16.mxu0 0
      %4224 = vmatpush1.bf16.msra.mxu0 0
      %4225 = vmatprep.subr.bf16.mxu0 0
      %4226 = vmatpush1.bf16.msra.mxu0 0
      %4227 = vmatprep.subr.bf16.mxu0 0
      %4228 = vmatpush1.bf16.msra.mxu0 0
      %4229 = vmatprep.mubr.bf16.mxu0 0
      %4230 = vmatmul.mubr.bf16.gmra.mrb[0].mxu0 %v4195
      %v4231 = vpop.f32.mrb[0].mxu0
      %v4232 = vadd.f32 0.0, %v4231
      %v4233 = vpop.f32.mrb[0].mxu0
      %v4234 = vadd.f32 0.0, %v4233
      %v4235 = vpop.f32.mrb[0].mxu0
      %v4236 = vpop.f32.mrb[0].mxu0
      %4237 = vdwg.mxu0
      %v4240 = vrot.slane %v4232, 6
      %v4241 = vrot.slane %v4234, 6
      %v4244 = vadd.f32 %v4192, %v4240
      %v4245 = vadd.f32 %v4193, %v4241
      %v4246 = vxor.u32 %v4244, 2147483648
      %v4247 = vxor.u32 %v4245, 2147483648
      %v4248 = vmul.f32 %v4246, 1.442695
      %v4249 = vpow.pop %v4248
      %v4250 = vmul.f32 %v4247, 1.442695
      %v4251 = vpow.pop %v4250
      %v4252 = vadd.f32 %v4249, 1.0
      %v4253 = vadd.f32 %v4251, 1.0
      %v4254 = vrcp.pop %v4252
      %v4255 = vmul.f32 1.0, %v4254
      %v4256 = vrcp.pop %v4253
      %v4257 = vmul.f32 1.0, %v4256
      %v4258 = vtanh.pop %v4245
      %v4260 = vrot.slane %v4179, 6
      %v4262 = vmul.f32 %v4255, %v4260
      %v4263 = vmul.f32 %v4255, %v4258
      %4265 = vrot.lane.b32.xlu0 %v4263, 64
      %v4266 = vpop.permute.xlu0 %4265
      %v4268 = vadd.f32 %v4262, %v4266
      %v4269 = vtanh.pop %v4268
      %v4270 = vmul.f32 %v4257, %v4269
      %v4271 = vpack.c.bf16 %v4270, %v4270
      %4272 = vst.msk [vmem:[%s237 + $0x28] sm:$0x2] %vm720, %v4271
      %v4274 = vunpack.c.l.b16 %v4271
      %v4275 = vpack.c.b16 %v4274, %v4274
      %v4276 = vrot.slane %v4275, 7
      %4277 = vrot.lane.b32.xlu0 %v4276, 96
      %v4278 = vpop.permute.xlu0 %4277
      %4280 = vst.msk [vmem:[%s244 + $0x14] sm:$0x4] %vm729, %v4278
      %v4281 = vld [vmem:[#allocation2 + $0xa0] sm:$0x30]
      %v4282 = vld [vmem:[#allocation2 + $0xa8] sm:$0x30]
      %v4283 = vrot.slane %v4271, 1
      %v4285 = vsel %vm559, %v4283, 0
      %4287 = vmatprep.subr.bf16.mxu0 %v544
      %4288 = vmatpush1.bf16.msra.mxu0 %v543
      %4289 = vmatprep.subr.bf16.mxu0 %v546
      %4290 = vmatpush1.bf16.msra.mxu0 %v545
      %4291 = vmatprep.subr.bf16.mxu0 %v548
      %4292 = vmatpush1.bf16.msra.mxu0 %v547
      %4293 = vmatprep.subr.bf16.mxu0 %v550
      %4294 = vmatpush1.bf16.msra.mxu0 %v549
      %4295 = vmatprep.subr.bf16.mxu0 0
      %4296 = vmatpush1.bf16.msra.mxu0 0
      %4297 = vmatprep.subr.bf16.mxu0 0
      %4298 = vmatpush1.bf16.msra.mxu0 0
      %4299 = vmatprep.subr.bf16.mxu0 0
      %4300 = vmatpush1.bf16.msra.mxu0 0
      %4301 = vmatprep.subr.bf16.mxu0 0
      %4302 = vmatpush1.bf16.msra.mxu0 0
      %4303 = vmatprep.subr.bf16.mxu0 0
      %4304 = vmatpush1.bf16.msra.mxu0 0
      %4305 = vmatprep.subr.bf16.mxu0 0
      %4306 = vmatpush1.bf16.msra.mxu0 0
      %4307 = vmatprep.subr.bf16.mxu0 0
      %4308 = vmatpush1.bf16.msra.mxu0 0
      %4309 = vmatprep.subr.bf16.mxu0 0
      %4310 = vmatpush1.bf16.msra.mxu0 0
      %4311 = vmatprep.subr.bf16.mxu0 0
      %4312 = vmatpush1.bf16.msra.mxu0 0
      %4313 = vmatprep.subr.bf16.mxu0 0
      %4314 = vmatpush1.bf16.msra.mxu0 0
      %4315 = vmatprep.subr.bf16.mxu0 0
      %4316 = vmatpush1.bf16.msra.mxu0 0
      %4317 = vmatprep.subr.bf16.mxu0 0
      %4318 = vmatpush1.bf16.msra.mxu0 0
      %4319 = vmatprep.mubr.bf16.mxu0 0
      %4320 = vmatmul.mubr.bf16.gmra.mrb[0].mxu0 %v4285
      %v4321 = vpop.f32.mrb[0].mxu0
      %v4322 = vadd.f32 0.0, %v4321
      %v4323 = vpop.f32.mrb[0].mxu0
      %v4324 = vadd.f32 0.0, %v4323
      %v4325 = vpop.f32.mrb[0].mxu0
      %v4326 = vpop.f32.mrb[0].mxu0
      %4327 = vdwg.mxu0
      %v4330 = vrot.slane %v4322, 4
      %v4331 = vrot.slane %v4324, 4
      %v4334 = vadd.f32 %v4281, %v4330
      %v4335 = vadd.f32 %v4282, %v4331
      %v4336 = vxor.u32 %v4334, 2147483648
      %v4337 = vxor.u32 %v4335, 2147483648
      %v4338 = vmul.f32 %v4336, 1.442695
      %v4339 = vpow.pop %v4338
      %v4340 = vmul.f32 %v4337, 1.442695
      %v4341 = vpow.pop %v4340
      %v4342 = vadd.f32 %v4339, 1.0
      %v4343 = vadd.f32 %v4341, 1.0
      %v4344 = vrcp.pop %v4342
      %v4345 = vmul.f32 1.0, %v4344
      %v4346 = vrcp.pop %v4343
      %v4347 = vmul.f32 1.0, %v4346
      %v4348 = vtanh.pop %v4335
      %v4350 = vrot.slane %v4268, 6
      %v4352 = vmul.f32 %v4345, %v4350
      %v4353 = vmul.f32 %v4345, %v4348
      %4355 = vrot.lane.b32.xlu0 %v4353, 64
      %v4356 = vpop.permute.xlu0 %4355
      %v4358 = vadd.f32 %v4352, %v4356
      %v4359 = vtanh.pop %v4358
      %v4360 = vmul.f32 %v4347, %v4359
      %v4361 = vpack.c.bf16 %v4360, %v4360
      %4362 = vst.msk [vmem:[%s237 + $0x28] sm:$0x4] %vm729, %v4361
      %v4364 = vunpack.c.l.b16 %v4361
      %v4365 = vpack.c.b16 %v4364, %v4364
      %v4366 = vrot.slane %v4365, 5
      %v4367 = vrot.slane %v4366, 4
      %4368 = vrot.lane.b32.xlu0 %v4367, 96
      %v4369 = vpop.permute.xlu0 %4368
      %4371 = vst.msk [vmem:[%s244 + $0x14] sm:$0x2] %vm720, %v4369
      %v4372 = vld [vmem:[#allocation2 + $0xa0] sm:$0xc0]
      %v4373 = vld [vmem:[#allocation2 + $0xa8] sm:$0xc0]
      %v4374 = vrot.slane %v4361, 2
      %v4376 = vsel %vm559, %v4374, 0
      %4378 = vmatprep.subr.bf16.mxu0 %v544
      %4379 = vmatpush1.bf16.msra.mxu0 %v543
      %4380 = vmatprep.subr.bf16.mxu0 %v546
      %4381 = vmatpush1.bf16.msra.mxu0 %v545
      %4382 = vmatprep.subr.bf16.mxu0 %v548
      %4383 = vmatpush1.bf16.msra.mxu0 %v547
      %4384 = vmatprep.subr.bf16.mxu0 %v550
      %4385 = vmatpush1.bf16.msra.mxu0 %v549
      %4386 = vmatprep.subr.bf16.mxu0 0
      %4387 = vmatpush1.bf16.msra.mxu0 0
      %4388 = vmatprep.subr.bf16.mxu0 0
      %4389 = vmatpush1.bf16.msra.mxu0 0
      %4390 = vmatprep.subr.bf16.mxu0 0
      %4391 = vmatpush1.bf16.msra.mxu0 0
      %4392 = vmatprep.subr.bf16.mxu0 0
      %4393 = vmatpush1.bf16.msra.mxu0 0
      %4394 = vmatprep.subr.bf16.mxu0 0
      %4395 = vmatpush1.bf16.msra.mxu0 0
      %4396 = vmatprep.subr.bf16.mxu0 0
      %4397 = vmatpush1.bf16.msra.mxu0 0
      %4398 = vmatprep.subr.bf16.mxu0 0
      %4399 = vmatpush1.bf16.msra.mxu0 0
      %4400 = vmatprep.subr.bf16.mxu0 0
      %4401 = vmatpush1.bf16.msra.mxu0 0
      %4402 = vmatprep.subr.bf16.mxu0 0
      %4403 = vmatpush1.bf16.msra.mxu0 0
      %4404 = vmatprep.subr.bf16.mxu0 0
      %4405 = vmatpush1.bf16.msra.mxu0 0
      %4406 = vmatprep.subr.bf16.mxu0 0
      %4407 = vmatpush1.bf16.msra.mxu0 0
      %4408 = vmatprep.subr.bf16.mxu0 0
      %4409 = vmatpush1.bf16.msra.mxu0 0
      %4410 = vmatprep.mubr.bf16.mxu0 0
      %4411 = vmatmul.mubr.bf16.gmra.mrb[0].mxu0 %v4376
      %v4412 = vpop.f32.mrb[0].mxu0
      %v4413 = vadd.f32 0.0, %v4412
      %v4414 = vpop.f32.mrb[0].mxu0
      %v4415 = vadd.f32 0.0, %v4414
      %v4416 = vpop.f32.mrb[0].mxu0
      %v4417 = vpop.f32.mrb[0].mxu0
      %4418 = vdwg.mxu0
      %v4421 = vrot.slane %v4413, 2
      %v4422 = vrot.slane %v4415, 2
      %v4425 = vadd.f32 %v4372, %v4421
      %v4426 = vadd.f32 %v4373, %v4422
      %v4427 = vxor.u32 %v4425, 2147483648
      %v4428 = vxor.u32 %v4426, 2147483648
      %v4429 = vmul.f32 %v4427, 1.442695
      %v4430 = vpow.pop %v4429
      %v4431 = vmul.f32 %v4428, 1.442695
      %v4432 = vpow.pop %v4431
      %v4433 = vadd.f32 %v4430, 1.0
      %v4434 = vadd.f32 %v4432, 1.0
      %v4435 = vrcp.pop %v4433
      %v4436 = vmul.f32 1.0, %v4435
      %v4437 = vrcp.pop %v4434
      %v4438 = vmul.f32 1.0, %v4437
      %v4439 = vtanh.pop %v4426
      %v4441 = vrot.slane %v4358, 6
      %v4443 = vmul.f32 %v4436, %v4441
      %v4444 = vmul.f32 %v4436, %v4439
      %4446 = vrot.lane.b32.xlu0 %v4444, 64
      %v4447 = vpop.permute.xlu0 %4446
      %v4449 = vadd.f32 %v4443, %v4447
      %v4450 = vtanh.pop %v4449
      %v4451 = vmul.f32 %v4438, %v4450
      %v4452 = vpack.c.bf16 %v4451, %v4451
      %4453 = vst.msk [vmem:[%s237 + $0x28] sm:$0x8] %vm638, %v4452
      %v4455 = vunpack.c.l.b16 %v4452
      %v4456 = vpack.c.b16 %v4455, %v4455
      %v4457 = vrot.slane %v4456, 7
      %v4458 = vrot.slane %v4457, 4
      %4459 = vrot.lane.b32.xlu0 %v4458, 96
      %v4460 = vpop.permute.xlu0 %4459
      %4462 = vst.msk [vmem:[%s244 + $0x14] sm:$0x1] %vm629, %v4460
      %v4463 = vld [vmem:[#allocation2 + $0xb0] sm:$0x3]
      %v4464 = vld [vmem:[#allocation2 + $0xb8] sm:$0x3]
      %v4465 = vrot.slane %v4452, 3
      %v4467 = vsel %vm559, %v4465, 0
      %4469 = vmatprep.subr.bf16.mxu0 %v544
      %4470 = vmatpush1.bf16.msra.mxu0 %v543
      %4471 = vmatprep.subr.bf16.mxu0 %v546
      %4472 = vmatpush1.bf16.msra.mxu0 %v545
      %4473 = vmatprep.subr.bf16.mxu0 %v548
      %4474 = vmatpush1.bf16.msra.mxu0 %v547
      %4475 = vmatprep.subr.bf16.mxu0 %v550
      %4476 = vmatpush1.bf16.msra.mxu0 %v549
      %4477 = vmatprep.subr.bf16.mxu0 0
      %4478 = vmatpush1.bf16.msra.mxu0 0
      %4479 = vmatprep.subr.bf16.mxu0 0
      %4480 = vmatpush1.bf16.msra.mxu0 0
      %4481 = vmatprep.subr.bf16.mxu0 0
      %4482 = vmatpush1.bf16.msra.mxu0 0
      %4483 = vmatprep.subr.bf16.mxu0 0
      %4484 = vmatpush1.bf16.msra.mxu0 0
      %4485 = vmatprep.subr.bf16.mxu0 0
      %4486 = vmatpush1.bf16.msra.mxu0 0
      %4487 = vmatprep.subr.bf16.mxu0 0
      %4488 = vmatpush1.bf16.msra.mxu0 0
      %4489 = vmatprep.subr.bf16.mxu0 0
      %4490 = vmatpush1.bf16.msra.mxu0 0
      %4491 = vmatprep.subr.bf16.mxu0 0
      %4492 = vmatpush1.bf16.msra.mxu0 0
      %4493 = vmatprep.subr.bf16.mxu0 0
      %4494 = vmatpush1.bf16.msra.mxu0 0
      %4495 = vmatprep.subr.bf16.mxu0 0
      %4496 = vmatpush1.bf16.msra.mxu0 0
      %4497 = vmatprep.subr.bf16.mxu0 0
      %4498 = vmatpush1.bf16.msra.mxu0 0
      %4499 = vmatprep.subr.bf16.mxu0 0
      %4500 = vmatpush1.bf16.msra.mxu0 0
      %4501 = vmatprep.mubr.bf16.mxu0 0
      %4502 = vmatmul.mubr.bf16.gmra.mrb[0].mxu0 %v4467
      %v4503 = vpop.f32.mrb[0].mxu0
      %v4504 = vadd.f32 0.0, %v4503
      %v4505 = vpop.f32.mrb[0].mxu0
      %v4506 = vadd.f32 0.0, %v4505
      %v4507 = vpop.f32.mrb[0].mxu0
      %v4508 = vpop.f32.mrb[0].mxu0
      %4509 = vdwg.mxu0
      %v4510 = vadd.f32 %v4463, %v4504
      %v4511 = vadd.f32 %v4464, %v4506
      %v4512 = vxor.u32 %v4510, 2147483648
      %v4513 = vxor.u32 %v4511, 2147483648
      %v4514 = vmul.f32 %v4512, 1.442695
      %v4515 = vpow.pop %v4514
      %v4516 = vmul.f32 %v4513, 1.442695
      %v4517 = vpow.pop %v4516
      %v4518 = vadd.f32 %v4515, 1.0
      %v4519 = vadd.f32 %v4517, 1.0
      %v4520 = vrcp.pop %v4518
      %v4521 = vmul.f32 1.0, %v4520
      %v4522 = vrcp.pop %v4519
      %v4523 = vmul.f32 1.0, %v4522
      %v4524 = vtanh.pop %v4511
      %v4526 = vrot.slane %v4449, 6
      %v4528 = vmul.f32 %v4521, %v4526
      %v4529 = vmul.f32 %v4521, %v4524
      %4531 = vrot.lane.b32.xlu0 %v4529, 64
      %v4532 = vpop.permute.xlu0 %4531
      %v4534 = vadd.f32 %v4528, %v4532
      %v4535 = vtanh.pop %v4534
      %v4536 = vmul.f32 %v4523, %v4535
      %v4537 = vpack.c.bf16 %v4536, %v4536
      %4538 = vst.msk [vmem:[%s237 + $0x2c] sm:$0x1] %vm629, %v4537
      %v4540 = vunpack.c.l.b16 %v4537
      %v4541 = vpack.c.b16 %v4540, %v4540
      %v4542 = vrot.slane %v4541, 5
      %4543 = vrot.lane.b32.xlu0 %v4542, 96
      %v4544 = vpop.permute.xlu0 %4543
      %4546 = vst.msk [vmem:[%s244 + $0x10] sm:$0x8] %vm638, %v4544
      %v4547 = vld [vmem:[#allocation2 + $0xb0] sm:$0xc]
      %v4548 = vld [vmem:[#allocation2 + $0xb8] sm:$0xc]
      %v4550 = vsel %vm559, %v4537, 0
      %4552 = vmatprep.subr.bf16.mxu0 %v544
      %4553 = vmatpush1.bf16.msra.mxu0 %v543
      %4554 = vmatprep.subr.bf16.mxu0 %v546
      %4555 = vmatpush1.bf16.msra.mxu0 %v545
      %4556 = vmatprep.subr.bf16.mxu0 %v548
      %4557 = vmatpush1.bf16.msra.mxu0 %v547
      %4558 = vmatprep.subr.bf16.mxu0 %v550
      %4559 = vmatpush1.bf16.msra.mxu0 %v549
      %4560 = vmatprep.subr.bf16.mxu0 0
      %4561 = vmatpush1.bf16.msra.mxu0 0
      %4562 = vmatprep.subr.bf16.mxu0 0
      %4563 = vmatpush1.bf16.msra.mxu0 0
      %4564 = vmatprep.subr.bf16.mxu0 0
      %4565 = vmatpush1.bf16.msra.mxu0 0
      %4566 = vmatprep.subr.bf16.mxu0 0
      %4567 = vmatpush1.bf16.msra.mxu0 0
      %4568 = vmatprep.subr.bf16.mxu0 0
      %4569 = vmatpush1.bf16.msra.mxu0 0
      %4570 = vmatprep.subr.bf16.mxu0 0
      %4571 = vmatpush1.bf16.msra.mxu0 0
      %4572 = vmatprep.subr.bf16.mxu0 0
      %4573 = vmatpush1.bf16.msra.mxu0 0
      %4574 = vmatprep.subr.bf16.mxu0 0
      %4575 = vmatpush1.bf16.msra.mxu0 0
      %4576 = vmatprep.subr.bf16.mxu0 0
      %4577 = vmatpush1.bf16.msra.mxu0 0
      %4578 = vmatprep.subr.bf16.mxu0 0
      %4579 = vmatpush1.bf16.msra.mxu0 0
      %4580 = vmatprep.subr.bf16.mxu0 0
      %4581 = vmatpush1.bf16.msra.mxu0 0
      %4582 = vmatprep.subr.bf16.mxu0 0
      %4583 = vmatpush1.bf16.msra.mxu0 0
      %4584 = vmatprep.mubr.bf16.mxu0 0
      %4585 = vmatmul.mubr.bf16.gmra.mrb[0].mxu0 %v4550
      %v4586 = vpop.f32.mrb[0].mxu0
      %v4587 = vadd.f32 0.0, %v4586
      %v4588 = vpop.f32.mrb[0].mxu0
      %v4589 = vadd.f32 0.0, %v4588
      %v4590 = vpop.f32.mrb[0].mxu0
      %v4591 = vpop.f32.mrb[0].mxu0
      %4592 = vdwg.mxu0
      %v4595 = vrot.slane %v4587, 6
      %v4596 = vrot.slane %v4589, 6
      %v4599 = vadd.f32 %v4547, %v4595
      %v4600 = vadd.f32 %v4548, %v4596
      %v4601 = vxor.u32 %v4599, 2147483648
      %v4602 = vxor.u32 %v4600, 2147483648
      %v4603 = vmul.f32 %v4601, 1.442695
      %v4604 = vpow.pop %v4603
      %v4605 = vmul.f32 %v4602, 1.442695
      %v4606 = vpow.pop %v4605
      %v4607 = vadd.f32 %v4604, 1.0
      %v4608 = vadd.f32 %v4606, 1.0
      %v4609 = vrcp.pop %v4607
      %v4610 = vmul.f32 1.0, %v4609
      %v4611 = vrcp.pop %v4608
      %v4612 = vmul.f32 1.0, %v4611
      %v4613 = vtanh.pop %v4600
      %v4615 = vrot.slane %v4534, 6
      %v4617 = vmul.f32 %v4610, %v4615
      %v4618 = vmul.f32 %v4610, %v4613
      %4620 = vrot.lane.b32.xlu0 %v4618, 64
      %v4621 = vpop.permute.xlu0 %4620
      %v4623 = vadd.f32 %v4617, %v4621
      %v4624 = vtanh.pop %v4623
      %v4625 = vmul.f32 %v4612, %v4624
      %v4626 = vpack.c.bf16 %v4625, %v4625
      %4627 = vst.msk [vmem:[%s237 + $0x2c] sm:$0x2] %vm720, %v4626
      %v4629 = vunpack.c.l.b16 %v4626
      %v4630 = vpack.c.b16 %v4629, %v4629
      %v4631 = vrot.slane %v4630, 7
      %4632 = vrot.lane.b32.xlu0 %v4631, 96
      %v4633 = vpop.permute.xlu0 %4632
      %4635 = vst.msk [vmem:[%s244 + $0x10] sm:$0x4] %vm729, %v4633
      %v4636 = vld [vmem:[#allocation2 + $0xb0] sm:$0x30]
      %v4637 = vld [vmem:[#allocation2 + $0xb8] sm:$0x30]
      %v4638 = vrot.slane %v4626, 1
      %v4640 = vsel %vm559, %v4638, 0
      %4642 = vmatprep.subr.bf16.mxu0 %v544
      %4643 = vmatpush1.bf16.msra.mxu0 %v543
      %4644 = vmatprep.subr.bf16.mxu0 %v546
      %4645 = vmatpush1.bf16.msra.mxu0 %v545
      %4646 = vmatprep.subr.bf16.mxu0 %v548
      %4647 = vmatpush1.bf16.msra.mxu0 %v547
      %4648 = vmatprep.subr.bf16.mxu0 %v550
      %4649 = vmatpush1.bf16.msra.mxu0 %v549
      %4650 = vmatprep.subr.bf16.mxu0 0
      %4651 = vmatpush1.bf16.msra.mxu0 0
      %4652 = vmatprep.subr.bf16.mxu0 0
      %4653 = vmatpush1.bf16.msra.mxu0 0
      %4654 = vmatprep.subr.bf16.mxu0 0
      %4655 = vmatpush1.bf16.msra.mxu0 0
      %4656 = vmatprep.subr.bf16.mxu0 0
      %4657 = vmatpush1.bf16.msra.mxu0 0
      %4658 = vmatprep.subr.bf16.mxu0 0
      %4659 = vmatpush1.bf16.msra.mxu0 0
      %4660 = vmatprep.subr.bf16.mxu0 0
      %4661 = vmatpush1.bf16.msra.mxu0 0
      %4662 = vmatprep.subr.bf16.mxu0 0
      %4663 = vmatpush1.bf16.msra.mxu0 0
      %4664 = vmatprep.subr.bf16.mxu0 0
      %4665 = vmatpush1.bf16.msra.mxu0 0
      %4666 = vmatprep.subr.bf16.mxu0 0
      %4667 = vmatpush1.bf16.msra.mxu0 0
      %4668 = vmatprep.subr.bf16.mxu0 0
      %4669 = vmatpush1.bf16.msra.mxu0 0
      %4670 = vmatprep.subr.bf16.mxu0 0
      %4671 = vmatpush1.bf16.msra.mxu0 0
      %4672 = vmatprep.subr.bf16.mxu0 0
      %4673 = vmatpush1.bf16.msra.mxu0 0
      %4674 = vmatprep.mubr.bf16.mxu0 0
      %4675 = vmatmul.mubr.bf16.gmra.mrb[0].mxu0 %v4640
      %v4676 = vpop.f32.mrb[0].mxu0
      %v4677 = vadd.f32 0.0, %v4676
      %v4678 = vpop.f32.mrb[0].mxu0
      %v4679 = vadd.f32 0.0, %v4678
      %v4680 = vpop.f32.mrb[0].mxu0
      %v4681 = vpop.f32.mrb[0].mxu0
      %4682 = vdwg.mxu0
      %v4685 = vrot.slane %v4677, 4
      %v4686 = vrot.slane %v4679, 4
      %v4689 = vadd.f32 %v4636, %v4685
      %v4690 = vadd.f32 %v4637, %v4686
      %v4691 = vxor.u32 %v4689, 2147483648
      %v4692 = vxor.u32 %v4690, 2147483648
      %v4693 = vmul.f32 %v4691, 1.442695
      %v4694 = vpow.pop %v4693
      %v4695 = vmul.f32 %v4692, 1.442695
      %v4696 = vpow.pop %v4695
      %v4697 = vadd.f32 %v4694, 1.0
      %v4698 = vadd.f32 %v4696, 1.0
      %v4699 = vrcp.pop %v4697
      %v4700 = vmul.f32 1.0, %v4699
      %v4701 = vrcp.pop %v4698
      %v4702 = vmul.f32 1.0, %v4701
      %v4703 = vtanh.pop %v4690
      %v4705 = vrot.slane %v4623, 6
      %v4707 = vmul.f32 %v4700, %v4705
      %v4708 = vmul.f32 %v4700, %v4703
      %4710 = vrot.lane.b32.xlu0 %v4708, 64
      %v4711 = vpop.permute.xlu0 %4710
      %v4713 = vadd.f32 %v4707, %v4711
      %v4714 = vtanh.pop %v4713
      %v4715 = vmul.f32 %v4702, %v4714
      %v4716 = vpack.c.bf16 %v4715, %v4715
      %4717 = vst.msk [vmem:[%s237 + $0x2c] sm:$0x4] %vm729, %v4716
      %v4719 = vunpack.c.l.b16 %v4716
      %v4720 = vpack.c.b16 %v4719, %v4719
      %v4721 = vrot.slane %v4720, 5
      %v4722 = vrot.slane %v4721, 4
      %4723 = vrot.lane.b32.xlu0 %v4722, 96
      %v4724 = vpop.permute.xlu0 %4723
      %4726 = vst.msk [vmem:[%s244 + $0x10] sm:$0x2] %vm720, %v4724
      %v4727 = vld [vmem:[#allocation2 + $0xb0] sm:$0xc0]
      %v4728 = vld [vmem:[#allocation2 + $0xb8] sm:$0xc0]
      %v4729 = vrot.slane %v4716, 2
      %v4731 = vsel %vm559, %v4729, 0
      %4733 = vmatprep.subr.bf16.mxu0 %v544
      %4734 = vmatpush1.bf16.msra.mxu0 %v543
      %4735 = vmatprep.subr.bf16.mxu0 %v546
      %4736 = vmatpush1.bf16.msra.mxu0 %v545
      %4737 = vmatprep.subr.bf16.mxu0 %v548
      %4738 = vmatpush1.bf16.msra.mxu0 %v547
      %4739 = vmatprep.subr.bf16.mxu0 %v550
      %4740 = vmatpush1.bf16.msra.mxu0 %v549
      %4741 = vmatprep.subr.bf16.mxu0 0
      %4742 = vmatpush1.bf16.msra.mxu0 0
      %4743 = vmatprep.subr.bf16.mxu0 0
      %4744 = vmatpush1.bf16.msra.mxu0 0
      %4745 = vmatprep.subr.bf16.mxu0 0
      %4746 = vmatpush1.bf16.msra.mxu0 0
      %4747 = vmatprep.subr.bf16.mxu0 0
      %4748 = vmatpush1.bf16.msra.mxu0 0
      %4749 = vmatprep.subr.bf16.mxu0 0
      %4750 = vmatpush1.bf16.msra.mxu0 0
      %4751 = vmatprep.subr.bf16.mxu0 0
      %4752 = vmatpush1.bf16.msra.mxu0 0
      %4753 = vmatprep.subr.bf16.mxu0 0
      %4754 = vmatpush1.bf16.msra.mxu0 0
      %4755 = vmatprep.subr.bf16.mxu0 0
      %4756 = vmatpush1.bf16.msra.mxu0 0
      %4757 = vmatprep.subr.bf16.mxu0 0
      %4758 = vmatpush1.bf16.msra.mxu0 0
      %4759 = vmatprep.subr.bf16.mxu0 0
      %4760 = vmatpush1.bf16.msra.mxu0 0
      %4761 = vmatprep.subr.bf16.mxu0 0
      %4762 = vmatpush1.bf16.msra.mxu0 0
      %4763 = vmatprep.subr.bf16.mxu0 0
      %4764 = vmatpush1.bf16.msra.mxu0 0
      %4765 = vmatprep.mubr.bf16.mxu0 0
      %4766 = vmatmul.mubr.bf16.gmra.mrb[0].mxu0 %v4731
      %v4767 = vpop.f32.mrb[0].mxu0
      %v4768 = vadd.f32 0.0, %v4767
      %v4769 = vpop.f32.mrb[0].mxu0
      %v4770 = vadd.f32 0.0, %v4769
      %v4771 = vpop.f32.mrb[0].mxu0
      %v4772 = vpop.f32.mrb[0].mxu0
      %4773 = vdwg.mxu0
      %v4776 = vrot.slane %v4768, 2
      %v4777 = vrot.slane %v4770, 2
      %v4780 = vadd.f32 %v4727, %v4776
      %v4781 = vadd.f32 %v4728, %v4777
      %v4782 = vxor.u32 %v4780, 2147483648
      %v4783 = vxor.u32 %v4781, 2147483648
      %v4784 = vmul.f32 %v4782, 1.442695
      %v4785 = vpow.pop %v4784
      %v4786 = vmul.f32 %v4783, 1.442695
      %v4787 = vpow.pop %v4786
      %v4788 = vadd.f32 %v4785, 1.0
      %v4789 = vadd.f32 %v4787, 1.0
      %v4790 = vrcp.pop %v4788
      %v4791 = vmul.f32 1.0, %v4790
      %v4792 = vrcp.pop %v4789
      %v4793 = vmul.f32 1.0, %v4792
      %v4794 = vtanh.pop %v4781
      %v4796 = vrot.slane %v4713, 6
      %v4798 = vmul.f32 %v4791, %v4796
      %v4799 = vmul.f32 %v4791, %v4794
      %4801 = vrot.lane.b32.xlu0 %v4799, 64
      %v4802 = vpop.permute.xlu0 %4801
      %v4804 = vadd.f32 %v4798, %v4802
      %v4805 = vtanh.pop %v4804
      %v4806 = vmul.f32 %v4793, %v4805
      %v4807 = vpack.c.bf16 %v4806, %v4806
      %4808 = vst.msk [vmem:[%s237 + $0x2c] sm:$0x8] %vm638, %v4807
      %v4810 = vunpack.c.l.b16 %v4807
      %v4811 = vpack.c.b16 %v4810, %v4810
      %v4812 = vrot.slane %v4811, 7
      %v4813 = vrot.slane %v4812, 4
      %4814 = vrot.lane.b32.xlu0 %v4813, 96
      %v4815 = vpop.permute.xlu0 %4814
      %4817 = vst.msk [vmem:[%s244 + $0x10] sm:$0x1] %vm629, %v4815
      %v4818 = vld [vmem:[#allocation2 + $0xc0] sm:$0x3]
      %v4819 = vld [vmem:[#allocation2 + $0xc8] sm:$0x3]
      %v4820 = vrot.slane %v4807, 3
      %v4822 = vsel %vm559, %v4820, 0
      %4824 = vmatprep.subr.bf16.mxu0 %v544
      %4825 = vmatpush1.bf16.msra.mxu0 %v543
      %4826 = vmatprep.subr.bf16.mxu0 %v546
      %4827 = vmatpush1.bf16.msra.mxu0 %v545
      %4828 = vmatprep.subr.bf16.mxu0 %v548
      %4829 = vmatpush1.bf16.msra.mxu0 %v547
      %4830 = vmatprep.subr.bf16.mxu0 %v550
      %4831 = vmatpush1.bf16.msra.mxu0 %v549
      %4832 = vmatprep.subr.bf16.mxu0 0
      %4833 = vmatpush1.bf16.msra.mxu0 0
      %4834 = vmatprep.subr.bf16.mxu0 0
      %4835 = vmatpush1.bf16.msra.mxu0 0
      %4836 = vmatprep.subr.bf16.mxu0 0
      %4837 = vmatpush1.bf16.msra.mxu0 0
      %4838 = vmatprep.subr.bf16.mxu0 0
      %4839 = vmatpush1.bf16.msra.mxu0 0
      %4840 = vmatprep.subr.bf16.mxu0 0
      %4841 = vmatpush1.bf16.msra.mxu0 0
      %4842 = vmatprep.subr.bf16.mxu0 0
      %4843 = vmatpush1.bf16.msra.mxu0 0
      %4844 = vmatprep.subr.bf16.mxu0 0
      %4845 = vmatpush1.bf16.msra.mxu0 0
      %4846 = vmatprep.subr.bf16.mxu0 0
      %4847 = vmatpush1.bf16.msra.mxu0 0
      %4848 = vmatprep.subr.bf16.mxu0 0
      %4849 = vmatpush1.bf16.msra.mxu0 0
      %4850 = vmatprep.subr.bf16.mxu0 0
      %4851 = vmatpush1.bf16.msra.mxu0 0
      %4852 = vmatprep.subr.bf16.mxu0 0
      %4853 = vmatpush1.bf16.msra.mxu0 0
      %4854 = vmatprep.subr.bf16.mxu0 0
      %4855 = vmatpush1.bf16.msra.mxu0 0
      %4856 = vmatprep.mubr.bf16.mxu0 0
      %4857 = vmatmul.mubr.bf16.gmra.mrb[0].mxu0 %v4822
      %v4858 = vpop.f32.mrb[0].mxu0
      %v4859 = vadd.f32 0.0, %v4858
      %v4860 = vpop.f32.mrb[0].mxu0
      %v4861 = vadd.f32 0.0, %v4860
      %v4862 = vpop.f32.mrb[0].mxu0
      %v4863 = vpop.f32.mrb[0].mxu0
      %4864 = vdwg.mxu0
      %v4865 = vadd.f32 %v4818, %v4859
      %v4866 = vadd.f32 %v4819, %v4861
      %v4867 = vxor.u32 %v4865, 2147483648
      %v4868 = vxor.u32 %v4866, 2147483648
      %v4869 = vmul.f32 %v4867, 1.442695
      %v4870 = vpow.pop %v4869
      %v4871 = vmul.f32 %v4868, 1.442695
      %v4872 = vpow.pop %v4871
      %v4873 = vadd.f32 %v4870, 1.0
      %v4874 = vadd.f32 %v4872, 1.0
      %v4875 = vrcp.pop %v4873
      %v4876 = vmul.f32 1.0, %v4875
      %v4877 = vrcp.pop %v4874
      %v4878 = vmul.f32 1.0, %v4877
      %v4879 = vtanh.pop %v4866
      %v4881 = vrot.slane %v4804, 6
      %v4883 = vmul.f32 %v4876, %v4881
      %v4884 = vmul.f32 %v4876, %v4879
      %4886 = vrot.lane.b32.xlu0 %v4884, 64
      %v4887 = vpop.permute.xlu0 %4886
      %v4889 = vadd.f32 %v4883, %v4887
      %v4890 = vtanh.pop %v4889
      %v4891 = vmul.f32 %v4878, %v4890
      %v4892 = vpack.c.bf16 %v4891, %v4891
      %4893 = vst.msk [vmem:[%s237 + $0x30] sm:$0x1] %vm629, %v4892
      %v4895 = vunpack.c.l.b16 %v4892
      %v4896 = vpack.c.b16 %v4895, %v4895
      %v4897 = vrot.slane %v4896, 5
      %4898 = vrot.lane.b32.xlu0 %v4897, 96
      %v4899 = vpop.permute.xlu0 %4898
      %4901 = vst.msk [vmem:[%s244 + $0xc] sm:$0x8] %vm638, %v4899
      %v4902 = vld [vmem:[#allocation2 + $0xc0] sm:$0xc]
      %v4903 = vld [vmem:[#allocation2 + $0xc8] sm:$0xc]
      %v4905 = vsel %vm559, %v4892, 0
      %4907 = vmatprep.subr.bf16.mxu0 %v544
      %4908 = vmatpush1.bf16.msra.mxu0 %v543
      %4909 = vmatprep.subr.bf16.mxu0 %v546
      %4910 = vmatpush1.bf16.msra.mxu0 %v545
      %4911 = vmatprep.subr.bf16.mxu0 %v548
      %4912 = vmatpush1.bf16.msra.mxu0 %v547
      %4913 = vmatprep.subr.bf16.mxu0 %v550
      %4914 = vmatpush1.bf16.msra.mxu0 %v549
      %4915 = vmatprep.subr.bf16.mxu0 0
      %4916 = vmatpush1.bf16.msra.mxu0 0
      %4917 = vmatprep.subr.bf16.mxu0 0
      %4918 = vmatpush1.bf16.msra.mxu0 0
      %4919 = vmatprep.subr.bf16.mxu0 0
      %4920 = vmatpush1.bf16.msra.mxu0 0
      %4921 = vmatprep.subr.bf16.mxu0 0
      %4922 = vmatpush1.bf16.msra.mxu0 0
      %4923 = vmatprep.subr.bf16.mxu0 0
      %4924 = vmatpush1.bf16.msra.mxu0 0
      %4925 = vmatprep.subr.bf16.mxu0 0
      %4926 = vmatpush1.bf16.msra.mxu0 0
      %4927 = vmatprep.subr.bf16.mxu0 0
      %4928 = vmatpush1.bf16.msra.mxu0 0
      %4929 = vmatprep.subr.bf16.mxu0 0
      %4930 = vmatpush1.bf16.msra.mxu0 0
      %4931 = vmatprep.subr.bf16.mxu0 0
      %4932 = vmatpush1.bf16.msra.mxu0 0
      %4933 = vmatprep.subr.bf16.mxu0 0
      %4934 = vmatpush1.bf16.msra.mxu0 0
      %4935 = vmatprep.subr.bf16.mxu0 0
      %4936 = vmatpush1.bf16.msra.mxu0 0
      %4937 = vmatprep.subr.bf16.mxu0 0
      %4938 = vmatpush1.bf16.msra.mxu0 0
      %4939 = vmatprep.mubr.bf16.mxu0 0
      %4940 = vmatmul.mubr.bf16.gmra.mrb[0].mxu0 %v4905
      %v4941 = vpop.f32.mrb[0].mxu0
      %v4942 = vadd.f32 0.0, %v4941
      %v4943 = vpop.f32.mrb[0].mxu0
      %v4944 = vadd.f32 0.0, %v4943
      %v4945 = vpop.f32.mrb[0].mxu0
      %v4946 = vpop.f32.mrb[0].mxu0
      %4947 = vdwg.mxu0
      %v4950 = vrot.slane %v4942, 6
      %v4951 = vrot.slane %v4944, 6
      %v4954 = vadd.f32 %v4902, %v4950
      %v4955 = vadd.f32 %v4903, %v4951
      %v4956 = vxor.u32 %v4954, 2147483648
      %v4957 = vxor.u32 %v4955, 2147483648
      %v4958 = vmul.f32 %v4956, 1.442695
      %v4959 = vpow.pop %v4958
      %v4960 = vmul.f32 %v4957, 1.442695
      %v4961 = vpow.pop %v4960
      %v4962 = vadd.f32 %v4959, 1.0
      %v4963 = vadd.f32 %v4961, 1.0
      %v4964 = vrcp.pop %v4962
      %v4965 = vmul.f32 1.0, %v4964
      %v4966 = vrcp.pop %v4963
      %v4967 = vmul.f32 1.0, %v4966
      %v4968 = vtanh.pop %v4955
      %v4970 = vrot.slane %v4889, 6
      %v4972 = vmul.f32 %v4965, %v4970
      %v4973 = vmul.f32 %v4965, %v4968
      %4975 = vrot.lane.b32.xlu0 %v4973, 64
      %v4976 = vpop.permute.xlu0 %4975
      %v4978 = vadd.f32 %v4972, %v4976
      %v4979 = vtanh.pop %v4978
      %v4980 = vmul.f32 %v4967, %v4979
      %v4981 = vpack.c.bf16 %v4980, %v4980
      %4982 = vst.msk [vmem:[%s237 + $0x30] sm:$0x2] %vm720, %v4981
      %v4984 = vunpack.c.l.b16 %v4981
      %v4985 = vpack.c.b16 %v4984, %v4984
      %v4986 = vrot.slane %v4985, 7
      %4987 = vrot.lane.b32.xlu0 %v4986, 96
      %v4988 = vpop.permute.xlu0 %4987
      %4990 = vst.msk [vmem:[%s244 + $0xc] sm:$0x4] %vm729, %v4988
      %v4991 = vld [vmem:[#allocation2 + $0xc0] sm:$0x30]
      %v4992 = vld [vmem:[#allocation2 + $0xc8] sm:$0x30]
      %v4993 = vrot.slane %v4981, 1
      %v4995 = vsel %vm559, %v4993, 0
      %4997 = vmatprep.subr.bf16.mxu0 %v544
      %4998 = vmatpush1.bf16.msra.mxu0 %v543
      %4999 = vmatprep.subr.bf16.mxu0 %v546
      %5000 = vmatpush1.bf16.msra.mxu0 %v545
      %5001 = vmatprep.subr.bf16.mxu0 %v548
      %5002 = vmatpush1.bf16.msra.mxu0 %v547
      %5003 = vmatprep.subr.bf16.mxu0 %v550
      %5004 = vmatpush1.bf16.msra.mxu0 %v549
      %5005 = vmatprep.subr.bf16.mxu0 0
      %5006 = vmatpush1.bf16.msra.mxu0 0
      %5007 = vmatprep.subr.bf16.mxu0 0
      %5008 = vmatpush1.bf16.msra.mxu0 0
      %5009 = vmatprep.subr.bf16.mxu0 0
      %5010 = vmatpush1.bf16.msra.mxu0 0
      %5011 = vmatprep.subr.bf16.mxu0 0
      %5012 = vmatpush1.bf16.msra.mxu0 0
      %5013 = vmatprep.subr.bf16.mxu0 0
      %5014 = vmatpush1.bf16.msra.mxu0 0
      %5015 = vmatprep.subr.bf16.mxu0 0
      %5016 = vmatpush1.bf16.msra.mxu0 0
      %5017 = vmatprep.subr.bf16.mxu0 0
      %5018 = vmatpush1.bf16.msra.mxu0 0
      %5019 = vmatprep.subr.bf16.mxu0 0
      %5020 = vmatpush1.bf16.msra.mxu0 0
      %5021 = vmatprep.subr.bf16.mxu0 0
      %5022 = vmatpush1.bf16.msra.mxu0 0
      %5023 = vmatprep.subr.bf16.mxu0 0
      %5024 = vmatpush1.bf16.msra.mxu0 0
      %5025 = vmatprep.subr.bf16.mxu0 0
      %5026 = vmatpush1.bf16.msra.mxu0 0
      %5027 = vmatprep.subr.bf16.mxu0 0
      %5028 = vmatpush1.bf16.msra.mxu0 0
      %5029 = vmatprep.mubr.bf16.mxu0 0
      %5030 = vmatmul.mubr.bf16.gmra.mrb[0].mxu0 %v4995
      %v5031 = vpop.f32.mrb[0].mxu0
      %v5032 = vadd.f32 0.0, %v5031
      %v5033 = vpop.f32.mrb[0].mxu0
      %v5034 = vadd.f32 0.0, %v5033
      %v5035 = vpop.f32.mrb[0].mxu0
      %v5036 = vpop.f32.mrb[0].mxu0
      %5037 = vdwg.mxu0
      %v5040 = vrot.slane %v5032, 4
      %v5041 = vrot.slane %v5034, 4
      %v5044 = vadd.f32 %v4991, %v5040
      %v5045 = vadd.f32 %v4992, %v5041
      %v5046 = vxor.u32 %v5044, 2147483648
      %v5047 = vxor.u32 %v5045, 2147483648
      %v5048 = vmul.f32 %v5046, 1.442695
      %v5049 = vpow.pop %v5048
      %v5050 = vmul.f32 %v5047, 1.442695
      %v5051 = vpow.pop %v5050
      %v5052 = vadd.f32 %v5049, 1.0
      %v5053 = vadd.f32 %v5051, 1.0
      %v5054 = vrcp.pop %v5052
      %v5055 = vmul.f32 1.0, %v5054
      %v5056 = vrcp.pop %v5053
      %v5057 = vmul.f32 1.0, %v5056
      %v5058 = vtanh.pop %v5045
      %v5060 = vrot.slane %v4978, 6
      %v5062 = vmul.f32 %v5055, %v5060
      %v5063 = vmul.f32 %v5055, %v5058
      %5065 = vrot.lane.b32.xlu0 %v5063, 64
      %v5066 = vpop.permute.xlu0 %5065
      %v5068 = vadd.f32 %v5062, %v5066
      %v5069 = vtanh.pop %v5068
      %v5070 = vmul.f32 %v5057, %v5069
      %v5071 = vpack.c.bf16 %v5070, %v5070
      %5072 = vst.msk [vmem:[%s237 + $0x30] sm:$0x4] %vm729, %v5071
      %v5074 = vunpack.c.l.b16 %v5071
      %v5075 = vpack.c.b16 %v5074, %v5074
      %v5076 = vrot.slane %v5075, 5
      %v5077 = vrot.slane %v5076, 4
      %5078 = vrot.lane.b32.xlu0 %v5077, 96
      %v5079 = vpop.permute.xlu0 %5078
      %5081 = vst.msk [vmem:[%s244 + $0xc] sm:$0x2] %vm720, %v5079
      %v5082 = vld [vmem:[#allocation2 + $0xc0] sm:$0xc0]
      %v5083 = vld [vmem:[#allocation2 + $0xc8] sm:$0xc0]
      %v5084 = vrot.slane %v5071, 2
      %v5086 = vsel %vm559, %v5084, 0
      %5088 = vmatprep.subr.bf16.mxu0 %v544
      %5089 = vmatpush1.bf16.msra.mxu0 %v543
      %5090 = vmatprep.subr.bf16.mxu0 %v546
      %5091 = vmatpush1.bf16.msra.mxu0 %v545
      %5092 = vmatprep.subr.bf16.mxu0 %v548
      %5093 = vmatpush1.bf16.msra.mxu0 %v547
      %5094 = vmatprep.subr.bf16.mxu0 %v550
      %5095 = vmatpush1.bf16.msra.mxu0 %v549
      %5096 = vmatprep.subr.bf16.mxu0 0
      %5097 = vmatpush1.bf16.msra.mxu0 0
      %5098 = vmatprep.subr.bf16.mxu0 0
      %5099 = vmatpush1.bf16.msra.mxu0 0
      %5100 = vmatprep.subr.bf16.mxu0 0
      %5101 = vmatpush1.bf16.msra.mxu0 0
      %5102 = vmatprep.subr.bf16.mxu0 0
      %5103 = vmatpush1.bf16.msra.mxu0 0
      %5104 = vmatprep.subr.bf16.mxu0 0
      %5105 = vmatpush1.bf16.msra.mxu0 0
      %5106 = vmatprep.subr.bf16.mxu0 0
      %5107 = vmatpush1.bf16.msra.mxu0 0
      %5108 = vmatprep.subr.bf16.mxu0 0
      %5109 = vmatpush1.bf16.msra.mxu0 0
      %5110 = vmatprep.subr.bf16.mxu0 0
      %5111 = vmatpush1.bf16.msra.mxu0 0
      %5112 = vmatprep.subr.bf16.mxu0 0
      %5113 = vmatpush1.bf16.msra.mxu0 0
      %5114 = vmatprep.subr.bf16.mxu0 0
      %5115 = vmatpush1.bf16.msra.mxu0 0
      %5116 = vmatprep.subr.bf16.mxu0 0
      %5117 = vmatpush1.bf16.msra.mxu0 0
      %5118 = vmatprep.subr.bf16.mxu0 0
      %5119 = vmatpush1.bf16.msra.mxu0 0
      %5120 = vmatprep.mubr.bf16.mxu0 0
      %5121 = vmatmul.mubr.bf16.gmra.mrb[0].mxu0 %v5086
      %v5122 = vpop.f32.mrb[0].mxu0
      %v5123 = vadd.f32 0.0, %v5122
      %v5124 = vpop.f32.mrb[0].mxu0
      %v5125 = vadd.f32 0.0, %v5124
      %v5126 = vpop.f32.mrb[0].mxu0
      %v5127 = vpop.f32.mrb[0].mxu0
      %5128 = vdwg.mxu0
      %v5131 = vrot.slane %v5123, 2
      %v5132 = vrot.slane %v5125, 2
      %v5135 = vadd.f32 %v5082, %v5131
      %v5136 = vadd.f32 %v5083, %v5132
      %v5137 = vxor.u32 %v5135, 2147483648
      %v5138 = vxor.u32 %v5136, 2147483648
      %v5139 = vmul.f32 %v5137, 1.442695
      %v5140 = vpow.pop %v5139
      %v5141 = vmul.f32 %v5138, 1.442695
      %v5142 = vpow.pop %v5141
      %v5143 = vadd.f32 %v5140, 1.0
      %v5144 = vadd.f32 %v5142, 1.0
      %v5145 = vrcp.pop %v5143
      %v5146 = vmul.f32 1.0, %v5145
      %v5147 = vrcp.pop %v5144
      %v5148 = vmul.f32 1.0, %v5147
      %v5149 = vtanh.pop %v5136
      %v5151 = vrot.slane %v5068, 6
      %v5153 = vmul.f32 %v5146, %v5151
      %v5154 = vmul.f32 %v5146, %v5149
      %5156 = vrot.lane.b32.xlu0 %v5154, 64
      %v5157 = vpop.permute.xlu0 %5156
      %v5159 = vadd.f32 %v5153, %v5157
      %v5160 = vtanh.pop %v5159
      %v5161 = vmul.f32 %v5148, %v5160
      %v5162 = vpack.c.bf16 %v5161, %v5161
      %5163 = vst.msk [vmem:[%s237 + $0x30] sm:$0x8] %vm638, %v5162
      %v5165 = vunpack.c.l.b16 %v5162
      %v5166 = vpack.c.b16 %v5165, %v5165
      %v5167 = vrot.slane %v5166, 7
      %v5168 = vrot.slane %v5167, 4
      %5169 = vrot.lane.b32.xlu0 %v5168, 96
      %v5170 = vpop.permute.xlu0 %5169
      %5172 = vst.msk [vmem:[%s244 + $0xc] sm:$0x1] %vm629, %v5170
      %v5173 = vld [vmem:[#allocation2 + $0xd0] sm:$0x3]
      %v5174 = vld [vmem:[#allocation2 + $0xd8] sm:$0x3]
      %v5175 = vrot.slane %v5162, 3
      %v5177 = vsel %vm559, %v5175, 0
      %5179 = vmatprep.subr.bf16.mxu0 %v544
      %5180 = vmatpush1.bf16.msra.mxu0 %v543
      %5181 = vmatprep.subr.bf16.mxu0 %v546
      %5182 = vmatpush1.bf16.msra.mxu0 %v545
      %5183 = vmatprep.subr.bf16.mxu0 %v548
      %5184 = vmatpush1.bf16.msra.mxu0 %v547
      %5185 = vmatprep.subr.bf16.mxu0 %v550
      %5186 = vmatpush1.bf16.msra.mxu0 %v549
      %5187 = vmatprep.subr.bf16.mxu0 0
      %5188 = vmatpush1.bf16.msra.mxu0 0
      %5189 = vmatprep.subr.bf16.mxu0 0
      %5190 = vmatpush1.bf16.msra.mxu0 0
      %5191 = vmatprep.subr.bf16.mxu0 0
      %5192 = vmatpush1.bf16.msra.mxu0 0
      %5193 = vmatprep.subr.bf16.mxu0 0
      %5194 = vmatpush1.bf16.msra.mxu0 0
      %5195 = vmatprep.subr.bf16.mxu0 0
      %5196 = vmatpush1.bf16.msra.mxu0 0
      %5197 = vmatprep.subr.bf16.mxu0 0
      %5198 = vmatpush1.bf16.msra.mxu0 0
      %5199 = vmatprep.subr.bf16.mxu0 0
      %5200 = vmatpush1.bf16.msra.mxu0 0
      %5201 = vmatprep.subr.bf16.mxu0 0
      %5202 = vmatpush1.bf16.msra.mxu0 0
      %5203 = vmatprep.subr.bf16.mxu0 0
      %5204 = vmatpush1.bf16.msra.mxu0 0
      %5205 = vmatprep.subr.bf16.mxu0 0
      %5206 = vmatpush1.bf16.msra.mxu0 0
      %5207 = vmatprep.subr.bf16.mxu0 0
      %5208 = vmatpush1.bf16.msra.mxu0 0
      %5209 = vmatprep.subr.bf16.mxu0 0
      %5210 = vmatpush1.bf16.msra.mxu0 0
      %5211 = vmatprep.mubr.bf16.mxu0 0
      %5212 = vmatmul.mubr.bf16.gmra.mrb[0].mxu0 %v5177
      %v5213 = vpop.f32.mrb[0].mxu0
      %v5214 = vadd.f32 0.0, %v5213
      %v5215 = vpop.f32.mrb[0].mxu0
      %v5216 = vadd.f32 0.0, %v5215
      %v5217 = vpop.f32.mrb[0].mxu0
      %v5218 = vpop.f32.mrb[0].mxu0
      %5219 = vdwg.mxu0
      %v5220 = vadd.f32 %v5173, %v5214
      %v5221 = vadd.f32 %v5174, %v5216
      %v5222 = vxor.u32 %v5220, 2147483648
      %v5223 = vxor.u32 %v5221, 2147483648
      %v5224 = vmul.f32 %v5222, 1.442695
      %v5225 = vpow.pop %v5224
      %v5226 = vmul.f32 %v5223, 1.442695
      %v5227 = vpow.pop %v5226
      %v5228 = vadd.f32 %v5225, 1.0
      %v5229 = vadd.f32 %v5227, 1.0
      %v5230 = vrcp.pop %v5228
      %v5231 = vmul.f32 1.0, %v5230
      %v5232 = vrcp.pop %v5229
      %v5233 = vmul.f32 1.0, %v5232
      %v5234 = vtanh.pop %v5221
      %v5236 = vrot.slane %v5159, 6
      %v5238 = vmul.f32 %v5231, %v5236
      %v5239 = vmul.f32 %v5231, %v5234
      %5241 = vrot.lane.b32.xlu0 %v5239, 64
      %v5242 = vpop.permute.xlu0 %5241
      %v5244 = vadd.f32 %v5238, %v5242
      %v5245 = vtanh.pop %v5244
      %v5246 = vmul.f32 %v5233, %v5245
      %v5247 = vpack.c.bf16 %v5246, %v5246
      %5248 = vst.msk [vmem:[%s237 + $0x34] sm:$0x1] %vm629, %v5247
      %v5250 = vunpack.c.l.b16 %v5247
      %v5251 = vpack.c.b16 %v5250, %v5250
      %v5252 = vrot.slane %v5251, 5
      %5253 = vrot.lane.b32.xlu0 %v5252, 96
      %v5254 = vpop.permute.xlu0 %5253
      %5256 = vst.msk [vmem:[%s244 + $0x8] sm:$0x8] %vm638, %v5254
      %v5257 = vld [vmem:[#allocation2 + $0xd0] sm:$0xc]
      %v5258 = vld [vmem:[#allocation2 + $0xd8] sm:$0xc]
      %v5260 = vsel %vm559, %v5247, 0
      %5262 = vmatprep.subr.bf16.mxu0 %v544
      %5263 = vmatpush1.bf16.msra.mxu0 %v543
      %5264 = vmatprep.subr.bf16.mxu0 %v546
      %5265 = vmatpush1.bf16.msra.mxu0 %v545
      %5266 = vmatprep.subr.bf16.mxu0 %v548
      %5267 = vmatpush1.bf16.msra.mxu0 %v547
      %5268 = vmatprep.subr.bf16.mxu0 %v550
      %5269 = vmatpush1.bf16.msra.mxu0 %v549
      %5270 = vmatprep.subr.bf16.mxu0 0
      %5271 = vmatpush1.bf16.msra.mxu0 0
      %5272 = vmatprep.subr.bf16.mxu0 0
      %5273 = vmatpush1.bf16.msra.mxu0 0
      %5274 = vmatprep.subr.bf16.mxu0 0
      %5275 = vmatpush1.bf16.msra.mxu0 0
      %5276 = vmatprep.subr.bf16.mxu0 0
      %5277 = vmatpush1.bf16.msra.mxu0 0
      %5278 = vmatprep.subr.bf16.mxu0 0
      %5279 = vmatpush1.bf16.msra.mxu0 0
      %5280 = vmatprep.subr.bf16.mxu0 0
      %5281 = vmatpush1.bf16.msra.mxu0 0
      %5282 = vmatprep.subr.bf16.mxu0 0
      %5283 = vmatpush1.bf16.msra.mxu0 0
      %5284 = vmatprep.subr.bf16.mxu0 0
      %5285 = vmatpush1.bf16.msra.mxu0 0
      %5286 = vmatprep.subr.bf16.mxu0 0
      %5287 = vmatpush1.bf16.msra.mxu0 0
      %5288 = vmatprep.subr.bf16.mxu0 0
      %5289 = vmatpush1.bf16.msra.mxu0 0
      %5290 = vmatprep.subr.bf16.mxu0 0
      %5291 = vmatpush1.bf16.msra.mxu0 0
      %5292 = vmatprep.subr.bf16.mxu0 0
      %5293 = vmatpush1.bf16.msra.mxu0 0
      %5294 = vmatprep.mubr.bf16.mxu0 0
      %5295 = vmatmul.mubr.bf16.gmra.mrb[0].mxu0 %v5260
      %v5296 = vpop.f32.mrb[0].mxu0
      %v5297 = vadd.f32 0.0, %v5296
      %v5298 = vpop.f32.mrb[0].mxu0
      %v5299 = vadd.f32 0.0, %v5298
      %v5300 = vpop.f32.mrb[0].mxu0
      %v5301 = vpop.f32.mrb[0].mxu0
      %5302 = vdwg.mxu0
      %v5305 = vrot.slane %v5297, 6
      %v5306 = vrot.slane %v5299, 6
      %v5309 = vadd.f32 %v5257, %v5305
      %v5310 = vadd.f32 %v5258, %v5306
      %v5311 = vxor.u32 %v5309, 2147483648
      %v5312 = vxor.u32 %v5310, 2147483648
      %v5313 = vmul.f32 %v5311, 1.442695
      %v5314 = vpow.pop %v5313
      %v5315 = vmul.f32 %v5312, 1.442695
      %v5316 = vpow.pop %v5315
      %v5317 = vadd.f32 %v5314, 1.0
      %v5318 = vadd.f32 %v5316, 1.0
      %v5319 = vrcp.pop %v5317
      %v5320 = vmul.f32 1.0, %v5319
      %v5321 = vrcp.pop %v5318
      %v5322 = vmul.f32 1.0, %v5321
      %v5323 = vtanh.pop %v5310
      %v5325 = vrot.slane %v5244, 6
      %v5327 = vmul.f32 %v5320, %v5325
      %v5328 = vmul.f32 %v5320, %v5323
      %5330 = vrot.lane.b32.xlu0 %v5328, 64
      %v5331 = vpop.permute.xlu0 %5330
      %v5333 = vadd.f32 %v5327, %v5331
      %v5334 = vtanh.pop %v5333
      %v5335 = vmul.f32 %v5322, %v5334
      %v5336 = vpack.c.bf16 %v5335, %v5335
      %5337 = vst.msk [vmem:[%s237 + $0x34] sm:$0x2] %vm720, %v5336
      %v5339 = vunpack.c.l.b16 %v5336
      %v5340 = vpack.c.b16 %v5339, %v5339
      %v5341 = vrot.slane %v5340, 7
      %5342 = vrot.lane.b32.xlu0 %v5341, 96
      %v5343 = vpop.permute.xlu0 %5342
      %5345 = vst.msk [vmem:[%s244 + $0x8] sm:$0x4] %vm729, %v5343
      %v5346 = vld [vmem:[#allocation2 + $0xd0] sm:$0x30]
      %v5347 = vld [vmem:[#allocation2 + $0xd8] sm:$0x30]
      %v5348 = vrot.slane %v5336, 1
      %v5350 = vsel %vm559, %v5348, 0
      %5352 = vmatprep.subr.bf16.mxu0 %v544
      %5353 = vmatpush1.bf16.msra.mxu0 %v543
      %5354 = vmatprep.subr.bf16.mxu0 %v546
      %5355 = vmatpush1.bf16.msra.mxu0 %v545
      %5356 = vmatprep.subr.bf16.mxu0 %v548
      %5357 = vmatpush1.bf16.msra.mxu0 %v547
      %5358 = vmatprep.subr.bf16.mxu0 %v550
      %5359 = vmatpush1.bf16.msra.mxu0 %v549
      %5360 = vmatprep.subr.bf16.mxu0 0
      %5361 = vmatpush1.bf16.msra.mxu0 0
      %5362 = vmatprep.subr.bf16.mxu0 0
      %5363 = vmatpush1.bf16.msra.mxu0 0
      %5364 = vmatprep.subr.bf16.mxu0 0
      %5365 = vmatpush1.bf16.msra.mxu0 0
      %5366 = vmatprep.subr.bf16.mxu0 0
      %5367 = vmatpush1.bf16.msra.mxu0 0
      %5368 = vmatprep.subr.bf16.mxu0 0
      %5369 = vmatpush1.bf16.msra.mxu0 0
      %5370 = vmatprep.subr.bf16.mxu0 0
      %5371 = vmatpush1.bf16.msra.mxu0 0
      %5372 = vmatprep.subr.bf16.mxu0 0
      %5373 = vmatpush1.bf16.msra.mxu0 0
      %5374 = vmatprep.subr.bf16.mxu0 0
      %5375 = vmatpush1.bf16.msra.mxu0 0
      %5376 = vmatprep.subr.bf16.mxu0 0
      %5377 = vmatpush1.bf16.msra.mxu0 0
      %5378 = vmatprep.subr.bf16.mxu0 0
      %5379 = vmatpush1.bf16.msra.mxu0 0
      %5380 = vmatprep.subr.bf16.mxu0 0
      %5381 = vmatpush1.bf16.msra.mxu0 0
      %5382 = vmatprep.subr.bf16.mxu0 0
      %5383 = vmatpush1.bf16.msra.mxu0 0
      %5384 = vmatprep.mubr.bf16.mxu0 0
      %5385 = vmatmul.mubr.bf16.gmra.mrb[0].mxu0 %v5350
      %v5386 = vpop.f32.mrb[0].mxu0
      %v5387 = vadd.f32 0.0, %v5386
      %v5388 = vpop.f32.mrb[0].mxu0
      %v5389 = vadd.f32 0.0, %v5388
      %v5390 = vpop.f32.mrb[0].mxu0
      %v5391 = vpop.f32.mrb[0].mxu0
      %5392 = vdwg.mxu0
      %v5395 = vrot.slane %v5387, 4
      %v5396 = vrot.slane %v5389, 4
      %v5399 = vadd.f32 %v5346, %v5395
      %v5400 = vadd.f32 %v5347, %v5396
      %v5401 = vxor.u32 %v5399, 2147483648
      %v5402 = vxor.u32 %v5400, 2147483648
      %v5403 = vmul.f32 %v5401, 1.442695
      %v5404 = vpow.pop %v5403
      %v5405 = vmul.f32 %v5402, 1.442695
      %v5406 = vpow.pop %v5405
      %v5407 = vadd.f32 %v5404, 1.0
      %v5408 = vadd.f32 %v5406, 1.0
      %v5409 = vrcp.pop %v5407
      %v5410 = vmul.f32 1.0, %v5409
      %v5411 = vrcp.pop %v5408
      %v5412 = vmul.f32 1.0, %v5411
      %v5413 = vtanh.pop %v5400
      %v5415 = vrot.slane %v5333, 6
      %v5417 = vmul.f32 %v5410, %v5415
      %v5418 = vmul.f32 %v5410, %v5413
      %5420 = vrot.lane.b32.xlu0 %v5418, 64
      %v5421 = vpop.permute.xlu0 %5420
      %v5423 = vadd.f32 %v5417, %v5421
      %v5424 = vtanh.pop %v5423
      %v5425 = vmul.f32 %v5412, %v5424
      %v5426 = vpack.c.bf16 %v5425, %v5425
      %5427 = vst.msk [vmem:[%s237 + $0x34] sm:$0x4] %vm729, %v5426
      %v5429 = vunpack.c.l.b16 %v5426
      %v5430 = vpack.c.b16 %v5429, %v5429
      %v5431 = vrot.slane %v5430, 5
      %v5432 = vrot.slane %v5431, 4
      %5433 = vrot.lane.b32.xlu0 %v5432, 96
      %v5434 = vpop.permute.xlu0 %5433
      %5436 = vst.msk [vmem:[%s244 + $0x8] sm:$0x2] %vm720, %v5434
      %v5437 = vld [vmem:[#allocation2 + $0xd0] sm:$0xc0]
      %v5438 = vld [vmem:[#allocation2 + $0xd8] sm:$0xc0]
      %v5439 = vrot.slane %v5426, 2
      %v5441 = vsel %vm559, %v5439, 0
      %5443 = vmatprep.subr.bf16.mxu0 %v544
      %5444 = vmatpush1.bf16.msra.mxu0 %v543
      %5445 = vmatprep.subr.bf16.mxu0 %v546
      %5446 = vmatpush1.bf16.msra.mxu0 %v545
      %5447 = vmatprep.subr.bf16.mxu0 %v548
      %5448 = vmatpush1.bf16.msra.mxu0 %v547
      %5449 = vmatprep.subr.bf16.mxu0 %v550
      %5450 = vmatpush1.bf16.msra.mxu0 %v549
      %5451 = vmatprep.subr.bf16.mxu0 0
      %5452 = vmatpush1.bf16.msra.mxu0 0
      %5453 = vmatprep.subr.bf16.mxu0 0
      %5454 = vmatpush1.bf16.msra.mxu0 0
      %5455 = vmatprep.subr.bf16.mxu0 0
      %5456 = vmatpush1.bf16.msra.mxu0 0
      %5457 = vmatprep.subr.bf16.mxu0 0
      %5458 = vmatpush1.bf16.msra.mxu0 0
      %5459 = vmatprep.subr.bf16.mxu0 0
      %5460 = vmatpush1.bf16.msra.mxu0 0
      %5461 = vmatprep.subr.bf16.mxu0 0
      %5462 = vmatpush1.bf16.msra.mxu0 0
      %5463 = vmatprep.subr.bf16.mxu0 0
      %5464 = vmatpush1.bf16.msra.mxu0 0
      %5465 = vmatprep.subr.bf16.mxu0 0
      %5466 = vmatpush1.bf16.msra.mxu0 0
      %5467 = vmatprep.subr.bf16.mxu0 0
      %5468 = vmatpush1.bf16.msra.mxu0 0
      %5469 = vmatprep.subr.bf16.mxu0 0
      %5470 = vmatpush1.bf16.msra.mxu0 0
      %5471 = vmatprep.subr.bf16.mxu0 0
      %5472 = vmatpush1.bf16.msra.mxu0 0
      %5473 = vmatprep.subr.bf16.mxu0 0
      %5474 = vmatpush1.bf16.msra.mxu0 0
      %5475 = vmatprep.mubr.bf16.mxu0 0
      %5476 = vmatmul.mubr.bf16.gmra.mrb[0].mxu0 %v5441
      %v5477 = vpop.f32.mrb[0].mxu0
      %v5478 = vadd.f32 0.0, %v5477
      %v5479 = vpop.f32.mrb[0].mxu0
      %v5480 = vadd.f32 0.0, %v5479
      %v5481 = vpop.f32.mrb[0].mxu0
      %v5482 = vpop.f32.mrb[0].mxu0
      %5483 = vdwg.mxu0
      %v5486 = vrot.slane %v5478, 2
      %v5487 = vrot.slane %v5480, 2
      %v5490 = vadd.f32 %v5437, %v5486
      %v5491 = vadd.f32 %v5438, %v5487
      %v5492 = vxor.u32 %v5490, 2147483648
      %v5493 = vxor.u32 %v5491, 2147483648
      %v5494 = vmul.f32 %v5492, 1.442695
      %v5495 = vpow.pop %v5494
      %v5496 = vmul.f32 %v5493, 1.442695
      %v5497 = vpow.pop %v5496
      %v5498 = vadd.f32 %v5495, 1.0
      %v5499 = vadd.f32 %v5497, 1.0
      %v5500 = vrcp.pop %v5498
      %v5501 = vmul.f32 1.0, %v5500
      %v5502 = vrcp.pop %v5499
      %v5503 = vmul.f32 1.0, %v5502
      %v5504 = vtanh.pop %v5491
      %v5506 = vrot.slane %v5423, 6
      %v5508 = vmul.f32 %v5501, %v5506
      %v5509 = vmul.f32 %v5501, %v5504
      %5511 = vrot.lane.b32.xlu0 %v5509, 64
      %v5512 = vpop.permute.xlu0 %5511
      %v5514 = vadd.f32 %v5508, %v5512
      %v5515 = vtanh.pop %v5514
      %v5516 = vmul.f32 %v5503, %v5515
      %v5517 = vpack.c.bf16 %v5516, %v5516
      %5518 = vst.msk [vmem:[%s237 + $0x34] sm:$0x8] %vm638, %v5517
      %v5520 = vunpack.c.l.b16 %v5517
      %v5521 = vpack.c.b16 %v5520, %v5520
      %v5522 = vrot.slane %v5521, 7
      %v5523 = vrot.slane %v5522, 4
      %5524 = vrot.lane.b32.xlu0 %v5523, 96
      %v5525 = vpop.permute.xlu0 %5524
      %5527 = vst.msk [vmem:[%s244 + $0x8] sm:$0x1] %vm629, %v5525
      %v5528 = vld [vmem:[#allocation2 + $0xe0] sm:$0x3]
      %v5529 = vld [vmem:[#allocation2 + $0xe8] sm:$0x3]
      %v5530 = vrot.slane %v5517, 3
      %v5532 = vsel %vm559, %v5530, 0
      %5534 = vmatprep.subr.bf16.mxu0 %v544
      %5535 = vmatpush1.bf16.msra.mxu0 %v543
      %5536 = vmatprep.subr.bf16.mxu0 %v546
      %5537 = vmatpush1.bf16.msra.mxu0 %v545
      %5538 = vmatprep.subr.bf16.mxu0 %v548
      %5539 = vmatpush1.bf16.msra.mxu0 %v547
      %5540 = vmatprep.subr.bf16.mxu0 %v550
      %5541 = vmatpush1.bf16.msra.mxu0 %v549
      %5542 = vmatprep.subr.bf16.mxu0 0
      %5543 = vmatpush1.bf16.msra.mxu0 0
      %5544 = vmatprep.subr.bf16.mxu0 0
      %5545 = vmatpush1.bf16.msra.mxu0 0
      %5546 = vmatprep.subr.bf16.mxu0 0
      %5547 = vmatpush1.bf16.msra.mxu0 0
      %5548 = vmatprep.subr.bf16.mxu0 0
      %5549 = vmatpush1.bf16.msra.mxu0 0
      %5550 = vmatprep.subr.bf16.mxu0 0
      %5551 = vmatpush1.bf16.msra.mxu0 0
      %5552 = vmatprep.subr.bf16.mxu0 0
      %5553 = vmatpush1.bf16.msra.mxu0 0
      %5554 = vmatprep.subr.bf16.mxu0 0
      %5555 = vmatpush1.bf16.msra.mxu0 0
      %5556 = vmatprep.subr.bf16.mxu0 0
      %5557 = vmatpush1.bf16.msra.mxu0 0
      %5558 = vmatprep.subr.bf16.mxu0 0
      %5559 = vmatpush1.bf16.msra.mxu0 0
      %5560 = vmatprep.subr.bf16.mxu0 0
      %5561 = vmatpush1.bf16.msra.mxu0 0
      %5562 = vmatprep.subr.bf16.mxu0 0
      %5563 = vmatpush1.bf16.msra.mxu0 0
      %5564 = vmatprep.subr.bf16.mxu0 0
      %5565 = vmatpush1.bf16.msra.mxu0 0
      %5566 = vmatprep.mubr.bf16.mxu0 0
      %5567 = vmatmul.mubr.bf16.gmra.mrb[0].mxu0 %v5532
      %v5568 = vpop.f32.mrb[0].mxu0
      %v5569 = vadd.f32 0.0, %v5568
      %v5570 = vpop.f32.mrb[0].mxu0
      %v5571 = vadd.f32 0.0, %v5570
      %v5572 = vpop.f32.mrb[0].mxu0
      %v5573 = vpop.f32.mrb[0].mxu0
      %5574 = vdwg.mxu0
      %v5575 = vadd.f32 %v5528, %v5569
      %v5576 = vadd.f32 %v5529, %v5571
      %v5577 = vxor.u32 %v5575, 2147483648
      %v5578 = vxor.u32 %v5576, 2147483648
      %v5579 = vmul.f32 %v5577, 1.442695
      %v5580 = vpow.pop %v5579
      %v5581 = vmul.f32 %v5578, 1.442695
      %v5582 = vpow.pop %v5581
      %v5583 = vadd.f32 %v5580, 1.0
      %v5584 = vadd.f32 %v5582, 1.0
      %v5585 = vrcp.pop %v5583
      %v5586 = vmul.f32 1.0, %v5585
      %v5587 = vrcp.pop %v5584
      %v5588 = vmul.f32 1.0, %v5587
      %v5589 = vtanh.pop %v5576
      %v5591 = vrot.slane %v5514, 6
      %v5593 = vmul.f32 %v5586, %v5591
      %v5594 = vmul.f32 %v5586, %v5589
      %5596 = vrot.lane.b32.xlu0 %v5594, 64
      %v5597 = vpop.permute.xlu0 %5596
      %v5599 = vadd.f32 %v5593, %v5597
      %v5600 = vtanh.pop %v5599
      %v5601 = vmul.f32 %v5588, %v5600
      %v5602 = vpack.c.bf16 %v5601, %v5601
      %5603 = vst.msk [vmem:[%s237 + $0x38] sm:$0x1] %vm629, %v5602
      %v5605 = vunpack.c.l.b16 %v5602
      %v5606 = vpack.c.b16 %v5605, %v5605
      %v5607 = vrot.slane %v5606, 5
      %5608 = vrot.lane.b32.xlu0 %v5607, 96
      %v5609 = vpop.permute.xlu0 %5608
      %5611 = vst.msk [vmem:[%s244 + $0x4] sm:$0x8] %vm638, %v5609
      %v5612 = vld [vmem:[#allocation2 + $0xe0] sm:$0xc]
      %v5613 = vld [vmem:[#allocation2 + $0xe8] sm:$0xc]
      %v5615 = vsel %vm559, %v5602, 0
      %5617 = vmatprep.subr.bf16.mxu0 %v544
      %5618 = vmatpush1.bf16.msra.mxu0 %v543
      %5619 = vmatprep.subr.bf16.mxu0 %v546
      %5620 = vmatpush1.bf16.msra.mxu0 %v545
      %5621 = vmatprep.subr.bf16.mxu0 %v548
      %5622 = vmatpush1.bf16.msra.mxu0 %v547
      %5623 = vmatprep.subr.bf16.mxu0 %v550
      %5624 = vmatpush1.bf16.msra.mxu0 %v549
      %5625 = vmatprep.subr.bf16.mxu0 0
      %5626 = vmatpush1.bf16.msra.mxu0 0
      %5627 = vmatprep.subr.bf16.mxu0 0
      %5628 = vmatpush1.bf16.msra.mxu0 0
      %5629 = vmatprep.subr.bf16.mxu0 0
      %5630 = vmatpush1.bf16.msra.mxu0 0
      %5631 = vmatprep.subr.bf16.mxu0 0
      %5632 = vmatpush1.bf16.msra.mxu0 0
      %5633 = vmatprep.subr.bf16.mxu0 0
      %5634 = vmatpush1.bf16.msra.mxu0 0
      %5635 = vmatprep.subr.bf16.mxu0 0
      %5636 = vmatpush1.bf16.msra.mxu0 0
      %5637 = vmatprep.subr.bf16.mxu0 0
      %5638 = vmatpush1.bf16.msra.mxu0 0
      %5639 = vmatprep.subr.bf16.mxu0 0
      %5640 = vmatpush1.bf16.msra.mxu0 0
      %5641 = vmatprep.subr.bf16.mxu0 0
      %5642 = vmatpush1.bf16.msra.mxu0 0
      %5643 = vmatprep.subr.bf16.mxu0 0
      %5644 = vmatpush1.bf16.msra.mxu0 0
      %5645 = vmatprep.subr.bf16.mxu0 0
      %5646 = vmatpush1.bf16.msra.mxu0 0
      %5647 = vmatprep.subr.bf16.mxu0 0
      %5648 = vmatpush1.bf16.msra.mxu0 0
      %5649 = vmatprep.mubr.bf16.mxu0 0
      %5650 = vmatmul.mubr.bf16.gmra.mrb[0].mxu0 %v5615
      %v5651 = vpop.f32.mrb[0].mxu0
      %v5652 = vadd.f32 0.0, %v5651
      %v5653 = vpop.f32.mrb[0].mxu0
      %v5654 = vadd.f32 0.0, %v5653
      %v5655 = vpop.f32.mrb[0].mxu0
      %v5656 = vpop.f32.mrb[0].mxu0
      %5657 = vdwg.mxu0
      %v5660 = vrot.slane %v5652, 6
      %v5661 = vrot.slane %v5654, 6
      %v5664 = vadd.f32 %v5612, %v5660
      %v5665 = vadd.f32 %v5613, %v5661
      %v5666 = vxor.u32 %v5664, 2147483648
      %v5667 = vxor.u32 %v5665, 2147483648
      %v5668 = vmul.f32 %v5666, 1.442695
      %v5669 = vpow.pop %v5668
      %v5670 = vmul.f32 %v5667, 1.442695
      %v5671 = vpow.pop %v5670
      %v5672 = vadd.f32 %v5669, 1.0
      %v5673 = vadd.f32 %v5671, 1.0
      %v5674 = vrcp.pop %v5672
      %v5675 = vmul.f32 1.0, %v5674
      %v5676 = vrcp.pop %v5673
      %v5677 = vmul.f32 1.0, %v5676
      %v5678 = vtanh.pop %v5665
      %v5680 = vrot.slane %v5599, 6
      %v5682 = vmul.f32 %v5675, %v5680
      %v5683 = vmul.f32 %v5675, %v5678
      %5685 = vrot.lane.b32.xlu0 %v5683, 64
      %v5686 = vpop.permute.xlu0 %5685
      %v5688 = vadd.f32 %v5682, %v5686
      %v5689 = vtanh.pop %v5688
      %v5690 = vmul.f32 %v5677, %v5689
      %v5691 = vpack.c.bf16 %v5690, %v5690
      %5692 = vst.msk [vmem:[%s237 + $0x38] sm:$0x2] %vm720, %v5691
      %v5694 = vunpack.c.l.b16 %v5691
      %v5695 = vpack.c.b16 %v5694, %v5694
      %v5696 = vrot.slane %v5695, 7
      %5697 = vrot.lane.b32.xlu0 %v5696, 96
      %v5698 = vpop.permute.xlu0 %5697
      %5700 = vst.msk [vmem:[%s244 + $0x4] sm:$0x4] %vm729, %v5698
      %v5701 = vld [vmem:[#allocation2 + $0xe0] sm:$0x30]
      %v5702 = vld [vmem:[#allocation2 + $0xe8] sm:$0x30]
      %v5703 = vrot.slane %v5691, 1
      %v5705 = vsel %vm559, %v5703, 0
      %5707 = vmatprep.subr.bf16.mxu0 %v544
      %5708 = vmatpush1.bf16.msra.mxu0 %v543
      %5709 = vmatprep.subr.bf16.mxu0 %v546
      %5710 = vmatpush1.bf16.msra.mxu0 %v545
      %5711 = vmatprep.subr.bf16.mxu0 %v548
      %5712 = vmatpush1.bf16.msra.mxu0 %v547
      %5713 = vmatprep.subr.bf16.mxu0 %v550
      %5714 = vmatpush1.bf16.msra.mxu0 %v549
      %5715 = vmatprep.subr.bf16.mxu0 0
      %5716 = vmatpush1.bf16.msra.mxu0 0
      %5717 = vmatprep.subr.bf16.mxu0 0
      %5718 = vmatpush1.bf16.msra.mxu0 0
      %5719 = vmatprep.subr.bf16.mxu0 0
      %5720 = vmatpush1.bf16.msra.mxu0 0
      %5721 = vmatprep.subr.bf16.mxu0 0
      %5722 = vmatpush1.bf16.msra.mxu0 0
      %5723 = vmatprep.subr.bf16.mxu0 0
      %5724 = vmatpush1.bf16.msra.mxu0 0
      %5725 = vmatprep.subr.bf16.mxu0 0
      %5726 = vmatpush1.bf16.msra.mxu0 0
      %5727 = vmatprep.subr.bf16.mxu0 0
      %5728 = vmatpush1.bf16.msra.mxu0 0
      %5729 = vmatprep.subr.bf16.mxu0 0
      %5730 = vmatpush1.bf16.msra.mxu0 0
      %5731 = vmatprep.subr.bf16.mxu0 0
      %5732 = vmatpush1.bf16.msra.mxu0 0
      %5733 = vmatprep.subr.bf16.mxu0 0
      %5734 = vmatpush1.bf16.msra.mxu0 0
      %5735 = vmatprep.subr.bf16.mxu0 0
      %5736 = vmatpush1.bf16.msra.mxu0 0
      %5737 = vmatprep.subr.bf16.mxu0 0
      %5738 = vmatpush1.bf16.msra.mxu0 0
      %5739 = vmatprep.mubr.bf16.mxu0 0
      %5740 = vmatmul.mubr.bf16.gmra.mrb[0].mxu0 %v5705
      %v5741 = vpop.f32.mrb[0].mxu0
      %v5742 = vadd.f32 0.0, %v5741
      %v5743 = vpop.f32.mrb[0].mxu0
      %v5744 = vadd.f32 0.0, %v5743
      %v5745 = vpop.f32.mrb[0].mxu0
      %v5746 = vpop.f32.mrb[0].mxu0
      %5747 = vdwg.mxu0
      %v5750 = vrot.slane %v5742, 4
      %v5751 = vrot.slane %v5744, 4
      %v5754 = vadd.f32 %v5701, %v5750
      %v5755 = vadd.f32 %v5702, %v5751
      %v5756 = vxor.u32 %v5754, 2147483648
      %v5757 = vxor.u32 %v5755, 2147483648
      %v5758 = vmul.f32 %v5756, 1.442695
      %v5759 = vpow.pop %v5758
      %v5760 = vmul.f32 %v5757, 1.442695
      %v5761 = vpow.pop %v5760
      %v5762 = vadd.f32 %v5759, 1.0
      %v5763 = vadd.f32 %v5761, 1.0
      %v5764 = vrcp.pop %v5762
      %v5765 = vmul.f32 1.0, %v5764
      %v5766 = vrcp.pop %v5763
      %v5767 = vmul.f32 1.0, %v5766
      %v5768 = vtanh.pop %v5755
      %v5770 = vrot.slane %v5688, 6
      %v5772 = vmul.f32 %v5765, %v5770
      %v5773 = vmul.f32 %v5765, %v5768
      %5775 = vrot.lane.b32.xlu0 %v5773, 64
      %v5776 = vpop.permute.xlu0 %5775
      %v5778 = vadd.f32 %v5772, %v5776
      %v5779 = vtanh.pop %v5778
      %v5780 = vmul.f32 %v5767, %v5779
      %v5781 = vpack.c.bf16 %v5780, %v5780
      %5782 = vst.msk [vmem:[%s237 + $0x38] sm:$0x4] %vm729, %v5781
      %v5784 = vunpack.c.l.b16 %v5781
      %v5785 = vpack.c.b16 %v5784, %v5784
      %v5786 = vrot.slane %v5785, 5
      %v5787 = vrot.slane %v5786, 4
      %5788 = vrot.lane.b32.xlu0 %v5787, 96
      %v5789 = vpop.permute.xlu0 %5788
      %5791 = vst.msk [vmem:[%s244 + $0x4] sm:$0x2] %vm720, %v5789
      %v5792 = vld [vmem:[#allocation2 + $0xe0] sm:$0xc0]
      %v5793 = vld [vmem:[#allocation2 + $0xe8] sm:$0xc0]
      %v5794 = vrot.slane %v5781, 2
      %v5796 = vsel %vm559, %v5794, 0
      %5798 = vmatprep.subr.bf16.mxu0 %v544
      %5799 = vmatpush1.bf16.msra.mxu0 %v543
      %5800 = vmatprep.subr.bf16.mxu0 %v546
      %5801 = vmatpush1.bf16.msra.mxu0 %v545
      %5802 = vmatprep.subr.bf16.mxu0 %v548
      %5803 = vmatpush1.bf16.msra.mxu0 %v547
      %5804 = vmatprep.subr.bf16.mxu0 %v550
      %5805 = vmatpush1.bf16.msra.mxu0 %v549
      %5806 = vmatprep.subr.bf16.mxu0 0
      %5807 = vmatpush1.bf16.msra.mxu0 0
      %5808 = vmatprep.subr.bf16.mxu0 0
      %5809 = vmatpush1.bf16.msra.mxu0 0
      %5810 = vmatprep.subr.bf16.mxu0 0
      %5811 = vmatpush1.bf16.msra.mxu0 0
      %5812 = vmatprep.subr.bf16.mxu0 0
      %5813 = vmatpush1.bf16.msra.mxu0 0
      %5814 = vmatprep.subr.bf16.mxu0 0
      %5815 = vmatpush1.bf16.msra.mxu0 0
      %5816 = vmatprep.subr.bf16.mxu0 0
      %5817 = vmatpush1.bf16.msra.mxu0 0
      %5818 = vmatprep.subr.bf16.mxu0 0
      %5819 = vmatpush1.bf16.msra.mxu0 0
      %5820 = vmatprep.subr.bf16.mxu0 0
      %5821 = vmatpush1.bf16.msra.mxu0 0
      %5822 = vmatprep.subr.bf16.mxu0 0
      %5823 = vmatpush1.bf16.msra.mxu0 0
      %5824 = vmatprep.subr.bf16.mxu0 0
      %5825 = vmatpush1.bf16.msra.mxu0 0
      %5826 = vmatprep.subr.bf16.mxu0 0
      %5827 = vmatpush1.bf16.msra.mxu0 0
      %5828 = vmatprep.subr.bf16.mxu0 0
      %5829 = vmatpush1.bf16.msra.mxu0 0
      %5830 = vmatprep.mubr.bf16.mxu0 0
      %5831 = vmatmul.mubr.bf16.gmra.mrb[0].mxu0 %v5796
      %v5832 = vpop.f32.mrb[0].mxu0
      %v5833 = vadd.f32 0.0, %v5832
      %v5834 = vpop.f32.mrb[0].mxu0
      %v5835 = vadd.f32 0.0, %v5834
      %v5836 = vpop.f32.mrb[0].mxu0
      %v5837 = vpop.f32.mrb[0].mxu0
      %5838 = vdwg.mxu0
      %v5841 = vrot.slane %v5833, 2
      %v5842 = vrot.slane %v5835, 2
      %v5845 = vadd.f32 %v5792, %v5841
      %v5846 = vadd.f32 %v5793, %v5842
      %v5847 = vxor.u32 %v5845, 2147483648
      %v5848 = vxor.u32 %v5846, 2147483648
      %v5849 = vmul.f32 %v5847, 1.442695
      %v5850 = vpow.pop %v5849
      %v5851 = vmul.f32 %v5848, 1.442695
      %v5852 = vpow.pop %v5851
      %v5853 = vadd.f32 %v5850, 1.0
      %v5854 = vadd.f32 %v5852, 1.0
      %v5855 = vrcp.pop %v5853
      %v5856 = vmul.f32 1.0, %v5855
      %v5857 = vrcp.pop %v5854
      %v5858 = vmul.f32 1.0, %v5857
      %v5859 = vtanh.pop %v5846
      %v5861 = vrot.slane %v5778, 6
      %v5863 = vmul.f32 %v5856, %v5861
      %v5864 = vmul.f32 %v5856, %v5859
      %5866 = vrot.lane.b32.xlu0 %v5864, 64
      %v5867 = vpop.permute.xlu0 %5866
      %v5869 = vadd.f32 %v5863, %v5867
      %v5870 = vtanh.pop %v5869
      %v5871 = vmul.f32 %v5858, %v5870
      %v5872 = vpack.c.bf16 %v5871, %v5871
      %5873 = vst.msk [vmem:[%s237 + $0x38] sm:$0x8] %vm638, %v5872
      %v5875 = vunpack.c.l.b16 %v5872
      %v5876 = vpack.c.b16 %v5875, %v5875
      %v5877 = vrot.slane %v5876, 7
      %v5878 = vrot.slane %v5877, 4
      %5879 = vrot.lane.b32.xlu0 %v5878, 96
      %v5880 = vpop.permute.xlu0 %5879
      %5882 = vst.msk [vmem:[%s244 + $0x4] sm:$0x1] %vm629, %v5880
      %v5883 = vld [vmem:[#allocation2 + $0xf0] sm:$0x3]
      %v5884 = vld [vmem:[#allocation2 + $0xf8] sm:$0x3]
      %v5885 = vrot.slane %v5872, 3
      %v5887 = vsel %vm559, %v5885, 0
      %5889 = vmatprep.subr.bf16.mxu0 %v544
      %5890 = vmatpush1.bf16.msra.mxu0 %v543
      %5891 = vmatprep.subr.bf16.mxu0 %v546
      %5892 = vmatpush1.bf16.msra.mxu0 %v545
      %5893 = vmatprep.subr.bf16.mxu0 %v548
      %5894 = vmatpush1.bf16.msra.mxu0 %v547
      %5895 = vmatprep.subr.bf16.mxu0 %v550
      %5896 = vmatpush1.bf16.msra.mxu0 %v549
      %5897 = vmatprep.subr.bf16.mxu0 0
      %5898 = vmatpush1.bf16.msra.mxu0 0
      %5899 = vmatprep.subr.bf16.mxu0 0
      %5900 = vmatpush1.bf16.msra.mxu0 0
      %5901 = vmatprep.subr.bf16.mxu0 0
      %5902 = vmatpush1.bf16.msra.mxu0 0
      %5903 = vmatprep.subr.bf16.mxu0 0
      %5904 = vmatpush1.bf16.msra.mxu0 0
      %5905 = vmatprep.subr.bf16.mxu0 0
      %5906 = vmatpush1.bf16.msra.mxu0 0
      %5907 = vmatprep.subr.bf16.mxu0 0
      %5908 = vmatpush1.bf16.msra.mxu0 0
      %5909 = vmatprep.subr.bf16.mxu0 0
      %5910 = vmatpush1.bf16.msra.mxu0 0
      %5911 = vmatprep.subr.bf16.mxu0 0
      %5912 = vmatpush1.bf16.msra.mxu0 0
      %5913 = vmatprep.subr.bf16.mxu0 0
      %5914 = vmatpush1.bf16.msra.mxu0 0
      %5915 = vmatprep.subr.bf16.mxu0 0
      %5916 = vmatpush1.bf16.msra.mxu0 0
      %5917 = vmatprep.subr.bf16.mxu0 0
      %5918 = vmatpush1.bf16.msra.mxu0 0
      %5919 = vmatprep.subr.bf16.mxu0 0
      %5920 = vmatpush1.bf16.msra.mxu0 0
      %5921 = vmatprep.mubr.bf16.mxu0 0
      %5922 = vmatmul.mubr.bf16.gmra.mrb[0].mxu0 %v5887
      %v5923 = vpop.f32.mrb[0].mxu0
      %v5924 = vadd.f32 0.0, %v5923
      %v5925 = vpop.f32.mrb[0].mxu0
      %v5926 = vadd.f32 0.0, %v5925
      %v5927 = vpop.f32.mrb[0].mxu0
      %v5928 = vpop.f32.mrb[0].mxu0
      %5929 = vdwg.mxu0
      %v5930 = vadd.f32 %v5883, %v5924
      %v5931 = vadd.f32 %v5884, %v5926
      %v5932 = vxor.u32 %v5930, 2147483648
      %v5933 = vxor.u32 %v5931, 2147483648
      %v5934 = vmul.f32 %v5932, 1.442695
      %v5935 = vpow.pop %v5934
      %v5936 = vmul.f32 %v5933, 1.442695
      %v5937 = vpow.pop %v5936
      %v5938 = vadd.f32 %v5935, 1.0
      %v5939 = vadd.f32 %v5937, 1.0
      %v5940 = vrcp.pop %v5938
      %v5941 = vmul.f32 1.0, %v5940
      %v5942 = vrcp.pop %v5939
      %v5943 = vmul.f32 1.0, %v5942
      %v5944 = vtanh.pop %v5931
      %v5946 = vrot.slane %v5869, 6
      %v5948 = vmul.f32 %v5941, %v5946
      %v5949 = vmul.f32 %v5941, %v5944
      %5951 = vrot.lane.b32.xlu0 %v5949, 64
      %v5952 = vpop.permute.xlu0 %5951
      %v5954 = vadd.f32 %v5948, %v5952
      %v5955 = vtanh.pop %v5954
      %v5956 = vmul.f32 %v5943, %v5955
      %v5957 = vpack.c.bf16 %v5956, %v5956
      %5958 = vst.msk [vmem:[%s237 + $0x3c] sm:$0x1] %vm629, %v5957
      %v5960 = vunpack.c.l.b16 %v5957
      %v5961 = vpack.c.b16 %v5960, %v5960
      %v5962 = vrot.slane %v5961, 5
      %5963 = vrot.lane.b32.xlu0 %v5962, 96
      %v5964 = vpop.permute.xlu0 %5963
      %5966 = vst.msk [vmem:[%s244] sm:$0x8] %vm638, %v5964
      %v5967 = vld [vmem:[#allocation2 + $0xf0] sm:$0xc]
      %v5968 = vld [vmem:[#allocation2 + $0xf8] sm:$0xc]
      %v5970 = vsel %vm559, %v5957, 0
      %5972 = vmatprep.subr.bf16.mxu0 %v544
      %5973 = vmatpush1.bf16.msra.mxu0 %v543
      %5974 = vmatprep.subr.bf16.mxu0 %v546
      %5975 = vmatpush1.bf16.msra.mxu0 %v545
      %5976 = vmatprep.subr.bf16.mxu0 %v548
      %5977 = vmatpush1.bf16.msra.mxu0 %v547
      %5978 = vmatprep.subr.bf16.mxu0 %v550
      %5979 = vmatpush1.bf16.msra.mxu0 %v549
      %5980 = vmatprep.subr.bf16.mxu0 0
      %5981 = vmatpush1.bf16.msra.mxu0 0
      %5982 = vmatprep.subr.bf16.mxu0 0
      %5983 = vmatpush1.bf16.msra.mxu0 0
      %5984 = vmatprep.subr.bf16.mxu0 0
      %5985 = vmatpush1.bf16.msra.mxu0 0
      %5986 = vmatprep.subr.bf16.mxu0 0
      %5987 = vmatpush1.bf16.msra.mxu0 0
      %5988 = vmatprep.subr.bf16.mxu0 0
      %5989 = vmatpush1.bf16.msra.mxu0 0
      %5990 = vmatprep.subr.bf16.mxu0 0
      %5991 = vmatpush1.bf16.msra.mxu0 0
      %5992 = vmatprep.subr.bf16.mxu0 0
      %5993 = vmatpush1.bf16.msra.mxu0 0
      %5994 = vmatprep.subr.bf16.mxu0 0
      %5995 = vmatpush1.bf16.msra.mxu0 0
      %5996 = vmatprep.subr.bf16.mxu0 0
      %5997 = vmatpush1.bf16.msra.mxu0 0
      %5998 = vmatprep.subr.bf16.mxu0 0
      %5999 = vmatpush1.bf16.msra.mxu0 0
      %6000 = vmatprep.subr.bf16.mxu0 0
      %6001 = vmatpush1.bf16.msra.mxu0 0
      %6002 = vmatprep.subr.bf16.mxu0 0
      %6003 = vmatpush1.bf16.msra.mxu0 0
      %6004 = vmatprep.mubr.bf16.mxu0 0
      %6005 = vmatmul.mubr.bf16.gmra.mrb[0].mxu0 %v5970
      %v6006 = vpop.f32.mrb[0].mxu0
      %v6007 = vadd.f32 0.0, %v6006
      %v6008 = vpop.f32.mrb[0].mxu0
      %v6009 = vadd.f32 0.0, %v6008
      %v6010 = vpop.f32.mrb[0].mxu0
      %v6011 = vpop.f32.mrb[0].mxu0
      %6012 = vdwg.mxu0
      %v6015 = vrot.slane %v6007, 6
      %v6016 = vrot.slane %v6009, 6
      %v6019 = vadd.f32 %v5967, %v6015
      %v6020 = vadd.f32 %v5968, %v6016
      %v6021 = vxor.u32 %v6019, 2147483648
      %v6022 = vxor.u32 %v6020, 2147483648
      %v6023 = vmul.f32 %v6021, 1.442695
      %v6024 = vpow.pop %v6023
      %v6025 = vmul.f32 %v6022, 1.442695
      %v6026 = vpow.pop %v6025
      %v6027 = vadd.f32 %v6024, 1.0
      %v6028 = vadd.f32 %v6026, 1.0
      %v6029 = vrcp.pop %v6027
      %v6030 = vmul.f32 1.0, %v6029
      %v6031 = vrcp.pop %v6028
      %v6032 = vmul.f32 1.0, %v6031
      %v6033 = vtanh.pop %v6020
      %v6035 = vrot.slane %v5954, 6
      %v6037 = vmul.f32 %v6030, %v6035
      %v6038 = vmul.f32 %v6030, %v6033
      %6040 = vrot.lane.b32.xlu0 %v6038, 64
      %v6041 = vpop.permute.xlu0 %6040
      %v6043 = vadd.f32 %v6037, %v6041
      %v6044 = vtanh.pop %v6043
      %v6045 = vmul.f32 %v6032, %v6044
      %v6046 = vpack.c.bf16 %v6045, %v6045
      %6047 = vst.msk [vmem:[%s237 + $0x3c] sm:$0x2] %vm720, %v6046
      %v6049 = vunpack.c.l.b16 %v6046
      %v6050 = vpack.c.b16 %v6049, %v6049
      %v6051 = vrot.slane %v6050, 7
      %6052 = vrot.lane.b32.xlu0 %v6051, 96
      %v6053 = vpop.permute.xlu0 %6052
      %6055 = vst.msk [vmem:[%s244] sm:$0x4] %vm729, %v6053
      %v6056 = vld [vmem:[#allocation2 + $0xf0] sm:$0x30]
      %v6057 = vld [vmem:[#allocation2 + $0xf8] sm:$0x30]
      %v6058 = vrot.slane %v6046, 1
      %v6060 = vsel %vm559, %v6058, 0
      %6062 = vmatprep.subr.bf16.mxu0 %v544
      %6063 = vmatpush1.bf16.msra.mxu0 %v543
      %6064 = vmatprep.subr.bf16.mxu0 %v546
      %6065 = vmatpush1.bf16.msra.mxu0 %v545
      %6066 = vmatprep.subr.bf16.mxu0 %v548
      %6067 = vmatpush1.bf16.msra.mxu0 %v547
      %6068 = vmatprep.subr.bf16.mxu0 %v550
      %6069 = vmatpush1.bf16.msra.mxu0 %v549
      %6070 = vmatprep.subr.bf16.mxu0 0
      %6071 = vmatpush1.bf16.msra.mxu0 0
      %6072 = vmatprep.subr.bf16.mxu0 0
      %6073 = vmatpush1.bf16.msra.mxu0 0
      %6074 = vmatprep.subr.bf16.mxu0 0
      %6075 = vmatpush1.bf16.msra.mxu0 0
      %6076 = vmatprep.subr.bf16.mxu0 0
      %6077 = vmatpush1.bf16.msra.mxu0 0
      %6078 = vmatprep.subr.bf16.mxu0 0
      %6079 = vmatpush1.bf16.msra.mxu0 0
      %6080 = vmatprep.subr.bf16.mxu0 0
      %6081 = vmatpush1.bf16.msra.mxu0 0
      %6082 = vmatprep.subr.bf16.mxu0 0
      %6083 = vmatpush1.bf16.msra.mxu0 0
      %6084 = vmatprep.subr.bf16.mxu0 0
      %6085 = vmatpush1.bf16.msra.mxu0 0
      %6086 = vmatprep.subr.bf16.mxu0 0
      %6087 = vmatpush1.bf16.msra.mxu0 0
      %6088 = vmatprep.subr.bf16.mxu0 0
      %6089 = vmatpush1.bf16.msra.mxu0 0
      %6090 = vmatprep.subr.bf16.mxu0 0
      %6091 = vmatpush1.bf16.msra.mxu0 0
      %6092 = vmatprep.subr.bf16.mxu0 0
      %6093 = vmatpush1.bf16.msra.mxu0 0
      %6094 = vmatprep.mubr.bf16.mxu0 0
      %6095 = vmatmul.mubr.bf16.gmra.mrb[0].mxu0 %v6060
      %v6096 = vpop.f32.mrb[0].mxu0
      %v6097 = vadd.f32 0.0, %v6096
      %v6098 = vpop.f32.mrb[0].mxu0
      %v6099 = vadd.f32 0.0, %v6098
      %v6100 = vpop.f32.mrb[0].mxu0
      %v6101 = vpop.f32.mrb[0].mxu0
      %6102 = vdwg.mxu0
      %v6105 = vrot.slane %v6097, 4
      %v6106 = vrot.slane %v6099, 4
      %v6109 = vadd.f32 %v6056, %v6105
      %v6110 = vadd.f32 %v6057, %v6106
      %v6111 = vxor.u32 %v6109, 2147483648
      %v6112 = vxor.u32 %v6110, 2147483648
      %v6113 = vmul.f32 %v6111, 1.442695
      %v6114 = vpow.pop %v6113
      %v6115 = vmul.f32 %v6112, 1.442695
      %v6116 = vpow.pop %v6115
      %v6117 = vadd.f32 %v6114, 1.0
      %v6118 = vadd.f32 %v6116, 1.0
      %v6119 = vrcp.pop %v6117
      %v6120 = vmul.f32 1.0, %v6119
      %v6121 = vrcp.pop %v6118
      %v6122 = vmul.f32 1.0, %v6121
      %v6123 = vtanh.pop %v6110
      %v6125 = vrot.slane %v6043, 6
      %v6127 = vmul.f32 %v6120, %v6125
      %v6128 = vmul.f32 %v6120, %v6123
      %6130 = vrot.lane.b32.xlu0 %v6128, 64
      %v6131 = vpop.permute.xlu0 %6130
      %v6133 = vadd.f32 %v6127, %v6131
      %v6134 = vtanh.pop %v6133
      %v6135 = vmul.f32 %v6122, %v6134
      %v6136 = vpack.c.bf16 %v6135, %v6135
      %6137 = vst.msk [vmem:[%s237 + $0x3c] sm:$0x4] %vm729, %v6136
      %v6139 = vunpack.c.l.b16 %v6136
      %v6140 = vpack.c.b16 %v6139, %v6139
      %v6141 = vrot.slane %v6140, 5
      %v6142 = vrot.slane %v6141, 4
      %6143 = vrot.lane.b32.xlu0 %v6142, 96
      %v6144 = vpop.permute.xlu0 %6143
      %6146 = vst.msk [vmem:[%s244] sm:$0x2] %vm720, %v6144
      %v6147 = vld [vmem:[#allocation2 + $0xf0] sm:$0xc0]
      %v6148 = vld [vmem:[#allocation2 + $0xf8] sm:$0xc0]
      %v6149 = vrot.slane %v6136, 2
      %v6151 = vsel %vm559, %v6149, 0
      %6153 = vmatprep.subr.bf16.mxu0 %v544
      %6154 = vmatpush1.bf16.msra.mxu0 %v543
      %6155 = vmatprep.subr.bf16.mxu0 %v546
      %6156 = vmatpush1.bf16.msra.mxu0 %v545
      %6157 = vmatprep.subr.bf16.mxu0 %v548
      %6158 = vmatpush1.bf16.msra.mxu0 %v547
      %6159 = vmatprep.subr.bf16.mxu0 %v550
      %6160 = vmatpush1.bf16.msra.mxu0 %v549
      %6161 = vmatprep.subr.bf16.mxu0 0
      %6162 = vmatpush1.bf16.msra.mxu0 0
      %6163 = vmatprep.subr.bf16.mxu0 0
      %6164 = vmatpush1.bf16.msra.mxu0 0
      %6165 = vmatprep.subr.bf16.mxu0 0
      %6166 = vmatpush1.bf16.msra.mxu0 0
      %6167 = vmatprep.subr.bf16.mxu0 0
      %6168 = vmatpush1.bf16.msra.mxu0 0
      %6169 = vmatprep.subr.bf16.mxu0 0
      %6170 = vmatpush1.bf16.msra.mxu0 0
      %6171 = vmatprep.subr.bf16.mxu0 0
      %6172 = vmatpush1.bf16.msra.mxu0 0
      %6173 = vmatprep.subr.bf16.mxu0 0
      %6174 = vmatpush1.bf16.msra.mxu0 0
      %6175 = vmatprep.subr.bf16.mxu0 0
      %6176 = vmatpush1.bf16.msra.mxu0 0
      %6177 = vmatprep.subr.bf16.mxu0 0
      %6178 = vmatpush1.bf16.msra.mxu0 0
      %6179 = vmatprep.subr.bf16.mxu0 0
      %6180 = vmatpush1.bf16.msra.mxu0 0
      %6181 = vmatprep.subr.bf16.mxu0 0
      %6182 = vmatpush1.bf16.msra.mxu0 0
      %6183 = vmatprep.subr.bf16.mxu0 0
      %6184 = vmatpush1.bf16.msra.mxu0 0
      %6185 = vmatprep.mubr.bf16.mxu0 0
      %6186 = vmatmul.mubr.bf16.gmra.mrb[0].mxu0 %v6151
      %v6187 = vpop.f32.mrb[0].mxu0
      %v6188 = vadd.f32 0.0, %v6187
      %v6189 = vpop.f32.mrb[0].mxu0
      %v6190 = vadd.f32 0.0, %v6189
      %v6191 = vpop.f32.mrb[0].mxu0
      %v6192 = vpop.f32.mrb[0].mxu0
      %6193 = vdwg.mxu0
      %v6196 = vrot.slane %v6188, 2
      %v6197 = vrot.slane %v6190, 2
      %v6200 = vadd.f32 %v6147, %v6196
      %v6201 = vadd.f32 %v6148, %v6197
      %v6202 = vxor.u32 %v6200, 2147483648
      %v6203 = vxor.u32 %v6201, 2147483648
      %v6204 = vmul.f32 %v6202, 1.442695
      %v6205 = vpow.pop %v6204
      %v6206 = vmul.f32 %v6203, 1.442695
      %v6207 = vpow.pop %v6206
      %v6208 = vadd.f32 %v6205, 1.0
      %v6209 = vadd.f32 %v6207, 1.0
      %v6210 = vrcp.pop %v6208
      %v6211 = vmul.f32 1.0, %v6210
      %v6212 = vrcp.pop %v6209
      %v6213 = vmul.f32 1.0, %v6212
      %v6214 = vtanh.pop %v6201
      %v6216 = vrot.slane %v6133, 6
      %v6218 = vmul.f32 %v6211, %v6216
      %v6219 = vmul.f32 %v6211, %v6214
      %6221 = vrot.lane.b32.xlu0 %v6219, 64
      %v6222 = vpop.permute.xlu0 %6221
      %v6224 = vadd.f32 %v6218, %v6222
      %v6225 = vtanh.pop %v6224
      %v6226 = vmul.f32 %v6213, %v6225
      %v6227 = vpack.c.bf16 %v6226, %v6226
      %6228 = vst.msk [vmem:[%s237 + $0x3c] sm:$0x8] %vm638, %v6227
      %v6230 = vunpack.c.l.b16 %v6227
      %v6231 = vpack.c.b16 %v6230, %v6230
      %v6232 = vrot.slane %v6231, 7
      %v6233 = vrot.slane %v6232, 4
      %6234 = vrot.lane.b32.xlu0 %v6233, 96
      %v6235 = vpop.permute.xlu0 %6234
      %6237 = vst.msk [vmem:[%s244] sm:$0x1] %vm629, %v6235
      %v6239 = vunpack.c.l.s4 1966171168
      %v6240 = vunpack.c.0.s8 %v6239
      %v6241 = vlaneseq
      %v6242 = vshrl.u32 %v6241, 7
      %v6243 = vsub.s32 %v6240, %v6242
      %v6244 = vrot.slane %v6227, %v6243
      %v6245 = vcombine.high %v6244, %v6244
      %v6247 = vunpack.c.l.s4 1966171168
      %v6248 = vunpack.c.0.s8 %v6247
      %v6249 = vlaneseq
      %v6250 = vshrl.u32 %v6249, 7
      %v6251 = vsub.s32 %v6248, %v6250
      %v6252 = vrot.slane %v6245, %v6251
      %v6253 = vcombine.high %v6252, %v6252
      %vm6255 = vcmask 516096
      %6256 = vst.msk [vmem:[#allocation3] sm:$0x1] %vm6255, %v6253
      %vm6257 = vcmask 523270
      %6258 = vst.msk [vmem:[#allocation4 - $0x6] sm:$0xc0] %vm6257, %v6224
      %s6259 = smul.u32 16, %s17
      %p6260 = scmp.lt.s32.totalorder %s6259, 63
      %s6261 = scalar_select %p6260, %s6259, 63
      %s6262 = smul.addr %s6261, 4
      %s6263 = scalar_lea.vmem %s4, %s6262
      %s6264 = ssub.s32 3, %s17
      %s6265 = smul.u32 16, %s6264
      %p6266 = scmp.lt.s32.totalorder %s6265, 63
      %s6267 = scalar_select %p6266, %s6265, 63
      %s6268 = smul.addr %s6267, 4
      %s6269 = scalar_lea.vmem %s5, %s6268
      // Predicated region
      $region41: #{blstm_forward.2} parent=35 // pred_check
        %p6270 = pneg %p124
      $region42: #{blstm_forward.2} parent=35 // pred_check_branch
        %6272 = sbr.rel (%p6270) target = $region44
      $region43: #{blstm_forward.2} parent=35 // pred_region
        %s6273 = smul.u32 16, %s17
      $region44: #{blstm_forward.2} parent=35 // pred_fallthru
        _
      // Predicated region
      $region45: #{blstm_forward.2} parent=35 // pred_check
        %p6274 = pneg %p152
      $region46: #{blstm_forward.2} parent=35 // pred_check_branch
        %6276 = sbr.rel (%p6274) target = $region48
      $region47: #{blstm_forward.2} parent=35 // pred_region
        %s6277 = ssub.s32 3, %s17
        %s6278 = smul.u32 16, %s6277
      $region48: #{blstm_forward.2} parent=35 // pred_fallthru
        _
    $region36: #{blstm_forward.2} parent=5 // pred_fallthru
      _
    %p6279 = scmp.le.s32.totalorder 2, %s12
    // Predicated region
    $region49: #{blstm_forward.2} parent=5 // pred_check
      %p6280 = pneg %p6279
    $region50: #{blstm_forward.2} parent=5 // pred_check_branch
      %6282 = sbr.rel (%p6280) target = $region52
    $region51: #{blstm_forward.2} parent=5 // pred_region
      %s6283 = ssub.s32 %s12, 2
      // Predicated region
      $region53: #{blstm_forward.2} parent=51 // pred_check
        %p6284 = pneg %p130
      $region54: #{blstm_forward.2} parent=51 // pred_check_branch
        %6286 = sbr.rel (%p6284) target = $region56
      $region55: #{blstm_forward.2} parent=51 // pred_region
        %s6287 = smul.u32 16, %s18
        %p6288 = scmp.lt.s32.totalorder %s6287, 63
        %s6289 = scalar_select %p6288, %s6287, 63
        %s6290 = smul.addr %s6289, 4
        %s6291 = scalar_lea.vmem %s4, %s6290
      $region56: #{blstm_forward.2} parent=51 // pred_fallthru
        _
      // Predicated region
      $region57: #{blstm_forward.2} parent=51 // pred_check
        %p6292 = pneg %p158
      $region58: #{blstm_forward.2} parent=51 // pred_check_branch
        %6294 = sbr.rel (%p6292) target = $region60
      $region59: #{blstm_forward.2} parent=51 // pred_region
        %s6295 = ssub.s32 3, %s18
        %s6296 = smul.u32 16, %s6295
        %p6297 = scmp.lt.s32.totalorder %s6296, 63
        %s6298 = scalar_select %p6297, %s6296, 63
        %s6299 = smul.addr %s6298, 4
        %s6300 = scalar_lea.vmem %s5, %s6299
      $region60: #{blstm_forward.2} parent=51 // pred_fallthru
        _
    $region52: #{blstm_forward.2} parent=5 // pred_fallthru
      _
  $region6: #{blstm_forward.2} parent=0 // loop_footer
    %s16 = sadd.s32 1, %s12
  $region7: #{blstm_forward.2} parent=0 // loop_footer_branch
    %11 = sbr.rel target = $region3
  $region8: #{blstm_forward.2} parent=0 // loop_exit
    _

</llo_original>
